<compile_context>
chip_gen: v6e
topology: v6e:2x2x1
jax: 0.10.0
libtpu: 0.0.40
codegen_flags: <defaults>
</compile_context>

<pallas_src>
import math

import numpy as np
import jax
import jax.numpy as jnp
from jax import lax
from jax.experimental import pallas as pl
from jax.experimental.pallas import tpu as pltpu


# ------------------------------ fused kernel ---------------------------------

def _make_kernel(layers, alpha, H, W, B):
    """Kernel factory; all arguments are static Python values."""
    n_conv = layers - 1
    HW = H * W

    def kernel(*refs):
        it = iter(refs)
        x_ref = next(it)          # (B, C, HW)      f32
        z_ref = next(it)          # (B, C, HW)      f32  standard-normal noise
        prec_ref = next(it)       # (C, 1)          f32  = exp(log_precision)
        mask_ref = next(it)       # (layers, 1, HW) f32  1.0 where spatially valid
        conv_params = [(next(it), next(it)) for _ in range(n_conv)]   # (9, cout, cin), (cout, 1)
        skip_params = [(next(it), next(it)) for _ in range(layers)]   # (classnum, cin), (classnum, 1)
        logits_ref = next(it)     # (B, classnum, 1) f32
        energy_ref = next(it)     # (B, C, HW)       f32

        prec = prec_ref[...]                                   # (C, 1) broadcast over lanes

        for b in range(B):                                     # static unroll over batch block
            # ---- add_noise ----
            z = z_ref[b]                                       # (C, HW) lane-dense
            x = x_ref[b] + prec * z                            # noisy input, f32
            energy_ref[b] = -0.5 * z * z                       # -(randn)^2 / 2

            y_max = None
            for i in range(layers):
                # ---- skip 1x1 conv (one MXU matmul, spatial on lanes) + masked LSE ----
                swT_ref, sb_ref = skip_params[i]
                yt = (jnp.dot(swT_ref[...], x, preferred_element_type=jnp.float32)
                      + sb_ref[...]) * alpha                   # (classnum, HW)
                if i == 0:
                    ym = yt                                    # full window is valid
                else:
                    ym = jnp.where(mask_ref[i] > 0.0, yt, -jnp.inf)
                m = jnp.max(ym, axis=-1, keepdims=True)        # (classnum, 1)
                lse = m + jnp.log(jnp.sum(jnp.exp(ym - m), axis=-1, keepdims=True))
                if y_max is None:
                    y_max = lse
                else:
                    # softmax(a, b) modeled as logaddexp, hand-rolled for Mosaic.
                    mm = jnp.maximum(y_max, lse)
                    y_max = mm + jnp.log(jnp.exp(y_max - mm) + jnp.exp(lse - mm))

                if i == layers - 1:
                    break                                      # last block: Identity conv

                # ---- 3x3 VALID conv: 9 accumulating (cout,cin)x(cin,HW) matmuls over
                #      lane-rolled views; output keeps pitch W, valid window shrinks by 2.
                w9_ref, cb_ref = conv_params[i]
                acc = None
                for k in range(9):
                    dh, dw = divmod(k, 3)
                    off = dh * W + dw
                    xs = x if off == 0 else pltpu.roll(x, shift=HW - off, axis=1)
                    t = jnp.dot(w9_ref[k], xs, preferred_element_type=jnp.float32)
                    acc = t if acc is None else acc + t
                acc = acc + cb_ref[...]                        # (cout, HW)
                # ---- Fold (CReLU): sublane concat, channels double, no relayout ----
                x = jnp.concatenate([jnp.maximum(acc, 0.0), jnp.maximum(-acc, 0.0)], axis=0)

            logits_ref[b] = y_max * (1.0 / alpha)              # (classnum, 1)

    return kernel


# ------------------------------ wrapper ---------------------------------------

def bottlenet_forward(x_nchw, z_nchw, params, alpha=1.0, batch_block=2):
    """Matches BottleNetMax.forward: returns (y_max/alpha (N,classnum), energy (N,C,H,W))."""
    N, C, H, W = x_nchw.shape
    HW = H * W
    x = x_nchw.reshape(N, C, HW)                 # contiguous reshape, no transpose
    z = z_nchw.reshape(N, C, HW)
    prec = jnp.exp(params['logprec']).reshape(C, 1)   # precomputed once, outside the kernel

    conv_params = params['conv']                 # [(w_hwio (3,3,Cin,Cout), b (1,Cout))]
    skip_params = params['skip']                 # [(w (Cin,classnum),     b (1,classnum))]
    layers = len(skip_params)
    classnum = skip_params[0][0].shape[-1]

    # Static per-layer validity masks (VALID conv shrinks the window by 2 each layer).
    valid_np = np.zeros((layers, 1, HW), np.float32)
    for i in range(layers):
        hv, wv = H - 2 * i, W - 2 * i
        m2 = np.zeros((H, W), np.float32)
        m2[:hv, :wv] = 1.0
        valid_np[i, 0] = m2.reshape(HW)
    valid = jnp.asarray(valid_np)

    B = max(1, min(batch_block, N))
    while N % B:
        B -= 1
    grid = (N // B,)

    flat_inputs = [x, z, prec, valid]
    in_specs = [
        pl.BlockSpec((B, C, HW), lambda n: (n, 0, 0)),
        pl.BlockSpec((B, C, HW), lambda n: (n, 0, 0)),
        pl.BlockSpec((C, 1), lambda n: (0, 0)),
        pl.BlockSpec((layers, 1, HW), lambda n: (0, 0, 0)),
    ]
    for cw, cb in conv_params:
        kh, kw, cin, cout = cw.shape
        w9 = jnp.transpose(cw, (0, 1, 3, 2)).reshape(kh * kw, cout, cin)   # (9, cout, cin)
        cb2 = cb.reshape(cout, 1)
        flat_inputs += [w9, cb2]
        in_specs += [pl.BlockSpec(w9.shape, lambda n: (0, 0, 0)),
                     pl.BlockSpec(cb2.shape, lambda n: (0, 0))]
    for sw, sb in skip_params:
        swT = sw.T                                                          # (classnum, cin)
        sb2 = sb.reshape(classnum, 1)
        flat_inputs += [swT, sb2]
        in_specs += [pl.BlockSpec(swT.shape, lambda n: (0, 0)),
                     pl.BlockSpec(sb2.shape, lambda n: (0, 0))]

    kernel = _make_kernel(layers, float(alpha), H, W, B)
    logits, energy = pl.pallas_call(
        kernel,
        grid=grid,
        in_specs=in_specs,
        out_specs=(
            pl.BlockSpec((B, classnum, 1), lambda n: (n, 0, 0)),
            pl.BlockSpec((B, C, HW), lambda n: (n, 0, 0)),
        ),
        out_shape=(jax.ShapeDtypeStruct((N, classnum, 1), jnp.float32),
                   jax.ShapeDtypeStruct((N, C, HW), jnp.float32)),
        compiler_params=pltpu.CompilerParams(
            dimension_semantics=("parallel",)),   # shard grid steps over 2 TCs on v7x
    )(*flat_inputs)

    return logits.reshape(N, classnum), energy.reshape(N, C, H, W)


# ------------------------------ params ----------------------------------------

def init_params(key, layers=4, classnum=10, num_filter=8, filter_scale=1, init_coef=1.0):
    num_filter = math.ceil(num_filter * filter_scale)
    assert layers <= 14, "k_sh_list gives 3x3 spatial convs only for layers <= 14"
    filternums = (layers - 1) * (num_filter,) + (classnum,)
    conv, skip = [], []
    in_ch = 3
    for i in range(layers):
        if i < layers - 1:
            key, k1, k2 = jax.random.split(key, 3)
            bound = 1.0 / math.sqrt(in_ch * 9)       # PyTorch Conv2d default init bound
            cw = jax.random.uniform(k1, (3, 3, in_ch, filternums[i]), jnp.float32,
                                    -bound, bound) * init_coef
            cb = jax.random.uniform(k2, (1, filternums[i]), jnp.float32, -bound, bound)
            conv.append((cw, cb))
        key, k1, k2 = jax.random.split(key, 3)
        bound = 1.0 / math.sqrt(in_ch)
        sw = jax.random.uniform(k1, (in_ch, classnum), jnp.float32, -bound, bound) * init_coef
        sb = jax.random.uniform(k2, (1, classnum), jnp.float32, -bound, bound)
        skip.append((sw, sb))
        in_ch = num_filter * 2                       # Fold doubles the channel count
    return {'logprec': jnp.ones((1, 3), jnp.float32), 'conv': conv, 'skip': skip}


# ------------------------------ pure-JAX reference -----------------------------

def reference_forward(x_nchw, z_nchw, params, alpha=1.0):
    prec = jnp.exp(params['logprec']).reshape(1, 3, 1, 1)
    randoms = prec * z_nchw
    x = x_nchw + randoms
    energy = -(randoms / prec) ** 2 / 2.0
    dn = ('NCHW', 'HWIO', 'NCHW')
    layers = len(params['skip'])
    y_max = None
    for i in range(layers):
        sw, sb = params['skip'][i]
        yt = lax.conv_general_dilated(x, sw.reshape(1, 1, *sw.shape), (1, 1), 'VALID',
                                      dimension_numbers=dn, precision=lax.Precision.HIGHEST)
        yt = yt + sb.reshape(1, -1, 1, 1)
        lse = jax.scipy.special.logsumexp(alpha * yt, axis=(2, 3))
        y_max = lse if y_max is None else jnp.logaddexp(y_max, lse)
        if i == layers - 1:
            break
        cw, cb = params['conv'][i]
        x = lax.conv_general_dilated(x, cw, (1, 1), 'VALID',
                                     dimension_numbers=dn, precision=lax.Precision.HIGHEST)
        x = x + cb.reshape(1, -1, 1, 1)
        x = jnp.concatenate([jnp.maximum(x, 0.0), jnp.maximum(-x, 0.0)], axis=1)  # Fold
    return y_max / alpha, energy


# ------------------------------ main -------------------------------------------

if __name__ == "__main__":
    key = jax.random.PRNGKey(0)
    kx, kz, kp = jax.random.split(key, 3)

    layers, classnum, num_filter = 4, 10, 8
    N, H, W = 4, 16, 16                                      # grid = (2,) with B=2
    x = jax.random.normal(kx, (N, 3, H, W), jnp.float32)     # NCHW like PyTorch
    z = jax.random.normal(kz, (N, 3, H, W), jnp.float32)     # deterministic stand-in for randn_like
    params = init_params(kp, layers, classnum, num_filter)

    fwd = jax.jit(bottlenet_forward)
    logits, energy = fwd(x, z, params)
    jax.block_until_ready((logits, energy))

    ref_logits, ref_energy = reference_forward(x, z, params)
    assert logits.shape == (N, classnum), logits.shape
    assert energy.shape == (N, 3, H, W), energy.shape
    # Kernel matmuls run in f32 (no bf16 operand casts), so tolerances are tight.
    assert jnp.allclose(logits, ref_logits, atol=1e-2, rtol=1e-2), \
        float(jnp.max(jnp.abs(logits - ref_logits)))
    assert jnp.allclose(energy, ref_energy, atol=1e-5, rtol=1e-5), \
        float(jnp.max(jnp.abs(energy - ref_energy)))

    print("KERNEL_OK")
</pallas_src>

<mosaic_0001>
module attributes {stable_mosaic.version = 11 : i64} {
  func.func @kernel(%arg0: i32, %arg1: memref<2x3x256xf32, #tpu.memory_space<vmem>>, %arg2: memref<2x3x256xf32, #tpu.memory_space<vmem>>, %arg3: memref<3x1xf32, #tpu.memory_space<vmem>>, %arg4: memref<4x1x256xf32, #tpu.memory_space<vmem>>, %arg5: memref<9x8x3xf32, #tpu.memory_space<vmem>>, %arg6: memref<8x1xf32, #tpu.memory_space<vmem>>, %arg7: memref<9x8x16xf32, #tpu.memory_space<vmem>>, %arg8: memref<8x1xf32, #tpu.memory_space<vmem>>, %arg9: memref<9x8x16xf32, #tpu.memory_space<vmem>>, %arg10: memref<8x1xf32, #tpu.memory_space<vmem>>, %arg11: memref<10x3xf32, #tpu.memory_space<vmem>>, %arg12: memref<10x1xf32, #tpu.memory_space<vmem>>, %arg13: memref<10x16xf32, #tpu.memory_space<vmem>>, %arg14: memref<10x1xf32, #tpu.memory_space<vmem>>, %arg15: memref<10x16xf32, #tpu.memory_space<vmem>>, %arg16: memref<10x1xf32, #tpu.memory_space<vmem>>, %arg17: memref<10x16xf32, #tpu.memory_space<vmem>>, %arg18: memref<10x1xf32, #tpu.memory_space<vmem>>, %arg19: memref<2x10x1xf32, #tpu.memory_space<vmem>>, %arg20: memref<2x3x256xf32, #tpu.memory_space<vmem>>) attributes {dimension_semantics = [#tpu.dimension_semantics<parallel>], iteration_bounds = array<i64: 2>, scalar_prefetch = 0 : i64, scratch_operands = 0 : i64, tpu.core_type = #tpu.core_type<tc>, window_params = [{transform_indices = @transform_0, window_bounds = array<i64: 2, 3, 256>}, {transform_indices = @transform_1, window_bounds = array<i64: 2, 3, 256>}, {pipeline_mode = #tpu.pipeline_mode<synchronous>, transform_indices = @transform_2, window_bounds = array<i64: 3, 1>}, {pipeline_mode = #tpu.pipeline_mode<synchronous>, transform_indices = @transform_3, window_bounds = array<i64: 4, 1, 256>}, {pipeline_mode = #tpu.pipeline_mode<synchronous>, transform_indices = @transform_4, window_bounds = array<i64: 9, 8, 3>}, {pipeline_mode = #tpu.pipeline_mode<synchronous>, transform_indices = @transform_5, window_bounds = array<i64: 8, 1>}, {pipeline_mode = #tpu.pipeline_mode<synchronous>, transform_indices = @transform_6, window_bounds = array<i64: 9, 8, 16>}, {pipeline_mode = #tpu.pipeline_mode<synchronous>, transform_indices = @transform_7, window_bounds = array<i64: 8, 1>}, {pipeline_mode = #tpu.pipeline_mode<synchronous>, transform_indices = @transform_8, window_bounds = array<i64: 9, 8, 16>}, {pipeline_mode = #tpu.pipeline_mode<synchronous>, transform_indices = @transform_9, window_bounds = array<i64: 8, 1>}, {pipeline_mode = #tpu.pipeline_mode<synchronous>, transform_indices = @transform_10, window_bounds = array<i64: 10, 3>}, {pipeline_mode = #tpu.pipeline_mode<synchronous>, transform_indices = @transform_11, window_bounds = array<i64: 10, 1>}, {pipeline_mode = #tpu.pipeline_mode<synchronous>, transform_indices = @transform_12, window_bounds = array<i64: 10, 16>}, {pipeline_mode = #tpu.pipeline_mode<synchronous>, transform_indices = @transform_13, window_bounds = array<i64: 10, 1>}, {pipeline_mode = #tpu.pipeline_mode<synchronous>, transform_indices = @transform_14, window_bounds = array<i64: 10, 16>}, {pipeline_mode = #tpu.pipeline_mode<synchronous>, transform_indices = @transform_15, window_bounds = array<i64: 10, 1>}, {pipeline_mode = #tpu.pipeline_mode<synchronous>, transform_indices = @transform_16, window_bounds = array<i64: 10, 16>}, {pipeline_mode = #tpu.pipeline_mode<synchronous>, transform_indices = @transform_17, window_bounds = array<i64: 10, 1>}, {transform_indices = @transform_18, window_bounds = array<i64: 2, 10, 1>}, {transform_indices = @transform_19, window_bounds = array<i64: 2, 3, 256>}]} {
    %c0 = arith.constant 0 : index
    %c0_0 = arith.constant 0 : index
    %0 = vector.load %arg3[%c0, %c0_0] : memref<3x1xf32, #tpu.memory_space<vmem>>, vector<3x1xf32>
    %c0_1 = arith.constant 0 : index
    %c0_2 = arith.constant 0 : index
    %c0_3 = arith.constant 0 : index
    %1 = vector.load %arg2[%c0_1, %c0_2, %c0_3] : memref<2x3x256xf32, #tpu.memory_space<vmem>>, vector<1x3x256xf32>
    %2 = vector.shape_cast %1 : vector<1x3x256xf32> to vector<3x256xf32>
    %c0_4 = arith.constant 0 : index
    %c0_5 = arith.constant 0 : index
    %c0_6 = arith.constant 0 : index
    %3 = vector.load %arg1[%c0_4, %c0_5, %c0_6] : memref<2x3x256xf32, #tpu.memory_space<vmem>>, vector<1x3x256xf32>
    %4 = vector.shape_cast %3 : vector<1x3x256xf32> to vector<3x256xf32>
    %5 = vector.broadcast %0 : vector<3x1xf32> to vector<3x256xf32>
    %6 = arith.mulf %5, %2 : vector<3x256xf32>
    %7 = arith.addf %4, %6 : vector<3x256xf32>
    %cst = arith.constant -5.000000e-01 : f32
    %8 = vector.broadcast %cst : f32 to vector<3x256xf32>
    %9 = arith.mulf %8, %2 : vector<3x256xf32>
    %10 = arith.mulf %9, %2 : vector<3x256xf32>
    %c0_7 = arith.constant 0 : index
    %c0_8 = arith.constant 0 : index
    %c0_9 = arith.constant 0 : index
    %11 = vector.load %arg20[%c0_7, %c0_8, %c0_9] : memref<2x3x256xf32, #tpu.memory_space<vmem>>, vector<1x3x256xf32>
    %12 = vector.shape_cast %11 : vector<1x3x256xf32> to vector<3x256xf32>
    %13 = vector.shape_cast %10 : vector<3x256xf32> to vector<1x3x256xf32>
    tpu.vector_store %arg20[%c0_7, %c0_8, %c0_9], %13 {strides = array<i32>} : memref<2x3x256xf32, #tpu.memory_space<vmem>>, vector<1x3x256xf32>,
    %c0_10 = arith.constant 0 : index
    %c0_11 = arith.constant 0 : index
    %14 = vector.load %arg11[%c0_10, %c0_11] : memref<10x3xf32, #tpu.memory_space<vmem>>, vector<10x3xf32>
    %cst_12 = arith.constant dense<0.000000e+00> : vector<10x256xf32>
    %15 = tpu.matmul %14, %7, %cst_12 {dimension_numbers = #tpu.dot_dimension_numbers<[1], [0], [0], [1], [0, 0, 1, 1], [], []>} : vector<10x3xf32>, vector<3x256xf32>, vector<10x256xf32> -> vector<10x256xf32>
    %c0_13 = arith.constant 0 : index
    %c0_14 = arith.constant 0 : index
    %16 = vector.load %arg12[%c0_13, %c0_14] : memref<10x1xf32, #tpu.memory_space<vmem>>, vector<10x1xf32>
    %17 = vector.broadcast %16 : vector<10x1xf32> to vector<10x256xf32>
    %18 = arith.addf %15, %17 : vector<10x256xf32>
    %cst_15 = arith.constant 1.000000e+00 : f32
    %19 = vector.broadcast %cst_15 : f32 to vector<10x256xf32>
    %20 = arith.mulf %18, %19 : vector<10x256xf32>
    %cst_16 = arith.constant dense<0xFF800000> : vector<10xf32>
    %21 = vector.multi_reduction <maximumf>, %20, %cst_16 [1] : vector<10x256xf32> to vector<10xf32>
    %22 = vector.shape_cast %21 : vector<10xf32> to vector<10x1xf32>
    %23 = vector.broadcast %22 : vector<10x1xf32> to vector<10x256xf32>
    %24 = arith.subf %20, %23 : vector<10x256xf32>
    %25 = math.exp %24 : vector<10x256xf32>
    %cst_17 = arith.constant dense<0.000000e+00> : vector<10xf32>
    %26 = vector.multi_reduction <add>, %25, %cst_17 [1] : vector<10x256xf32> to vector<10xf32>
    %27 = vector.shape_cast %26 : vector<10xf32> to vector<10x1xf32>
    %28 = math.log %27 : vector<10x1xf32>
    %29 = arith.addf %22, %28 : vector<10x1xf32>
    %c0_18 = arith.constant 0 : index
    %c0_19 = arith.constant 0 : index
    %c0_20 = arith.constant 0 : index
    %30 = vector.load %arg5[%c0_18, %c0_19, %c0_20] : memref<9x8x3xf32, #tpu.memory_space<vmem>>, vector<1x8x3xf32>
    %31 = vector.shape_cast %30 : vector<1x8x3xf32> to vector<8x3xf32>
    %cst_21 = arith.constant dense<0.000000e+00> : vector<8x256xf32>
    %32 = tpu.matmul %31, %7, %cst_21 {dimension_numbers = #tpu.dot_dimension_numbers<[1], [0], [0], [1], [0, 0, 1, 1], [], []>} : vector<8x3xf32>, vector<3x256xf32>, vector<8x256xf32> -> vector<8x256xf32>
    %c255_i32 = arith.constant 255 : i32
    %33 = tpu.dynamic_rotate %7 by %c255_i32 dim 1 : vector<3x256xf32>, i32 -> vector<3x256xf32>
    %c1 = arith.constant 1 : index
    %c0_22 = arith.constant 0 : index
    %c0_23 = arith.constant 0 : index
    %34 = vector.load %arg5[%c1, %c0_22, %c0_23] : memref<9x8x3xf32, #tpu.memory_space<vmem>>, vector<1x8x3xf32>
    %35 = vector.shape_cast %34 : vector<1x8x3xf32> to vector<8x3xf32>
    %cst_24 = arith.constant dense<0.000000e+00> : vector<8x256xf32>
    %36 = tpu.matmul %35, %33, %cst_24 {dimension_numbers = #tpu.dot_dimension_numbers<[1], [0], [0], [1], [0, 0, 1, 1], [], []>} : vector<8x3xf32>, vector<3x256xf32>, vector<8x256xf32> -> vector<8x256xf32>
    %37 = arith.addf %32, %36 : vector<8x256xf32>
    %c254_i32 = arith.constant 254 : i32
    %38 = tpu.dynamic_rotate %7 by %c254_i32 dim 1 : vector<3x256xf32>, i32 -> vector<3x256xf32>
    %c2 = arith.constant 2 : index
    %c0_25 = arith.constant 0 : index
    %c0_26 = arith.constant 0 : index
    %39 = vector.load %arg5[%c2, %c0_25, %c0_26] : memref<9x8x3xf32, #tpu.memory_space<vmem>>, vector<1x8x3xf32>
    %40 = vector.shape_cast %39 : vector<1x8x3xf32> to vector<8x3xf32>
    %cst_27 = arith.constant dense<0.000000e+00> : vector<8x256xf32>
    %41 = tpu.matmul %40, %38, %cst_27 {dimension_numbers = #tpu.dot_dimension_numbers<[1], [0], [0], [1], [0, 0, 1, 1], [], []>} : vector<8x3xf32>, vector<3x256xf32>, vector<8x256xf32> -> vector<8x256xf32>
    %42 = arith.addf %37, %41 : vector<8x256xf32>
    %c240_i32 = arith.constant 240 : i32
    %43 = tpu.dynamic_rotate %7 by %c240_i32 dim 1 : vector<3x256xf32>, i32 -> vector<3x256xf32>
    %c3 = arith.constant 3 : index
    %c0_28 = arith.constant 0 : index
    %c0_29 = arith.constant 0 : index
    %44 = vector.load %arg5[%c3, %c0_28, %c0_29] : memref<9x8x3xf32, #tpu.memory_space<vmem>>, vector<1x8x3xf32>
    %45 = vector.shape_cast %44 : vector<1x8x3xf32> to vector<8x3xf32>
    %cst_30 = arith.constant dense<0.000000e+00> : vector<8x256xf32>
    %46 = tpu.matmul %45, %43, %cst_30 {dimension_numbers = #tpu.dot_dimension_numbers<[1], [0], [0], [1], [0, 0, 1, 1], [], []>} : vector<8x3xf32>, vector<3x256xf32>, vector<8x256xf32> -> vector<8x256xf32>
    %47 = arith.addf %42, %46 : vector<8x256xf32>
    %c239_i32 = arith.constant 239 : i32
    %48 = tpu.dynamic_rotate %7 by %c239_i32 dim 1 : vector<3x256xf32>, i32 -> vector<3x256xf32>
    %c4 = arith.constant 4 : index
    %c0_31 = arith.constant 0 : index
    %c0_32 = arith.constant 0 : index
    %49 = vector.load %arg5[%c4, %c0_31, %c0_32] : memref<9x8x3xf32, #tpu.memory_space<vmem>>, vector<1x8x3xf32>
    %50 = vector.shape_cast %49 : vector<1x8x3xf32> to vector<8x3xf32>
    %cst_33 = arith.constant dense<0.000000e+00> : vector<8x256xf32>
    %51 = tpu.matmul %50, %48, %cst_33 {dimension_numbers = #tpu.dot_dimension_numbers<[1], [0], [0], [1], [0, 0, 1, 1], [], []>} : vector<8x3xf32>, vector<3x256xf32>, vector<8x256xf32> -> vector<8x256xf32>
    %52 = arith.addf %47, %51 : vector<8x256xf32>
    %c238_i32 = arith.constant 238 : i32
    %53 = tpu.dynamic_rotate %7 by %c238_i32 dim 1 : vector<3x256xf32>, i32 -> vector<3x256xf32>
    %c5 = arith.constant 5 : index
    %c0_34 = arith.constant 0 : index
    %c0_35 = arith.constant 0 : index
    %54 = vector.load %arg5[%c5, %c0_34, %c0_35] : memref<9x8x3xf32, #tpu.memory_space<vmem>>, vector<1x8x3xf32>
    %55 = vector.shape_cast %54 : vector<1x8x3xf32> to vector<8x3xf32>
    %cst_36 = arith.constant dense<0.000000e+00> : vector<8x256xf32>
    %56 = tpu.matmul %55, %53, %cst_36 {dimension_numbers = #tpu.dot_dimension_numbers<[1], [0], [0], [1], [0, 0, 1, 1], [], []>} : vector<8x3xf32>, vector<3x256xf32>, vector<8x256xf32> -> vector<8x256xf32>
    %57 = arith.addf %52, %56 : vector<8x256xf32>
    %c224_i32 = arith.constant 224 : i32
    %58 = tpu.dynamic_rotate %7 by %c224_i32 dim 1 : vector<3x256xf32>, i32 -> vector<3x256xf32>
    %c6 = arith.constant 6 : index
    %c0_37 = arith.constant 0 : index
    %c0_38 = arith.constant 0 : index
    %59 = vector.load %arg5[%c6, %c0_37, %c0_38] : memref<9x8x3xf32, #tpu.memory_space<vmem>>, vector<1x8x3xf32>
    %60 = vector.shape_cast %59 : vector<1x8x3xf32> to vector<8x3xf32>
    %cst_39 = arith.constant dense<0.000000e+00> : vector<8x256xf32>
    %61 = tpu.matmul %60, %58, %cst_39 {dimension_numbers = #tpu.dot_dimension_numbers<[1], [0], [0], [1], [0, 0, 1, 1], [], []>} : vector<8x3xf32>, vector<3x256xf32>, vector<8x256xf32> -> vector<8x256xf32>
    %62 = arith.addf %57, %61 : vector<8x256xf32>
    %c223_i32 = arith.constant 223 : i32
    %63 = tpu.dynamic_rotate %7 by %c223_i32 dim 1 : vector<3x256xf32>, i32 -> vector<3x256xf32>
    %c7 = arith.constant 7 : index
    %c0_40 = arith.constant 0 : index
    %c0_41 = arith.constant 0 : index
    %64 = vector.load %arg5[%c7, %c0_40, %c0_41] : memref<9x8x3xf32, #tpu.memory_space<vmem>>, vector<1x8x3xf32>
    %65 = vector.shape_cast %64 : vector<1x8x3xf32> to vector<8x3xf32>
    %cst_42 = arith.constant dense<0.000000e+00> : vector<8x256xf32>
    %66 = tpu.matmul %65, %63, %cst_42 {dimension_numbers = #tpu.dot_dimension_numbers<[1], [0], [0], [1], [0, 0, 1, 1], [], []>} : vector<8x3xf32>, vector<3x256xf32>, vector<8x256xf32> -> vector<8x256xf32>
    %67 = arith.addf %62, %66 : vector<8x256xf32>
    %c222_i32 = arith.constant 222 : i32
    %68 = tpu.dynamic_rotate %7 by %c222_i32 dim 1 : vector<3x256xf32>, i32 -> vector<3x256xf32>
    %c8 = arith.constant 8 : index
    %c0_43 = arith.constant 0 : index
    %c0_44 = arith.constant 0 : index
    %69 = vector.load %arg5[%c8, %c0_43, %c0_44] : memref<9x8x3xf32, #tpu.memory_space<vmem>>, vector<1x8x3xf32>
    %70 = vector.shape_cast %69 : vector<1x8x3xf32> to vector<8x3xf32>
    %cst_45 = arith.constant dense<0.000000e+00> : vector<8x256xf32>
    %71 = tpu.matmul %70, %68, %cst_45 {dimension_numbers = #tpu.dot_dimension_numbers<[1], [0], [0], [1], [0, 0, 1, 1], [], []>} : vector<8x3xf32>, vector<3x256xf32>, vector<8x256xf32> -> vector<8x256xf32>
    %72 = arith.addf %67, %71 : vector<8x256xf32>
    %c0_46 = arith.constant 0 : index
    %c0_47 = arith.constant 0 : index
    %73 = vector.load %arg6[%c0_46, %c0_47] : memref<8x1xf32, #tpu.memory_space<vmem>>, vector<8x1xf32>
    %74 = vector.broadcast %73 : vector<8x1xf32> to vector<8x256xf32>
    %75 = arith.addf %72, %74 : vector<8x256xf32>
    %cst_48 = arith.constant 0.000000e+00 : f32
    %76 = vector.broadcast %cst_48 : f32 to vector<8x256xf32>
    %77 = arith.maximumf %75, %76 : vector<8x256xf32>
    %cst_49 = arith.constant 0.000000e+00 : f32
    %78 = vector.broadcast %cst_49 : f32 to vector<8x256xf32>
    %79 = arith.subf %78, %75 : vector<8x256xf32>
    %cst_50 = arith.constant 0.000000e+00 : f32
    %80 = vector.broadcast %cst_50 : f32 to vector<8x256xf32>
    %81 = arith.maximumf %79, %80 : vector<8x256xf32>
    %82 = tpu.concatenate %77, %81 in 0 : vector<8x256xf32>, vector<8x256xf32> -> vector<16x256xf32>
    %c0_51 = arith.constant 0 : index
    %c0_52 = arith.constant 0 : index
    %83 = vector.load %arg13[%c0_51, %c0_52] : memref<10x16xf32, #tpu.memory_space<vmem>>, vector<10x16xf32>
    %cst_53 = arith.constant dense<0.000000e+00> : vector<10x256xf32>
    %84 = tpu.matmul %83, %82, %cst_53 {dimension_numbers = #tpu.dot_dimension_numbers<[1], [0], [0], [1], [0, 0, 1, 1], [], []>} : vector<10x16xf32>, vector<16x256xf32>, vector<10x256xf32> -> vector<10x256xf32>
    %c0_54 = arith.constant 0 : index
    %c0_55 = arith.constant 0 : index
    %85 = vector.load %arg14[%c0_54, %c0_55] : memref<10x1xf32, #tpu.memory_space<vmem>>, vector<10x1xf32>
    %86 = vector.broadcast %85 : vector<10x1xf32> to vector<10x256xf32>
    %87 = arith.addf %84, %86 : vector<10x256xf32>
    %cst_56 = arith.constant 1.000000e+00 : f32
    %88 = vector.broadcast %cst_56 : f32 to vector<10x256xf32>
    %89 = arith.mulf %87, %88 : vector<10x256xf32>
    %c1_57 = arith.constant 1 : index
    %c0_58 = arith.constant 0 : index
    %c0_59 = arith.constant 0 : index
    %90 = vector.load %arg4[%c1_57, %c0_58, %c0_59] : memref<4x1x256xf32, #tpu.memory_space<vmem>>, vector<1x1x256xf32>
    %91 = vector.shape_cast %90 : vector<1x1x256xf32> to vector<1x256xf32>
    %cst_60 = arith.constant 0.000000e+00 : f32
    %92 = vector.broadcast %cst_60 : f32 to vector<1x256xf32>
    %93 = arith.cmpf ogt, %91, %92 : vector<1x256xf32>
    %cst_61 = arith.constant 0xFF800000 : f32
    %94 = vector.shape_cast %93 : vector<1x256xi1> to vector<1x256xi1>
    %95 = vector.broadcast %94 : vector<1x256xi1> to vector<10x256xi1>
    %96 = vector.broadcast %cst_61 : f32 to vector<10x256xf32>
    %97 = arith.select %95, %89, %96 : vector<10x256xi1>, vector<10x256xf32>
    %cst_62 = arith.constant dense<0xFF800000> : vector<10xf32>
    %98 = vector.multi_reduction <maximumf>, %97, %cst_62 [1] : vector<10x256xf32> to vector<10xf32>
    %99 = vector.shape_cast %98 : vector<10xf32> to vector<10x1xf32>
    %100 = vector.broadcast %99 : vector<10x1xf32> to vector<10x256xf32>
    %101 = arith.subf %97, %100 : vector<10x256xf32>
    %102 = math.exp %101 : vector<10x256xf32>
    %cst_63 = arith.constant dense<0.000000e+00> : vector<10xf32>
    %103 = vector.multi_reduction <add>, %102, %cst_63 [1] : vector<10x256xf32> to vector<10xf32>
    %104 = vector.shape_cast %103 : vector<10xf32> to vector<10x1xf32>
    %105 = math.log %104 : vector<10x1xf32>
    %106 = arith.addf %99, %105 : vector<10x1xf32>
    %107 = arith.maximumf %29, %106 : vector<10x1xf32>
    %108 = arith.subf %29, %107 : vector<10x1xf32>
    %109 = math.exp %108 : vector<10x1xf32>
    %110 = arith.subf %106, %107 : vector<10x1xf32>
    %111 = math.exp %110 : vector<10x1xf32>
    %112 = arith.addf %109, %111 : vector<10x1xf32>
    %113 = math.log %112 : vector<10x1xf32>
    %114 = arith.addf %107, %113 : vector<10x1xf32>
    %c0_64 = arith.constant 0 : index
    %c0_65 = arith.constant 0 : index
    %c0_66 = arith.constant 0 : index
    %115 = vector.load %arg7[%c0_64, %c0_65, %c0_66] : memref<9x8x16xf32, #tpu.memory_space<vmem>>, vector<1x8x16xf32>
    %116 = vector.shape_cast %115 : vector<1x8x16xf32> to vector<8x16xf32>
    %cst_67 = arith.constant dense<0.000000e+00> : vector<8x256xf32>
    %117 = tpu.matmul %116, %82, %cst_67 {dimension_numbers = #tpu.dot_dimension_numbers<[1], [0], [0], [1], [0, 0, 1, 1], [], []>} : vector<8x16xf32>, vector<16x256xf32>, vector<8x256xf32> -> vector<8x256xf32>
    %c255_i32_68 = arith.constant 255 : i32
    %118 = tpu.dynamic_rotate %82 by %c255_i32_68 dim 1 : vector<16x256xf32>, i32 -> vector<16x256xf32>
    %c1_69 = arith.constant 1 : index
    %c0_70 = arith.constant 0 : index
    %c0_71 = arith.constant 0 : index
    %119 = vector.load %arg7[%c1_69, %c0_70, %c0_71] : memref<9x8x16xf32, #tpu.memory_space<vmem>>, vector<1x8x16xf32>
    %120 = vector.shape_cast %119 : vector<1x8x16xf32> to vector<8x16xf32>
    %cst_72 = arith.constant dense<0.000000e+00> : vector<8x256xf32>
    %121 = tpu.matmul %120, %118, %cst_72 {dimension_numbers = #tpu.dot_dimension_numbers<[1], [0], [0], [1], [0, 0, 1, 1], [], []>} : vector<8x16xf32>, vector<16x256xf32>, vector<8x256xf32> -> vector<8x256xf32>
    %122 = arith.addf %117, %121 : vector<8x256xf32>
    %c254_i32_73 = arith.constant 254 : i32
    %123 = tpu.dynamic_rotate %82 by %c254_i32_73 dim 1 : vector<16x256xf32>, i32 -> vector<16x256xf32>
    %c2_74 = arith.constant 2 : index
    %c0_75 = arith.constant 0 : index
    %c0_76 = arith.constant 0 : index
    %124 = vector.load %arg7[%c2_74, %c0_75, %c0_76] : memref<9x8x16xf32, #tpu.memory_space<vmem>>, vector<1x8x16xf32>
    %125 = vector.shape_cast %124 : vector<1x8x16xf32> to vector<8x16xf32>
    %cst_77 = arith.constant dense<0.000000e+00> : vector<8x256xf32>
    %126 = tpu.matmul %125, %123, %cst_77 {dimension_numbers = #tpu.dot_dimension_numbers<[1], [0], [0], [1], [0, 0, 1, 1], [], []>} : vector<8x16xf32>, vector<16x256xf32>, vector<8x256xf32> -> vector<8x256xf32>
    %127 = arith.addf %122, %126 : vector<8x256xf32>
    %c240_i32_78 = arith.constant 240 : i32
    %128 = tpu.dynamic_rotate %82 by %c240_i32_78 dim 1 : vector<16x256xf32>, i32 -> vector<16x256xf32>
    %c3_79 = arith.constant 3 : index
    %c0_80 = arith.constant 0 : index
    %c0_81 = arith.constant 0 : index
    %129 = vector.load %arg7[%c3_79, %c0_80, %c0_81] : memref<9x8x16xf32, #tpu.memory_space<vmem>>, vector<1x8x16xf32>
    %130 = vector.shape_cast %129 : vector<1x8x16xf32> to vector<8x16xf32>
    %cst_82 = arith.constant dense<0.000000e+00> : vector<8x256xf32>
    %131 = tpu.matmul %130, %128, %cst_82 {dimension_numbers = #tpu.dot_dimension_numbers<[1], [0], [0], [1], [0, 0, 1, 1], [], []>} : vector<8x16xf32>, vector<16x256xf32>, vector<8x256xf32> -> vector<8x256xf32>
    %132 = arith.addf %127, %131 : vector<8x256xf32>
    %c239_i32_83 = arith.constant 239 : i32
    %133 = tpu.dynamic_rotate %82 by %c239_i32_83 dim 1 : vector<16x256xf32>, i32 -> vector<16x256xf32>
    %c4_84 = arith.constant 4 : index
    %c0_85 = arith.constant 0 : index
    %c0_86 = arith.constant 0 : index
    %134 = vector.load %arg7[%c4_84, %c0_85, %c0_86] : memref<9x8x16xf32, #tpu.memory_space<vmem>>, vector<1x8x16xf32>
    %135 = vector.shape_cast %134 : vector<1x8x16xf32> to vector<8x16xf32>
    %cst_87 = arith.constant dense<0.000000e+00> : vector<8x256xf32>
    %136 = tpu.matmul %135, %133, %cst_87 {dimension_numbers = #tpu.dot_dimension_numbers<[1], [0], [0], [1], [0, 0, 1, 1], [], []>} : vector<8x16xf32>, vector<16x256xf32>, vector<8x256xf32> -> vector<8x256xf32>
    %137 = arith.addf %132, %136 : vector<8x256xf32>
    %c238_i32_88 = arith.constant 238 : i32
    %138 = tpu.dynamic_rotate %82 by %c238_i32_88 dim 1 : vector<16x256xf32>, i32 -> vector<16x256xf32>
    %c5_89 = arith.constant 5 : index
    %c0_90 = arith.constant 0 : index
    %c0_91 = arith.constant 0 : index
    %139 = vector.load %arg7[%c5_89, %c0_90, %c0_91] : memref<9x8x16xf32, #tpu.memory_space<vmem>>, vector<1x8x16xf32>
    %140 = vector.shape_cast %139 : vector<1x8x16xf32> to vector<8x16xf32>
    %cst_92 = arith.constant dense<0.000000e+00> : vector<8x256xf32>
    %141 = tpu.matmul %140, %138, %cst_92 {dimension_numbers = #tpu.dot_dimension_numbers<[1], [0], [0], [1], [0, 0, 1, 1], [], []>} : vector<8x16xf32>, vector<16x256xf32>, vector<8x256xf32> -> vector<8x256xf32>
    %142 = arith.addf %137, %141 : vector<8x256xf32>
    %c224_i32_93 = arith.constant 224 : i32
    %143 = tpu.dynamic_rotate %82 by %c224_i32_93 dim 1 : vector<16x256xf32>, i32 -> vector<16x256xf32>
    %c6_94 = arith.constant 6 : index
    %c0_95 = arith.constant 0 : index
    %c0_96 = arith.constant 0 : index
    %144 = vector.load %arg7[%c6_94, %c0_95, %c0_96] : memref<9x8x16xf32, #tpu.memory_space<vmem>>, vector<1x8x16xf32>
    %145 = vector.shape_cast %144 : vector<1x8x16xf32> to vector<8x16xf32>
    %cst_97 = arith.constant dense<0.000000e+00> : vector<8x256xf32>
    %146 = tpu.matmul %145, %143, %cst_97 {dimension_numbers = #tpu.dot_dimension_numbers<[1], [0], [0], [1], [0, 0, 1, 1], [], []>} : vector<8x16xf32>, vector<16x256xf32>, vector<8x256xf32> -> vector<8x256xf32>
    %147 = arith.addf %142, %146 : vector<8x256xf32>
    %c223_i32_98 = arith.constant 223 : i32
    %148 = tpu.dynamic_rotate %82 by %c223_i32_98 dim 1 : vector<16x256xf32>, i32 -> vector<16x256xf32>
    %c7_99 = arith.constant 7 : index
    %c0_100 = arith.constant 0 : index
    %c0_101 = arith.constant 0 : index
    %149 = vector.load %arg7[%c7_99, %c0_100, %c0_101] : memref<9x8x16xf32, #tpu.memory_space<vmem>>, vector<1x8x16xf32>
    %150 = vector.shape_cast %149 : vector<1x8x16xf32> to vector<8x16xf32>
    %cst_102 = arith.constant dense<0.000000e+00> : vector<8x256xf32>
    %151 = tpu.matmul %150, %148, %cst_102 {dimension_numbers = #tpu.dot_dimension_numbers<[1], [0], [0], [1], [0, 0, 1, 1], [], []>} : vector<8x16xf32>, vector<16x256xf32>, vector<8x256xf32> -> vector<8x256xf32>
    %152 = arith.addf %147, %151 : vector<8x256xf32>
    %c222_i32_103 = arith.constant 222 : i32
    %153 = tpu.dynamic_rotate %82 by %c222_i32_103 dim 1 : vector<16x256xf32>, i32 -> vector<16x256xf32>
    %c8_104 = arith.constant 8 : index
    %c0_105 = arith.constant 0 : index
    %c0_106 = arith.constant 0 : index
    %154 = vector.load %arg7[%c8_104, %c0_105, %c0_106] : memref<9x8x16xf32, #tpu.memory_space<vmem>>, vector<1x8x16xf32>
    %155 = vector.shape_cast %154 : vector<1x8x16xf32> to vector<8x16xf32>
    %cst_107 = arith.constant dense<0.000000e+00> : vector<8x256xf32>
    %156 = tpu.matmul %155, %153, %cst_107 {dimension_numbers = #tpu.dot_dimension_numbers<[1], [0], [0], [1], [0, 0, 1, 1], [], []>} : vector<8x16xf32>, vector<16x256xf32>, vector<8x256xf32> -> vector<8x256xf32>
    %157 = arith.addf %152, %156 : vector<8x256xf32>
    %c0_108 = arith.constant 0 : index
    %c0_109 = arith.constant 0 : index
    %158 = vector.load %arg8[%c0_108, %c0_109] : memref<8x1xf32, #tpu.memory_space<vmem>>, vector<8x1xf32>
    %159 = vector.broadcast %158 : vector<8x1xf32> to vector<8x256xf32>
    %160 = arith.addf %157, %159 : vector<8x256xf32>
    %cst_110 = arith.constant 0.000000e+00 : f32
    %161 = vector.broadcast %cst_110 : f32 to vector<8x256xf32>
    %162 = arith.maximumf %160, %161 : vector<8x256xf32>
    %cst_111 = arith.constant 0.000000e+00 : f32
    %163 = vector.broadcast %cst_111 : f32 to vector<8x256xf32>
    %164 = arith.subf %163, %160 : vector<8x256xf32>
    %cst_112 = arith.constant 0.000000e+00 : f32
    %165 = vector.broadcast %cst_112 : f32 to vector<8x256xf32>
    %166 = arith.maximumf %164, %165 : vector<8x256xf32>
    %167 = tpu.concatenate %162, %166 in 0 : vector<8x256xf32>, vector<8x256xf32> -> vector<16x256xf32>
    %c0_113 = arith.constant 0 : index
    %c0_114 = arith.constant 0 : index
    %168 = vector.load %arg15[%c0_113, %c0_114] : memref<10x16xf32, #tpu.memory_space<vmem>>, vector<10x16xf32>
    %cst_115 = arith.constant dense<0.000000e+00> : vector<10x256xf32>
    %169 = tpu.matmul %168, %167, %cst_115 {dimension_numbers = #tpu.dot_dimension_numbers<[1], [0], [0], [1], [0, 0, 1, 1], [], []>} : vector<10x16xf32>, vector<16x256xf32>, vector<10x256xf32> -> vector<10x256xf32>
    %c0_116 = arith.constant 0 : index
    %c0_117 = arith.constant 0 : index
    %170 = vector.load %arg16[%c0_116, %c0_117] : memref<10x1xf32, #tpu.memory_space<vmem>>, vector<10x1xf32>
    %171 = vector.broadcast %170 : vector<10x1xf32> to vector<10x256xf32>
    %172 = arith.addf %169, %171 : vector<10x256xf32>
    %cst_118 = arith.constant 1.000000e+00 : f32
    %173 = vector.broadcast %cst_118 : f32 to vector<10x256xf32>
    %174 = arith.mulf %172, %173 : vector<10x256xf32>
    %c2_119 = arith.constant 2 : index
    %c0_120 = arith.constant 0 : index
    %c0_121 = arith.constant 0 : index
    %175 = vector.load %arg4[%c2_119, %c0_120, %c0_121] : memref<4x1x256xf32, #tpu.memory_space<vmem>>, vector<1x1x256xf32>
    %176 = vector.shape_cast %175 : vector<1x1x256xf32> to vector<1x256xf32>
    %cst_122 = arith.constant 0.000000e+00 : f32
    %177 = vector.broadcast %cst_122 : f32 to vector<1x256xf32>
    %178 = arith.cmpf ogt, %176, %177 : vector<1x256xf32>
    %cst_123 = arith.constant 0xFF800000 : f32
    %179 = vector.shape_cast %178 : vector<1x256xi1> to vector<1x256xi1>
    %180 = vector.broadcast %179 : vector<1x256xi1> to vector<10x256xi1>
    %181 = vector.broadcast %cst_123 : f32 to vector<10x256xf32>
    %182 = arith.select %180, %174, %181 : vector<10x256xi1>, vector<10x256xf32>
    %cst_124 = arith.constant dense<0xFF800000> : vector<10xf32>
    %183 = vector.multi_reduction <maximumf>, %182, %cst_124 [1] : vector<10x256xf32> to vector<10xf32>
    %184 = vector.shape_cast %183 : vector<10xf32> to vector<10x1xf32>
    %185 = vector.broadcast %184 : vector<10x1xf32> to vector<10x256xf32>
    %186 = arith.subf %182, %185 : vector<10x256xf32>
    %187 = math.exp %186 : vector<10x256xf32>
    %cst_125 = arith.constant dense<0.000000e+00> : vector<10xf32>
    %188 = vector.multi_reduction <add>, %187, %cst_125 [1] : vector<10x256xf32> to vector<10xf32>
    %189 = vector.shape_cast %188 : vector<10xf32> to vector<10x1xf32>
    %190 = math.log %189 : vector<10x1xf32>
    %191 = arith.addf %184, %190 : vector<10x1xf32>
    %192 = arith.maximumf %114, %191 : vector<10x1xf32>
    %193 = arith.subf %114, %192 : vector<10x1xf32>
    %194 = math.exp %193 : vector<10x1xf32>
    %195 = arith.subf %191, %192 : vector<10x1xf32>
    %196 = math.exp %195 : vector<10x1xf32>
    %197 = arith.addf %194, %196 : vector<10x1xf32>
    %198 = math.log %197 : vector<10x1xf32>
    %199 = arith.addf %192, %198 : vector<10x1xf32>
    %c0_126 = arith.constant 0 : index
    %c0_127 = arith.constant 0 : index
    %c0_128 = arith.constant 0 : index
    %200 = vector.load %arg9[%c0_126, %c0_127, %c0_128] : memref<9x8x16xf32, #tpu.memory_space<vmem>>, vector<1x8x16xf32>
    %201 = vector.shape_cast %200 : vector<1x8x16xf32> to vector<8x16xf32>
    %cst_129 = arith.constant dense<0.000000e+00> : vector<8x256xf32>
    %202 = tpu.matmul %201, %167, %cst_129 {dimension_numbers = #tpu.dot_dimension_numbers<[1], [0], [0], [1], [0, 0, 1, 1], [], []>} : vector<8x16xf32>, vector<16x256xf32>, vector<8x256xf32> -> vector<8x256xf32>
    %c255_i32_130 = arith.constant 255 : i32
    %203 = tpu.dynamic_rotate %167 by %c255_i32_130 dim 1 : vector<16x256xf32>, i32 -> vector<16x256xf32>
    %c1_131 = arith.constant 1 : index
    %c0_132 = arith.constant 0 : index
    %c0_133 = arith.constant 0 : index
    %204 = vector.load %arg9[%c1_131, %c0_132, %c0_133] : memref<9x8x16xf32, #tpu.memory_space<vmem>>, vector<1x8x16xf32>
    %205 = vector.shape_cast %204 : vector<1x8x16xf32> to vector<8x16xf32>
    %cst_134 = arith.constant dense<0.000000e+00> : vector<8x256xf32>
    %206 = tpu.matmul %205, %203, %cst_134 {dimension_numbers = #tpu.dot_dimension_numbers<[1], [0], [0], [1], [0, 0, 1, 1], [], []>} : vector<8x16xf32>, vector<16x256xf32>, vector<8x256xf32> -> vector<8x256xf32>
    %207 = arith.addf %202, %206 : vector<8x256xf32>
    %c254_i32_135 = arith.constant 254 : i32
    %208 = tpu.dynamic_rotate %167 by %c254_i32_135 dim 1 : vector<16x256xf32>, i32 -> vector<16x256xf32>
    %c2_136 = arith.constant 2 : index
    %c0_137 = arith.constant 0 : index
    %c0_138 = arith.constant 0 : index
    %209 = vector.load %arg9[%c2_136, %c0_137, %c0_138] : memref<9x8x16xf32, #tpu.memory_space<vmem>>, vector<1x8x16xf32>
    %210 = vector.shape_cast %209 : vector<1x8x16xf32> to vector<8x16xf32>
    %cst_139 = arith.constant dense<0.000000e+00> : vector<8x256xf32>
    %211 = tpu.matmul %210, %208, %cst_139 {dimension_numbers = #tpu.dot_dimension_numbers<[1], [0], [0], [1], [0, 0, 1, 1], [], []>} : vector<8x16xf32>, vector<16x256xf32>, vector<8x256xf32> -> vector<8x256xf32>
    %212 = arith.addf %207, %211 : vector<8x256xf32>
    %c240_i32_140 = arith.constant 240 : i32
    %213 = tpu.dynamic_rotate %167 by %c240_i32_140 dim 1 : vector<16x256xf32>, i32 -> vector<16x256xf32>
    %c3_141 = arith.constant 3 : index
    %c0_142 = arith.constant 0 : index
    %c0_143 = arith.constant 0 : index
    %214 = vector.load %arg9[%c3_141, %c0_142, %c0_143] : memref<9x8x16xf32, #tpu.memory_space<vmem>>, vector<1x8x16xf32>
    %215 = vector.shape_cast %214 : vector<1x8x16xf32> to vector<8x16xf32>
    %cst_144 = arith.constant dense<0.000000e+00> : vector<8x256xf32>
    %216 = tpu.matmul %215, %213, %cst_144 {dimension_numbers = #tpu.dot_dimension_numbers<[1], [0], [0], [1], [0, 0, 1, 1], [], []>} : vector<8x16xf32>, vector<16x256xf32>, vector<8x256xf32> -> vector<8x256xf32>
    %217 = arith.addf %212, %216 : vector<8x256xf32>
    %c239_i32_145 = arith.constant 239 : i32
    %218 = tpu.dynamic_rotate %167 by %c239_i32_145 dim 1 : vector<16x256xf32>, i32 -> vector<16x256xf32>
    %c4_146 = arith.constant 4 : index
    %c0_147 = arith.constant 0 : index
    %c0_148 = arith.constant 0 : index
    %219 = vector.load %arg9[%c4_146, %c0_147, %c0_148] : memref<9x8x16xf32, #tpu.memory_space<vmem>>, vector<1x8x16xf32>
    %220 = vector.shape_cast %219 : vector<1x8x16xf32> to vector<8x16xf32>
    %cst_149 = arith.constant dense<0.000000e+00> : vector<8x256xf32>
    %221 = tpu.matmul %220, %218, %cst_149 {dimension_numbers = #tpu.dot_dimension_numbers<[1], [0], [0], [1], [0, 0, 1, 1], [], []>} : vector<8x16xf32>, vector<16x256xf32>, vector<8x256xf32> -> vector<8x256xf32>
    %222 = arith.addf %217, %221 : vector<8x256xf32>
    %c238_i32_150 = arith.constant 238 : i32
    %223 = tpu.dynamic_rotate %167 by %c238_i32_150 dim 1 : vector<16x256xf32>, i32 -> vector<16x256xf32>
    %c5_151 = arith.constant 5 : index
    %c0_152 = arith.constant 0 : index
    %c0_153 = arith.constant 0 : index
    %224 = vector.load %arg9[%c5_151, %c0_152, %c0_153] : memref<9x8x16xf32, #tpu.memory_space<vmem>>, vector<1x8x16xf32>
    %225 = vector.shape_cast %224 : vector<1x8x16xf32> to vector<8x16xf32>
    %cst_154 = arith.constant dense<0.000000e+00> : vector<8x256xf32>
    %226 = tpu.matmul %225, %223, %cst_154 {dimension_numbers = #tpu.dot_dimension_numbers<[1], [0], [0], [1], [0, 0, 1, 1], [], []>} : vector<8x16xf32>, vector<16x256xf32>, vector<8x256xf32> -> vector<8x256xf32>
    %227 = arith.addf %222, %226 : vector<8x256xf32>
    %c224_i32_155 = arith.constant 224 : i32
    %228 = tpu.dynamic_rotate %167 by %c224_i32_155 dim 1 : vector<16x256xf32>, i32 -> vector<16x256xf32>
    %c6_156 = arith.constant 6 : index
    %c0_157 = arith.constant 0 : index
    %c0_158 = arith.constant 0 : index
    %229 = vector.load %arg9[%c6_156, %c0_157, %c0_158] : memref<9x8x16xf32, #tpu.memory_space<vmem>>, vector<1x8x16xf32>
    %230 = vector.shape_cast %229 : vector<1x8x16xf32> to vector<8x16xf32>
    %cst_159 = arith.constant dense<0.000000e+00> : vector<8x256xf32>
    %231 = tpu.matmul %230, %228, %cst_159 {dimension_numbers = #tpu.dot_dimension_numbers<[1], [0], [0], [1], [0, 0, 1, 1], [], []>} : vector<8x16xf32>, vector<16x256xf32>, vector<8x256xf32> -> vector<8x256xf32>
    %232 = arith.addf %227, %231 : vector<8x256xf32>
    %c223_i32_160 = arith.constant 223 : i32
    %233 = tpu.dynamic_rotate %167 by %c223_i32_160 dim 1 : vector<16x256xf32>, i32 -> vector<16x256xf32>
    %c7_161 = arith.constant 7 : index
    %c0_162 = arith.constant 0 : index
    %c0_163 = arith.constant 0 : index
    %234 = vector.load %arg9[%c7_161, %c0_162, %c0_163] : memref<9x8x16xf32, #tpu.memory_space<vmem>>, vector<1x8x16xf32>
    %235 = vector.shape_cast %234 : vector<1x8x16xf32> to vector<8x16xf32>
    %cst_164 = arith.constant dense<0.000000e+00> : vector<8x256xf32>
    %236 = tpu.matmul %235, %233, %cst_164 {dimension_numbers = #tpu.dot_dimension_numbers<[1], [0], [0], [1], [0, 0, 1, 1], [], []>} : vector<8x16xf32>, vector<16x256xf32>, vector<8x256xf32> -> vector<8x256xf32>
    %237 = arith.addf %232, %236 : vector<8x256xf32>
    %c222_i32_165 = arith.constant 222 : i32
    %238 = tpu.dynamic_rotate %167 by %c222_i32_165 dim 1 : vector<16x256xf32>, i32 -> vector<16x256xf32>
    %c8_166 = arith.constant 8 : index
    %c0_167 = arith.constant 0 : index
    %c0_168 = arith.constant 0 : index
    %239 = vector.load %arg9[%c8_166, %c0_167, %c0_168] : memref<9x8x16xf32, #tpu.memory_space<vmem>>, vector<1x8x16xf32>
    %240 = vector.shape_cast %239 : vector<1x8x16xf32> to vector<8x16xf32>
    %cst_169 = arith.constant dense<0.000000e+00> : vector<8x256xf32>
    %241 = tpu.matmul %240, %238, %cst_169 {dimension_numbers = #tpu.dot_dimension_numbers<[1], [0], [0], [1], [0, 0, 1, 1], [], []>} : vector<8x16xf32>, vector<16x256xf32>, vector<8x256xf32> -> vector<8x256xf32>
    %242 = arith.addf %237, %241 : vector<8x256xf32>
    %c0_170 = arith.constant 0 : index
    %c0_171 = arith.constant 0 : index
    %243 = vector.load %arg10[%c0_170, %c0_171] : memref<8x1xf32, #tpu.memory_space<vmem>>, vector<8x1xf32>
    %244 = vector.broadcast %243 : vector<8x1xf32> to vector<8x256xf32>
    %245 = arith.addf %242, %244 : vector<8x256xf32>
    %cst_172 = arith.constant 0.000000e+00 : f32
    %246 = vector.broadcast %cst_172 : f32 to vector<8x256xf32>
    %247 = arith.maximumf %245, %246 : vector<8x256xf32>
    %cst_173 = arith.constant 0.000000e+00 : f32
    %248 = vector.broadcast %cst_173 : f32 to vector<8x256xf32>
    %249 = arith.subf %248, %245 : vector<8x256xf32>
    %cst_174 = arith.constant 0.000000e+00 : f32
    %250 = vector.broadcast %cst_174 : f32 to vector<8x256xf32>
    %251 = arith.maximumf %249, %250 : vector<8x256xf32>
    %252 = tpu.concatenate %247, %251 in 0 : vector<8x256xf32>, vector<8x256xf32> -> vector<16x256xf32>
    %c0_175 = arith.constant 0 : index
    %c0_176 = arith.constant 0 : index
    %253 = vector.load %arg17[%c0_175, %c0_176] : memref<10x16xf32, #tpu.memory_space<vmem>>, vector<10x16xf32>
    %cst_177 = arith.constant dense<0.000000e+00> : vector<10x256xf32>
    %254 = tpu.matmul %253, %252, %cst_177 {dimension_numbers = #tpu.dot_dimension_numbers<[1], [0], [0], [1], [0, 0, 1, 1], [], []>} : vector<10x16xf32>, vector<16x256xf32>, vector<10x256xf32> -> vector<10x256xf32>
    %c0_178 = arith.constant 0 : index
    %c0_179 = arith.constant 0 : index
    %255 = vector.load %arg18[%c0_178, %c0_179] : memref<10x1xf32, #tpu.memory_space<vmem>>, vector<10x1xf32>
    %256 = vector.broadcast %255 : vector<10x1xf32> to vector<10x256xf32>
    %257 = arith.addf %254, %256 : vector<10x256xf32>
    %cst_180 = arith.constant 1.000000e+00 : f32
    %258 = vector.broadcast %cst_180 : f32 to vector<10x256xf32>
    %259 = arith.mulf %257, %258 : vector<10x256xf32>
    %c3_181 = arith.constant 3 : index
    %c0_182 = arith.constant 0 : index
    %c0_183 = arith.constant 0 : index
    %260 = vector.load %arg4[%c3_181, %c0_182, %c0_183] : memref<4x1x256xf32, #tpu.memory_space<vmem>>, vector<1x1x256xf32>
    %261 = vector.shape_cast %260 : vector<1x1x256xf32> to vector<1x256xf32>
    %cst_184 = arith.constant 0.000000e+00 : f32
    %262 = vector.broadcast %cst_184 : f32 to vector<1x256xf32>
    %263 = arith.cmpf ogt, %261, %262 : vector<1x256xf32>
    %cst_185 = arith.constant 0xFF800000 : f32
    %264 = vector.shape_cast %263 : vector<1x256xi1> to vector<1x256xi1>
    %265 = vector.broadcast %264 : vector<1x256xi1> to vector<10x256xi1>
    %266 = vector.broadcast %cst_185 : f32 to vector<10x256xf32>
    %267 = arith.select %265, %259, %266 : vector<10x256xi1>, vector<10x256xf32>
    %cst_186 = arith.constant dense<0xFF800000> : vector<10xf32>
    %268 = vector.multi_reduction <maximumf>, %267, %cst_186 [1] : vector<10x256xf32> to vector<10xf32>
    %269 = vector.shape_cast %268 : vector<10xf32> to vector<10x1xf32>
    %270 = vector.broadcast %269 : vector<10x1xf32> to vector<10x256xf32>
    %271 = arith.subf %267, %270 : vector<10x256xf32>
    %272 = math.exp %271 : vector<10x256xf32>
    %cst_187 = arith.constant dense<0.000000e+00> : vector<10xf32>
    %273 = vector.multi_reduction <add>, %272, %cst_187 [1] : vector<10x256xf32> to vector<10xf32>
    %274 = vector.shape_cast %273 : vector<10xf32> to vector<10x1xf32>
    %275 = math.log %274 : vector<10x1xf32>
    %276 = arith.addf %269, %275 : vector<10x1xf32>
    %277 = arith.maximumf %199, %276 : vector<10x1xf32>
    %278 = arith.subf %199, %277 : vector<10x1xf32>
    %279 = math.exp %278 : vector<10x1xf32>
    %280 = arith.subf %276, %277 : vector<10x1xf32>
    %281 = math.exp %280 : vector<10x1xf32>
    %282 = arith.addf %279, %281 : vector<10x1xf32>
    %283 = math.log %282 : vector<10x1xf32>
    %284 = arith.addf %277, %283 : vector<10x1xf32>
    %cst_188 = arith.constant 1.000000e+00 : f32
    %285 = vector.broadcast %cst_188 : f32 to vector<10x1xf32>
    %286 = arith.mulf %284, %285 : vector<10x1xf32>
    %c0_189 = arith.constant 0 : index
    %c0_190 = arith.constant 0 : index
    %c0_191 = arith.constant 0 : index
    %287 = vector.load %arg19[%c0_189, %c0_190, %c0_191] : memref<2x10x1xf32, #tpu.memory_space<vmem>>, vector<1x10x1xf32>
    %288 = vector.shape_cast %287 : vector<1x10x1xf32> to vector<10x1xf32>
    %289 = vector.shape_cast %286 : vector<10x1xf32> to vector<1x10x1xf32>
    tpu.vector_store %arg19[%c0_189, %c0_190, %c0_191], %289 {strides = array<i32>} : memref<2x10x1xf32, #tpu.memory_space<vmem>>, vector<1x10x1xf32>,
    %c1_192 = arith.constant 1 : index
    %c0_193 = arith.constant 0 : index
    %c0_194 = arith.constant 0 : index
    %290 = vector.load %arg2[%c1_192, %c0_193, %c0_194] : memref<2x3x256xf32, #tpu.memory_space<vmem>>, vector<1x3x256xf32>
    %291 = vector.shape_cast %290 : vector<1x3x256xf32> to vector<3x256xf32>
    %c1_195 = arith.constant 1 : index
    %c0_196 = arith.constant 0 : index
    %c0_197 = arith.constant 0 : index
    %292 = vector.load %arg1[%c1_195, %c0_196, %c0_197] : memref<2x3x256xf32, #tpu.memory_space<vmem>>, vector<1x3x256xf32>
    %293 = vector.shape_cast %292 : vector<1x3x256xf32> to vector<3x256xf32>
    %294 = vector.broadcast %0 : vector<3x1xf32> to vector<3x256xf32>
    %295 = arith.mulf %294, %291 : vector<3x256xf32>
    %296 = arith.addf %293, %295 : vector<3x256xf32>
    %cst_198 = arith.constant -5.000000e-01 : f32
    %297 = vector.broadcast %cst_198 : f32 to vector<3x256xf32>
    %298 = arith.mulf %297, %291 : vector<3x256xf32>
    %299 = arith.mulf %298, %291 : vector<3x256xf32>
    %c1_199 = arith.constant 1 : index
    %c0_200 = arith.constant 0 : index
    %c0_201 = arith.constant 0 : index
    %300 = vector.load %arg20[%c1_199, %c0_200, %c0_201] : memref<2x3x256xf32, #tpu.memory_space<vmem>>, vector<1x3x256xf32>
    %301 = vector.shape_cast %300 : vector<1x3x256xf32> to vector<3x256xf32>
    %302 = vector.shape_cast %299 : vector<3x256xf32> to vector<1x3x256xf32>
    tpu.vector_store %arg20[%c1_199, %c0_200, %c0_201], %302 {strides = array<i32>} : memref<2x3x256xf32, #tpu.memory_space<vmem>>, vector<1x3x256xf32>,
    %c0_202 = arith.constant 0 : index
    %c0_203 = arith.constant 0 : index
    %303 = vector.load %arg11[%c0_202, %c0_203] : memref<10x3xf32, #tpu.memory_space<vmem>>, vector<10x3xf32>
    %cst_204 = arith.constant dense<0.000000e+00> : vector<10x256xf32>
    %304 = tpu.matmul %303, %296, %cst_204 {dimension_numbers = #tpu.dot_dimension_numbers<[1], [0], [0], [1], [0, 0, 1, 1], [], []>} : vector<10x3xf32>, vector<3x256xf32>, vector<10x256xf32> -> vector<10x256xf32>
    %c0_205 = arith.constant 0 : index
    %c0_206 = arith.constant 0 : index
    %305 = vector.load %arg12[%c0_205, %c0_206] : memref<10x1xf32, #tpu.memory_space<vmem>>, vector<10x1xf32>
    %306 = vector.broadcast %305 : vector<10x1xf32> to vector<10x256xf32>
    %307 = arith.addf %304, %306 : vector<10x256xf32>
    %cst_207 = arith.constant 1.000000e+00 : f32
    %308 = vector.broadcast %cst_207 : f32 to vector<10x256xf32>
    %309 = arith.mulf %307, %308 : vector<10x256xf32>
    %cst_208 = arith.constant dense<0xFF800000> : vector<10xf32>
    %310 = vector.multi_reduction <maximumf>, %309, %cst_208 [1] : vector<10x256xf32> to vector<10xf32>
    %311 = vector.shape_cast %310 : vector<10xf32> to vector<10x1xf32>
    %312 = vector.broadcast %311 : vector<10x1xf32> to vector<10x256xf32>
    %313 = arith.subf %309, %312 : vector<10x256xf32>
    %314 = math.exp %313 : vector<10x256xf32>
    %cst_209 = arith.constant dense<0.000000e+00> : vector<10xf32>
    %315 = vector.multi_reduction <add>, %314, %cst_209 [1] : vector<10x256xf32> to vector<10xf32>
    %316 = vector.shape_cast %315 : vector<10xf32> to vector<10x1xf32>
    %317 = math.log %316 : vector<10x1xf32>
    %318 = arith.addf %311, %317 : vector<10x1xf32>
    %c0_210 = arith.constant 0 : index
    %c0_211 = arith.constant 0 : index
    %c0_212 = arith.constant 0 : index
    %319 = vector.load %arg5[%c0_210, %c0_211, %c0_212] : memref<9x8x3xf32, #tpu.memory_space<vmem>>, vector<1x8x3xf32>
    %320 = vector.shape_cast %319 : vector<1x8x3xf32> to vector<8x3xf32>
    %cst_213 = arith.constant dense<0.000000e+00> : vector<8x256xf32>
    %321 = tpu.matmul %320, %296, %cst_213 {dimension_numbers = #tpu.dot_dimension_numbers<[1], [0], [0], [1], [0, 0, 1, 1], [], []>} : vector<8x3xf32>, vector<3x256xf32>, vector<8x256xf32> -> vector<8x256xf32>
    %c255_i32_214 = arith.constant 255 : i32
    %322 = tpu.dynamic_rotate %296 by %c255_i32_214 dim 1 : vector<3x256xf32>, i32 -> vector<3x256xf32>
    %c1_215 = arith.constant 1 : index
    %c0_216 = arith.constant 0 : index
    %c0_217 = arith.constant 0 : index
    %323 = vector.load %arg5[%c1_215, %c0_216, %c0_217] : memref<9x8x3xf32, #tpu.memory_space<vmem>>, vector<1x8x3xf32>
    %324 = vector.shape_cast %323 : vector<1x8x3xf32> to vector<8x3xf32>
    %cst_218 = arith.constant dense<0.000000e+00> : vector<8x256xf32>
    %325 = tpu.matmul %324, %322, %cst_218 {dimension_numbers = #tpu.dot_dimension_numbers<[1], [0], [0], [1], [0, 0, 1, 1], [], []>} : vector<8x3xf32>, vector<3x256xf32>, vector<8x256xf32> -> vector<8x256xf32>
    %326 = arith.addf %321, %325 : vector<8x256xf32>
    %c254_i32_219 = arith.constant 254 : i32
    %327 = tpu.dynamic_rotate %296 by %c254_i32_219 dim 1 : vector<3x256xf32>, i32 -> vector<3x256xf32>
    %c2_220 = arith.constant 2 : index
    %c0_221 = arith.constant 0 : index
    %c0_222 = arith.constant 0 : index
    %328 = vector.load %arg5[%c2_220, %c0_221, %c0_222] : memref<9x8x3xf32, #tpu.memory_space<vmem>>, vector<1x8x3xf32>
    %329 = vector.shape_cast %328 : vector<1x8x3xf32> to vector<8x3xf32>
    %cst_223 = arith.constant dense<0.000000e+00> : vector<8x256xf32>
    %330 = tpu.matmul %329, %327, %cst_223 {dimension_numbers = #tpu.dot_dimension_numbers<[1], [0], [0], [1], [0, 0, 1, 1], [], []>} : vector<8x3xf32>, vector<3x256xf32>, vector<8x256xf32> -> vector<8x256xf32>
    %331 = arith.addf %326, %330 : vector<8x256xf32>
    %c240_i32_224 = arith.constant 240 : i32
    %332 = tpu.dynamic_rotate %296 by %c240_i32_224 dim 1 : vector<3x256xf32>, i32 -> vector<3x256xf32>
    %c3_225 = arith.constant 3 : index
    %c0_226 = arith.constant 0 : index
    %c0_227 = arith.constant 0 : index
    %333 = vector.load %arg5[%c3_225, %c0_226, %c0_227] : memref<9x8x3xf32, #tpu.memory_space<vmem>>, vector<1x8x3xf32>
    %334 = vector.shape_cast %333 : vector<1x8x3xf32> to vector<8x3xf32>
    %cst_228 = arith.constant dense<0.000000e+00> : vector<8x256xf32>
    %335 = tpu.matmul %334, %332, %cst_228 {dimension_numbers = #tpu.dot_dimension_numbers<[1], [0], [0], [1], [0, 0, 1, 1], [], []>} : vector<8x3xf32>, vector<3x256xf32>, vector<8x256xf32> -> vector<8x256xf32>
    %336 = arith.addf %331, %335 : vector<8x256xf32>
    %c239_i32_229 = arith.constant 239 : i32
    %337 = tpu.dynamic_rotate %296 by %c239_i32_229 dim 1 : vector<3x256xf32>, i32 -> vector<3x256xf32>
    %c4_230 = arith.constant 4 : index
    %c0_231 = arith.constant 0 : index
    %c0_232 = arith.constant 0 : index
    %338 = vector.load %arg5[%c4_230, %c0_231, %c0_232] : memref<9x8x3xf32, #tpu.memory_space<vmem>>, vector<1x8x3xf32>
    %339 = vector.shape_cast %338 : vector<1x8x3xf32> to vector<8x3xf32>
    %cst_233 = arith.constant dense<0.000000e+00> : vector<8x256xf32>
    %340 = tpu.matmul %339, %337, %cst_233 {dimension_numbers = #tpu.dot_dimension_numbers<[1], [0], [0], [1], [0, 0, 1, 1], [], []>} : vector<8x3xf32>, vector<3x256xf32>, vector<8x256xf32> -> vector<8x256xf32>
    %341 = arith.addf %336, %340 : vector<8x256xf32>
    %c238_i32_234 = arith.constant 238 : i32
    %342 = tpu.dynamic_rotate %296 by %c238_i32_234 dim 1 : vector<3x256xf32>, i32 -> vector<3x256xf32>
    %c5_235 = arith.constant 5 : index
    %c0_236 = arith.constant 0 : index
    %c0_237 = arith.constant 0 : index
    %343 = vector.load %arg5[%c5_235, %c0_236, %c0_237] : memref<9x8x3xf32, #tpu.memory_space<vmem>>, vector<1x8x3xf32>
    %344 = vector.shape_cast %343 : vector<1x8x3xf32> to vector<8x3xf32>
    %cst_238 = arith.constant dense<0.000000e+00> : vector<8x256xf32>
    %345 = tpu.matmul %344, %342, %cst_238 {dimension_numbers = #tpu.dot_dimension_numbers<[1], [0], [0], [1], [0, 0, 1, 1], [], []>} : vector<8x3xf32>, vector<3x256xf32>, vector<8x256xf32> -> vector<8x256xf32>
    %346 = arith.addf %341, %345 : vector<8x256xf32>
    %c224_i32_239 = arith.constant 224 : i32
    %347 = tpu.dynamic_rotate %296 by %c224_i32_239 dim 1 : vector<3x256xf32>, i32 -> vector<3x256xf32>
    %c6_240 = arith.constant 6 : index
    %c0_241 = arith.constant 0 : index
    %c0_242 = arith.constant 0 : index
    %348 = vector.load %arg5[%c6_240, %c0_241, %c0_242] : memref<9x8x3xf32, #tpu.memory_space<vmem>>, vector<1x8x3xf32>
    %349 = vector.shape_cast %348 : vector<1x8x3xf32> to vector<8x3xf32>
    %cst_243 = arith.constant dense<0.000000e+00> : vector<8x256xf32>
    %350 = tpu.matmul %349, %347, %cst_243 {dimension_numbers = #tpu.dot_dimension_numbers<[1], [0], [0], [1], [0, 0, 1, 1], [], []>} : vector<8x3xf32>, vector<3x256xf32>, vector<8x256xf32> -> vector<8x256xf32>
    %351 = arith.addf %346, %350 : vector<8x256xf32>
    %c223_i32_244 = arith.constant 223 : i32
    %352 = tpu.dynamic_rotate %296 by %c223_i32_244 dim 1 : vector<3x256xf32>, i32 -> vector<3x256xf32>
    %c7_245 = arith.constant 7 : index
    %c0_246 = arith.constant 0 : index
    %c0_247 = arith.constant 0 : index
    %353 = vector.load %arg5[%c7_245, %c0_246, %c0_247] : memref<9x8x3xf32, #tpu.memory_space<vmem>>, vector<1x8x3xf32>
    %354 = vector.shape_cast %353 : vector<1x8x3xf32> to vector<8x3xf32>
    %cst_248 = arith.constant dense<0.000000e+00> : vector<8x256xf32>
    %355 = tpu.matmul %354, %352, %cst_248 {dimension_numbers = #tpu.dot_dimension_numbers<[1], [0], [0], [1], [0, 0, 1, 1], [], []>} : vector<8x3xf32>, vector<3x256xf32>, vector<8x256xf32> -> vector<8x256xf32>
    %356 = arith.addf %351, %355 : vector<8x256xf32>
    %c222_i32_249 = arith.constant 222 : i32
    %357 = tpu.dynamic_rotate %296 by %c222_i32_249 dim 1 : vector<3x256xf32>, i32 -> vector<3x256xf32>
    %c8_250 = arith.constant 8 : index
    %c0_251 = arith.constant 0 : index
    %c0_252 = arith.constant 0 : index
    %358 = vector.load %arg5[%c8_250, %c0_251, %c0_252] : memref<9x8x3xf32, #tpu.memory_space<vmem>>, vector<1x8x3xf32>
    %359 = vector.shape_cast %358 : vector<1x8x3xf32> to vector<8x3xf32>
    %cst_253 = arith.constant dense<0.000000e+00> : vector<8x256xf32>
    %360 = tpu.matmul %359, %357, %cst_253 {dimension_numbers = #tpu.dot_dimension_numbers<[1], [0], [0], [1], [0, 0, 1, 1], [], []>} : vector<8x3xf32>, vector<3x256xf32>, vector<8x256xf32> -> vector<8x256xf32>
    %361 = arith.addf %356, %360 : vector<8x256xf32>
    %c0_254 = arith.constant 0 : index
    %c0_255 = arith.constant 0 : index
    %362 = vector.load %arg6[%c0_254, %c0_255] : memref<8x1xf32, #tpu.memory_space<vmem>>, vector<8x1xf32>
    %363 = vector.broadcast %362 : vector<8x1xf32> to vector<8x256xf32>
    %364 = arith.addf %361, %363 : vector<8x256xf32>
    %cst_256 = arith.constant 0.000000e+00 : f32
    %365 = vector.broadcast %cst_256 : f32 to vector<8x256xf32>
    %366 = arith.maximumf %364, %365 : vector<8x256xf32>
    %cst_257 = arith.constant 0.000000e+00 : f32
    %367 = vector.broadcast %cst_257 : f32 to vector<8x256xf32>
    %368 = arith.subf %367, %364 : vector<8x256xf32>
    %cst_258 = arith.constant 0.000000e+00 : f32
    %369 = vector.broadcast %cst_258 : f32 to vector<8x256xf32>
    %370 = arith.maximumf %368, %369 : vector<8x256xf32>
    %371 = tpu.concatenate %366, %370 in 0 : vector<8x256xf32>, vector<8x256xf32> -> vector<16x256xf32>
    %c0_259 = arith.constant 0 : index
    %c0_260 = arith.constant 0 : index
    %372 = vector.load %arg13[%c0_259, %c0_260] : memref<10x16xf32, #tpu.memory_space<vmem>>, vector<10x16xf32>
    %cst_261 = arith.constant dense<0.000000e+00> : vector<10x256xf32>
    %373 = tpu.matmul %372, %371, %cst_261 {dimension_numbers = #tpu.dot_dimension_numbers<[1], [0], [0], [1], [0, 0, 1, 1], [], []>} : vector<10x16xf32>, vector<16x256xf32>, vector<10x256xf32> -> vector<10x256xf32>
    %c0_262 = arith.constant 0 : index
    %c0_263 = arith.constant 0 : index
    %374 = vector.load %arg14[%c0_262, %c0_263] : memref<10x1xf32, #tpu.memory_space<vmem>>, vector<10x1xf32>
    %375 = vector.broadcast %374 : vector<10x1xf32> to vector<10x256xf32>
    %376 = arith.addf %373, %375 : vector<10x256xf32>
    %cst_264 = arith.constant 1.000000e+00 : f32
    %377 = vector.broadcast %cst_264 : f32 to vector<10x256xf32>
    %378 = arith.mulf %376, %377 : vector<10x256xf32>
    %c1_265 = arith.constant 1 : index
    %c0_266 = arith.constant 0 : index
    %c0_267 = arith.constant 0 : index
    %379 = vector.load %arg4[%c1_265, %c0_266, %c0_267] : memref<4x1x256xf32, #tpu.memory_space<vmem>>, vector<1x1x256xf32>
    %380 = vector.shape_cast %379 : vector<1x1x256xf32> to vector<1x256xf32>
    %cst_268 = arith.constant 0.000000e+00 : f32
    %381 = vector.broadcast %cst_268 : f32 to vector<1x256xf32>
    %382 = arith.cmpf ogt, %380, %381 : vector<1x256xf32>
    %cst_269 = arith.constant 0xFF800000 : f32
    %383 = vector.shape_cast %382 : vector<1x256xi1> to vector<1x256xi1>
    %384 = vector.broadcast %383 : vector<1x256xi1> to vector<10x256xi1>
    %385 = vector.broadcast %cst_269 : f32 to vector<10x256xf32>
    %386 = arith.select %384, %378, %385 : vector<10x256xi1>, vector<10x256xf32>
    %cst_270 = arith.constant dense<0xFF800000> : vector<10xf32>
    %387 = vector.multi_reduction <maximumf>, %386, %cst_270 [1] : vector<10x256xf32> to vector<10xf32>
    %388 = vector.shape_cast %387 : vector<10xf32> to vector<10x1xf32>
    %389 = vector.broadcast %388 : vector<10x1xf32> to vector<10x256xf32>
    %390 = arith.subf %386, %389 : vector<10x256xf32>
    %391 = math.exp %390 : vector<10x256xf32>
    %cst_271 = arith.constant dense<0.000000e+00> : vector<10xf32>
    %392 = vector.multi_reduction <add>, %391, %cst_271 [1] : vector<10x256xf32> to vector<10xf32>
    %393 = vector.shape_cast %392 : vector<10xf32> to vector<10x1xf32>
    %394 = math.log %393 : vector<10x1xf32>
    %395 = arith.addf %388, %394 : vector<10x1xf32>
    %396 = arith.maximumf %318, %395 : vector<10x1xf32>
    %397 = arith.subf %318, %396 : vector<10x1xf32>
    %398 = math.exp %397 : vector<10x1xf32>
    %399 = arith.subf %395, %396 : vector<10x1xf32>
    %400 = math.exp %399 : vector<10x1xf32>
    %401 = arith.addf %398, %400 : vector<10x1xf32>
    %402 = math.log %401 : vector<10x1xf32>
    %403 = arith.addf %396, %402 : vector<10x1xf32>
    %c0_272 = arith.constant 0 : index
    %c0_273 = arith.constant 0 : index
    %c0_274 = arith.constant 0 : index
    %404 = vector.load %arg7[%c0_272, %c0_273, %c0_274] : memref<9x8x16xf32, #tpu.memory_space<vmem>>, vector<1x8x16xf32>
    %405 = vector.shape_cast %404 : vector<1x8x16xf32> to vector<8x16xf32>
    %cst_275 = arith.constant dense<0.000000e+00> : vector<8x256xf32>
    %406 = tpu.matmul %405, %371, %cst_275 {dimension_numbers = #tpu.dot_dimension_numbers<[1], [0], [0], [1], [0, 0, 1, 1], [], []>} : vector<8x16xf32>, vector<16x256xf32>, vector<8x256xf32> -> vector<8x256xf32>
    %c255_i32_276 = arith.constant 255 : i32
    %407 = tpu.dynamic_rotate %371 by %c255_i32_276 dim 1 : vector<16x256xf32>, i32 -> vector<16x256xf32>
    %c1_277 = arith.constant 1 : index
    %c0_278 = arith.constant 0 : index
    %c0_279 = arith.constant 0 : index
    %408 = vector.load %arg7[%c1_277, %c0_278, %c0_279] : memref<9x8x16xf32, #tpu.memory_space<vmem>>, vector<1x8x16xf32>
    %409 = vector.shape_cast %408 : vector<1x8x16xf32> to vector<8x16xf32>
    %cst_280 = arith.constant dense<0.000000e+00> : vector<8x256xf32>
    %410 = tpu.matmul %409, %407, %cst_280 {dimension_numbers = #tpu.dot_dimension_numbers<[1], [0], [0], [1], [0, 0, 1, 1], [], []>} : vector<8x16xf32>, vector<16x256xf32>, vector<8x256xf32> -> vector<8x256xf32>
    %411 = arith.addf %406, %410 : vector<8x256xf32>
    %c254_i32_281 = arith.constant 254 : i32
    %412 = tpu.dynamic_rotate %371 by %c254_i32_281 dim 1 : vector<16x256xf32>, i32 -> vector<16x256xf32>
    %c2_282 = arith.constant 2 : index
    %c0_283 = arith.constant 0 : index
    %c0_284 = arith.constant 0 : index
    %413 = vector.load %arg7[%c2_282, %c0_283, %c0_284] : memref<9x8x16xf32, #tpu.memory_space<vmem>>, vector<1x8x16xf32>
    %414 = vector.shape_cast %413 : vector<1x8x16xf32> to vector<8x16xf32>
    %cst_285 = arith.constant dense<0.000000e+00> : vector<8x256xf32>
    %415 = tpu.matmul %414, %412, %cst_285 {dimension_numbers = #tpu.dot_dimension_numbers<[1], [0], [0], [1], [0, 0, 1, 1], [], []>} : vector<8x16xf32>, vector<16x256xf32>, vector<8x256xf32> -> vector<8x256xf32>
    %416 = arith.addf %411, %415 : vector<8x256xf32>
    %c240_i32_286 = arith.constant 240 : i32
    %417 = tpu.dynamic_rotate %371 by %c240_i32_286 dim 1 : vector<16x256xf32>, i32 -> vector<16x256xf32>
    %c3_287 = arith.constant 3 : index
    %c0_288 = arith.constant 0 : index
    %c0_289 = arith.constant 0 : index
    %418 = vector.load %arg7[%c3_287, %c0_288, %c0_289] : memref<9x8x16xf32, #tpu.memory_space<vmem>>, vector<1x8x16xf32>
    %419 = vector.shape_cast %418 : vector<1x8x16xf32> to vector<8x16xf32>
    %cst_290 = arith.constant dense<0.000000e+00> : vector<8x256xf32>
    %420 = tpu.matmul %419, %417, %cst_290 {dimension_numbers = #tpu.dot_dimension_numbers<[1], [0], [0], [1], [0, 0, 1, 1], [], []>} : vector<8x16xf32>, vector<16x256xf32>, vector<8x256xf32> -> vector<8x256xf32>
    %421 = arith.addf %416, %420 : vector<8x256xf32>
    %c239_i32_291 = arith.constant 239 : i32
    %422 = tpu.dynamic_rotate %371 by %c239_i32_291 dim 1 : vector<16x256xf32>, i32 -> vector<16x256xf32>
    %c4_292 = arith.constant 4 : index
    %c0_293 = arith.constant 0 : index
    %c0_294 = arith.constant 0 : index
    %423 = vector.load %arg7[%c4_292, %c0_293, %c0_294] : memref<9x8x16xf32, #tpu.memory_space<vmem>>, vector<1x8x16xf32>
    %424 = vector.shape_cast %423 : vector<1x8x16xf32> to vector<8x16xf32>
    %cst_295 = arith.constant dense<0.000000e+00> : vector<8x256xf32>
    %425 = tpu.matmul %424, %422, %cst_295 {dimension_numbers = #tpu.dot_dimension_numbers<[1], [0], [0], [1], [0, 0, 1, 1], [], []>} : vector<8x16xf32>, vector<16x256xf32>, vector<8x256xf32> -> vector<8x256xf32>
    %426 = arith.addf %421, %425 : vector<8x256xf32>
    %c238_i32_296 = arith.constant 238 : i32
    %427 = tpu.dynamic_rotate %371 by %c238_i32_296 dim 1 : vector<16x256xf32>, i32 -> vector<16x256xf32>
    %c5_297 = arith.constant 5 : index
    %c0_298 = arith.constant 0 : index
    %c0_299 = arith.constant 0 : index
    %428 = vector.load %arg7[%c5_297, %c0_298, %c0_299] : memref<9x8x16xf32, #tpu.memory_space<vmem>>, vector<1x8x16xf32>
    %429 = vector.shape_cast %428 : vector<1x8x16xf32> to vector<8x16xf32>
    %cst_300 = arith.constant dense<0.000000e+00> : vector<8x256xf32>
    %430 = tpu.matmul %429, %427, %cst_300 {dimension_numbers = #tpu.dot_dimension_numbers<[1], [0], [0], [1], [0, 0, 1, 1], [], []>} : vector<8x16xf32>, vector<16x256xf32>, vector<8x256xf32> -> vector<8x256xf32>
    %431 = arith.addf %426, %430 : vector<8x256xf32>
    %c224_i32_301 = arith.constant 224 : i32
    %432 = tpu.dynamic_rotate %371 by %c224_i32_301 dim 1 : vector<16x256xf32>, i32 -> vector<16x256xf32>
    %c6_302 = arith.constant 6 : index
    %c0_303 = arith.constant 0 : index
    %c0_304 = arith.constant 0 : index
    %433 = vector.load %arg7[%c6_302, %c0_303, %c0_304] : memref<9x8x16xf32, #tpu.memory_space<vmem>>, vector<1x8x16xf32>
    %434 = vector.shape_cast %433 : vector<1x8x16xf32> to vector<8x16xf32>
    %cst_305 = arith.constant dense<0.000000e+00> : vector<8x256xf32>
    %435 = tpu.matmul %434, %432, %cst_305 {dimension_numbers = #tpu.dot_dimension_numbers<[1], [0], [0], [1], [0, 0, 1, 1], [], []>} : vector<8x16xf32>, vector<16x256xf32>, vector<8x256xf32> -> vector<8x256xf32>
    %436 = arith.addf %431, %435 : vector<8x256xf32>
    %c223_i32_306 = arith.constant 223 : i32
    %437 = tpu.dynamic_rotate %371 by %c223_i32_306 dim 1 : vector<16x256xf32>, i32 -> vector<16x256xf32>
    %c7_307 = arith.constant 7 : index
    %c0_308 = arith.constant 0 : index
    %c0_309 = arith.constant 0 : index
    %438 = vector.load %arg7[%c7_307, %c0_308, %c0_309] : memref<9x8x16xf32, #tpu.memory_space<vmem>>, vector<1x8x16xf32>
    %439 = vector.shape_cast %438 : vector<1x8x16xf32> to vector<8x16xf32>
    %cst_310 = arith.constant dense<0.000000e+00> : vector<8x256xf32>
    %440 = tpu.matmul %439, %437, %cst_310 {dimension_numbers = #tpu.dot_dimension_numbers<[1], [0], [0], [1], [0, 0, 1, 1], [], []>} : vector<8x16xf32>, vector<16x256xf32>, vector<8x256xf32> -> vector<8x256xf32>
    %441 = arith.addf %436, %440 : vector<8x256xf32>
    %c222_i32_311 = arith.constant 222 : i32
    %442 = tpu.dynamic_rotate %371 by %c222_i32_311 dim 1 : vector<16x256xf32>, i32 -> vector<16x256xf32>
    %c8_312 = arith.constant 8 : index
    %c0_313 = arith.constant 0 : index
    %c0_314 = arith.constant 0 : index
    %443 = vector.load %arg7[%c8_312, %c0_313, %c0_314] : memref<9x8x16xf32, #tpu.memory_space<vmem>>, vector<1x8x16xf32>
    %444 = vector.shape_cast %443 : vector<1x8x16xf32> to vector<8x16xf32>
    %cst_315 = arith.constant dense<0.000000e+00> : vector<8x256xf32>
    %445 = tpu.matmul %444, %442, %cst_315 {dimension_numbers = #tpu.dot_dimension_numbers<[1], [0], [0], [1], [0, 0, 1, 1], [], []>} : vector<8x16xf32>, vector<16x256xf32>, vector<8x256xf32> -> vector<8x256xf32>
    %446 = arith.addf %441, %445 : vector<8x256xf32>
    %c0_316 = arith.constant 0 : index
    %c0_317 = arith.constant 0 : index
    %447 = vector.load %arg8[%c0_316, %c0_317] : memref<8x1xf32, #tpu.memory_space<vmem>>, vector<8x1xf32>
    %448 = vector.broadcast %447 : vector<8x1xf32> to vector<8x256xf32>
    %449 = arith.addf %446, %448 : vector<8x256xf32>
    %cst_318 = arith.constant 0.000000e+00 : f32
    %450 = vector.broadcast %cst_318 : f32 to vector<8x256xf32>
    %451 = arith.maximumf %449, %450 : vector<8x256xf32>
    %cst_319 = arith.constant 0.000000e+00 : f32
    %452 = vector.broadcast %cst_319 : f32 to vector<8x256xf32>
    %453 = arith.subf %452, %449 : vector<8x256xf32>
    %cst_320 = arith.constant 0.000000e+00 : f32
    %454 = vector.broadcast %cst_320 : f32 to vector<8x256xf32>
    %455 = arith.maximumf %453, %454 : vector<8x256xf32>
    %456 = tpu.concatenate %451, %455 in 0 : vector<8x256xf32>, vector<8x256xf32> -> vector<16x256xf32>
    %c0_321 = arith.constant 0 : index
    %c0_322 = arith.constant 0 : index
    %457 = vector.load %arg15[%c0_321, %c0_322] : memref<10x16xf32, #tpu.memory_space<vmem>>, vector<10x16xf32>
    %cst_323 = arith.constant dense<0.000000e+00> : vector<10x256xf32>
    %458 = tpu.matmul %457, %456, %cst_323 {dimension_numbers = #tpu.dot_dimension_numbers<[1], [0], [0], [1], [0, 0, 1, 1], [], []>} : vector<10x16xf32>, vector<16x256xf32>, vector<10x256xf32> -> vector<10x256xf32>
    %c0_324 = arith.constant 0 : index
    %c0_325 = arith.constant 0 : index
    %459 = vector.load %arg16[%c0_324, %c0_325] : memref<10x1xf32, #tpu.memory_space<vmem>>, vector<10x1xf32>
    %460 = vector.broadcast %459 : vector<10x1xf32> to vector<10x256xf32>
    %461 = arith.addf %458, %460 : vector<10x256xf32>
    %cst_326 = arith.constant 1.000000e+00 : f32
    %462 = vector.broadcast %cst_326 : f32 to vector<10x256xf32>
    %463 = arith.mulf %461, %462 : vector<10x256xf32>
    %c2_327 = arith.constant 2 : index
    %c0_328 = arith.constant 0 : index
    %c0_329 = arith.constant 0 : index
    %464 = vector.load %arg4[%c2_327, %c0_328, %c0_329] : memref<4x1x256xf32, #tpu.memory_space<vmem>>, vector<1x1x256xf32>
    %465 = vector.shape_cast %464 : vector<1x1x256xf32> to vector<1x256xf32>
    %cst_330 = arith.constant 0.000000e+00 : f32
    %466 = vector.broadcast %cst_330 : f32 to vector<1x256xf32>
    %467 = arith.cmpf ogt, %465, %466 : vector<1x256xf32>
    %cst_331 = arith.constant 0xFF800000 : f32
    %468 = vector.shape_cast %467 : vector<1x256xi1> to vector<1x256xi1>
    %469 = vector.broadcast %468 : vector<1x256xi1> to vector<10x256xi1>
    %470 = vector.broadcast %cst_331 : f32 to vector<10x256xf32>
    %471 = arith.select %469, %463, %470 : vector<10x256xi1>, vector<10x256xf32>
    %cst_332 = arith.constant dense<0xFF800000> : vector<10xf32>
    %472 = vector.multi_reduction <maximumf>, %471, %cst_332 [1] : vector<10x256xf32> to vector<10xf32>
    %473 = vector.shape_cast %472 : vector<10xf32> to vector<10x1xf32>
    %474 = vector.broadcast %473 : vector<10x1xf32> to vector<10x256xf32>
    %475 = arith.subf %471, %474 : vector<10x256xf32>
    %476 = math.exp %475 : vector<10x256xf32>
    %cst_333 = arith.constant dense<0.000000e+00> : vector<10xf32>
    %477 = vector.multi_reduction <add>, %476, %cst_333 [1] : vector<10x256xf32> to vector<10xf32>
    %478 = vector.shape_cast %477 : vector<10xf32> to vector<10x1xf32>
    %479 = math.log %478 : vector<10x1xf32>
    %480 = arith.addf %473, %479 : vector<10x1xf32>
    %481 = arith.maximumf %403, %480 : vector<10x1xf32>
    %482 = arith.subf %403, %481 : vector<10x1xf32>
    %483 = math.exp %482 : vector<10x1xf32>
    %484 = arith.subf %480, %481 : vector<10x1xf32>
    %485 = math.exp %484 : vector<10x1xf32>
    %486 = arith.addf %483, %485 : vector<10x1xf32>
    %487 = math.log %486 : vector<10x1xf32>
    %488 = arith.addf %481, %487 : vector<10x1xf32>
    %c0_334 = arith.constant 0 : index
    %c0_335 = arith.constant 0 : index
    %c0_336 = arith.constant 0 : index
    %489 = vector.load %arg9[%c0_334, %c0_335, %c0_336] : memref<9x8x16xf32, #tpu.memory_space<vmem>>, vector<1x8x16xf32>
    %490 = vector.shape_cast %489 : vector<1x8x16xf32> to vector<8x16xf32>
    %cst_337 = arith.constant dense<0.000000e+00> : vector<8x256xf32>
    %491 = tpu.matmul %490, %456, %cst_337 {dimension_numbers = #tpu.dot_dimension_numbers<[1], [0], [0], [1], [0, 0, 1, 1], [], []>} : vector<8x16xf32>, vector<16x256xf32>, vector<8x256xf32> -> vector<8x256xf32>
    %c255_i32_338 = arith.constant 255 : i32
    %492 = tpu.dynamic_rotate %456 by %c255_i32_338 dim 1 : vector<16x256xf32>, i32 -> vector<16x256xf32>
    %c1_339 = arith.constant 1 : index
    %c0_340 = arith.constant 0 : index
    %c0_341 = arith.constant 0 : index
    %493 = vector.load %arg9[%c1_339, %c0_340, %c0_341] : memref<9x8x16xf32, #tpu.memory_space<vmem>>, vector<1x8x16xf32>
    %494 = vector.shape_cast %493 : vector<1x8x16xf32> to vector<8x16xf32>
    %cst_342 = arith.constant dense<0.000000e+00> : vector<8x256xf32>
    %495 = tpu.matmul %494, %492, %cst_342 {dimension_numbers = #tpu.dot_dimension_numbers<[1], [0], [0], [1], [0, 0, 1, 1], [], []>} : vector<8x16xf32>, vector<16x256xf32>, vector<8x256xf32> -> vector<8x256xf32>
    %496 = arith.addf %491, %495 : vector<8x256xf32>
    %c254_i32_343 = arith.constant 254 : i32
    %497 = tpu.dynamic_rotate %456 by %c254_i32_343 dim 1 : vector<16x256xf32>, i32 -> vector<16x256xf32>
    %c2_344 = arith.constant 2 : index
    %c0_345 = arith.constant 0 : index
    %c0_346 = arith.constant 0 : index
    %498 = vector.load %arg9[%c2_344, %c0_345, %c0_346] : memref<9x8x16xf32, #tpu.memory_space<vmem>>, vector<1x8x16xf32>
    %499 = vector.shape_cast %498 : vector<1x8x16xf32> to vector<8x16xf32>
    %cst_347 = arith.constant dense<0.000000e+00> : vector<8x256xf32>
    %500 = tpu.matmul %499, %497, %cst_347 {dimension_numbers = #tpu.dot_dimension_numbers<[1], [0], [0], [1], [0, 0, 1, 1], [], []>} : vector<8x16xf32>, vector<16x256xf32>, vector<8x256xf32> -> vector<8x256xf32>
    %501 = arith.addf %496, %500 : vector<8x256xf32>
    %c240_i32_348 = arith.constant 240 : i32
    %502 = tpu.dynamic_rotate %456 by %c240_i32_348 dim 1 : vector<16x256xf32>, i32 -> vector<16x256xf32>
    %c3_349 = arith.constant 3 : index
    %c0_350 = arith.constant 0 : index
    %c0_351 = arith.constant 0 : index
    %503 = vector.load %arg9[%c3_349, %c0_350, %c0_351] : memref<9x8x16xf32, #tpu.memory_space<vmem>>, vector<1x8x16xf32>
    %504 = vector.shape_cast %503 : vector<1x8x16xf32> to vector<8x16xf32>
    %cst_352 = arith.constant dense<0.000000e+00> : vector<8x256xf32>
    %505 = tpu.matmul %504, %502, %cst_352 {dimension_numbers = #tpu.dot_dimension_numbers<[1], [0], [0], [1], [0, 0, 1, 1], [], []>} : vector<8x16xf32>, vector<16x256xf32>, vector<8x256xf32> -> vector<8x256xf32>
    %506 = arith.addf %501, %505 : vector<8x256xf32>
    %c239_i32_353 = arith.constant 239 : i32
    %507 = tpu.dynamic_rotate %456 by %c239_i32_353 dim 1 : vector<16x256xf32>, i32 -> vector<16x256xf32>
    %c4_354 = arith.constant 4 : index
    %c0_355 = arith.constant 0 : index
    %c0_356 = arith.constant 0 : index
    %508 = vector.load %arg9[%c4_354, %c0_355, %c0_356] : memref<9x8x16xf32, #tpu.memory_space<vmem>>, vector<1x8x16xf32>
    %509 = vector.shape_cast %508 : vector<1x8x16xf32> to vector<8x16xf32>
    %cst_357 = arith.constant dense<0.000000e+00> : vector<8x256xf32>
    %510 = tpu.matmul %509, %507, %cst_357 {dimension_numbers = #tpu.dot_dimension_numbers<[1], [0], [0], [1], [0, 0, 1, 1], [], []>} : vector<8x16xf32>, vector<16x256xf32>, vector<8x256xf32> -> vector<8x256xf32>
    %511 = arith.addf %506, %510 : vector<8x256xf32>
    %c238_i32_358 = arith.constant 238 : i32
    %512 = tpu.dynamic_rotate %456 by %c238_i32_358 dim 1 : vector<16x256xf32>, i32 -> vector<16x256xf32>
    %c5_359 = arith.constant 5 : index
    %c0_360 = arith.constant 0 : index
    %c0_361 = arith.constant 0 : index
    %513 = vector.load %arg9[%c5_359, %c0_360, %c0_361] : memref<9x8x16xf32, #tpu.memory_space<vmem>>, vector<1x8x16xf32>
    %514 = vector.shape_cast %513 : vector<1x8x16xf32> to vector<8x16xf32>
    %cst_362 = arith.constant dense<0.000000e+00> : vector<8x256xf32>
    %515 = tpu.matmul %514, %512, %cst_362 {dimension_numbers = #tpu.dot_dimension_numbers<[1], [0], [0], [1], [0, 0, 1, 1], [], []>} : vector<8x16xf32>, vector<16x256xf32>, vector<8x256xf32> -> vector<8x256xf32>
    %516 = arith.addf %511, %515 : vector<8x256xf32>
    %c224_i32_363 = arith.constant 224 : i32
    %517 = tpu.dynamic_rotate %456 by %c224_i32_363 dim 1 : vector<16x256xf32>, i32 -> vector<16x256xf32>
    %c6_364 = arith.constant 6 : index
    %c0_365 = arith.constant 0 : index
    %c0_366 = arith.constant 0 : index
    %518 = vector.load %arg9[%c6_364, %c0_365, %c0_366] : memref<9x8x16xf32, #tpu.memory_space<vmem>>, vector<1x8x16xf32>
    %519 = vector.shape_cast %518 : vector<1x8x16xf32> to vector<8x16xf32>
    %cst_367 = arith.constant dense<0.000000e+00> : vector<8x256xf32>
    %520 = tpu.matmul %519, %517, %cst_367 {dimension_numbers = #tpu.dot_dimension_numbers<[1], [0], [0], [1], [0, 0, 1, 1], [], []>} : vector<8x16xf32>, vector<16x256xf32>, vector<8x256xf32> -> vector<8x256xf32>
    %521 = arith.addf %516, %520 : vector<8x256xf32>
    %c223_i32_368 = arith.constant 223 : i32
    %522 = tpu.dynamic_rotate %456 by %c223_i32_368 dim 1 : vector<16x256xf32>, i32 -> vector<16x256xf32>
    %c7_369 = arith.constant 7 : index
    %c0_370 = arith.constant 0 : index
    %c0_371 = arith.constant 0 : index
    %523 = vector.load %arg9[%c7_369, %c0_370, %c0_371] : memref<9x8x16xf32, #tpu.memory_space<vmem>>, vector<1x8x16xf32>
    %524 = vector.shape_cast %523 : vector<1x8x16xf32> to vector<8x16xf32>
    %cst_372 = arith.constant dense<0.000000e+00> : vector<8x256xf32>
    %525 = tpu.matmul %524, %522, %cst_372 {dimension_numbers = #tpu.dot_dimension_numbers<[1], [0], [0], [1], [0, 0, 1, 1], [], []>} : vector<8x16xf32>, vector<16x256xf32>, vector<8x256xf32> -> vector<8x256xf32>
    %526 = arith.addf %521, %525 : vector<8x256xf32>
    %c222_i32_373 = arith.constant 222 : i32
    %527 = tpu.dynamic_rotate %456 by %c222_i32_373 dim 1 : vector<16x256xf32>, i32 -> vector<16x256xf32>
    %c8_374 = arith.constant 8 : index
    %c0_375 = arith.constant 0 : index
    %c0_376 = arith.constant 0 : index
    %528 = vector.load %arg9[%c8_374, %c0_375, %c0_376] : memref<9x8x16xf32, #tpu.memory_space<vmem>>, vector<1x8x16xf32>
    %529 = vector.shape_cast %528 : vector<1x8x16xf32> to vector<8x16xf32>
    %cst_377 = arith.constant dense<0.000000e+00> : vector<8x256xf32>
    %530 = tpu.matmul %529, %527, %cst_377 {dimension_numbers = #tpu.dot_dimension_numbers<[1], [0], [0], [1], [0, 0, 1, 1], [], []>} : vector<8x16xf32>, vector<16x256xf32>, vector<8x256xf32> -> vector<8x256xf32>
    %531 = arith.addf %526, %530 : vector<8x256xf32>
    %c0_378 = arith.constant 0 : index
    %c0_379 = arith.constant 0 : index
    %532 = vector.load %arg10[%c0_378, %c0_379] : memref<8x1xf32, #tpu.memory_space<vmem>>, vector<8x1xf32>
    %533 = vector.broadcast %532 : vector<8x1xf32> to vector<8x256xf32>
    %534 = arith.addf %531, %533 : vector<8x256xf32>
    %cst_380 = arith.constant 0.000000e+00 : f32
    %535 = vector.broadcast %cst_380 : f32 to vector<8x256xf32>
    %536 = arith.maximumf %534, %535 : vector<8x256xf32>
    %cst_381 = arith.constant 0.000000e+00 : f32
    %537 = vector.broadcast %cst_381 : f32 to vector<8x256xf32>
    %538 = arith.subf %537, %534 : vector<8x256xf32>
    %cst_382 = arith.constant 0.000000e+00 : f32
    %539 = vector.broadcast %cst_382 : f32 to vector<8x256xf32>
    %540 = arith.maximumf %538, %539 : vector<8x256xf32>
    %541 = tpu.concatenate %536, %540 in 0 : vector<8x256xf32>, vector<8x256xf32> -> vector<16x256xf32>
    %c0_383 = arith.constant 0 : index
    %c0_384 = arith.constant 0 : index
    %542 = vector.load %arg17[%c0_383, %c0_384] : memref<10x16xf32, #tpu.memory_space<vmem>>, vector<10x16xf32>
    %cst_385 = arith.constant dense<0.000000e+00> : vector<10x256xf32>
    %543 = tpu.matmul %542, %541, %cst_385 {dimension_numbers = #tpu.dot_dimension_numbers<[1], [0], [0], [1], [0, 0, 1, 1], [], []>} : vector<10x16xf32>, vector<16x256xf32>, vector<10x256xf32> -> vector<10x256xf32>
    %c0_386 = arith.constant 0 : index
    %c0_387 = arith.constant 0 : index
    %544 = vector.load %arg18[%c0_386, %c0_387] : memref<10x1xf32, #tpu.memory_space<vmem>>, vector<10x1xf32>
    %545 = vector.broadcast %544 : vector<10x1xf32> to vector<10x256xf32>
    %546 = arith.addf %543, %545 : vector<10x256xf32>
    %cst_388 = arith.constant 1.000000e+00 : f32
    %547 = vector.broadcast %cst_388 : f32 to vector<10x256xf32>
    %548 = arith.mulf %546, %547 : vector<10x256xf32>
    %c3_389 = arith.constant 3 : index
    %c0_390 = arith.constant 0 : index
    %c0_391 = arith.constant 0 : index
    %549 = vector.load %arg4[%c3_389, %c0_390, %c0_391] : memref<4x1x256xf32, #tpu.memory_space<vmem>>, vector<1x1x256xf32>
    %550 = vector.shape_cast %549 : vector<1x1x256xf32> to vector<1x256xf32>
    %cst_392 = arith.constant 0.000000e+00 : f32
    %551 = vector.broadcast %cst_392 : f32 to vector<1x256xf32>
    %552 = arith.cmpf ogt, %550, %551 : vector<1x256xf32>
    %cst_393 = arith.constant 0xFF800000 : f32
    %553 = vector.shape_cast %552 : vector<1x256xi1> to vector<1x256xi1>
    %554 = vector.broadcast %553 : vector<1x256xi1> to vector<10x256xi1>
    %555 = vector.broadcast %cst_393 : f32 to vector<10x256xf32>
    %556 = arith.select %554, %548, %555 : vector<10x256xi1>, vector<10x256xf32>
    %cst_394 = arith.constant dense<0xFF800000> : vector<10xf32>
    %557 = vector.multi_reduction <maximumf>, %556, %cst_394 [1] : vector<10x256xf32> to vector<10xf32>
    %558 = vector.shape_cast %557 : vector<10xf32> to vector<10x1xf32>
    %559 = vector.broadcast %558 : vector<10x1xf32> to vector<10x256xf32>
    %560 = arith.subf %556, %559 : vector<10x256xf32>
    %561 = math.exp %560 : vector<10x256xf32>
    %cst_395 = arith.constant dense<0.000000e+00> : vector<10xf32>
    %562 = vector.multi_reduction <add>, %561, %cst_395 [1] : vector<10x256xf32> to vector<10xf32>
    %563 = vector.shape_cast %562 : vector<10xf32> to vector<10x1xf32>
    %564 = math.log %563 : vector<10x1xf32>
    %565 = arith.addf %558, %564 : vector<10x1xf32>
    %566 = arith.maximumf %488, %565 : vector<10x1xf32>
    %567 = arith.subf %488, %566 : vector<10x1xf32>
    %568 = math.exp %567 : vector<10x1xf32>
    %569 = arith.subf %565, %566 : vector<10x1xf32>
    %570 = math.exp %569 : vector<10x1xf32>
    %571 = arith.addf %568, %570 : vector<10x1xf32>
    %572 = math.log %571 : vector<10x1xf32>
    %573 = arith.addf %566, %572 : vector<10x1xf32>
    %cst_396 = arith.constant 1.000000e+00 : f32
    %574 = vector.broadcast %cst_396 : f32 to vector<10x1xf32>
    %575 = arith.mulf %573, %574 : vector<10x1xf32>
    %c1_397 = arith.constant 1 : index
    %c0_398 = arith.constant 0 : index
    %c0_399 = arith.constant 0 : index
    %576 = vector.load %arg19[%c1_397, %c0_398, %c0_399] : memref<2x10x1xf32, #tpu.memory_space<vmem>>, vector<1x10x1xf32>
    %577 = vector.shape_cast %576 : vector<1x10x1xf32> to vector<10x1xf32>
    %578 = vector.shape_cast %575 : vector<10x1xf32> to vector<1x10x1xf32>
    tpu.vector_store %arg19[%c1_397, %c0_398, %c0_399], %578 {strides = array<i32>} : memref<2x10x1xf32, #tpu.memory_space<vmem>>, vector<1x10x1xf32>,
    return
  }
  func.func @transform_0(%arg0: i32) -> (i32, i32, i32) {
    %c0_i32 = arith.constant 0 : i32
    %c0_i32_0 = arith.constant 0 : i32
    %c0_i32_1 = arith.constant 0 : i32
    return %arg0, %c0_i32, %c0_i32_0 : i32, i32, i32
  }
  func.func @transform_1(%arg0: i32) -> (i32, i32, i32) {
    %c0_i32 = arith.constant 0 : i32
    %c0_i32_0 = arith.constant 0 : i32
    %c0_i32_1 = arith.constant 0 : i32
    return %arg0, %c0_i32, %c0_i32_0 : i32, i32, i32
  }
  func.func @transform_2(%arg0: i32) -> (i32, i32) {
    %c0_i32 = arith.constant 0 : i32
    %c0_i32_0 = arith.constant 0 : i32
    %c0_i32_1 = arith.constant 0 : i32
    return %c0_i32, %c0_i32_0 : i32, i32
  }
  func.func @transform_3(%arg0: i32) -> (i32, i32, i32) {
    %c0_i32 = arith.constant 0 : i32
    %c0_i32_0 = arith.constant 0 : i32
    %c0_i32_1 = arith.constant 0 : i32
    %c0_i32_2 = arith.constant 0 : i32
    return %c0_i32, %c0_i32_0, %c0_i32_1 : i32, i32, i32
  }
  func.func @transform_4(%arg0: i32) -> (i32, i32, i32) {
    %c0_i32 = arith.constant 0 : i32
    %c0_i32_0 = arith.constant 0 : i32
    %c0_i32_1 = arith.constant 0 : i32
    %c0_i32_2 = arith.constant 0 : i32
    return %c0_i32, %c0_i32_0, %c0_i32_1 : i32, i32, i32
  }
  func.func @transform_5(%arg0: i32) -> (i32, i32) {
    %c0_i32 = arith.constant 0 : i32
    %c0_i32_0 = arith.constant 0 : i32
    %c0_i32_1 = arith.constant 0 : i32
    return %c0_i32, %c0_i32_0 : i32, i32
  }
  func.func @transform_6(%arg0: i32) -> (i32, i32, i32) {
    %c0_i32 = arith.constant 0 : i32
    %c0_i32_0 = arith.constant 0 : i32
    %c0_i32_1 = arith.constant 0 : i32
    %c0_i32_2 = arith.constant 0 : i32
    return %c0_i32, %c0_i32_0, %c0_i32_1 : i32, i32, i32
  }
  func.func @transform_7(%arg0: i32) -> (i32, i32) {
    %c0_i32 = arith.constant 0 : i32
    %c0_i32_0 = arith.constant 0 : i32
    %c0_i32_1 = arith.constant 0 : i32
    return %c0_i32, %c0_i32_0 : i32, i32
  }
  func.func @transform_8(%arg0: i32) -> (i32, i32, i32) {
    %c0_i32 = arith.constant 0 : i32
    %c0_i32_0 = arith.constant 0 : i32
    %c0_i32_1 = arith.constant 0 : i32
    %c0_i32_2 = arith.constant 0 : i32
    return %c0_i32, %c0_i32_0, %c0_i32_1 : i32, i32, i32
  }
  func.func @transform_9(%arg0: i32) -> (i32, i32) {
    %c0_i32 = arith.constant 0 : i32
    %c0_i32_0 = arith.constant 0 : i32
    %c0_i32_1 = arith.constant 0 : i32
    return %c0_i32, %c0_i32_0 : i32, i32
  }
  func.func @transform_10(%arg0: i32) -> (i32, i32) {
    %c0_i32 = arith.constant 0 : i32
    %c0_i32_0 = arith.constant 0 : i32
    %c0_i32_1 = arith.constant 0 : i32
    return %c0_i32, %c0_i32_0 : i32, i32
  }
  func.func @transform_11(%arg0: i32) -> (i32, i32) {
    %c0_i32 = arith.constant 0 : i32
    %c0_i32_0 = arith.constant 0 : i32
    %c0_i32_1 = arith.constant 0 : i32
    return %c0_i32, %c0_i32_0 : i32, i32
  }
  func.func @transform_12(%arg0: i32) -> (i32, i32) {
    %c0_i32 = arith.constant 0 : i32
    %c0_i32_0 = arith.constant 0 : i32
    %c0_i32_1 = arith.constant 0 : i32
    return %c0_i32, %c0_i32_0 : i32, i32
  }
  func.func @transform_13(%arg0: i32) -> (i32, i32) {
    %c0_i32 = arith.constant 0 : i32
    %c0_i32_0 = arith.constant 0 : i32
    %c0_i32_1 = arith.constant 0 : i32
    return %c0_i32, %c0_i32_0 : i32, i32
  }
  func.func @transform_14(%arg0: i32) -> (i32, i32) {
    %c0_i32 = arith.constant 0 : i32
    %c0_i32_0 = arith.constant 0 : i32
    %c0_i32_1 = arith.constant 0 : i32
    return %c0_i32, %c0_i32_0 : i32, i32
  }
  func.func @transform_15(%arg0: i32) -> (i32, i32) {
    %c0_i32 = arith.constant 0 : i32
    %c0_i32_0 = arith.constant 0 : i32
    %c0_i32_1 = arith.constant 0 : i32
    return %c0_i32, %c0_i32_0 : i32, i32
  }
  func.func @transform_16(%arg0: i32) -> (i32, i32) {
    %c0_i32 = arith.constant 0 : i32
    %c0_i32_0 = arith.constant 0 : i32
    %c0_i32_1 = arith.constant 0 : i32
    return %c0_i32, %c0_i32_0 : i32, i32
  }
  func.func @transform_17(%arg0: i32) -> (i32, i32) {
    %c0_i32 = arith.constant 0 : i32
    %c0_i32_0 = arith.constant 0 : i32
    %c0_i32_1 = arith.constant 0 : i32
    return %c0_i32, %c0_i32_0 : i32, i32
  }
  func.func @transform_18(%arg0: i32) -> (i32, i32, i32) {
    %c0_i32 = arith.constant 0 : i32
    %c0_i32_0 = arith.constant 0 : i32
    %c0_i32_1 = arith.constant 0 : i32
    return %arg0, %c0_i32, %c0_i32_0 : i32, i32, i32
  }
  func.func @transform_19(%arg0: i32) -> (i32, i32, i32) {
    %c0_i32 = arith.constant 0 : i32
    %c0_i32_0 = arith.constant 0 : i32
    %c0_i32_1 = arith.constant 0 : i32
    return %arg0, %c0_i32, %c0_i32_0 : i32, i32, i32
  }
}

</mosaic_0001>

<llo_original>
// kernel: bottlenet_forward.1
$region0: #{bottlenet_forward.1}
  #allocation0 [shape = 'u32[]', space=smem, size = 0x4, offset = 0x4, fixed_abs, tag = 'smem constant byte address 0x4 - core index']
  #allocation1 [shape = 'u32[144,128]{1,0:T(1,128)}', space=vmem, size = 0x12000, scoped, tag = 'internal scratch']
  %s0 = inlined_call_operand.vmem [shape: f32[4,3,256], index: 0, kind: input, shape index: {}]
  %s1 = inlined_call_operand.vmem [shape: f32[4,3,256], index: 1, kind: input, shape index: {}]
  %s2 = inlined_call_operand.vmem [shape: f32[3,1], index: 2, kind: input, shape index: {}]
  %s3 = inlined_call_operand.vmem [shape: f32[4,1,256], index: 3, kind: input, shape index: {}]
  %s4 = inlined_call_operand.vmem [shape: f32[9,8,3], index: 4, kind: input, shape index: {}]
  %s5 = inlined_call_operand.vmem [shape: f32[8,1], index: 5, kind: input, shape index: {}]
  %s6 = inlined_call_operand.vmem [shape: f32[9,8,16], index: 6, kind: input, shape index: {}]
  %s7 = inlined_call_operand.vmem [shape: f32[8,1], index: 7, kind: input, shape index: {}]
  %s8 = inlined_call_operand.vmem [shape: f32[9,8,16], index: 8, kind: input, shape index: {}]
  %s9 = inlined_call_operand.vmem [shape: f32[8,1], index: 9, kind: input, shape index: {}]
  %s10 = inlined_call_operand.vmem [shape: f32[10,3], index: 10, kind: input, shape index: {}]
  %s11 = inlined_call_operand.vmem [shape: f32[10,1], index: 11, kind: input, shape index: {}]
  %s12 = inlined_call_operand.vmem [shape: f32[10,16], index: 12, kind: input, shape index: {}]
  %s13 = inlined_call_operand.vmem [shape: f32[10,1], index: 13, kind: input, shape index: {}]
  %s14 = inlined_call_operand.vmem [shape: f32[10,16], index: 14, kind: input, shape index: {}]
  %s15 = inlined_call_operand.vmem [shape: f32[10,1], index: 15, kind: input, shape index: {}]
  %s16 = inlined_call_operand.vmem [shape: f32[10,16], index: 16, kind: input, shape index: {}]
  %s17 = inlined_call_operand.vmem [shape: f32[10,1], index: 17, kind: input, shape index: {}]
  %s18 = inlined_call_operand.vmem [shape: f32[4,10,1], index: 18, kind: output, shape index: {0}]
  %s19 = inlined_call_operand.vmem [shape: f32[4,3,256], index: 19, kind: output, shape index: {1}]
  %20 = xla_tuple %s18, %s19
  %s21 = sld [smem:[#allocation0]]
  $region113: #{bottlenet_forward.1} parent=0
    _
  %s23 = ssub.s32 1, %s21
  %s24 = scalar_select 0, %s23, %s21
  loop: start=0, step=1, limit=4
  $region2: #{bottlenet_forward.1} parent=0 // loop_pre_header
    _
  $region3: #{bottlenet_forward.1} parent=0 // loop_header
    %s26 = sphi 0, %s30
    %p27 = scmp.ge.s32.totalorder %s26, 4
    %s36 = sphi 0, %s38
    %s39 = sphi 0, %s36
    %s40 = sphi 0, %s39
    %s56 = sphi 0, %s40
    %s62 = sphi 0, %s64
    %s65 = sphi 0, %s62
    %s66 = sphi 0, %s65
    %s82 = sphi 0, %s66
    %s86 = sphi 0, %s86
    %s88 = sphi 0, %s86
    %s89 = sphi 0, %s88
    %s103 = sphi 0, %s89
    %s107 = sphi 0, %s107
    %s109 = sphi 0, %s107
    %s110 = sphi 0, %s109
    %s124 = sphi 0, %s110
    %s128 = sphi 0, %s128
    %s130 = sphi 0, %s128
    %s131 = sphi 0, %s130
    %s145 = sphi 0, %s131
    %s149 = sphi 0, %s149
    %s151 = sphi 0, %s149
    %s152 = sphi 0, %s151
    %s166 = sphi 0, %s152
    %s170 = sphi 0, %s170
    %s172 = sphi 0, %s170
    %s173 = sphi 0, %s172
    %s187 = sphi 0, %s173
    %s191 = sphi 0, %s191
    %s193 = sphi 0, %s191
    %s194 = sphi 0, %s193
    %s208 = sphi 0, %s194
    %s212 = sphi 0, %s212
    %s214 = sphi 0, %s212
    %s215 = sphi 0, %s214
    %s229 = sphi 0, %s215
    %s233 = sphi 0, %s233
    %s235 = sphi 0, %s233
    %s236 = sphi 0, %s235
    %s250 = sphi 0, %s236
    %s254 = sphi 0, %s254
    %s256 = sphi 0, %s254
    %s257 = sphi 0, %s256
    %s271 = sphi 0, %s257
    %s275 = sphi 0, %s275
    %s277 = sphi 0, %s275
    %s278 = sphi 0, %s277
    %s292 = sphi 0, %s278
    %s296 = sphi 0, %s296
    %s298 = sphi 0, %s296
    %s299 = sphi 0, %s298
    %s313 = sphi 0, %s299
    %s317 = sphi 0, %s317
    %s319 = sphi 0, %s317
    %s320 = sphi 0, %s319
    %s334 = sphi 0, %s320
    %s338 = sphi 0, %s338
    %s340 = sphi 0, %s338
    %s341 = sphi 0, %s340
    %s355 = sphi 0, %s341
    %s359 = sphi 0, %s359
    %s361 = sphi 0, %s359
    %s362 = sphi 0, %s361
    %s376 = sphi 0, %s362
    %s380 = sphi 0, %s380
    %s382 = sphi 0, %s380
    %s383 = sphi 0, %s382
    %s397 = sphi 0, %s383
    %s401 = sphi 0, %s401
    %s403 = sphi 0, %s401
    %s404 = sphi 0, %s403
    %s418 = sphi 0, %s404
    %s424 = sphi 0, %s426
    %s427 = sphi 0, %s424
    %s428 = sphi 0, %s427
    %s444 = sphi 0, %s428
    %s450 = sphi 0, %s452
    %s453 = sphi 0, %s450
    %s454 = sphi 0, %s453
    %s470 = sphi 0, %s454
  $region4: #{bottlenet_forward.1} parent=0 // loop_header_branch
    %29 = sbr.rel (%p27) target = $region8
  $region5: #{bottlenet_forward.1} parent=0 // loop_body
    %s31 = ssub.s32 %s26, 1
    %s32 = ssub.s32 %s26, 2
    %s33 = sadd.s32 %s26, 1
    %s34 = ssub.s32 %s26, %s33
    %p35 = scmp.eq.s32.totalorder %s34, 0
    %s37 = sadd.s32 %s36, 1
    %s38 = scalar_select %p35, %s36, %s37
    %p41 = pneg %p35
    %p42 = scmp.eq.s32.totalorder %s26, 1
    %p43 = por %p41, %p42
    %p44 = scmp.ne.s32.totalorder %s36, %s39
    %p45 = scmp.eq.s32.totalorder %s26, 0
    %p46 = por %p44, %p45
    %p47 = scmp.ne.s32.totalorder %s36, %s39
    %p48 = scmp.eq.s32.totalorder %s31, 1
    %p49 = por %p47, %p48
    %p50 = scmp.ne.s32.totalorder %s39, %s40
    %p51 = scmp.eq.s32.totalorder %s31, 0
    %p52 = por %p50, %p51
    %p53 = scmp.ne.s32.totalorder %s39, %s40
    %p54 = scmp.eq.s32.totalorder %s32, 1
    %p55 = por %p53, %p54
    %p57 = scmp.ne.s32.totalorder %s40, %s56
    %p58 = scmp.eq.s32.totalorder %s32, 0
    %p59 = por %p57, %p58
    %s60 = ssub.s32 %s26, %s33
    %p61 = scmp.eq.s32.totalorder %s60, 0
    %s63 = sadd.s32 %s62, 1
    %s64 = scalar_select %p61, %s62, %s63
    %p67 = pneg %p61
    %p68 = scmp.eq.s32.totalorder %s26, 1
    %p69 = por %p67, %p68
    %p70 = scmp.ne.s32.totalorder %s62, %s65
    %p71 = scmp.eq.s32.totalorder %s26, 0
    %p72 = por %p70, %p71
    %p73 = scmp.ne.s32.totalorder %s62, %s65
    %p74 = scmp.eq.s32.totalorder %s31, 1
    %p75 = por %p73, %p74
    %p76 = scmp.ne.s32.totalorder %s65, %s66
    %p77 = scmp.eq.s32.totalorder %s31, 0
    %p78 = por %p76, %p77
    %p79 = scmp.ne.s32.totalorder %s65, %s66
    %p80 = scmp.eq.s32.totalorder %s32, 1
    %p81 = por %p79, %p80
    %p83 = scmp.ne.s32.totalorder %s66, %s82
    %p84 = scmp.eq.s32.totalorder %s32, 0
    %p85 = por %p83, %p84
    %s87 = sadd.s32 %s86, 1
    %p90 = scmp.eq.s32.totalorder %s26, 1
    %p91 = scmp.ne.s32.totalorder %s86, %s88
    %p92 = scmp.eq.s32.totalorder %s26, 0
    %p93 = por %p91, %p92
    %p94 = scmp.ne.s32.totalorder %s86, %s88
    %p95 = scmp.eq.s32.totalorder %s31, 1
    %p96 = por %p94, %p95
    %p97 = scmp.ne.s32.totalorder %s88, %s89
    %p98 = scmp.eq.s32.totalorder %s31, 0
    %p99 = por %p97, %p98
    %p100 = scmp.ne.s32.totalorder %s88, %s89
    %p101 = scmp.eq.s32.totalorder %s32, 1
    %p102 = por %p100, %p101
    %p104 = scmp.ne.s32.totalorder %s89, %s103
    %p105 = scmp.eq.s32.totalorder %s32, 0
    %p106 = por %p104, %p105
    %s108 = sadd.s32 %s107, 1
    %p111 = scmp.eq.s32.totalorder %s26, 1
    %p112 = scmp.ne.s32.totalorder %s107, %s109
    %p113 = scmp.eq.s32.totalorder %s26, 0
    %p114 = por %p112, %p113
    %p115 = scmp.ne.s32.totalorder %s107, %s109
    %p116 = scmp.eq.s32.totalorder %s31, 1
    %p117 = por %p115, %p116
    %p118 = scmp.ne.s32.totalorder %s109, %s110
    %p119 = scmp.eq.s32.totalorder %s31, 0
    %p120 = por %p118, %p119
    %p121 = scmp.ne.s32.totalorder %s109, %s110
    %p122 = scmp.eq.s32.totalorder %s32, 1
    %p123 = por %p121, %p122
    %p125 = scmp.ne.s32.totalorder %s110, %s124
    %p126 = scmp.eq.s32.totalorder %s32, 0
    %p127 = por %p125, %p126
    %s129 = sadd.s32 %s128, 1
    %p132 = scmp.eq.s32.totalorder %s26, 1
    %p133 = scmp.ne.s32.totalorder %s128, %s130
    %p134 = scmp.eq.s32.totalorder %s26, 0
    %p135 = por %p133, %p134
    %p136 = scmp.ne.s32.totalorder %s128, %s130
    %p137 = scmp.eq.s32.totalorder %s31, 1
    %p138 = por %p136, %p137
    %p139 = scmp.ne.s32.totalorder %s130, %s131
    %p140 = scmp.eq.s32.totalorder %s31, 0
    %p141 = por %p139, %p140
    %p142 = scmp.ne.s32.totalorder %s130, %s131
    %p143 = scmp.eq.s32.totalorder %s32, 1
    %p144 = por %p142, %p143
    %p146 = scmp.ne.s32.totalorder %s131, %s145
    %p147 = scmp.eq.s32.totalorder %s32, 0
    %p148 = por %p146, %p147
    %s150 = sadd.s32 %s149, 1
    %p153 = scmp.eq.s32.totalorder %s26, 1
    %p154 = scmp.ne.s32.totalorder %s149, %s151
    %p155 = scmp.eq.s32.totalorder %s26, 0
    %p156 = por %p154, %p155
    %p157 = scmp.ne.s32.totalorder %s149, %s151
    %p158 = scmp.eq.s32.totalorder %s31, 1
    %p159 = por %p157, %p158
    %p160 = scmp.ne.s32.totalorder %s151, %s152
    %p161 = scmp.eq.s32.totalorder %s31, 0
    %p162 = por %p160, %p161
    %p163 = scmp.ne.s32.totalorder %s151, %s152
    %p164 = scmp.eq.s32.totalorder %s32, 1
    %p165 = por %p163, %p164
    %p167 = scmp.ne.s32.totalorder %s152, %s166
    %p168 = scmp.eq.s32.totalorder %s32, 0
    %p169 = por %p167, %p168
    %s171 = sadd.s32 %s170, 1
    %p174 = scmp.eq.s32.totalorder %s26, 1
    %p175 = scmp.ne.s32.totalorder %s170, %s172
    %p176 = scmp.eq.s32.totalorder %s26, 0
    %p177 = por %p175, %p176
    %p178 = scmp.ne.s32.totalorder %s170, %s172
    %p179 = scmp.eq.s32.totalorder %s31, 1
    %p180 = por %p178, %p179
    %p181 = scmp.ne.s32.totalorder %s172, %s173
    %p182 = scmp.eq.s32.totalorder %s31, 0
    %p183 = por %p181, %p182
    %p184 = scmp.ne.s32.totalorder %s172, %s173
    %p185 = scmp.eq.s32.totalorder %s32, 1
    %p186 = por %p184, %p185
    %p188 = scmp.ne.s32.totalorder %s173, %s187
    %p189 = scmp.eq.s32.totalorder %s32, 0
    %p190 = por %p188, %p189
    %s192 = sadd.s32 %s191, 1
    %p195 = scmp.eq.s32.totalorder %s26, 1
    %p196 = scmp.ne.s32.totalorder %s191, %s193
    %p197 = scmp.eq.s32.totalorder %s26, 0
    %p198 = por %p196, %p197
    %p199 = scmp.ne.s32.totalorder %s191, %s193
    %p200 = scmp.eq.s32.totalorder %s31, 1
    %p201 = por %p199, %p200
    %p202 = scmp.ne.s32.totalorder %s193, %s194
    %p203 = scmp.eq.s32.totalorder %s31, 0
    %p204 = por %p202, %p203
    %p205 = scmp.ne.s32.totalorder %s193, %s194
    %p206 = scmp.eq.s32.totalorder %s32, 1
    %p207 = por %p205, %p206
    %p209 = scmp.ne.s32.totalorder %s194, %s208
    %p210 = scmp.eq.s32.totalorder %s32, 0
    %p211 = por %p209, %p210
    %s213 = sadd.s32 %s212, 1
    %p216 = scmp.eq.s32.totalorder %s26, 1
    %p217 = scmp.ne.s32.totalorder %s212, %s214
    %p218 = scmp.eq.s32.totalorder %s26, 0
    %p219 = por %p217, %p218
    %p220 = scmp.ne.s32.totalorder %s212, %s214
    %p221 = scmp.eq.s32.totalorder %s31, 1
    %p222 = por %p220, %p221
    %p223 = scmp.ne.s32.totalorder %s214, %s215
    %p224 = scmp.eq.s32.totalorder %s31, 0
    %p225 = por %p223, %p224
    %p226 = scmp.ne.s32.totalorder %s214, %s215
    %p227 = scmp.eq.s32.totalorder %s32, 1
    %p228 = por %p226, %p227
    %p230 = scmp.ne.s32.totalorder %s215, %s229
    %p231 = scmp.eq.s32.totalorder %s32, 0
    %p232 = por %p230, %p231
    %s234 = sadd.s32 %s233, 1
    %p237 = scmp.eq.s32.totalorder %s26, 1
    %p238 = scmp.ne.s32.totalorder %s233, %s235
    %p239 = scmp.eq.s32.totalorder %s26, 0
    %p240 = por %p238, %p239
    %p241 = scmp.ne.s32.totalorder %s233, %s235
    %p242 = scmp.eq.s32.totalorder %s31, 1
    %p243 = por %p241, %p242
    %p244 = scmp.ne.s32.totalorder %s235, %s236
    %p245 = scmp.eq.s32.totalorder %s31, 0
    %p246 = por %p244, %p245
    %p247 = scmp.ne.s32.totalorder %s235, %s236
    %p248 = scmp.eq.s32.totalorder %s32, 1
    %p249 = por %p247, %p248
    %p251 = scmp.ne.s32.totalorder %s236, %s250
    %p252 = scmp.eq.s32.totalorder %s32, 0
    %p253 = por %p251, %p252
    %s255 = sadd.s32 %s254, 1
    %p258 = scmp.eq.s32.totalorder %s26, 1
    %p259 = scmp.ne.s32.totalorder %s254, %s256
    %p260 = scmp.eq.s32.totalorder %s26, 0
    %p261 = por %p259, %p260
    %p262 = scmp.ne.s32.totalorder %s254, %s256
    %p263 = scmp.eq.s32.totalorder %s31, 1
    %p264 = por %p262, %p263
    %p265 = scmp.ne.s32.totalorder %s256, %s257
    %p266 = scmp.eq.s32.totalorder %s31, 0
    %p267 = por %p265, %p266
    %p268 = scmp.ne.s32.totalorder %s256, %s257
    %p269 = scmp.eq.s32.totalorder %s32, 1
    %p270 = por %p268, %p269
    %p272 = scmp.ne.s32.totalorder %s257, %s271
    %p273 = scmp.eq.s32.totalorder %s32, 0
    %p274 = por %p272, %p273
    %s276 = sadd.s32 %s275, 1
    %p279 = scmp.eq.s32.totalorder %s26, 1
    %p280 = scmp.ne.s32.totalorder %s275, %s277
    %p281 = scmp.eq.s32.totalorder %s26, 0
    %p282 = por %p280, %p281
    %p283 = scmp.ne.s32.totalorder %s275, %s277
    %p284 = scmp.eq.s32.totalorder %s31, 1
    %p285 = por %p283, %p284
    %p286 = scmp.ne.s32.totalorder %s277, %s278
    %p287 = scmp.eq.s32.totalorder %s31, 0
    %p288 = por %p286, %p287
    %p289 = scmp.ne.s32.totalorder %s277, %s278
    %p290 = scmp.eq.s32.totalorder %s32, 1
    %p291 = por %p289, %p290
    %p293 = scmp.ne.s32.totalorder %s278, %s292
    %p294 = scmp.eq.s32.totalorder %s32, 0
    %p295 = por %p293, %p294
    %s297 = sadd.s32 %s296, 1
    %p300 = scmp.eq.s32.totalorder %s26, 1
    %p301 = scmp.ne.s32.totalorder %s296, %s298
    %p302 = scmp.eq.s32.totalorder %s26, 0
    %p303 = por %p301, %p302
    %p304 = scmp.ne.s32.totalorder %s296, %s298
    %p305 = scmp.eq.s32.totalorder %s31, 1
    %p306 = por %p304, %p305
    %p307 = scmp.ne.s32.totalorder %s298, %s299
    %p308 = scmp.eq.s32.totalorder %s31, 0
    %p309 = por %p307, %p308
    %p310 = scmp.ne.s32.totalorder %s298, %s299
    %p311 = scmp.eq.s32.totalorder %s32, 1
    %p312 = por %p310, %p311
    %p314 = scmp.ne.s32.totalorder %s299, %s313
    %p315 = scmp.eq.s32.totalorder %s32, 0
    %p316 = por %p314, %p315
    %s318 = sadd.s32 %s317, 1
    %p321 = scmp.eq.s32.totalorder %s26, 1
    %p322 = scmp.ne.s32.totalorder %s317, %s319
    %p323 = scmp.eq.s32.totalorder %s26, 0
    %p324 = por %p322, %p323
    %p325 = scmp.ne.s32.totalorder %s317, %s319
    %p326 = scmp.eq.s32.totalorder %s31, 1
    %p327 = por %p325, %p326
    %p328 = scmp.ne.s32.totalorder %s319, %s320
    %p329 = scmp.eq.s32.totalorder %s31, 0
    %p330 = por %p328, %p329
    %p331 = scmp.ne.s32.totalorder %s319, %s320
    %p332 = scmp.eq.s32.totalorder %s32, 1
    %p333 = por %p331, %p332
    %p335 = scmp.ne.s32.totalorder %s320, %s334
    %p336 = scmp.eq.s32.totalorder %s32, 0
    %p337 = por %p335, %p336
    %s339 = sadd.s32 %s338, 1
    %p342 = scmp.eq.s32.totalorder %s26, 1
    %p343 = scmp.ne.s32.totalorder %s338, %s340
    %p344 = scmp.eq.s32.totalorder %s26, 0
    %p345 = por %p343, %p344
    %p346 = scmp.ne.s32.totalorder %s338, %s340
    %p347 = scmp.eq.s32.totalorder %s31, 1
    %p348 = por %p346, %p347
    %p349 = scmp.ne.s32.totalorder %s340, %s341
    %p350 = scmp.eq.s32.totalorder %s31, 0
    %p351 = por %p349, %p350
    %p352 = scmp.ne.s32.totalorder %s340, %s341
    %p353 = scmp.eq.s32.totalorder %s32, 1
    %p354 = por %p352, %p353
    %p356 = scmp.ne.s32.totalorder %s341, %s355
    %p357 = scmp.eq.s32.totalorder %s32, 0
    %p358 = por %p356, %p357
    %s360 = sadd.s32 %s359, 1
    %p363 = scmp.eq.s32.totalorder %s26, 1
    %p364 = scmp.ne.s32.totalorder %s359, %s361
    %p365 = scmp.eq.s32.totalorder %s26, 0
    %p366 = por %p364, %p365
    %p367 = scmp.ne.s32.totalorder %s359, %s361
    %p368 = scmp.eq.s32.totalorder %s31, 1
    %p369 = por %p367, %p368
    %p370 = scmp.ne.s32.totalorder %s361, %s362
    %p371 = scmp.eq.s32.totalorder %s31, 0
    %p372 = por %p370, %p371
    %p373 = scmp.ne.s32.totalorder %s361, %s362
    %p374 = scmp.eq.s32.totalorder %s32, 1
    %p375 = por %p373, %p374
    %p377 = scmp.ne.s32.totalorder %s362, %s376
    %p378 = scmp.eq.s32.totalorder %s32, 0
    %p379 = por %p377, %p378
    %s381 = sadd.s32 %s380, 1
    %p384 = scmp.eq.s32.totalorder %s26, 1
    %p385 = scmp.ne.s32.totalorder %s380, %s382
    %p386 = scmp.eq.s32.totalorder %s26, 0
    %p387 = por %p385, %p386
    %p388 = scmp.ne.s32.totalorder %s380, %s382
    %p389 = scmp.eq.s32.totalorder %s31, 1
    %p390 = por %p388, %p389
    %p391 = scmp.ne.s32.totalorder %s382, %s383
    %p392 = scmp.eq.s32.totalorder %s31, 0
    %p393 = por %p391, %p392
    %p394 = scmp.ne.s32.totalorder %s382, %s383
    %p395 = scmp.eq.s32.totalorder %s32, 1
    %p396 = por %p394, %p395
    %p398 = scmp.ne.s32.totalorder %s383, %s397
    %p399 = scmp.eq.s32.totalorder %s32, 0
    %p400 = por %p398, %p399
    %s402 = sadd.s32 %s401, 1
    %p405 = scmp.eq.s32.totalorder %s26, 1
    %p406 = scmp.ne.s32.totalorder %s401, %s403
    %p407 = scmp.eq.s32.totalorder %s26, 0
    %p408 = por %p406, %p407
    %p409 = scmp.ne.s32.totalorder %s401, %s403
    %p410 = scmp.eq.s32.totalorder %s31, 1
    %p411 = por %p409, %p410
    %p412 = scmp.ne.s32.totalorder %s403, %s404
    %p413 = scmp.eq.s32.totalorder %s31, 0
    %p414 = por %p412, %p413
    %p415 = scmp.ne.s32.totalorder %s403, %s404
    %p416 = scmp.eq.s32.totalorder %s32, 1
    %p417 = por %p415, %p416
    %p419 = scmp.ne.s32.totalorder %s404, %s418
    %p420 = scmp.eq.s32.totalorder %s32, 0
    %p421 = por %p419, %p420
    %s422 = ssub.s32 %s26, %s33
    %p423 = scmp.eq.s32.totalorder %s422, 0
    %s425 = sadd.s32 %s424, 1
    %s426 = scalar_select %p423, %s424, %s425
    %p429 = pneg %p423
    %p430 = scmp.eq.s32.totalorder %s26, 1
    %p431 = por %p429, %p430
    %p432 = scmp.ne.s32.totalorder %s424, %s427
    %p433 = scmp.eq.s32.totalorder %s26, 0
    %p434 = por %p432, %p433
    %p435 = scmp.ne.s32.totalorder %s424, %s427
    %p436 = scmp.eq.s32.totalorder %s31, 1
    %p437 = por %p435, %p436
    %p438 = scmp.ne.s32.totalorder %s427, %s428
    %p439 = scmp.eq.s32.totalorder %s31, 0
    %p440 = por %p438, %p439
    %p441 = scmp.ne.s32.totalorder %s427, %s428
    %p442 = scmp.eq.s32.totalorder %s32, 1
    %p443 = por %p441, %p442
    %p445 = scmp.ne.s32.totalorder %s428, %s444
    %p446 = scmp.eq.s32.totalorder %s32, 0
    %p447 = por %p445, %p446
    %s448 = ssub.s32 %s26, %s33
    %p449 = scmp.eq.s32.totalorder %s448, 0
    %s451 = sadd.s32 %s450, 1
    %s452 = scalar_select %p449, %s450, %s451
    %p455 = pneg %p449
    %p456 = scmp.eq.s32.totalorder %s26, 1
    %p457 = por %p455, %p456
    %p458 = scmp.ne.s32.totalorder %s450, %s453
    %p459 = scmp.eq.s32.totalorder %s26, 0
    %p460 = por %p458, %p459
    %p461 = scmp.ne.s32.totalorder %s450, %s453
    %p462 = scmp.eq.s32.totalorder %s31, 1
    %p463 = por %p461, %p462
    %p464 = scmp.ne.s32.totalorder %s453, %s454
    %p465 = scmp.eq.s32.totalorder %s31, 0
    %p466 = por %p464, %p465
    %p467 = scmp.ne.s32.totalorder %s453, %s454
    %p468 = scmp.eq.s32.totalorder %s32, 1
    %p469 = por %p467, %p468
    %p471 = scmp.ne.s32.totalorder %s454, %s470
    %p472 = scmp.eq.s32.totalorder %s32, 0
    %p473 = por %p471, %p472
    %p474 = scmp.le.s32.totalorder 1, %s26
    %p475 = scmp.lt.s32.totalorder %s26, 3
    %p476 = pnand %p474, %p475
    %p477 = pneg %p476
    // Predicated region
    $region9: #{bottlenet_forward.1} parent=5 // pred_check
      _
    $region10: #{bottlenet_forward.1} parent=5 // pred_check_branch
      %479 = sbr.rel (%p476) target = $region12
    $region11: #{bottlenet_forward.1} parent=5 // pred_region
      %s480 = ssub.s32 %s26, 1
      // Predicated region
      $region13: #{bottlenet_forward.1} parent=11 // pred_check
        %p481 = pneg %p99
      $region14: #{bottlenet_forward.1} parent=11 // pred_check_branch
        %483 = sbr.rel (%p481) target = $region16
      $region15: #{bottlenet_forward.1} parent=11 // pred_region
        _
      $region16: #{bottlenet_forward.1} parent=11 // pred_fallthru
        _
      // Predicated region
      $region17: #{bottlenet_forward.1} parent=11 // pred_check
        %p484 = pneg %p120
      $region18: #{bottlenet_forward.1} parent=11 // pred_check_branch
        %486 = sbr.rel (%p484) target = $region20
      $region19: #{bottlenet_forward.1} parent=11 // pred_region
        _
      $region20: #{bottlenet_forward.1} parent=11 // pred_fallthru
        _
      // Predicated region
      $region21: #{bottlenet_forward.1} parent=11 // pred_check
        %p487 = pneg %p141
      $region22: #{bottlenet_forward.1} parent=11 // pred_check_branch
        %489 = sbr.rel (%p487) target = $region24
      $region23: #{bottlenet_forward.1} parent=11 // pred_region
        _
      $region24: #{bottlenet_forward.1} parent=11 // pred_fallthru
        _
      // Predicated region
      $region25: #{bottlenet_forward.1} parent=11 // pred_check
        %p490 = pneg %p162
      $region26: #{bottlenet_forward.1} parent=11 // pred_check_branch
        %492 = sbr.rel (%p490) target = $region28
      $region27: #{bottlenet_forward.1} parent=11 // pred_region
        _
      $region28: #{bottlenet_forward.1} parent=11 // pred_fallthru
        _
      // Predicated region
      $region29: #{bottlenet_forward.1} parent=11 // pred_check
        %p493 = pneg %p183
      $region30: #{bottlenet_forward.1} parent=11 // pred_check_branch
        %495 = sbr.rel (%p493) target = $region32
      $region31: #{bottlenet_forward.1} parent=11 // pred_region
        _
      $region32: #{bottlenet_forward.1} parent=11 // pred_fallthru
        _
      // Predicated region
      $region33: #{bottlenet_forward.1} parent=11 // pred_check
        %p496 = pneg %p204
      $region34: #{bottlenet_forward.1} parent=11 // pred_check_branch
        %498 = sbr.rel (%p496) target = $region36
      $region35: #{bottlenet_forward.1} parent=11 // pred_region
        _
      $region36: #{bottlenet_forward.1} parent=11 // pred_fallthru
        _
      // Predicated region
      $region37: #{bottlenet_forward.1} parent=11 // pred_check
        %p499 = pneg %p225
      $region38: #{bottlenet_forward.1} parent=11 // pred_check_branch
        %501 = sbr.rel (%p499) target = $region40
      $region39: #{bottlenet_forward.1} parent=11 // pred_region
        _
      $region40: #{bottlenet_forward.1} parent=11 // pred_fallthru
        _
      // Predicated region
      $region41: #{bottlenet_forward.1} parent=11 // pred_check
        %p502 = pneg %p246
      $region42: #{bottlenet_forward.1} parent=11 // pred_check_branch
        %504 = sbr.rel (%p502) target = $region44
      $region43: #{bottlenet_forward.1} parent=11 // pred_region
        _
      $region44: #{bottlenet_forward.1} parent=11 // pred_fallthru
        _
      // Predicated region
      $region45: #{bottlenet_forward.1} parent=11 // pred_check
        %p505 = pneg %p267
      $region46: #{bottlenet_forward.1} parent=11 // pred_check_branch
        %507 = sbr.rel (%p505) target = $region48
      $region47: #{bottlenet_forward.1} parent=11 // pred_region
        _
      $region48: #{bottlenet_forward.1} parent=11 // pred_fallthru
        _
      // Predicated region
      $region49: #{bottlenet_forward.1} parent=11 // pred_check
        %p508 = pneg %p288
      $region50: #{bottlenet_forward.1} parent=11 // pred_check_branch
        %510 = sbr.rel (%p508) target = $region52
      $region51: #{bottlenet_forward.1} parent=11 // pred_region
        _
      $region52: #{bottlenet_forward.1} parent=11 // pred_fallthru
        _
      // Predicated region
      $region53: #{bottlenet_forward.1} parent=11 // pred_check
        %p511 = pneg %p309
      $region54: #{bottlenet_forward.1} parent=11 // pred_check_branch
        %513 = sbr.rel (%p511) target = $region56
      $region55: #{bottlenet_forward.1} parent=11 // pred_region
        _
      $region56: #{bottlenet_forward.1} parent=11 // pred_fallthru
        _
      // Predicated region
      $region57: #{bottlenet_forward.1} parent=11 // pred_check
        %p514 = pneg %p330
      $region58: #{bottlenet_forward.1} parent=11 // pred_check_branch
        %516 = sbr.rel (%p514) target = $region60
      $region59: #{bottlenet_forward.1} parent=11 // pred_region
        _
      $region60: #{bottlenet_forward.1} parent=11 // pred_fallthru
        _
      // Predicated region
      $region61: #{bottlenet_forward.1} parent=11 // pred_check
        %p517 = pneg %p351
      $region62: #{bottlenet_forward.1} parent=11 // pred_check_branch
        %519 = sbr.rel (%p517) target = $region64
      $region63: #{bottlenet_forward.1} parent=11 // pred_region
        _
      $region64: #{bottlenet_forward.1} parent=11 // pred_fallthru
        _
      // Predicated region
      $region65: #{bottlenet_forward.1} parent=11 // pred_check
        %p520 = pneg %p372
      $region66: #{bottlenet_forward.1} parent=11 // pred_check_branch
        %522 = sbr.rel (%p520) target = $region68
      $region67: #{bottlenet_forward.1} parent=11 // pred_region
        _
      $region68: #{bottlenet_forward.1} parent=11 // pred_fallthru
        _
      // Predicated region
      $region69: #{bottlenet_forward.1} parent=11 // pred_check
        %p523 = pneg %p393
      $region70: #{bottlenet_forward.1} parent=11 // pred_check_branch
        %525 = sbr.rel (%p523) target = $region72
      $region71: #{bottlenet_forward.1} parent=11 // pred_region
        _
      $region72: #{bottlenet_forward.1} parent=11 // pred_fallthru
        _
      // Predicated region
      $region73: #{bottlenet_forward.1} parent=11 // pred_check
        %p526 = pneg %p414
      $region74: #{bottlenet_forward.1} parent=11 // pred_check_branch
        %528 = sbr.rel (%p526) target = $region76
      $region75: #{bottlenet_forward.1} parent=11 // pred_region
        _
      $region76: #{bottlenet_forward.1} parent=11 // pred_fallthru
        _
    $region12: #{bottlenet_forward.1} parent=5 // pred_fallthru
      _
    %p529 = scmp.lt.s32.totalorder %s26, 2
    // Predicated region
    $region77: #{bottlenet_forward.1} parent=5 // pred_check
      %p530 = pneg %p529
    $region78: #{bottlenet_forward.1} parent=5 // pred_check_branch
      %532 = sbr.rel (%p530) target = $region80
    $region79: #{bottlenet_forward.1} parent=5 // pred_region
      // Predicated region
      $region81: #{bottlenet_forward.1} parent=79 // pred_check
        %p533 = pneg %p46
      $region82: #{bottlenet_forward.1} parent=79 // pred_check_branch
        %535 = sbr.rel (%p533) target = $region84
      $region83: #{bottlenet_forward.1} parent=79 // pred_region
        %s536 = smul.u32 2, %s26
        %p537 = scmp.lt.s32.totalorder %s536, 3
        %s538 = scalar_select %p537, %s536, 3
        %s539 = smul.addr %s538, 2
        %s540 = smul.addr %s539, 4
        %s541 = scalar_lea.vmem %s0, %s540
        %s542 = smul.u32 2, %s26
      $region84: #{bottlenet_forward.1} parent=79 // pred_fallthru
        _
      // Predicated region
      $region85: #{bottlenet_forward.1} parent=79 // pred_check
        %p543 = pneg %p72
      $region86: #{bottlenet_forward.1} parent=79 // pred_check_branch
        %545 = sbr.rel (%p543) target = $region88
      $region87: #{bottlenet_forward.1} parent=79 // pred_region
        %s546 = smul.u32 2, %s26
        %p547 = scmp.lt.s32.totalorder %s546, 3
        %s548 = scalar_select %p547, %s546, 3
        %s549 = smul.addr %s548, 2
        %s550 = smul.addr %s549, 4
        %s551 = scalar_lea.vmem %s1, %s550
        %s552 = smul.u32 2, %s26
      $region88: #{bottlenet_forward.1} parent=79 // pred_fallthru
        _
    $region80: #{bottlenet_forward.1} parent=5 // pred_fallthru
      _
    %p553 = scmp.le.s32.totalorder 1, %s26
    %p554 = scmp.lt.s32.totalorder %s26, 3
    %p555 = pnand %p553, %p554
    %p556 = pneg %p555
    // Predicated region
    $region89: #{bottlenet_forward.1} parent=5 // pred_check
      _
    $region90: #{bottlenet_forward.1} parent=5 // pred_check_branch
      %558 = sbr.rel (%p555) target = $region92
    $region91: #{bottlenet_forward.1} parent=5 // pred_region
      %s559 = ssub.s32 %s26, 1
      %s560 = smul.u32 2, %s31
      %p561 = scmp.lt.s32.totalorder %s560, 3
      %s562 = scalar_select %p561, %s560, 3
      %s563 = smul.addr %s562, 2
      %s564 = smul.addr %s563, 4
      %s565 = scalar_lea.vmem %s0, %s564
      %p566 = pneg %p52
      %p567 = pneg %p49
      %s568 = smul.u32 2, %s31
      %p569 = scmp.lt.s32.totalorder %s568, 3
      %s570 = scalar_select %p569, %s568, 3
      %s571 = smul.addr %s570, 2
      %s572 = smul.addr %s571, 4
      %s573 = scalar_lea.vmem %s1, %s572
      %p574 = pneg %p78
      %p575 = pneg %p75
      %p576 = pneg %p99
      %p577 = pneg %p96
      %p578 = pneg %p120
      %p579 = pneg %p117
      %p580 = pneg %p141
      %p581 = pneg %p138
      %p582 = pneg %p162
      %p583 = pneg %p159
      %p584 = pneg %p183
      %p585 = pneg %p180
      %p586 = pneg %p204
      %p587 = pneg %p201
      %p588 = pneg %p225
      %p589 = pneg %p222
      %p590 = pneg %p246
      %p591 = pneg %p243
      %p592 = pneg %p267
      %p593 = pneg %p264
      %p594 = pneg %p288
      %p595 = pneg %p285
      %p596 = pneg %p309
      %p597 = pneg %p306
      %p598 = pneg %p330
      %p599 = pneg %p327
      %p600 = pneg %p351
      %p601 = pneg %p348
      %p602 = pneg %p372
      %p603 = pneg %p369
      %p604 = pneg %p393
      %p605 = pneg %p390
      %p606 = pneg %p414
      %p607 = pneg %p411
      %p608 = pneg %p440
      %p609 = pneg %p437
      %s610 = smul.u32 2, %s31
      %p611 = scmp.lt.s32.totalorder %s610, 3
      %s612 = scalar_select %p611, %s610, 3
      %s613 = smul.addr %s612, 2
      %s614 = smul.addr %s613, 8
      %s615 = scalar_lea.vmem %s18, %s614
      %p616 = pneg %p466
      %p617 = pneg %p463
      %s618 = smul.u32 2, %s31
      %p619 = scmp.lt.s32.totalorder %s618, 3
      %s620 = scalar_select %p619, %s618, 3
      %s621 = smul.addr %s620, 2
      %s622 = smul.addr %s621, 4
      %s623 = scalar_lea.vmem %s19, %s622
      %s624 = smul.u32 2, %s31
      %p625 = scmp.lt.s32.totalorder %s624, 3
      %s626 = scalar_select %p625, %s624, 3
      %s627 = smul.addr %s626, 2
      %s628 = smul.addr %s627, 4
      %s629 = scalar_lea.vmem %s0, %s628
      %s630 = smul.u32 2, %s31
      %s631 = smul.u32 2, %s31
      %p632 = scmp.lt.s32.totalorder %s631, 3
      %s633 = scalar_select %p632, %s631, 3
      %s634 = smul.addr %s633, 2
      %s635 = smul.addr %s634, 4
      %s636 = scalar_lea.vmem %s1, %s635
      %s637 = smul.u32 2, %s31
      %s638 = smul.u32 2, %s31
      %p639 = scmp.lt.s32.totalorder %s638, 3
      %s640 = scalar_select %p639, %s638, 3
      %s641 = smul.addr %s640, 2
      %s642 = smul.addr %s641, 8
      %s643 = scalar_lea.vmem %s18, %s642
      %s644 = smul.u32 2, %s31
      %s645 = smul.u32 2, %s31
      %p646 = scmp.lt.s32.totalorder %s645, 3
      %s647 = scalar_select %p646, %s645, 3
      %s648 = smul.addr %s647, 2
      %s649 = smul.addr %s648, 4
      %s650 = scalar_lea.vmem %s19, %s649
      %s651 = smul.u32 2, %s31
      %v652 = vld [vmem:[%s2] sm:$0x7]
      %v653 = vld [vmem:[%s636] sm:$0x77]
      %v654 = vld [vmem:[%s629] sm:$0x77]
      %656 = vset.pattern.permute.xlu0 0
      %657 = vperm.xlu0 %656, %v652
      %v658 = vpop.permute.xlu0 %657
      %v661 = vcombine.high %v653, %v653
      %v663 = vmul.f32 %v658, %v653
      %v664 = vmul.f32 %v658, %v661
      %v667 = vcombine.low %v663, %v664
      %v669 = vadd.f32 %v654, %v667
      %v670 = vmul.f32 %v653, -0.5
      %v671 = vmul.f32 %v670, %v653
      %672 = vst [vmem:[%s650] sm:$0x77] %v671
      %v673 = vld [vmem:[%s10] sm:$0xff]
      %v674 = vld [vmem:[%s10 + $0x8] sm:$0x3]
      %v675 = vld [vmem:[%s11] sm:$0xff]
      %v676 = vld [vmem:[%s11 + $0x8] sm:$0x3]
      %678 = vset.pattern.permute.xlu0 0
      %679 = vperm.xlu0 %678, %v675
      %v680 = vpop.permute.xlu0 %679
      %683 = vset.pattern.permute.xlu0 0
      %684 = vperm.xlu0 %683, %v676
      %v685 = vpop.permute.xlu0 %684
      %v688 = vcombine.high %v669, %v669
      %vm689 = vcmask 23552
      %v691 = vsel %vm689, %v673, 0
      %v694 = vsel %vm689, %v674, 0
      %vm696 = vcmask 1042432
      %v697 = vsel %vm696, %v669, 0
      %v699 = vsel %vm696, %v688, 0
      %701 = vmatprep.subr.mxu0 0.0
      %702 = vmatpush1.msra.mxu0 0.0
      %703 = vmatprep.subr.mxu0 0.0
      %704 = vmatpush1.msra.mxu0 0.0
      %705 = vmatprep.subr.mxu0 0.0
      %706 = vmatpush1.msra.mxu0 0.0
      %707 = vmatprep.subr.mxu0 0.0
      %708 = vmatpush1.msra.mxu0 0.0
      %709 = vmatprep.subr.mxu0 0.0
      %710 = vmatpush1.msra.mxu0 0.0
      %711 = vmatprep.subr.mxu0 0.0
      %712 = vmatpush1.msra.mxu0 0.0
      %713 = vmatprep.subr.mxu0 0.0
      %714 = vmatpush1.msra.mxu0 0.0
      %715 = vmatprep.subr.mxu0 0.0
      %716 = vmatpush1.msra.mxu0 0.0
      %717 = vmatprep.subr.mxu0 0.0
      %718 = vmatpush1.msra.mxu0 0.0
      %719 = vmatprep.subr.mxu0 0.0
      %720 = vmatpush1.msra.mxu0 0.0
      %721 = vmatprep.subr.mxu0 0.0
      %722 = vmatpush1.msra.mxu0 0.0
      %723 = vmatprep.subr.mxu0 0.0
      %724 = vmatpush1.msra.mxu0 0.0
      %725 = vmatprep.subr.mxu0 0.0
      %726 = vmatpush1.msra.mxu0 0.0
      %727 = vmatprep.subr.mxu0 0.0
      %728 = vmatpush1.msra.mxu0 0.0
      %729 = vmatprep.subr.mxu0 0.0
      %730 = vmatpush1.msra.mxu0 0.0
      %731 = vmatprep.subr.mxu0 %v699
      %732 = vmatpush1.msra.mxu0 %v697
      %733 = vmatprep.subr.mxu0 0.0
      %734 = vmatpush2.msra.mxu0 0.0
      %735 = vmatprep.subr.mxu0 0.0
      %736 = vmatpush2.msra.mxu0 0.0
      %737 = vmatprep.subr.mxu0 0.0
      %738 = vmatpush2.msra.mxu0 0.0
      %739 = vmatprep.subr.mxu0 0.0
      %740 = vmatpush2.msra.mxu0 0.0
      %741 = vmatprep.subr.mxu0 0.0
      %742 = vmatpush2.msra.mxu0 0.0
      %743 = vmatprep.subr.mxu0 0.0
      %744 = vmatpush2.msra.mxu0 0.0
      %745 = vmatprep.subr.mxu0 0.0
      %746 = vmatpush2.msra.mxu0 0.0
      %747 = vmatprep.subr.mxu0 0.0
      %748 = vmatpush2.msra.mxu0 0.0
      %749 = vmatprep.subr.mxu0 0.0
      %750 = vmatpush2.msra.mxu0 0.0
      %751 = vmatprep.subr.mxu0 0.0
      %752 = vmatpush2.msra.mxu0 0.0
      %753 = vmatprep.subr.mxu0 0.0
      %754 = vmatpush2.msra.mxu0 0.0
      %755 = vmatprep.subr.mxu0 0.0
      %756 = vmatpush2.msra.mxu0 0.0
      %757 = vmatprep.subr.mxu0 0.0
      %758 = vmatpush2.msra.mxu0 0.0
      %759 = vmatprep.subr.mxu0 0.0
      %760 = vmatpush2.msra.mxu0 0.0
      %761 = vmatprep.subr.mxu0 0.0
      %762 = vmatpush2.msra.mxu0 0.0
      %763 = vmatprep.subr.mxu0 0.0
      %764 = vmatpush2.msra.mxu0 0.0
      %765 = vmatprep.mubr.f32.mxu0 0.0
      %766 = vmatmul.mubr.f32.gmra.mxu0 %v691
      %v767 = vpop.f32.mrf.mxu0
      %v768 = vadd.f32 %v680, %v767
      %v769 = vpop.f32.mrf.mxu0
      %v770 = vadd.f32 %v680, %v769
      %771 = vmatprep.mubr.f32.mxu0 0.0
      %772 = vmatmul.mubr.f32.gmra.mxu0 %v694
      %v773 = vpop.f32.mrf.mxu0
      %v774 = vadd.f32 %v685, %v773
      %v775 = vpop.f32.mrf.mxu0
      %v776 = vadd.f32 %v685, %v775
      %777 = vdwg.mxu0
      %v778 = vmax.f32 %v768, %v770
      %779 = vmax.xlane.f32.xlu0 %v778
      %v780 = vpop.xlane.xlu0 %779
      %vm781 = vcmask 1041408
      %v782 = vsel %vm781, %v774, -inf
      %v783 = vsel %vm781, %v776, -inf
      %v784 = vmax.f32 %v782, %v783
      %785 = vmax.xlane.f32.xlu0 %v784
      %v786 = vpop.xlane.xlu0 %785
      %v787 = vsub.f32 %v768, %v780
      %v788 = vsub.f32 %v770, %v780
      %v789 = vsub.f32 %v774, %v786
      %v790 = vsub.f32 %v776, %v786
      %v791 = vmul.f32 %v787, 1.442695
      %v792 = vpow.pop %v791
      %v793 = vmul.f32 %v788, 1.442695
      %v794 = vpow.pop %v793
      %v795 = vmul.f32 %v789, 1.442695
      %v796 = vpow.pop %v795
      %v797 = vmul.f32 %v790, 1.442695
      %v798 = vpow.pop %v797
      %v799 = vadd.f32 %v792, %v794
      %800 = vadd.xlane.f32.xlu0 %v799
      %v801 = vpop.xlane.xlu0 %800
      %v802 = vsel %vm781, %v796, 0.0
      %v803 = vsel %vm781, %v798, 0.0
      %v804 = vadd.f32 %v802, %v803
      %805 = vadd.xlane.f32.xlu0 %v804
      %v806 = vpop.xlane.xlu0 %805
      %v807 = vlog2.pop %v801
      %v808 = vmul.f32 %v807, 0.6931472
      %v809 = vlog2.pop %v806
      %v810 = vmul.f32 %v809, 0.6931472
      %v811 = vadd.f32 %v780, %v808
      %v812 = vadd.f32 %v786, %v810
      %v813 = vld [vmem:[%s4] sm:$0xff]
      %815 = vrot.lane.b32.xlu0 %v669, 127
      %v816 = vpop.permute.xlu0 %815
      %817 = vrot.lane.b32.xlu0 %v688, 127
      %v818 = vpop.permute.xlu0 %817
      %v819 = vlaneseq
      %v820 = vand.u32 %v819, 127
      %vm821 = vcmp.lt.s32.totalorder %v820, 127
      %v822 = vsel %vm821, %v816, %v818
      %v823 = vsel %vm821, %v818, %v816
      %s824 = scalar_lea.vmem %s4, 8
      %v825 = vld [vmem:[%s824] sm:$0xff]
      %v827 = vsel %vm689, %v825, 0
      %v830 = vsel %vm696, %v822, 0
      %v833 = vsel %vm696, %v823, 0
      %835 = vmatprep.subr.mxu0 0.0
      %836 = vmatpush1.msra.mxu0 0.0
      %837 = vmatprep.subr.mxu0 0.0
      %838 = vmatpush1.msra.mxu0 0.0
      %839 = vmatprep.subr.mxu0 0.0
      %840 = vmatpush1.msra.mxu0 0.0
      %841 = vmatprep.subr.mxu0 0.0
      %842 = vmatpush1.msra.mxu0 0.0
      %843 = vmatprep.subr.mxu0 0.0
      %844 = vmatpush1.msra.mxu0 0.0
      %845 = vmatprep.subr.mxu0 0.0
      %846 = vmatpush1.msra.mxu0 0.0
      %847 = vmatprep.subr.mxu0 0.0
      %848 = vmatpush1.msra.mxu0 0.0
      %849 = vmatprep.subr.mxu0 0.0
      %850 = vmatpush1.msra.mxu0 0.0
      %851 = vmatprep.subr.mxu0 0.0
      %852 = vmatpush1.msra.mxu0 0.0
      %853 = vmatprep.subr.mxu0 0.0
      %854 = vmatpush1.msra.mxu0 0.0
      %855 = vmatprep.subr.mxu0 0.0
      %856 = vmatpush1.msra.mxu0 0.0
      %857 = vmatprep.subr.mxu0 0.0
      %858 = vmatpush1.msra.mxu0 0.0
      %859 = vmatprep.subr.mxu0 0.0
      %860 = vmatpush1.msra.mxu0 0.0
      %861 = vmatprep.subr.mxu0 0.0
      %862 = vmatpush1.msra.mxu0 0.0
      %863 = vmatprep.subr.mxu0 0.0
      %864 = vmatpush1.msra.mxu0 0.0
      %865 = vmatprep.subr.mxu0 %v833
      %866 = vmatpush1.msra.mxu0 %v830
      %867 = vmatprep.subr.mxu0 0.0
      %868 = vmatpush2.msra.mxu0 0.0
      %869 = vmatprep.subr.mxu0 0.0
      %870 = vmatpush2.msra.mxu0 0.0
      %871 = vmatprep.subr.mxu0 0.0
      %872 = vmatpush2.msra.mxu0 0.0
      %873 = vmatprep.subr.mxu0 0.0
      %874 = vmatpush2.msra.mxu0 0.0
      %875 = vmatprep.subr.mxu0 0.0
      %876 = vmatpush2.msra.mxu0 0.0
      %877 = vmatprep.subr.mxu0 0.0
      %878 = vmatpush2.msra.mxu0 0.0
      %879 = vmatprep.subr.mxu0 0.0
      %880 = vmatpush2.msra.mxu0 0.0
      %881 = vmatprep.subr.mxu0 0.0
      %882 = vmatpush2.msra.mxu0 0.0
      %883 = vmatprep.subr.mxu0 0.0
      %884 = vmatpush2.msra.mxu0 0.0
      %885 = vmatprep.subr.mxu0 0.0
      %886 = vmatpush2.msra.mxu0 0.0
      %887 = vmatprep.subr.mxu0 0.0
      %888 = vmatpush2.msra.mxu0 0.0
      %889 = vmatprep.subr.mxu0 0.0
      %890 = vmatpush2.msra.mxu0 0.0
      %891 = vmatprep.subr.mxu0 0.0
      %892 = vmatpush2.msra.mxu0 0.0
      %893 = vmatprep.subr.mxu0 0.0
      %894 = vmatpush2.msra.mxu0 0.0
      %895 = vmatprep.subr.mxu0 0.0
      %896 = vmatpush2.msra.mxu0 0.0
      %897 = vmatprep.subr.mxu0 0.0
      %898 = vmatpush2.msra.mxu0 0.0
      %899 = vmatprep.mubr.f32.mxu0 0.0
      %900 = vmatmul.mubr.f32.gmra.mxu0 %v827
      %v901 = vpop.f32.mrf.mxu0
      %v902 = vadd.f32 0.0, %v901
      %v903 = vpop.f32.mrf.mxu0
      %v904 = vadd.f32 0.0, %v903
      %905 = vdwg.mxu0
      %v907 = vsel %vm689, %v813, 0
      %909 = vmatprep.subr.mxu0 0.0
      %910 = vmatpush1.msra.mxu0 0.0
      %911 = vmatprep.subr.mxu0 0.0
      %912 = vmatpush1.msra.mxu0 0.0
      %913 = vmatprep.subr.mxu0 0.0
      %914 = vmatpush1.msra.mxu0 0.0
      %915 = vmatprep.subr.mxu0 0.0
      %916 = vmatpush1.msra.mxu0 0.0
      %917 = vmatprep.subr.mxu0 0.0
      %918 = vmatpush1.msra.mxu0 0.0
      %919 = vmatprep.subr.mxu0 0.0
      %920 = vmatpush1.msra.mxu0 0.0
      %921 = vmatprep.subr.mxu0 0.0
      %922 = vmatpush1.msra.mxu0 0.0
      %923 = vmatprep.subr.mxu0 0.0
      %924 = vmatpush1.msra.mxu0 0.0
      %925 = vmatprep.subr.mxu0 0.0
      %926 = vmatpush1.msra.mxu0 0.0
      %927 = vmatprep.subr.mxu0 0.0
      %928 = vmatpush1.msra.mxu0 0.0
      %929 = vmatprep.subr.mxu0 0.0
      %930 = vmatpush1.msra.mxu0 0.0
      %931 = vmatprep.subr.mxu0 0.0
      %932 = vmatpush1.msra.mxu0 0.0
      %933 = vmatprep.subr.mxu0 0.0
      %934 = vmatpush1.msra.mxu0 0.0
      %935 = vmatprep.subr.mxu0 0.0
      %936 = vmatpush1.msra.mxu0 0.0
      %937 = vmatprep.subr.mxu0 0.0
      %938 = vmatpush1.msra.mxu0 0.0
      %939 = vmatprep.subr.mxu0 %v699
      %940 = vmatpush1.msra.mxu0 %v697
      %941 = vmatprep.subr.mxu0 0.0
      %942 = vmatpush2.msra.mxu0 0.0
      %943 = vmatprep.subr.mxu0 0.0
      %944 = vmatpush2.msra.mxu0 0.0
      %945 = vmatprep.subr.mxu0 0.0
      %946 = vmatpush2.msra.mxu0 0.0
      %947 = vmatprep.subr.mxu0 0.0
      %948 = vmatpush2.msra.mxu0 0.0
      %949 = vmatprep.subr.mxu0 0.0
      %950 = vmatpush2.msra.mxu0 0.0
      %951 = vmatprep.subr.mxu0 0.0
      %952 = vmatpush2.msra.mxu0 0.0
      %953 = vmatprep.subr.mxu0 0.0
      %954 = vmatpush2.msra.mxu0 0.0
      %955 = vmatprep.subr.mxu0 0.0
      %956 = vmatpush2.msra.mxu0 0.0
      %957 = vmatprep.subr.mxu0 0.0
      %958 = vmatpush2.msra.mxu0 0.0
      %959 = vmatprep.subr.mxu0 0.0
      %960 = vmatpush2.msra.mxu0 0.0
      %961 = vmatprep.subr.mxu0 0.0
      %962 = vmatpush2.msra.mxu0 0.0
      %963 = vmatprep.subr.mxu0 0.0
      %964 = vmatpush2.msra.mxu0 0.0
      %965 = vmatprep.subr.mxu0 0.0
      %966 = vmatpush2.msra.mxu0 0.0
      %967 = vmatprep.subr.mxu0 0.0
      %968 = vmatpush2.msra.mxu0 0.0
      %969 = vmatprep.subr.mxu0 0.0
      %970 = vmatpush2.msra.mxu0 0.0
      %971 = vmatprep.subr.mxu0 0.0
      %972 = vmatpush2.msra.mxu0 0.0
      %973 = vmatprep.mubr.f32.mxu0 0.0
      %974 = vmatmul.mubr.f32.gmra.mxu0 %v907
      %v975 = vpop.f32.mrf.mxu0
      %v976 = vadd.f32 %v902, %v975
      %v977 = vpop.f32.mrf.mxu0
      %v978 = vadd.f32 %v904, %v977
      %979 = vdwg.mxu0
      %980 = vrot.lane.b32.xlu0 %v669, 126
      %v981 = vpop.permute.xlu0 %980
      %982 = vrot.lane.b32.xlu0 %v688, 126
      %v983 = vpop.permute.xlu0 %982
      %vm984 = vcmp.lt.s32.totalorder %v820, 126
      %v985 = vsel %vm984, %v981, %v983
      %v986 = vsel %vm984, %v983, %v981
      %s987 = scalar_lea.vmem %s4, 16
      %v988 = vld [vmem:[%s987] sm:$0xff]
      %v990 = vsel %vm689, %v988, 0
      %v993 = vsel %vm696, %v985, 0
      %v996 = vsel %vm696, %v986, 0
      %998 = vmatprep.subr.mxu0 0.0
      %999 = vmatpush1.msra.mxu0 0.0
      %1000 = vmatprep.subr.mxu0 0.0
      %1001 = vmatpush1.msra.mxu0 0.0
      %1002 = vmatprep.subr.mxu0 0.0
      %1003 = vmatpush1.msra.mxu0 0.0
      %1004 = vmatprep.subr.mxu0 0.0
      %1005 = vmatpush1.msra.mxu0 0.0
      %1006 = vmatprep.subr.mxu0 0.0
      %1007 = vmatpush1.msra.mxu0 0.0
      %1008 = vmatprep.subr.mxu0 0.0
      %1009 = vmatpush1.msra.mxu0 0.0
      %1010 = vmatprep.subr.mxu0 0.0
      %1011 = vmatpush1.msra.mxu0 0.0
      %1012 = vmatprep.subr.mxu0 0.0
      %1013 = vmatpush1.msra.mxu0 0.0
      %1014 = vmatprep.subr.mxu0 0.0
      %1015 = vmatpush1.msra.mxu0 0.0
      %1016 = vmatprep.subr.mxu0 0.0
      %1017 = vmatpush1.msra.mxu0 0.0
      %1018 = vmatprep.subr.mxu0 0.0
      %1019 = vmatpush1.msra.mxu0 0.0
      %1020 = vmatprep.subr.mxu0 0.0
      %1021 = vmatpush1.msra.mxu0 0.0
      %1022 = vmatprep.subr.mxu0 0.0
      %1023 = vmatpush1.msra.mxu0 0.0
      %1024 = vmatprep.subr.mxu0 0.0
      %1025 = vmatpush1.msra.mxu0 0.0
      %1026 = vmatprep.subr.mxu0 0.0
      %1027 = vmatpush1.msra.mxu0 0.0
      %1028 = vmatprep.subr.mxu0 %v996
      %1029 = vmatpush1.msra.mxu0 %v993
      %1030 = vmatprep.subr.mxu0 0.0
      %1031 = vmatpush2.msra.mxu0 0.0
      %1032 = vmatprep.subr.mxu0 0.0
      %1033 = vmatpush2.msra.mxu0 0.0
      %1034 = vmatprep.subr.mxu0 0.0
      %1035 = vmatpush2.msra.mxu0 0.0
      %1036 = vmatprep.subr.mxu0 0.0
      %1037 = vmatpush2.msra.mxu0 0.0
      %1038 = vmatprep.subr.mxu0 0.0
      %1039 = vmatpush2.msra.mxu0 0.0
      %1040 = vmatprep.subr.mxu0 0.0
      %1041 = vmatpush2.msra.mxu0 0.0
      %1042 = vmatprep.subr.mxu0 0.0
      %1043 = vmatpush2.msra.mxu0 0.0
      %1044 = vmatprep.subr.mxu0 0.0
      %1045 = vmatpush2.msra.mxu0 0.0
      %1046 = vmatprep.subr.mxu0 0.0
      %1047 = vmatpush2.msra.mxu0 0.0
      %1048 = vmatprep.subr.mxu0 0.0
      %1049 = vmatpush2.msra.mxu0 0.0
      %1050 = vmatprep.subr.mxu0 0.0
      %1051 = vmatpush2.msra.mxu0 0.0
      %1052 = vmatprep.subr.mxu0 0.0
      %1053 = vmatpush2.msra.mxu0 0.0
      %1054 = vmatprep.subr.mxu0 0.0
      %1055 = vmatpush2.msra.mxu0 0.0
      %1056 = vmatprep.subr.mxu0 0.0
      %1057 = vmatpush2.msra.mxu0 0.0
      %1058 = vmatprep.subr.mxu0 0.0
      %1059 = vmatpush2.msra.mxu0 0.0
      %1060 = vmatprep.subr.mxu0 0.0
      %1061 = vmatpush2.msra.mxu0 0.0
      %1062 = vmatprep.mubr.f32.mxu0 0.0
      %1063 = vmatmul.mubr.f32.gmra.mxu0 %v990
      %v1064 = vpop.f32.mrf.mxu0
      %v1065 = vadd.f32 0.0, %v1064
      %v1066 = vpop.f32.mrf.mxu0
      %v1067 = vadd.f32 0.0, %v1066
      %1068 = vdwg.mxu0
      %v1069 = vadd.f32 %v976, %v1065
      %v1070 = vadd.f32 %v978, %v1067
      %1071 = vrot.lane.b32.xlu0 %v669, 112
      %v1072 = vpop.permute.xlu0 %1071
      %1073 = vrot.lane.b32.xlu0 %v688, 112
      %v1074 = vpop.permute.xlu0 %1073
      %vm1075 = vcmp.lt.s32.totalorder %v820, 112
      %v1076 = vsel %vm1075, %v1072, %v1074
      %v1077 = vsel %vm1075, %v1074, %v1072
      %s1078 = scalar_lea.vmem %s4, 24
      %v1079 = vld [vmem:[%s1078] sm:$0xff]
      %v1081 = vsel %vm689, %v1079, 0
      %v1084 = vsel %vm696, %v1076, 0
      %v1087 = vsel %vm696, %v1077, 0
      %1089 = vmatprep.subr.mxu0 0.0
      %1090 = vmatpush1.msra.mxu0 0.0
      %1091 = vmatprep.subr.mxu0 0.0
      %1092 = vmatpush1.msra.mxu0 0.0
      %1093 = vmatprep.subr.mxu0 0.0
      %1094 = vmatpush1.msra.mxu0 0.0
      %1095 = vmatprep.subr.mxu0 0.0
      %1096 = vmatpush1.msra.mxu0 0.0
      %1097 = vmatprep.subr.mxu0 0.0
      %1098 = vmatpush1.msra.mxu0 0.0
      %1099 = vmatprep.subr.mxu0 0.0
      %1100 = vmatpush1.msra.mxu0 0.0
      %1101 = vmatprep.subr.mxu0 0.0
      %1102 = vmatpush1.msra.mxu0 0.0
      %1103 = vmatprep.subr.mxu0 0.0
      %1104 = vmatpush1.msra.mxu0 0.0
      %1105 = vmatprep.subr.mxu0 0.0
      %1106 = vmatpush1.msra.mxu0 0.0
      %1107 = vmatprep.subr.mxu0 0.0
      %1108 = vmatpush1.msra.mxu0 0.0
      %1109 = vmatprep.subr.mxu0 0.0
      %1110 = vmatpush1.msra.mxu0 0.0
      %1111 = vmatprep.subr.mxu0 0.0
      %1112 = vmatpush1.msra.mxu0 0.0
      %1113 = vmatprep.subr.mxu0 0.0
      %1114 = vmatpush1.msra.mxu0 0.0
      %1115 = vmatprep.subr.mxu0 0.0
      %1116 = vmatpush1.msra.mxu0 0.0
      %1117 = vmatprep.subr.mxu0 0.0
      %1118 = vmatpush1.msra.mxu0 0.0
      %1119 = vmatprep.subr.mxu0 %v1087
      %1120 = vmatpush1.msra.mxu0 %v1084
      %1121 = vmatprep.subr.mxu0 0.0
      %1122 = vmatpush2.msra.mxu0 0.0
      %1123 = vmatprep.subr.mxu0 0.0
      %1124 = vmatpush2.msra.mxu0 0.0
      %1125 = vmatprep.subr.mxu0 0.0
      %1126 = vmatpush2.msra.mxu0 0.0
      %1127 = vmatprep.subr.mxu0 0.0
      %1128 = vmatpush2.msra.mxu0 0.0
      %1129 = vmatprep.subr.mxu0 0.0
      %1130 = vmatpush2.msra.mxu0 0.0
      %1131 = vmatprep.subr.mxu0 0.0
      %1132 = vmatpush2.msra.mxu0 0.0
      %1133 = vmatprep.subr.mxu0 0.0
      %1134 = vmatpush2.msra.mxu0 0.0
      %1135 = vmatprep.subr.mxu0 0.0
      %1136 = vmatpush2.msra.mxu0 0.0
      %1137 = vmatprep.subr.mxu0 0.0
      %1138 = vmatpush2.msra.mxu0 0.0
      %1139 = vmatprep.subr.mxu0 0.0
      %1140 = vmatpush2.msra.mxu0 0.0
      %1141 = vmatprep.subr.mxu0 0.0
      %1142 = vmatpush2.msra.mxu0 0.0
      %1143 = vmatprep.subr.mxu0 0.0
      %1144 = vmatpush2.msra.mxu0 0.0
      %1145 = vmatprep.subr.mxu0 0.0
      %1146 = vmatpush2.msra.mxu0 0.0
      %1147 = vmatprep.subr.mxu0 0.0
      %1148 = vmatpush2.msra.mxu0 0.0
      %1149 = vmatprep.subr.mxu0 0.0
      %1150 = vmatpush2.msra.mxu0 0.0
      %1151 = vmatprep.subr.mxu0 0.0
      %1152 = vmatpush2.msra.mxu0 0.0
      %1153 = vmatprep.mubr.f32.mxu0 0.0
      %1154 = vmatmul.mubr.f32.gmra.mxu0 %v1081
      %v1155 = vpop.f32.mrf.mxu0
      %v1156 = vadd.f32 0.0, %v1155
      %v1157 = vpop.f32.mrf.mxu0
      %v1158 = vadd.f32 0.0, %v1157
      %1159 = vdwg.mxu0
      %v1160 = vadd.f32 %v1069, %v1156
      %v1161 = vadd.f32 %v1070, %v1158
      %1162 = vrot.lane.b32.xlu0 %v669, 111
      %v1163 = vpop.permute.xlu0 %1162
      %1164 = vrot.lane.b32.xlu0 %v688, 111
      %v1165 = vpop.permute.xlu0 %1164
      %vm1166 = vcmp.lt.s32.totalorder %v820, 111
      %v1167 = vsel %vm1166, %v1163, %v1165
      %v1168 = vsel %vm1166, %v1165, %v1163
      %s1169 = scalar_lea.vmem %s4, 32
      %v1170 = vld [vmem:[%s1169] sm:$0xff]
      %v1172 = vsel %vm689, %v1170, 0
      %v1175 = vsel %vm696, %v1167, 0
      %v1178 = vsel %vm696, %v1168, 0
      %1180 = vmatprep.subr.mxu0 0.0
      %1181 = vmatpush1.msra.mxu0 0.0
      %1182 = vmatprep.subr.mxu0 0.0
      %1183 = vmatpush1.msra.mxu0 0.0
      %1184 = vmatprep.subr.mxu0 0.0
      %1185 = vmatpush1.msra.mxu0 0.0
      %1186 = vmatprep.subr.mxu0 0.0
      %1187 = vmatpush1.msra.mxu0 0.0
      %1188 = vmatprep.subr.mxu0 0.0
      %1189 = vmatpush1.msra.mxu0 0.0
      %1190 = vmatprep.subr.mxu0 0.0
      %1191 = vmatpush1.msra.mxu0 0.0
      %1192 = vmatprep.subr.mxu0 0.0
      %1193 = vmatpush1.msra.mxu0 0.0
      %1194 = vmatprep.subr.mxu0 0.0
      %1195 = vmatpush1.msra.mxu0 0.0
      %1196 = vmatprep.subr.mxu0 0.0
      %1197 = vmatpush1.msra.mxu0 0.0
      %1198 = vmatprep.subr.mxu0 0.0
      %1199 = vmatpush1.msra.mxu0 0.0
      %1200 = vmatprep.subr.mxu0 0.0
      %1201 = vmatpush1.msra.mxu0 0.0
      %1202 = vmatprep.subr.mxu0 0.0
      %1203 = vmatpush1.msra.mxu0 0.0
      %1204 = vmatprep.subr.mxu0 0.0
      %1205 = vmatpush1.msra.mxu0 0.0
      %1206 = vmatprep.subr.mxu0 0.0
      %1207 = vmatpush1.msra.mxu0 0.0
      %1208 = vmatprep.subr.mxu0 0.0
      %1209 = vmatpush1.msra.mxu0 0.0
      %1210 = vmatprep.subr.mxu0 %v1178
      %1211 = vmatpush1.msra.mxu0 %v1175
      %1212 = vmatprep.subr.mxu0 0.0
      %1213 = vmatpush2.msra.mxu0 0.0
      %1214 = vmatprep.subr.mxu0 0.0
      %1215 = vmatpush2.msra.mxu0 0.0
      %1216 = vmatprep.subr.mxu0 0.0
      %1217 = vmatpush2.msra.mxu0 0.0
      %1218 = vmatprep.subr.mxu0 0.0
      %1219 = vmatpush2.msra.mxu0 0.0
      %1220 = vmatprep.subr.mxu0 0.0
      %1221 = vmatpush2.msra.mxu0 0.0
      %1222 = vmatprep.subr.mxu0 0.0
      %1223 = vmatpush2.msra.mxu0 0.0
      %1224 = vmatprep.subr.mxu0 0.0
      %1225 = vmatpush2.msra.mxu0 0.0
      %1226 = vmatprep.subr.mxu0 0.0
      %1227 = vmatpush2.msra.mxu0 0.0
      %1228 = vmatprep.subr.mxu0 0.0
      %1229 = vmatpush2.msra.mxu0 0.0
      %1230 = vmatprep.subr.mxu0 0.0
      %1231 = vmatpush2.msra.mxu0 0.0
      %1232 = vmatprep.subr.mxu0 0.0
      %1233 = vmatpush2.msra.mxu0 0.0
      %1234 = vmatprep.subr.mxu0 0.0
      %1235 = vmatpush2.msra.mxu0 0.0
      %1236 = vmatprep.subr.mxu0 0.0
      %1237 = vmatpush2.msra.mxu0 0.0
      %1238 = vmatprep.subr.mxu0 0.0
      %1239 = vmatpush2.msra.mxu0 0.0
      %1240 = vmatprep.subr.mxu0 0.0
      %1241 = vmatpush2.msra.mxu0 0.0
      %1242 = vmatprep.subr.mxu0 0.0
      %1243 = vmatpush2.msra.mxu0 0.0
      %1244 = vmatprep.mubr.f32.mxu0 0.0
      %1245 = vmatmul.mubr.f32.gmra.mxu0 %v1172
      %v1246 = vpop.f32.mrf.mxu0
      %v1247 = vadd.f32 0.0, %v1246
      %v1248 = vpop.f32.mrf.mxu0
      %v1249 = vadd.f32 0.0, %v1248
      %1250 = vdwg.mxu0
      %v1251 = vadd.f32 %v1160, %v1247
      %v1252 = vadd.f32 %v1161, %v1249
      %1253 = vrot.lane.b32.xlu0 %v669, 110
      %v1254 = vpop.permute.xlu0 %1253
      %1255 = vrot.lane.b32.xlu0 %v688, 110
      %v1256 = vpop.permute.xlu0 %1255
      %vm1257 = vcmp.lt.s32.totalorder %v820, 110
      %v1258 = vsel %vm1257, %v1254, %v1256
      %v1259 = vsel %vm1257, %v1256, %v1254
      %s1260 = scalar_lea.vmem %s4, 40
      %v1261 = vld [vmem:[%s1260] sm:$0xff]
      %v1263 = vsel %vm689, %v1261, 0
      %v1266 = vsel %vm696, %v1258, 0
      %v1269 = vsel %vm696, %v1259, 0
      %1271 = vmatprep.subr.mxu0 0.0
      %1272 = vmatpush1.msra.mxu0 0.0
      %1273 = vmatprep.subr.mxu0 0.0
      %1274 = vmatpush1.msra.mxu0 0.0
      %1275 = vmatprep.subr.mxu0 0.0
      %1276 = vmatpush1.msra.mxu0 0.0
      %1277 = vmatprep.subr.mxu0 0.0
      %1278 = vmatpush1.msra.mxu0 0.0
      %1279 = vmatprep.subr.mxu0 0.0
      %1280 = vmatpush1.msra.mxu0 0.0
      %1281 = vmatprep.subr.mxu0 0.0
      %1282 = vmatpush1.msra.mxu0 0.0
      %1283 = vmatprep.subr.mxu0 0.0
      %1284 = vmatpush1.msra.mxu0 0.0
      %1285 = vmatprep.subr.mxu0 0.0
      %1286 = vmatpush1.msra.mxu0 0.0
      %1287 = vmatprep.subr.mxu0 0.0
      %1288 = vmatpush1.msra.mxu0 0.0
      %1289 = vmatprep.subr.mxu0 0.0
      %1290 = vmatpush1.msra.mxu0 0.0
      %1291 = vmatprep.subr.mxu0 0.0
      %1292 = vmatpush1.msra.mxu0 0.0
      %1293 = vmatprep.subr.mxu0 0.0
      %1294 = vmatpush1.msra.mxu0 0.0
      %1295 = vmatprep.subr.mxu0 0.0
      %1296 = vmatpush1.msra.mxu0 0.0
      %1297 = vmatprep.subr.mxu0 0.0
      %1298 = vmatpush1.msra.mxu0 0.0
      %1299 = vmatprep.subr.mxu0 0.0
      %1300 = vmatpush1.msra.mxu0 0.0
      %1301 = vmatprep.subr.mxu0 %v1269
      %1302 = vmatpush1.msra.mxu0 %v1266
      %1303 = vmatprep.subr.mxu0 0.0
      %1304 = vmatpush2.msra.mxu0 0.0
      %1305 = vmatprep.subr.mxu0 0.0
      %1306 = vmatpush2.msra.mxu0 0.0
      %1307 = vmatprep.subr.mxu0 0.0
      %1308 = vmatpush2.msra.mxu0 0.0
      %1309 = vmatprep.subr.mxu0 0.0
      %1310 = vmatpush2.msra.mxu0 0.0
      %1311 = vmatprep.subr.mxu0 0.0
      %1312 = vmatpush2.msra.mxu0 0.0
      %1313 = vmatprep.subr.mxu0 0.0
      %1314 = vmatpush2.msra.mxu0 0.0
      %1315 = vmatprep.subr.mxu0 0.0
      %1316 = vmatpush2.msra.mxu0 0.0
      %1317 = vmatprep.subr.mxu0 0.0
      %1318 = vmatpush2.msra.mxu0 0.0
      %1319 = vmatprep.subr.mxu0 0.0
      %1320 = vmatpush2.msra.mxu0 0.0
      %1321 = vmatprep.subr.mxu0 0.0
      %1322 = vmatpush2.msra.mxu0 0.0
      %1323 = vmatprep.subr.mxu0 0.0
      %1324 = vmatpush2.msra.mxu0 0.0
      %1325 = vmatprep.subr.mxu0 0.0
      %1326 = vmatpush2.msra.mxu0 0.0
      %1327 = vmatprep.subr.mxu0 0.0
      %1328 = vmatpush2.msra.mxu0 0.0
      %1329 = vmatprep.subr.mxu0 0.0
      %1330 = vmatpush2.msra.mxu0 0.0
      %1331 = vmatprep.subr.mxu0 0.0
      %1332 = vmatpush2.msra.mxu0 0.0
      %1333 = vmatprep.subr.mxu0 0.0
      %1334 = vmatpush2.msra.mxu0 0.0
      %1335 = vmatprep.mubr.f32.mxu0 0.0
      %1336 = vmatmul.mubr.f32.gmra.mxu0 %v1263
      %v1337 = vpop.f32.mrf.mxu0
      %v1338 = vadd.f32 0.0, %v1337
      %v1339 = vpop.f32.mrf.mxu0
      %v1340 = vadd.f32 0.0, %v1339
      %1341 = vdwg.mxu0
      %v1342 = vadd.f32 %v1251, %v1338
      %v1343 = vadd.f32 %v1252, %v1340
      %1344 = vrot.lane.b32.xlu0 %v669, 96
      %v1345 = vpop.permute.xlu0 %1344
      %1346 = vrot.lane.b32.xlu0 %v688, 96
      %v1347 = vpop.permute.xlu0 %1346
      %vm1348 = vcmp.lt.s32.totalorder %v820, 96
      %v1349 = vsel %vm1348, %v1345, %v1347
      %v1350 = vsel %vm1348, %v1347, %v1345
      %s1351 = scalar_lea.vmem %s4, 48
      %v1352 = vld [vmem:[%s1351] sm:$0xff]
      %v1354 = vsel %vm689, %v1352, 0
      %v1357 = vsel %vm696, %v1349, 0
      %v1360 = vsel %vm696, %v1350, 0
      %1362 = vmatprep.subr.mxu0 0.0
      %1363 = vmatpush1.msra.mxu0 0.0
      %1364 = vmatprep.subr.mxu0 0.0
      %1365 = vmatpush1.msra.mxu0 0.0
      %1366 = vmatprep.subr.mxu0 0.0
      %1367 = vmatpush1.msra.mxu0 0.0
      %1368 = vmatprep.subr.mxu0 0.0
      %1369 = vmatpush1.msra.mxu0 0.0
      %1370 = vmatprep.subr.mxu0 0.0
      %1371 = vmatpush1.msra.mxu0 0.0
      %1372 = vmatprep.subr.mxu0 0.0
      %1373 = vmatpush1.msra.mxu0 0.0
      %1374 = vmatprep.subr.mxu0 0.0
      %1375 = vmatpush1.msra.mxu0 0.0
      %1376 = vmatprep.subr.mxu0 0.0
      %1377 = vmatpush1.msra.mxu0 0.0
      %1378 = vmatprep.subr.mxu0 0.0
      %1379 = vmatpush1.msra.mxu0 0.0
      %1380 = vmatprep.subr.mxu0 0.0
      %1381 = vmatpush1.msra.mxu0 0.0
      %1382 = vmatprep.subr.mxu0 0.0
      %1383 = vmatpush1.msra.mxu0 0.0
      %1384 = vmatprep.subr.mxu0 0.0
      %1385 = vmatpush1.msra.mxu0 0.0
      %1386 = vmatprep.subr.mxu0 0.0
      %1387 = vmatpush1.msra.mxu0 0.0
      %1388 = vmatprep.subr.mxu0 0.0
      %1389 = vmatpush1.msra.mxu0 0.0
      %1390 = vmatprep.subr.mxu0 0.0
      %1391 = vmatpush1.msra.mxu0 0.0
      %1392 = vmatprep.subr.mxu0 %v1360
      %1393 = vmatpush1.msra.mxu0 %v1357
      %1394 = vmatprep.subr.mxu0 0.0
      %1395 = vmatpush2.msra.mxu0 0.0
      %1396 = vmatprep.subr.mxu0 0.0
      %1397 = vmatpush2.msra.mxu0 0.0
      %1398 = vmatprep.subr.mxu0 0.0
      %1399 = vmatpush2.msra.mxu0 0.0
      %1400 = vmatprep.subr.mxu0 0.0
      %1401 = vmatpush2.msra.mxu0 0.0
      %1402 = vmatprep.subr.mxu0 0.0
      %1403 = vmatpush2.msra.mxu0 0.0
      %1404 = vmatprep.subr.mxu0 0.0
      %1405 = vmatpush2.msra.mxu0 0.0
      %1406 = vmatprep.subr.mxu0 0.0
      %1407 = vmatpush2.msra.mxu0 0.0
      %1408 = vmatprep.subr.mxu0 0.0
      %1409 = vmatpush2.msra.mxu0 0.0
      %1410 = vmatprep.subr.mxu0 0.0
      %1411 = vmatpush2.msra.mxu0 0.0
      %1412 = vmatprep.subr.mxu0 0.0
      %1413 = vmatpush2.msra.mxu0 0.0
      %1414 = vmatprep.subr.mxu0 0.0
      %1415 = vmatpush2.msra.mxu0 0.0
      %1416 = vmatprep.subr.mxu0 0.0
      %1417 = vmatpush2.msra.mxu0 0.0
      %1418 = vmatprep.subr.mxu0 0.0
      %1419 = vmatpush2.msra.mxu0 0.0
      %1420 = vmatprep.subr.mxu0 0.0
      %1421 = vmatpush2.msra.mxu0 0.0
      %1422 = vmatprep.subr.mxu0 0.0
      %1423 = vmatpush2.msra.mxu0 0.0
      %1424 = vmatprep.subr.mxu0 0.0
      %1425 = vmatpush2.msra.mxu0 0.0
      %1426 = vmatprep.mubr.f32.mxu0 0.0
      %1427 = vmatmul.mubr.f32.gmra.mxu0 %v1354
      %v1428 = vpop.f32.mrf.mxu0
      %v1429 = vadd.f32 0.0, %v1428
      %v1430 = vpop.f32.mrf.mxu0
      %v1431 = vadd.f32 0.0, %v1430
      %1432 = vdwg.mxu0
      %v1433 = vadd.f32 %v1342, %v1429
      %v1434 = vadd.f32 %v1343, %v1431
      %1435 = vrot.lane.b32.xlu0 %v669, 95
      %v1436 = vpop.permute.xlu0 %1435
      %1437 = vrot.lane.b32.xlu0 %v688, 95
      %v1438 = vpop.permute.xlu0 %1437
      %vm1439 = vcmp.lt.s32.totalorder %v820, 95
      %v1440 = vsel %vm1439, %v1436, %v1438
      %v1441 = vsel %vm1439, %v1438, %v1436
      %s1442 = scalar_lea.vmem %s4, 56
      %v1443 = vld [vmem:[%s1442] sm:$0xff]
      %v1445 = vsel %vm689, %v1443, 0
      %v1448 = vsel %vm696, %v1440, 0
      %v1451 = vsel %vm696, %v1441, 0
      %1453 = vmatprep.subr.mxu0 0.0
      %1454 = vmatpush1.msra.mxu0 0.0
      %1455 = vmatprep.subr.mxu0 0.0
      %1456 = vmatpush1.msra.mxu0 0.0
      %1457 = vmatprep.subr.mxu0 0.0
      %1458 = vmatpush1.msra.mxu0 0.0
      %1459 = vmatprep.subr.mxu0 0.0
      %1460 = vmatpush1.msra.mxu0 0.0
      %1461 = vmatprep.subr.mxu0 0.0
      %1462 = vmatpush1.msra.mxu0 0.0
      %1463 = vmatprep.subr.mxu0 0.0
      %1464 = vmatpush1.msra.mxu0 0.0
      %1465 = vmatprep.subr.mxu0 0.0
      %1466 = vmatpush1.msra.mxu0 0.0
      %1467 = vmatprep.subr.mxu0 0.0
      %1468 = vmatpush1.msra.mxu0 0.0
      %1469 = vmatprep.subr.mxu0 0.0
      %1470 = vmatpush1.msra.mxu0 0.0
      %1471 = vmatprep.subr.mxu0 0.0
      %1472 = vmatpush1.msra.mxu0 0.0
      %1473 = vmatprep.subr.mxu0 0.0
      %1474 = vmatpush1.msra.mxu0 0.0
      %1475 = vmatprep.subr.mxu0 0.0
      %1476 = vmatpush1.msra.mxu0 0.0
      %1477 = vmatprep.subr.mxu0 0.0
      %1478 = vmatpush1.msra.mxu0 0.0
      %1479 = vmatprep.subr.mxu0 0.0
      %1480 = vmatpush1.msra.mxu0 0.0
      %1481 = vmatprep.subr.mxu0 0.0
      %1482 = vmatpush1.msra.mxu0 0.0
      %1483 = vmatprep.subr.mxu0 %v1451
      %1484 = vmatpush1.msra.mxu0 %v1448
      %1485 = vmatprep.subr.mxu0 0.0
      %1486 = vmatpush2.msra.mxu0 0.0
      %1487 = vmatprep.subr.mxu0 0.0
      %1488 = vmatpush2.msra.mxu0 0.0
      %1489 = vmatprep.subr.mxu0 0.0
      %1490 = vmatpush2.msra.mxu0 0.0
      %1491 = vmatprep.subr.mxu0 0.0
      %1492 = vmatpush2.msra.mxu0 0.0
      %1493 = vmatprep.subr.mxu0 0.0
      %1494 = vmatpush2.msra.mxu0 0.0
      %1495 = vmatprep.subr.mxu0 0.0
      %1496 = vmatpush2.msra.mxu0 0.0
      %1497 = vmatprep.subr.mxu0 0.0
      %1498 = vmatpush2.msra.mxu0 0.0
      %1499 = vmatprep.subr.mxu0 0.0
      %1500 = vmatpush2.msra.mxu0 0.0
      %1501 = vmatprep.subr.mxu0 0.0
      %1502 = vmatpush2.msra.mxu0 0.0
      %1503 = vmatprep.subr.mxu0 0.0
      %1504 = vmatpush2.msra.mxu0 0.0
      %1505 = vmatprep.subr.mxu0 0.0
      %1506 = vmatpush2.msra.mxu0 0.0
      %1507 = vmatprep.subr.mxu0 0.0
      %1508 = vmatpush2.msra.mxu0 0.0
      %1509 = vmatprep.subr.mxu0 0.0
      %1510 = vmatpush2.msra.mxu0 0.0
      %1511 = vmatprep.subr.mxu0 0.0
      %1512 = vmatpush2.msra.mxu0 0.0
      %1513 = vmatprep.subr.mxu0 0.0
      %1514 = vmatpush2.msra.mxu0 0.0
      %1515 = vmatprep.subr.mxu0 0.0
      %1516 = vmatpush2.msra.mxu0 0.0
      %1517 = vmatprep.mubr.f32.mxu0 0.0
      %1518 = vmatmul.mubr.f32.gmra.mxu0 %v1445
      %v1519 = vpop.f32.mrf.mxu0
      %v1520 = vadd.f32 0.0, %v1519
      %v1521 = vpop.f32.mrf.mxu0
      %v1522 = vadd.f32 0.0, %v1521
      %1523 = vdwg.mxu0
      %v1524 = vadd.f32 %v1433, %v1520
      %v1525 = vadd.f32 %v1434, %v1522
      %1526 = vrot.lane.b32.xlu0 %v669, 94
      %v1527 = vpop.permute.xlu0 %1526
      %1528 = vrot.lane.b32.xlu0 %v688, 94
      %v1529 = vpop.permute.xlu0 %1528
      %vm1530 = vcmp.lt.s32.totalorder %v820, 94
      %v1531 = vsel %vm1530, %v1527, %v1529
      %v1532 = vsel %vm1530, %v1529, %v1527
      %s1533 = scalar_lea.vmem %s4, 64
      %v1534 = vld [vmem:[%s1533] sm:$0xff]
      %v1536 = vsel %vm689, %v1534, 0
      %v1539 = vsel %vm696, %v1531, 0
      %v1542 = vsel %vm696, %v1532, 0
      %1544 = vmatprep.subr.mxu0 0.0
      %1545 = vmatpush1.msra.mxu0 0.0
      %1546 = vmatprep.subr.mxu0 0.0
      %1547 = vmatpush1.msra.mxu0 0.0
      %1548 = vmatprep.subr.mxu0 0.0
      %1549 = vmatpush1.msra.mxu0 0.0
      %1550 = vmatprep.subr.mxu0 0.0
      %1551 = vmatpush1.msra.mxu0 0.0
      %1552 = vmatprep.subr.mxu0 0.0
      %1553 = vmatpush1.msra.mxu0 0.0
      %1554 = vmatprep.subr.mxu0 0.0
      %1555 = vmatpush1.msra.mxu0 0.0
      %1556 = vmatprep.subr.mxu0 0.0
      %1557 = vmatpush1.msra.mxu0 0.0
      %1558 = vmatprep.subr.mxu0 0.0
      %1559 = vmatpush1.msra.mxu0 0.0
      %1560 = vmatprep.subr.mxu0 0.0
      %1561 = vmatpush1.msra.mxu0 0.0
      %1562 = vmatprep.subr.mxu0 0.0
      %1563 = vmatpush1.msra.mxu0 0.0
      %1564 = vmatprep.subr.mxu0 0.0
      %1565 = vmatpush1.msra.mxu0 0.0
      %1566 = vmatprep.subr.mxu0 0.0
      %1567 = vmatpush1.msra.mxu0 0.0
      %1568 = vmatprep.subr.mxu0 0.0
      %1569 = vmatpush1.msra.mxu0 0.0
      %1570 = vmatprep.subr.mxu0 0.0
      %1571 = vmatpush1.msra.mxu0 0.0
      %1572 = vmatprep.subr.mxu0 0.0
      %1573 = vmatpush1.msra.mxu0 0.0
      %1574 = vmatprep.subr.mxu0 %v1542
      %1575 = vmatpush1.msra.mxu0 %v1539
      %1576 = vmatprep.subr.mxu0 0.0
      %1577 = vmatpush2.msra.mxu0 0.0
      %1578 = vmatprep.subr.mxu0 0.0
      %1579 = vmatpush2.msra.mxu0 0.0
      %1580 = vmatprep.subr.mxu0 0.0
      %1581 = vmatpush2.msra.mxu0 0.0
      %1582 = vmatprep.subr.mxu0 0.0
      %1583 = vmatpush2.msra.mxu0 0.0
      %1584 = vmatprep.subr.mxu0 0.0
      %1585 = vmatpush2.msra.mxu0 0.0
      %1586 = vmatprep.subr.mxu0 0.0
      %1587 = vmatpush2.msra.mxu0 0.0
      %1588 = vmatprep.subr.mxu0 0.0
      %1589 = vmatpush2.msra.mxu0 0.0
      %1590 = vmatprep.subr.mxu0 0.0
      %1591 = vmatpush2.msra.mxu0 0.0
      %1592 = vmatprep.subr.mxu0 0.0
      %1593 = vmatpush2.msra.mxu0 0.0
      %1594 = vmatprep.subr.mxu0 0.0
      %1595 = vmatpush2.msra.mxu0 0.0
      %1596 = vmatprep.subr.mxu0 0.0
      %1597 = vmatpush2.msra.mxu0 0.0
      %1598 = vmatprep.subr.mxu0 0.0
      %1599 = vmatpush2.msra.mxu0 0.0
      %1600 = vmatprep.subr.mxu0 0.0
      %1601 = vmatpush2.msra.mxu0 0.0
      %1602 = vmatprep.subr.mxu0 0.0
      %1603 = vmatpush2.msra.mxu0 0.0
      %1604 = vmatprep.subr.mxu0 0.0
      %1605 = vmatpush2.msra.mxu0 0.0
      %1606 = vmatprep.subr.mxu0 0.0
      %1607 = vmatpush2.msra.mxu0 0.0
      %1608 = vmatprep.mubr.f32.mxu0 0.0
      %1609 = vmatmul.mubr.f32.gmra.mxu0 %v1536
      %v1610 = vpop.f32.mrf.mxu0
      %v1611 = vadd.f32 0.0, %v1610
      %v1612 = vpop.f32.mrf.mxu0
      %v1613 = vadd.f32 0.0, %v1612
      %1614 = vdwg.mxu0
      %v1615 = vadd.f32 %v1524, %v1611
      %v1616 = vadd.f32 %v1525, %v1613
      %v1617 = vld [vmem:[%s5] sm:$0xff]
      %1619 = vset.pattern.permute.xlu0 0
      %1620 = vperm.xlu0 %1619, %v1617
      %v1621 = vpop.permute.xlu0 %1620
      %v1623 = vadd.f32 %v1615, %v1621
      %v1624 = vadd.f32 %v1616, %v1621
      %v1625 = vmax.f32 %v1623, 0.0
      %v1626 = vmax.f32 %v1624, 0.0
      %v1627 = vsub.f32 0.0, %v1623
      %v1628 = vsub.f32 0.0, %v1624
      %v1629 = vmax.f32 %v1627, 0.0
      %v1630 = vmax.f32 %v1628, 0.0
      %v1631 = vld [vmem:[%s12] sm:$0xff]
      %v1632 = vld [vmem:[%s12 + $0x8] sm:$0x3]
      %v1633 = vld [vmem:[%s13] sm:$0xff]
      %v1634 = vld [vmem:[%s13 + $0x8] sm:$0x3]
      %1636 = vset.pattern.permute.xlu0 0
      %1637 = vperm.xlu0 %1636, %v1633
      %v1638 = vpop.permute.xlu0 %1637
      %1641 = vset.pattern.permute.xlu0 0
      %1642 = vperm.xlu0 %1641, %v1634
      %v1643 = vpop.permute.xlu0 %1642
      %vm1645 = vcmask 130048
      %v1647 = vsel %vm1645, %v1631, 0
      %v1650 = vsel %vm1645, %v1632, 0
      %1652 = vmatprep.subr.mxu0 0.0
      %1653 = vmatpush1.msra.mxu0 0.0
      %1654 = vmatprep.subr.mxu0 0.0
      %1655 = vmatpush1.msra.mxu0 0.0
      %1656 = vmatprep.subr.mxu0 0.0
      %1657 = vmatpush1.msra.mxu0 0.0
      %1658 = vmatprep.subr.mxu0 0.0
      %1659 = vmatpush1.msra.mxu0 0.0
      %1660 = vmatprep.subr.mxu0 0.0
      %1661 = vmatpush1.msra.mxu0 0.0
      %1662 = vmatprep.subr.mxu0 0.0
      %1663 = vmatpush1.msra.mxu0 0.0
      %1664 = vmatprep.subr.mxu0 0.0
      %1665 = vmatpush1.msra.mxu0 0.0
      %1666 = vmatprep.subr.mxu0 0.0
      %1667 = vmatpush1.msra.mxu0 0.0
      %1668 = vmatprep.subr.mxu0 0.0
      %1669 = vmatpush1.msra.mxu0 0.0
      %1670 = vmatprep.subr.mxu0 0.0
      %1671 = vmatpush1.msra.mxu0 0.0
      %1672 = vmatprep.subr.mxu0 0.0
      %1673 = vmatpush1.msra.mxu0 0.0
      %1674 = vmatprep.subr.mxu0 0.0
      %1675 = vmatpush1.msra.mxu0 0.0
      %1676 = vmatprep.subr.mxu0 0.0
      %1677 = vmatpush1.msra.mxu0 0.0
      %1678 = vmatprep.subr.mxu0 0.0
      %1679 = vmatpush1.msra.mxu0 0.0
      %1680 = vmatprep.subr.mxu0 %v1630
      %1681 = vmatpush1.msra.mxu0 %v1629
      %1682 = vmatprep.subr.mxu0 %v1626
      %1683 = vmatpush1.msra.mxu0 %v1625
      %1684 = vmatprep.subr.mxu0 0.0
      %1685 = vmatpush2.msra.mxu0 0.0
      %1686 = vmatprep.subr.mxu0 0.0
      %1687 = vmatpush2.msra.mxu0 0.0
      %1688 = vmatprep.subr.mxu0 0.0
      %1689 = vmatpush2.msra.mxu0 0.0
      %1690 = vmatprep.subr.mxu0 0.0
      %1691 = vmatpush2.msra.mxu0 0.0
      %1692 = vmatprep.subr.mxu0 0.0
      %1693 = vmatpush2.msra.mxu0 0.0
      %1694 = vmatprep.subr.mxu0 0.0
      %1695 = vmatpush2.msra.mxu0 0.0
      %1696 = vmatprep.subr.mxu0 0.0
      %1697 = vmatpush2.msra.mxu0 0.0
      %1698 = vmatprep.subr.mxu0 0.0
      %1699 = vmatpush2.msra.mxu0 0.0
      %1700 = vmatprep.subr.mxu0 0.0
      %1701 = vmatpush2.msra.mxu0 0.0
      %1702 = vmatprep.subr.mxu0 0.0
      %1703 = vmatpush2.msra.mxu0 0.0
      %1704 = vmatprep.subr.mxu0 0.0
      %1705 = vmatpush2.msra.mxu0 0.0
      %1706 = vmatprep.subr.mxu0 0.0
      %1707 = vmatpush2.msra.mxu0 0.0
      %1708 = vmatprep.subr.mxu0 0.0
      %1709 = vmatpush2.msra.mxu0 0.0
      %1710 = vmatprep.subr.mxu0 0.0
      %1711 = vmatpush2.msra.mxu0 0.0
      %1712 = vmatprep.subr.mxu0 0.0
      %1713 = vmatpush2.msra.mxu0 0.0
      %1714 = vmatprep.subr.mxu0 0.0
      %1715 = vmatpush2.msra.mxu0 0.0
      %1716 = vmatprep.mubr.f32.mxu0 0.0
      %1717 = vmatmul.mubr.f32.gmra.mxu0 %v1647
      %v1718 = vpop.f32.mrf.mxu0
      %v1719 = vadd.f32 %v1638, %v1718
      %v1720 = vpop.f32.mrf.mxu0
      %v1721 = vadd.f32 %v1638, %v1720
      %1722 = vmatprep.mubr.f32.mxu0 0.0
      %1723 = vmatmul.mubr.f32.gmra.mxu0 %v1650
      %v1724 = vpop.f32.mrf.mxu0
      %v1725 = vadd.f32 %v1643, %v1724
      %v1726 = vpop.f32.mrf.mxu0
      %v1727 = vadd.f32 %v1643, %v1726
      %1728 = vdwg.mxu0
      %s1729 = scalar_lea.vmem %s3, 2
      %v1730 = vld [vmem:[%s1729] sm:$0x3]
      %vm1731 = vcmp.gt.f32.partialorder %v1730, 0.0
      %v1732 = vsel %vm1731, 1, 0
      %v1733 = vlaneseq
      %v1734 = vshrl.u32 %v1733, 7
      %v1735 = vsub.s32 0, %v1734
      %v1736 = vrot.slane %v1732, %v1735
      %v1737 = vlaneseq
      %v1738 = vshrl.u32 %v1737, 7
      %v1739 = vsub.s32 1, %v1738
      %v1740 = vrot.slane %v1732, %v1739
      %vm1741 = vcmp.eq.s32.totalorder %v1736, 1
      %vm1742 = vcmp.eq.s32.totalorder %v1740, 1
      %v1743 = vsel %vm1741, %v1719, -inf
      %v1744 = vsel %vm1742, %v1721, -inf
      %v1745 = vsel %vm1741, %v1725, -inf
      %v1746 = vsel %vm1742, %v1727, -inf
      %v1747 = vmax.f32 %v1743, %v1744
      %1748 = vmax.xlane.f32.xlu0 %v1747
      %v1749 = vpop.xlane.xlu0 %1748
      %v1750 = vsel %vm781, %v1745, -inf
      %v1751 = vsel %vm781, %v1746, -inf
      %v1752 = vmax.f32 %v1750, %v1751
      %1753 = vmax.xlane.f32.xlu0 %v1752
      %v1754 = vpop.xlane.xlu0 %1753
      %v1755 = vsub.f32 %v1743, %v1749
      %v1756 = vsub.f32 %v1744, %v1749
      %v1757 = vsub.f32 %v1745, %v1754
      %v1758 = vsub.f32 %v1746, %v1754
      %v1759 = vmul.f32 %v1755, 1.442695
      %v1760 = vpow.pop %v1759
      %v1761 = vmul.f32 %v1756, 1.442695
      %v1762 = vpow.pop %v1761
      %v1763 = vmul.f32 %v1757, 1.442695
      %v1764 = vpow.pop %v1763
      %v1765 = vmul.f32 %v1758, 1.442695
      %v1766 = vpow.pop %v1765
      %v1767 = vadd.f32 %v1760, %v1762
      %1768 = vadd.xlane.f32.xlu0 %v1767
      %v1769 = vpop.xlane.xlu0 %1768
      %v1770 = vsel %vm781, %v1764, 0.0
      %v1771 = vsel %vm781, %v1766, 0.0
      %v1772 = vadd.f32 %v1770, %v1771
      %1773 = vadd.xlane.f32.xlu0 %v1772
      %v1774 = vpop.xlane.xlu0 %1773
      %v1775 = vlog2.pop %v1769
      %v1776 = vmul.f32 %v1775, 0.6931472
      %v1777 = vlog2.pop %v1774
      %v1778 = vmul.f32 %v1777, 0.6931472
      %v1779 = vadd.f32 %v1749, %v1776
      %v1780 = vadd.f32 %v1754, %v1778
      %v1781 = vmax.f32 %v811, %v1779
      %v1782 = vmax.f32 %v812, %v1780
      %v1783 = vsub.f32 %v811, %v1781
      %v1784 = vsub.f32 %v812, %v1782
      %v1785 = vmul.f32 %v1783, 1.442695
      %v1786 = vpow.pop %v1785
      %v1787 = vmul.f32 %v1784, 1.442695
      %v1788 = vpow.pop %v1787
      %v1789 = vsub.f32 %v1779, %v1781
      %v1790 = vsub.f32 %v1780, %v1782
      %v1791 = vmul.f32 %v1789, 1.442695
      %v1792 = vpow.pop %v1791
      %v1793 = vmul.f32 %v1790, 1.442695
      %v1794 = vpow.pop %v1793
      %v1795 = vadd.f32 %v1786, %v1792
      %v1796 = vadd.f32 %v1788, %v1794
      %v1797 = vlog2.pop %v1795
      %v1798 = vmul.f32 %v1797, 0.6931472
      %v1799 = vlog2.pop %v1796
      %v1800 = vmul.f32 %v1799, 0.6931472
      %v1801 = vadd.f32 %v1781, %v1798
      %v1802 = vadd.f32 %v1782, %v1800
      %v1803 = vld [vmem:[%s6] sm:$0xff]
      %1804 = vrot.lane.b32.xlu0 %v1625, 127
      %v1805 = vpop.permute.xlu0 %1804
      %1806 = vrot.lane.b32.xlu0 %v1629, 127
      %v1807 = vpop.permute.xlu0 %1806
      %1808 = vrot.lane.b32.xlu0 %v1626, 127
      %v1809 = vpop.permute.xlu0 %1808
      %1810 = vrot.lane.b32.xlu0 %v1630, 127
      %v1811 = vpop.permute.xlu0 %1810
      %v1812 = vsel %vm821, %v1805, %v1809
      %v1813 = vsel %vm821, %v1807, %v1811
      %v1814 = vsel %vm821, %v1809, %v1805
      %v1815 = vsel %vm821, %v1811, %v1807
      %s1816 = scalar_lea.vmem %s6, 8
      %v1817 = vld [vmem:[%s1816] sm:$0xff]
      %v1819 = vsel %vm1645, %v1817, 0
      %1821 = vmatprep.subr.mxu0 0.0
      %1822 = vmatpush1.msra.mxu0 0.0
      %1823 = vmatprep.subr.mxu0 0.0
      %1824 = vmatpush1.msra.mxu0 0.0
      %1825 = vmatprep.subr.mxu0 0.0
      %1826 = vmatpush1.msra.mxu0 0.0
      %1827 = vmatprep.subr.mxu0 0.0
      %1828 = vmatpush1.msra.mxu0 0.0
      %1829 = vmatprep.subr.mxu0 0.0
      %1830 = vmatpush1.msra.mxu0 0.0
      %1831 = vmatprep.subr.mxu0 0.0
      %1832 = vmatpush1.msra.mxu0 0.0
      %1833 = vmatprep.subr.mxu0 0.0
      %1834 = vmatpush1.msra.mxu0 0.0
      %1835 = vmatprep.subr.mxu0 0.0
      %1836 = vmatpush1.msra.mxu0 0.0
      %1837 = vmatprep.subr.mxu0 0.0
      %1838 = vmatpush1.msra.mxu0 0.0
      %1839 = vmatprep.subr.mxu0 0.0
      %1840 = vmatpush1.msra.mxu0 0.0
      %1841 = vmatprep.subr.mxu0 0.0
      %1842 = vmatpush1.msra.mxu0 0.0
      %1843 = vmatprep.subr.mxu0 0.0
      %1844 = vmatpush1.msra.mxu0 0.0
      %1845 = vmatprep.subr.mxu0 0.0
      %1846 = vmatpush1.msra.mxu0 0.0
      %1847 = vmatprep.subr.mxu0 0.0
      %1848 = vmatpush1.msra.mxu0 0.0
      %1849 = vmatprep.subr.mxu0 %v1815
      %1850 = vmatpush1.msra.mxu0 %v1813
      %1851 = vmatprep.subr.mxu0 %v1814
      %1852 = vmatpush1.msra.mxu0 %v1812
      %1853 = vmatprep.subr.mxu0 0.0
      %1854 = vmatpush2.msra.mxu0 0.0
      %1855 = vmatprep.subr.mxu0 0.0
      %1856 = vmatpush2.msra.mxu0 0.0
      %1857 = vmatprep.subr.mxu0 0.0
      %1858 = vmatpush2.msra.mxu0 0.0
      %1859 = vmatprep.subr.mxu0 0.0
      %1860 = vmatpush2.msra.mxu0 0.0
      %1861 = vmatprep.subr.mxu0 0.0
      %1862 = vmatpush2.msra.mxu0 0.0
      %1863 = vmatprep.subr.mxu0 0.0
      %1864 = vmatpush2.msra.mxu0 0.0
      %1865 = vmatprep.subr.mxu0 0.0
      %1866 = vmatpush2.msra.mxu0 0.0
      %1867 = vmatprep.subr.mxu0 0.0
      %1868 = vmatpush2.msra.mxu0 0.0
      %1869 = vmatprep.subr.mxu0 0.0
      %1870 = vmatpush2.msra.mxu0 0.0
      %1871 = vmatprep.subr.mxu0 0.0
      %1872 = vmatpush2.msra.mxu0 0.0
      %1873 = vmatprep.subr.mxu0 0.0
      %1874 = vmatpush2.msra.mxu0 0.0
      %1875 = vmatprep.subr.mxu0 0.0
      %1876 = vmatpush2.msra.mxu0 0.0
      %1877 = vmatprep.subr.mxu0 0.0
      %1878 = vmatpush2.msra.mxu0 0.0
      %1879 = vmatprep.subr.mxu0 0.0
      %1880 = vmatpush2.msra.mxu0 0.0
      %1881 = vmatprep.subr.mxu0 0.0
      %1882 = vmatpush2.msra.mxu0 0.0
      %1883 = vmatprep.subr.mxu0 0.0
      %1884 = vmatpush2.msra.mxu0 0.0
      %1885 = vmatprep.mubr.f32.mxu0 0.0
      %1886 = vmatmul.mubr.f32.gmra.mxu0 %v1819
      %v1887 = vpop.f32.mrf.mxu0
      %v1888 = vadd.f32 0.0, %v1887
      %v1889 = vpop.f32.mrf.mxu0
      %v1890 = vadd.f32 0.0, %v1889
      %1891 = vdwg.mxu0
      %v1893 = vsel %vm1645, %v1803, 0
      %1895 = vmatprep.subr.mxu0 0.0
      %1896 = vmatpush1.msra.mxu0 0.0
      %1897 = vmatprep.subr.mxu0 0.0
      %1898 = vmatpush1.msra.mxu0 0.0
      %1899 = vmatprep.subr.mxu0 0.0
      %1900 = vmatpush1.msra.mxu0 0.0
      %1901 = vmatprep.subr.mxu0 0.0
      %1902 = vmatpush1.msra.mxu0 0.0
      %1903 = vmatprep.subr.mxu0 0.0
      %1904 = vmatpush1.msra.mxu0 0.0
      %1905 = vmatprep.subr.mxu0 0.0
      %1906 = vmatpush1.msra.mxu0 0.0
      %1907 = vmatprep.subr.mxu0 0.0
      %1908 = vmatpush1.msra.mxu0 0.0
      %1909 = vmatprep.subr.mxu0 0.0
      %1910 = vmatpush1.msra.mxu0 0.0
      %1911 = vmatprep.subr.mxu0 0.0
      %1912 = vmatpush1.msra.mxu0 0.0
      %1913 = vmatprep.subr.mxu0 0.0
      %1914 = vmatpush1.msra.mxu0 0.0
      %1915 = vmatprep.subr.mxu0 0.0
      %1916 = vmatpush1.msra.mxu0 0.0
      %1917 = vmatprep.subr.mxu0 0.0
      %1918 = vmatpush1.msra.mxu0 0.0
      %1919 = vmatprep.subr.mxu0 0.0
      %1920 = vmatpush1.msra.mxu0 0.0
      %1921 = vmatprep.subr.mxu0 0.0
      %1922 = vmatpush1.msra.mxu0 0.0
      %1923 = vmatprep.subr.mxu0 %v1630
      %1924 = vmatpush1.msra.mxu0 %v1629
      %1925 = vmatprep.subr.mxu0 %v1626
      %1926 = vmatpush1.msra.mxu0 %v1625
      %1927 = vmatprep.subr.mxu0 0.0
      %1928 = vmatpush2.msra.mxu0 0.0
      %1929 = vmatprep.subr.mxu0 0.0
      %1930 = vmatpush2.msra.mxu0 0.0
      %1931 = vmatprep.subr.mxu0 0.0
      %1932 = vmatpush2.msra.mxu0 0.0
      %1933 = vmatprep.subr.mxu0 0.0
      %1934 = vmatpush2.msra.mxu0 0.0
      %1935 = vmatprep.subr.mxu0 0.0
      %1936 = vmatpush2.msra.mxu0 0.0
      %1937 = vmatprep.subr.mxu0 0.0
      %1938 = vmatpush2.msra.mxu0 0.0
      %1939 = vmatprep.subr.mxu0 0.0
      %1940 = vmatpush2.msra.mxu0 0.0
      %1941 = vmatprep.subr.mxu0 0.0
      %1942 = vmatpush2.msra.mxu0 0.0
      %1943 = vmatprep.subr.mxu0 0.0
      %1944 = vmatpush2.msra.mxu0 0.0
      %1945 = vmatprep.subr.mxu0 0.0
      %1946 = vmatpush2.msra.mxu0 0.0
      %1947 = vmatprep.subr.mxu0 0.0
      %1948 = vmatpush2.msra.mxu0 0.0
      %1949 = vmatprep.subr.mxu0 0.0
      %1950 = vmatpush2.msra.mxu0 0.0
      %1951 = vmatprep.subr.mxu0 0.0
      %1952 = vmatpush2.msra.mxu0 0.0
      %1953 = vmatprep.subr.mxu0 0.0
      %1954 = vmatpush2.msra.mxu0 0.0
      %1955 = vmatprep.subr.mxu0 0.0
      %1956 = vmatpush2.msra.mxu0 0.0
      %1957 = vmatprep.subr.mxu0 0.0
      %1958 = vmatpush2.msra.mxu0 0.0
      %1959 = vmatprep.mubr.f32.mxu0 0.0
      %1960 = vmatmul.mubr.f32.gmra.mxu0 %v1893
      %v1961 = vpop.f32.mrf.mxu0
      %v1962 = vadd.f32 %v1888, %v1961
      %v1963 = vpop.f32.mrf.mxu0
      %v1964 = vadd.f32 %v1890, %v1963
      %1965 = vdwg.mxu0
      %1966 = vrot.lane.b32.xlu0 %v1625, 126
      %v1967 = vpop.permute.xlu0 %1966
      %1968 = vrot.lane.b32.xlu0 %v1629, 126
      %v1969 = vpop.permute.xlu0 %1968
      %1970 = vrot.lane.b32.xlu0 %v1626, 126
      %v1971 = vpop.permute.xlu0 %1970
      %1972 = vrot.lane.b32.xlu0 %v1630, 126
      %v1973 = vpop.permute.xlu0 %1972
      %v1974 = vsel %vm984, %v1967, %v1971
      %v1975 = vsel %vm984, %v1969, %v1973
      %v1976 = vsel %vm984, %v1971, %v1967
      %v1977 = vsel %vm984, %v1973, %v1969
      %s1978 = scalar_lea.vmem %s6, 16
      %v1979 = vld [vmem:[%s1978] sm:$0xff]
      %v1981 = vsel %vm1645, %v1979, 0
      %1983 = vmatprep.subr.mxu0 0.0
      %1984 = vmatpush1.msra.mxu0 0.0
      %1985 = vmatprep.subr.mxu0 0.0
      %1986 = vmatpush1.msra.mxu0 0.0
      %1987 = vmatprep.subr.mxu0 0.0
      %1988 = vmatpush1.msra.mxu0 0.0
      %1989 = vmatprep.subr.mxu0 0.0
      %1990 = vmatpush1.msra.mxu0 0.0
      %1991 = vmatprep.subr.mxu0 0.0
      %1992 = vmatpush1.msra.mxu0 0.0
      %1993 = vmatprep.subr.mxu0 0.0
      %1994 = vmatpush1.msra.mxu0 0.0
      %1995 = vmatprep.subr.mxu0 0.0
      %1996 = vmatpush1.msra.mxu0 0.0
      %1997 = vmatprep.subr.mxu0 0.0
      %1998 = vmatpush1.msra.mxu0 0.0
      %1999 = vmatprep.subr.mxu0 0.0
      %2000 = vmatpush1.msra.mxu0 0.0
      %2001 = vmatprep.subr.mxu0 0.0
      %2002 = vmatpush1.msra.mxu0 0.0
      %2003 = vmatprep.subr.mxu0 0.0
      %2004 = vmatpush1.msra.mxu0 0.0
      %2005 = vmatprep.subr.mxu0 0.0
      %2006 = vmatpush1.msra.mxu0 0.0
      %2007 = vmatprep.subr.mxu0 0.0
      %2008 = vmatpush1.msra.mxu0 0.0
      %2009 = vmatprep.subr.mxu0 0.0
      %2010 = vmatpush1.msra.mxu0 0.0
      %2011 = vmatprep.subr.mxu0 %v1977
      %2012 = vmatpush1.msra.mxu0 %v1975
      %2013 = vmatprep.subr.mxu0 %v1976
      %2014 = vmatpush1.msra.mxu0 %v1974
      %2015 = vmatprep.subr.mxu0 0.0
      %2016 = vmatpush2.msra.mxu0 0.0
      %2017 = vmatprep.subr.mxu0 0.0
      %2018 = vmatpush2.msra.mxu0 0.0
      %2019 = vmatprep.subr.mxu0 0.0
      %2020 = vmatpush2.msra.mxu0 0.0
      %2021 = vmatprep.subr.mxu0 0.0
      %2022 = vmatpush2.msra.mxu0 0.0
      %2023 = vmatprep.subr.mxu0 0.0
      %2024 = vmatpush2.msra.mxu0 0.0
      %2025 = vmatprep.subr.mxu0 0.0
      %2026 = vmatpush2.msra.mxu0 0.0
      %2027 = vmatprep.subr.mxu0 0.0
      %2028 = vmatpush2.msra.mxu0 0.0
      %2029 = vmatprep.subr.mxu0 0.0
      %2030 = vmatpush2.msra.mxu0 0.0
      %2031 = vmatprep.subr.mxu0 0.0
      %2032 = vmatpush2.msra.mxu0 0.0
      %2033 = vmatprep.subr.mxu0 0.0
      %2034 = vmatpush2.msra.mxu0 0.0
      %2035 = vmatprep.subr.mxu0 0.0
      %2036 = vmatpush2.msra.mxu0 0.0
      %2037 = vmatprep.subr.mxu0 0.0
      %2038 = vmatpush2.msra.mxu0 0.0
      %2039 = vmatprep.subr.mxu0 0.0
      %2040 = vmatpush2.msra.mxu0 0.0
      %2041 = vmatprep.subr.mxu0 0.0
      %2042 = vmatpush2.msra.mxu0 0.0
      %2043 = vmatprep.subr.mxu0 0.0
      %2044 = vmatpush2.msra.mxu0 0.0
      %2045 = vmatprep.subr.mxu0 0.0
      %2046 = vmatpush2.msra.mxu0 0.0
      %2047 = vmatprep.mubr.f32.mxu0 0.0
      %2048 = vmatmul.mubr.f32.gmra.mxu0 %v1981
      %v2049 = vpop.f32.mrf.mxu0
      %v2050 = vadd.f32 0.0, %v2049
      %v2051 = vpop.f32.mrf.mxu0
      %v2052 = vadd.f32 0.0, %v2051
      %2053 = vdwg.mxu0
      %v2054 = vadd.f32 %v1962, %v2050
      %v2055 = vadd.f32 %v1964, %v2052
      %2056 = vrot.lane.b32.xlu0 %v1625, 112
      %v2057 = vpop.permute.xlu0 %2056
      %2058 = vrot.lane.b32.xlu0 %v1629, 112
      %v2059 = vpop.permute.xlu0 %2058
      %2060 = vrot.lane.b32.xlu0 %v1626, 112
      %v2061 = vpop.permute.xlu0 %2060
      %2062 = vrot.lane.b32.xlu0 %v1630, 112
      %v2063 = vpop.permute.xlu0 %2062
      %v2064 = vsel %vm1075, %v2057, %v2061
      %v2065 = vsel %vm1075, %v2059, %v2063
      %v2066 = vsel %vm1075, %v2061, %v2057
      %v2067 = vsel %vm1075, %v2063, %v2059
      %s2068 = scalar_lea.vmem %s6, 24
      %v2069 = vld [vmem:[%s2068] sm:$0xff]
      %v2071 = vsel %vm1645, %v2069, 0
      %2073 = vmatprep.subr.mxu0 0.0
      %2074 = vmatpush1.msra.mxu0 0.0
      %2075 = vmatprep.subr.mxu0 0.0
      %2076 = vmatpush1.msra.mxu0 0.0
      %2077 = vmatprep.subr.mxu0 0.0
      %2078 = vmatpush1.msra.mxu0 0.0
      %2079 = vmatprep.subr.mxu0 0.0
      %2080 = vmatpush1.msra.mxu0 0.0
      %2081 = vmatprep.subr.mxu0 0.0
      %2082 = vmatpush1.msra.mxu0 0.0
      %2083 = vmatprep.subr.mxu0 0.0
      %2084 = vmatpush1.msra.mxu0 0.0
      %2085 = vmatprep.subr.mxu0 0.0
      %2086 = vmatpush1.msra.mxu0 0.0
      %2087 = vmatprep.subr.mxu0 0.0
      %2088 = vmatpush1.msra.mxu0 0.0
      %2089 = vmatprep.subr.mxu0 0.0
      %2090 = vmatpush1.msra.mxu0 0.0
      %2091 = vmatprep.subr.mxu0 0.0
      %2092 = vmatpush1.msra.mxu0 0.0
      %2093 = vmatprep.subr.mxu0 0.0
      %2094 = vmatpush1.msra.mxu0 0.0
      %2095 = vmatprep.subr.mxu0 0.0
      %2096 = vmatpush1.msra.mxu0 0.0
      %2097 = vmatprep.subr.mxu0 0.0
      %2098 = vmatpush1.msra.mxu0 0.0
      %2099 = vmatprep.subr.mxu0 0.0
      %2100 = vmatpush1.msra.mxu0 0.0
      %2101 = vmatprep.subr.mxu0 %v2067
      %2102 = vmatpush1.msra.mxu0 %v2065
      %2103 = vmatprep.subr.mxu0 %v2066
      %2104 = vmatpush1.msra.mxu0 %v2064
      %2105 = vmatprep.subr.mxu0 0.0
      %2106 = vmatpush2.msra.mxu0 0.0
      %2107 = vmatprep.subr.mxu0 0.0
      %2108 = vmatpush2.msra.mxu0 0.0
      %2109 = vmatprep.subr.mxu0 0.0
      %2110 = vmatpush2.msra.mxu0 0.0
      %2111 = vmatprep.subr.mxu0 0.0
      %2112 = vmatpush2.msra.mxu0 0.0
      %2113 = vmatprep.subr.mxu0 0.0
      %2114 = vmatpush2.msra.mxu0 0.0
      %2115 = vmatprep.subr.mxu0 0.0
      %2116 = vmatpush2.msra.mxu0 0.0
      %2117 = vmatprep.subr.mxu0 0.0
      %2118 = vmatpush2.msra.mxu0 0.0
      %2119 = vmatprep.subr.mxu0 0.0
      %2120 = vmatpush2.msra.mxu0 0.0
      %2121 = vmatprep.subr.mxu0 0.0
      %2122 = vmatpush2.msra.mxu0 0.0
      %2123 = vmatprep.subr.mxu0 0.0
      %2124 = vmatpush2.msra.mxu0 0.0
      %2125 = vmatprep.subr.mxu0 0.0
      %2126 = vmatpush2.msra.mxu0 0.0
      %2127 = vmatprep.subr.mxu0 0.0
      %2128 = vmatpush2.msra.mxu0 0.0
      %2129 = vmatprep.subr.mxu0 0.0
      %2130 = vmatpush2.msra.mxu0 0.0
      %2131 = vmatprep.subr.mxu0 0.0
      %2132 = vmatpush2.msra.mxu0 0.0
      %2133 = vmatprep.subr.mxu0 0.0
      %2134 = vmatpush2.msra.mxu0 0.0
      %2135 = vmatprep.subr.mxu0 0.0
      %2136 = vmatpush2.msra.mxu0 0.0
      %2137 = vmatprep.mubr.f32.mxu0 0.0
      %2138 = vmatmul.mubr.f32.gmra.mxu0 %v2071
      %v2139 = vpop.f32.mrf.mxu0
      %v2140 = vadd.f32 0.0, %v2139
      %v2141 = vpop.f32.mrf.mxu0
      %v2142 = vadd.f32 0.0, %v2141
      %2143 = vdwg.mxu0
      %v2144 = vadd.f32 %v2054, %v2140
      %v2145 = vadd.f32 %v2055, %v2142
      %2146 = vrot.lane.b32.xlu0 %v1625, 111
      %v2147 = vpop.permute.xlu0 %2146
      %2148 = vrot.lane.b32.xlu0 %v1629, 111
      %v2149 = vpop.permute.xlu0 %2148
      %2150 = vrot.lane.b32.xlu0 %v1626, 111
      %v2151 = vpop.permute.xlu0 %2150
      %2152 = vrot.lane.b32.xlu0 %v1630, 111
      %v2153 = vpop.permute.xlu0 %2152
      %v2154 = vsel %vm1166, %v2147, %v2151
      %v2155 = vsel %vm1166, %v2149, %v2153
      %v2156 = vsel %vm1166, %v2151, %v2147
      %v2157 = vsel %vm1166, %v2153, %v2149
      %s2158 = scalar_lea.vmem %s6, 32
      %v2159 = vld [vmem:[%s2158] sm:$0xff]
      %v2161 = vsel %vm1645, %v2159, 0
      %2163 = vmatprep.subr.mxu0 0.0
      %2164 = vmatpush1.msra.mxu0 0.0
      %2165 = vmatprep.subr.mxu0 0.0
      %2166 = vmatpush1.msra.mxu0 0.0
      %2167 = vmatprep.subr.mxu0 0.0
      %2168 = vmatpush1.msra.mxu0 0.0
      %2169 = vmatprep.subr.mxu0 0.0
      %2170 = vmatpush1.msra.mxu0 0.0
      %2171 = vmatprep.subr.mxu0 0.0
      %2172 = vmatpush1.msra.mxu0 0.0
      %2173 = vmatprep.subr.mxu0 0.0
      %2174 = vmatpush1.msra.mxu0 0.0
      %2175 = vmatprep.subr.mxu0 0.0
      %2176 = vmatpush1.msra.mxu0 0.0
      %2177 = vmatprep.subr.mxu0 0.0
      %2178 = vmatpush1.msra.mxu0 0.0
      %2179 = vmatprep.subr.mxu0 0.0
      %2180 = vmatpush1.msra.mxu0 0.0
      %2181 = vmatprep.subr.mxu0 0.0
      %2182 = vmatpush1.msra.mxu0 0.0
      %2183 = vmatprep.subr.mxu0 0.0
      %2184 = vmatpush1.msra.mxu0 0.0
      %2185 = vmatprep.subr.mxu0 0.0
      %2186 = vmatpush1.msra.mxu0 0.0
      %2187 = vmatprep.subr.mxu0 0.0
      %2188 = vmatpush1.msra.mxu0 0.0
      %2189 = vmatprep.subr.mxu0 0.0
      %2190 = vmatpush1.msra.mxu0 0.0
      %2191 = vmatprep.subr.mxu0 %v2157
      %2192 = vmatpush1.msra.mxu0 %v2155
      %2193 = vmatprep.subr.mxu0 %v2156
      %2194 = vmatpush1.msra.mxu0 %v2154
      %2195 = vmatprep.subr.mxu0 0.0
      %2196 = vmatpush2.msra.mxu0 0.0
      %2197 = vmatprep.subr.mxu0 0.0
      %2198 = vmatpush2.msra.mxu0 0.0
      %2199 = vmatprep.subr.mxu0 0.0
      %2200 = vmatpush2.msra.mxu0 0.0
      %2201 = vmatprep.subr.mxu0 0.0
      %2202 = vmatpush2.msra.mxu0 0.0
      %2203 = vmatprep.subr.mxu0 0.0
      %2204 = vmatpush2.msra.mxu0 0.0
      %2205 = vmatprep.subr.mxu0 0.0
      %2206 = vmatpush2.msra.mxu0 0.0
      %2207 = vmatprep.subr.mxu0 0.0
      %2208 = vmatpush2.msra.mxu0 0.0
      %2209 = vmatprep.subr.mxu0 0.0
      %2210 = vmatpush2.msra.mxu0 0.0
      %2211 = vmatprep.subr.mxu0 0.0
      %2212 = vmatpush2.msra.mxu0 0.0
      %2213 = vmatprep.subr.mxu0 0.0
      %2214 = vmatpush2.msra.mxu0 0.0
      %2215 = vmatprep.subr.mxu0 0.0
      %2216 = vmatpush2.msra.mxu0 0.0
      %2217 = vmatprep.subr.mxu0 0.0
      %2218 = vmatpush2.msra.mxu0 0.0
      %2219 = vmatprep.subr.mxu0 0.0
      %2220 = vmatpush2.msra.mxu0 0.0
      %2221 = vmatprep.subr.mxu0 0.0
      %2222 = vmatpush2.msra.mxu0 0.0
      %2223 = vmatprep.subr.mxu0 0.0
      %2224 = vmatpush2.msra.mxu0 0.0
      %2225 = vmatprep.subr.mxu0 0.0
      %2226 = vmatpush2.msra.mxu0 0.0
      %2227 = vmatprep.mubr.f32.mxu0 0.0
      %2228 = vmatmul.mubr.f32.gmra.mxu0 %v2161
      %v2229 = vpop.f32.mrf.mxu0
      %v2230 = vadd.f32 0.0, %v2229
      %v2231 = vpop.f32.mrf.mxu0
      %v2232 = vadd.f32 0.0, %v2231
      %2233 = vdwg.mxu0
      %v2234 = vadd.f32 %v2144, %v2230
      %v2235 = vadd.f32 %v2145, %v2232
      %2236 = vrot.lane.b32.xlu0 %v1625, 110
      %v2237 = vpop.permute.xlu0 %2236
      %2238 = vrot.lane.b32.xlu0 %v1629, 110
      %v2239 = vpop.permute.xlu0 %2238
      %2240 = vrot.lane.b32.xlu0 %v1626, 110
      %v2241 = vpop.permute.xlu0 %2240
      %2242 = vrot.lane.b32.xlu0 %v1630, 110
      %v2243 = vpop.permute.xlu0 %2242
      %v2244 = vsel %vm1257, %v2237, %v2241
      %v2245 = vsel %vm1257, %v2239, %v2243
      %v2246 = vsel %vm1257, %v2241, %v2237
      %v2247 = vsel %vm1257, %v2243, %v2239
      %s2248 = scalar_lea.vmem %s6, 40
      %v2249 = vld [vmem:[%s2248] sm:$0xff]
      %v2251 = vsel %vm1645, %v2249, 0
      %2253 = vmatprep.subr.mxu0 0.0
      %2254 = vmatpush1.msra.mxu0 0.0
      %2255 = vmatprep.subr.mxu0 0.0
      %2256 = vmatpush1.msra.mxu0 0.0
      %2257 = vmatprep.subr.mxu0 0.0
      %2258 = vmatpush1.msra.mxu0 0.0
      %2259 = vmatprep.subr.mxu0 0.0
      %2260 = vmatpush1.msra.mxu0 0.0
      %2261 = vmatprep.subr.mxu0 0.0
      %2262 = vmatpush1.msra.mxu0 0.0
      %2263 = vmatprep.subr.mxu0 0.0
      %2264 = vmatpush1.msra.mxu0 0.0
      %2265 = vmatprep.subr.mxu0 0.0
      %2266 = vmatpush1.msra.mxu0 0.0
      %2267 = vmatprep.subr.mxu0 0.0
      %2268 = vmatpush1.msra.mxu0 0.0
      %2269 = vmatprep.subr.mxu0 0.0
      %2270 = vmatpush1.msra.mxu0 0.0
      %2271 = vmatprep.subr.mxu0 0.0
      %2272 = vmatpush1.msra.mxu0 0.0
      %2273 = vmatprep.subr.mxu0 0.0
      %2274 = vmatpush1.msra.mxu0 0.0
      %2275 = vmatprep.subr.mxu0 0.0
      %2276 = vmatpush1.msra.mxu0 0.0
      %2277 = vmatprep.subr.mxu0 0.0
      %2278 = vmatpush1.msra.mxu0 0.0
      %2279 = vmatprep.subr.mxu0 0.0
      %2280 = vmatpush1.msra.mxu0 0.0
      %2281 = vmatprep.subr.mxu0 %v2247
      %2282 = vmatpush1.msra.mxu0 %v2245
      %2283 = vmatprep.subr.mxu0 %v2246
      %2284 = vmatpush1.msra.mxu0 %v2244
      %2285 = vmatprep.subr.mxu0 0.0
      %2286 = vmatpush2.msra.mxu0 0.0
      %2287 = vmatprep.subr.mxu0 0.0
      %2288 = vmatpush2.msra.mxu0 0.0
      %2289 = vmatprep.subr.mxu0 0.0
      %2290 = vmatpush2.msra.mxu0 0.0
      %2291 = vmatprep.subr.mxu0 0.0
      %2292 = vmatpush2.msra.mxu0 0.0
      %2293 = vmatprep.subr.mxu0 0.0
      %2294 = vmatpush2.msra.mxu0 0.0
      %2295 = vmatprep.subr.mxu0 0.0
      %2296 = vmatpush2.msra.mxu0 0.0
      %2297 = vmatprep.subr.mxu0 0.0
      %2298 = vmatpush2.msra.mxu0 0.0
      %2299 = vmatprep.subr.mxu0 0.0
      %2300 = vmatpush2.msra.mxu0 0.0
      %2301 = vmatprep.subr.mxu0 0.0
      %2302 = vmatpush2.msra.mxu0 0.0
      %2303 = vmatprep.subr.mxu0 0.0
      %2304 = vmatpush2.msra.mxu0 0.0
      %2305 = vmatprep.subr.mxu0 0.0
      %2306 = vmatpush2.msra.mxu0 0.0
      %2307 = vmatprep.subr.mxu0 0.0
      %2308 = vmatpush2.msra.mxu0 0.0
      %2309 = vmatprep.subr.mxu0 0.0
      %2310 = vmatpush2.msra.mxu0 0.0
      %2311 = vmatprep.subr.mxu0 0.0
      %2312 = vmatpush2.msra.mxu0 0.0
      %2313 = vmatprep.subr.mxu0 0.0
      %2314 = vmatpush2.msra.mxu0 0.0
      %2315 = vmatprep.subr.mxu0 0.0
      %2316 = vmatpush2.msra.mxu0 0.0
      %2317 = vmatprep.mubr.f32.mxu0 0.0
      %2318 = vmatmul.mubr.f32.gmra.mxu0 %v2251
      %v2319 = vpop.f32.mrf.mxu0
      %v2320 = vadd.f32 0.0, %v2319
      %v2321 = vpop.f32.mrf.mxu0
      %v2322 = vadd.f32 0.0, %v2321
      %2323 = vdwg.mxu0
      %v2324 = vadd.f32 %v2234, %v2320
      %v2325 = vadd.f32 %v2235, %v2322
      %2326 = vrot.lane.b32.xlu0 %v1625, 96
      %v2327 = vpop.permute.xlu0 %2326
      %2328 = vrot.lane.b32.xlu0 %v1629, 96
      %v2329 = vpop.permute.xlu0 %2328
      %2330 = vrot.lane.b32.xlu0 %v1626, 96
      %v2331 = vpop.permute.xlu0 %2330
      %2332 = vrot.lane.b32.xlu0 %v1630, 96
      %v2333 = vpop.permute.xlu0 %2332
      %v2334 = vsel %vm1348, %v2327, %v2331
      %v2335 = vsel %vm1348, %v2329, %v2333
      %v2336 = vsel %vm1348, %v2331, %v2327
      %v2337 = vsel %vm1348, %v2333, %v2329
      %s2338 = scalar_lea.vmem %s6, 48
      %v2339 = vld [vmem:[%s2338] sm:$0xff]
      %v2341 = vsel %vm1645, %v2339, 0
      %2343 = vmatprep.subr.mxu0 0.0
      %2344 = vmatpush1.msra.mxu0 0.0
      %2345 = vmatprep.subr.mxu0 0.0
      %2346 = vmatpush1.msra.mxu0 0.0
      %2347 = vmatprep.subr.mxu0 0.0
      %2348 = vmatpush1.msra.mxu0 0.0
      %2349 = vmatprep.subr.mxu0 0.0
      %2350 = vmatpush1.msra.mxu0 0.0
      %2351 = vmatprep.subr.mxu0 0.0
      %2352 = vmatpush1.msra.mxu0 0.0
      %2353 = vmatprep.subr.mxu0 0.0
      %2354 = vmatpush1.msra.mxu0 0.0
      %2355 = vmatprep.subr.mxu0 0.0
      %2356 = vmatpush1.msra.mxu0 0.0
      %2357 = vmatprep.subr.mxu0 0.0
      %2358 = vmatpush1.msra.mxu0 0.0
      %2359 = vmatprep.subr.mxu0 0.0
      %2360 = vmatpush1.msra.mxu0 0.0
      %2361 = vmatprep.subr.mxu0 0.0
      %2362 = vmatpush1.msra.mxu0 0.0
      %2363 = vmatprep.subr.mxu0 0.0
      %2364 = vmatpush1.msra.mxu0 0.0
      %2365 = vmatprep.subr.mxu0 0.0
      %2366 = vmatpush1.msra.mxu0 0.0
      %2367 = vmatprep.subr.mxu0 0.0
      %2368 = vmatpush1.msra.mxu0 0.0
      %2369 = vmatprep.subr.mxu0 0.0
      %2370 = vmatpush1.msra.mxu0 0.0
      %2371 = vmatprep.subr.mxu0 %v2337
      %2372 = vmatpush1.msra.mxu0 %v2335
      %2373 = vmatprep.subr.mxu0 %v2336
      %2374 = vmatpush1.msra.mxu0 %v2334
      %2375 = vmatprep.subr.mxu0 0.0
      %2376 = vmatpush2.msra.mxu0 0.0
      %2377 = vmatprep.subr.mxu0 0.0
      %2378 = vmatpush2.msra.mxu0 0.0
      %2379 = vmatprep.subr.mxu0 0.0
      %2380 = vmatpush2.msra.mxu0 0.0
      %2381 = vmatprep.subr.mxu0 0.0
      %2382 = vmatpush2.msra.mxu0 0.0
      %2383 = vmatprep.subr.mxu0 0.0
      %2384 = vmatpush2.msra.mxu0 0.0
      %2385 = vmatprep.subr.mxu0 0.0
      %2386 = vmatpush2.msra.mxu0 0.0
      %2387 = vmatprep.subr.mxu0 0.0
      %2388 = vmatpush2.msra.mxu0 0.0
      %2389 = vmatprep.subr.mxu0 0.0
      %2390 = vmatpush2.msra.mxu0 0.0
      %2391 = vmatprep.subr.mxu0 0.0
      %2392 = vmatpush2.msra.mxu0 0.0
      %2393 = vmatprep.subr.mxu0 0.0
      %2394 = vmatpush2.msra.mxu0 0.0
      %2395 = vmatprep.subr.mxu0 0.0
      %2396 = vmatpush2.msra.mxu0 0.0
      %2397 = vmatprep.subr.mxu0 0.0
      %2398 = vmatpush2.msra.mxu0 0.0
      %2399 = vmatprep.subr.mxu0 0.0
      %2400 = vmatpush2.msra.mxu0 0.0
      %2401 = vmatprep.subr.mxu0 0.0
      %2402 = vmatpush2.msra.mxu0 0.0
      %2403 = vmatprep.subr.mxu0 0.0
      %2404 = vmatpush2.msra.mxu0 0.0
      %2405 = vmatprep.subr.mxu0 0.0
      %2406 = vmatpush2.msra.mxu0 0.0
      %2407 = vmatprep.mubr.f32.mxu0 0.0
      %2408 = vmatmul.mubr.f32.gmra.mxu0 %v2341
      %v2409 = vpop.f32.mrf.mxu0
      %v2410 = vadd.f32 0.0, %v2409
      %v2411 = vpop.f32.mrf.mxu0
      %v2412 = vadd.f32 0.0, %v2411
      %2413 = vdwg.mxu0
      %v2414 = vadd.f32 %v2324, %v2410
      %v2415 = vadd.f32 %v2325, %v2412
      %2416 = vrot.lane.b32.xlu0 %v1625, 95
      %v2417 = vpop.permute.xlu0 %2416
      %2418 = vrot.lane.b32.xlu0 %v1629, 95
      %v2419 = vpop.permute.xlu0 %2418
      %2420 = vrot.lane.b32.xlu0 %v1626, 95
      %v2421 = vpop.permute.xlu0 %2420
      %2422 = vrot.lane.b32.xlu0 %v1630, 95
      %v2423 = vpop.permute.xlu0 %2422
      %v2424 = vsel %vm1439, %v2417, %v2421
      %v2425 = vsel %vm1439, %v2419, %v2423
      %v2426 = vsel %vm1439, %v2421, %v2417
      %v2427 = vsel %vm1439, %v2423, %v2419
      %s2428 = scalar_lea.vmem %s6, 56
      %v2429 = vld [vmem:[%s2428] sm:$0xff]
      %v2431 = vsel %vm1645, %v2429, 0
      %2433 = vmatprep.subr.mxu0 0.0
      %2434 = vmatpush1.msra.mxu0 0.0
      %2435 = vmatprep.subr.mxu0 0.0
      %2436 = vmatpush1.msra.mxu0 0.0
      %2437 = vmatprep.subr.mxu0 0.0
      %2438 = vmatpush1.msra.mxu0 0.0
      %2439 = vmatprep.subr.mxu0 0.0
      %2440 = vmatpush1.msra.mxu0 0.0
      %2441 = vmatprep.subr.mxu0 0.0
      %2442 = vmatpush1.msra.mxu0 0.0
      %2443 = vmatprep.subr.mxu0 0.0
      %2444 = vmatpush1.msra.mxu0 0.0
      %2445 = vmatprep.subr.mxu0 0.0
      %2446 = vmatpush1.msra.mxu0 0.0
      %2447 = vmatprep.subr.mxu0 0.0
      %2448 = vmatpush1.msra.mxu0 0.0
      %2449 = vmatprep.subr.mxu0 0.0
      %2450 = vmatpush1.msra.mxu0 0.0
      %2451 = vmatprep.subr.mxu0 0.0
      %2452 = vmatpush1.msra.mxu0 0.0
      %2453 = vmatprep.subr.mxu0 0.0
      %2454 = vmatpush1.msra.mxu0 0.0
      %2455 = vmatprep.subr.mxu0 0.0
      %2456 = vmatpush1.msra.mxu0 0.0
      %2457 = vmatprep.subr.mxu0 0.0
      %2458 = vmatpush1.msra.mxu0 0.0
      %2459 = vmatprep.subr.mxu0 0.0
      %2460 = vmatpush1.msra.mxu0 0.0
      %2461 = vmatprep.subr.mxu0 %v2427
      %2462 = vmatpush1.msra.mxu0 %v2425
      %2463 = vmatprep.subr.mxu0 %v2426
      %2464 = vmatpush1.msra.mxu0 %v2424
      %2465 = vmatprep.subr.mxu0 0.0
      %2466 = vmatpush2.msra.mxu0 0.0
      %2467 = vmatprep.subr.mxu0 0.0
      %2468 = vmatpush2.msra.mxu0 0.0
      %2469 = vmatprep.subr.mxu0 0.0
      %2470 = vmatpush2.msra.mxu0 0.0
      %2471 = vmatprep.subr.mxu0 0.0
      %2472 = vmatpush2.msra.mxu0 0.0
      %2473 = vmatprep.subr.mxu0 0.0
      %2474 = vmatpush2.msra.mxu0 0.0
      %2475 = vmatprep.subr.mxu0 0.0
      %2476 = vmatpush2.msra.mxu0 0.0
      %2477 = vmatprep.subr.mxu0 0.0
      %2478 = vmatpush2.msra.mxu0 0.0
      %2479 = vmatprep.subr.mxu0 0.0
      %2480 = vmatpush2.msra.mxu0 0.0
      %2481 = vmatprep.subr.mxu0 0.0
      %2482 = vmatpush2.msra.mxu0 0.0
      %2483 = vmatprep.subr.mxu0 0.0
      %2484 = vmatpush2.msra.mxu0 0.0
      %2485 = vmatprep.subr.mxu0 0.0
      %2486 = vmatpush2.msra.mxu0 0.0
      %2487 = vmatprep.subr.mxu0 0.0
      %2488 = vmatpush2.msra.mxu0 0.0
      %2489 = vmatprep.subr.mxu0 0.0
      %2490 = vmatpush2.msra.mxu0 0.0
      %2491 = vmatprep.subr.mxu0 0.0
      %2492 = vmatpush2.msra.mxu0 0.0
      %2493 = vmatprep.subr.mxu0 0.0
      %2494 = vmatpush2.msra.mxu0 0.0
      %2495 = vmatprep.subr.mxu0 0.0
      %2496 = vmatpush2.msra.mxu0 0.0
      %2497 = vmatprep.mubr.f32.mxu0 0.0
      %2498 = vmatmul.mubr.f32.gmra.mxu0 %v2431
      %v2499 = vpop.f32.mrf.mxu0
      %v2500 = vadd.f32 0.0, %v2499
      %v2501 = vpop.f32.mrf.mxu0
      %v2502 = vadd.f32 0.0, %v2501
      %2503 = vdwg.mxu0
      %v2504 = vadd.f32 %v2414, %v2500
      %v2505 = vadd.f32 %v2415, %v2502
      %2506 = vrot.lane.b32.xlu0 %v1625, 94
      %v2507 = vpop.permute.xlu0 %2506
      %2508 = vrot.lane.b32.xlu0 %v1629, 94
      %v2509 = vpop.permute.xlu0 %2508
      %2510 = vrot.lane.b32.xlu0 %v1626, 94
      %v2511 = vpop.permute.xlu0 %2510
      %2512 = vrot.lane.b32.xlu0 %v1630, 94
      %v2513 = vpop.permute.xlu0 %2512
      %v2514 = vsel %vm1530, %v2507, %v2511
      %v2515 = vsel %vm1530, %v2509, %v2513
      %v2516 = vsel %vm1530, %v2511, %v2507
      %v2517 = vsel %vm1530, %v2513, %v2509
      %s2518 = scalar_lea.vmem %s6, 64
      %v2519 = vld [vmem:[%s2518] sm:$0xff]
      %v2521 = vsel %vm1645, %v2519, 0
      %2523 = vmatprep.subr.mxu0 0.0
      %2524 = vmatpush1.msra.mxu0 0.0
      %2525 = vmatprep.subr.mxu0 0.0
      %2526 = vmatpush1.msra.mxu0 0.0
      %2527 = vmatprep.subr.mxu0 0.0
      %2528 = vmatpush1.msra.mxu0 0.0
      %2529 = vmatprep.subr.mxu0 0.0
      %2530 = vmatpush1.msra.mxu0 0.0
      %2531 = vmatprep.subr.mxu0 0.0
      %2532 = vmatpush1.msra.mxu0 0.0
      %2533 = vmatprep.subr.mxu0 0.0
      %2534 = vmatpush1.msra.mxu0 0.0
      %2535 = vmatprep.subr.mxu0 0.0
      %2536 = vmatpush1.msra.mxu0 0.0
      %2537 = vmatprep.subr.mxu0 0.0
      %2538 = vmatpush1.msra.mxu0 0.0
      %2539 = vmatprep.subr.mxu0 0.0
      %2540 = vmatpush1.msra.mxu0 0.0
      %2541 = vmatprep.subr.mxu0 0.0
      %2542 = vmatpush1.msra.mxu0 0.0
      %2543 = vmatprep.subr.mxu0 0.0
      %2544 = vmatpush1.msra.mxu0 0.0
      %2545 = vmatprep.subr.mxu0 0.0
      %2546 = vmatpush1.msra.mxu0 0.0
      %2547 = vmatprep.subr.mxu0 0.0
      %2548 = vmatpush1.msra.mxu0 0.0
      %2549 = vmatprep.subr.mxu0 0.0
      %2550 = vmatpush1.msra.mxu0 0.0
      %2551 = vmatprep.subr.mxu0 %v2517
      %2552 = vmatpush1.msra.mxu0 %v2515
      %2553 = vmatprep.subr.mxu0 %v2516
      %2554 = vmatpush1.msra.mxu0 %v2514
      %2555 = vmatprep.subr.mxu0 0.0
      %2556 = vmatpush2.msra.mxu0 0.0
      %2557 = vmatprep.subr.mxu0 0.0
      %2558 = vmatpush2.msra.mxu0 0.0
      %2559 = vmatprep.subr.mxu0 0.0
      %2560 = vmatpush2.msra.mxu0 0.0
      %2561 = vmatprep.subr.mxu0 0.0
      %2562 = vmatpush2.msra.mxu0 0.0
      %2563 = vmatprep.subr.mxu0 0.0
      %2564 = vmatpush2.msra.mxu0 0.0
      %2565 = vmatprep.subr.mxu0 0.0
      %2566 = vmatpush2.msra.mxu0 0.0
      %2567 = vmatprep.subr.mxu0 0.0
      %2568 = vmatpush2.msra.mxu0 0.0
      %2569 = vmatprep.subr.mxu0 0.0
      %2570 = vmatpush2.msra.mxu0 0.0
      %2571 = vmatprep.subr.mxu0 0.0
      %2572 = vmatpush2.msra.mxu0 0.0
      %2573 = vmatprep.subr.mxu0 0.0
      %2574 = vmatpush2.msra.mxu0 0.0
      %2575 = vmatprep.subr.mxu0 0.0
      %2576 = vmatpush2.msra.mxu0 0.0
      %2577 = vmatprep.subr.mxu0 0.0
      %2578 = vmatpush2.msra.mxu0 0.0
      %2579 = vmatprep.subr.mxu0 0.0
      %2580 = vmatpush2.msra.mxu0 0.0
      %2581 = vmatprep.subr.mxu0 0.0
      %2582 = vmatpush2.msra.mxu0 0.0
      %2583 = vmatprep.subr.mxu0 0.0
      %2584 = vmatpush2.msra.mxu0 0.0
      %2585 = vmatprep.subr.mxu0 0.0
      %2586 = vmatpush2.msra.mxu0 0.0
      %2587 = vmatprep.mubr.f32.mxu0 0.0
      %2588 = vmatmul.mubr.f32.gmra.mxu0 %v2521
      %v2589 = vpop.f32.mrf.mxu0
      %v2590 = vadd.f32 0.0, %v2589
      %v2591 = vpop.f32.mrf.mxu0
      %v2592 = vadd.f32 0.0, %v2591
      %2593 = vdwg.mxu0
      %v2594 = vadd.f32 %v2504, %v2590
      %v2595 = vadd.f32 %v2505, %v2592
      %v2596 = vld [vmem:[%s7] sm:$0xff]
      %2598 = vset.pattern.permute.xlu0 0
      %2599 = vperm.xlu0 %2598, %v2596
      %v2600 = vpop.permute.xlu0 %2599
      %v2602 = vadd.f32 %v2594, %v2600
      %v2603 = vadd.f32 %v2595, %v2600
      %v2604 = vmax.f32 %v2602, 0.0
      %v2605 = vmax.f32 %v2603, 0.0
      %v2606 = vsub.f32 0.0, %v2602
      %v2607 = vsub.f32 0.0, %v2603
      %v2608 = vmax.f32 %v2606, 0.0
      %v2609 = vmax.f32 %v2607, 0.0
      %v2610 = vld [vmem:[%s14] sm:$0xff]
      %v2611 = vld [vmem:[%s14 + $0x8] sm:$0x3]
      %v2612 = vld [vmem:[%s15] sm:$0xff]
      %v2613 = vld [vmem:[%s15 + $0x8] sm:$0x3]
      %2615 = vset.pattern.permute.xlu0 0
      %2616 = vperm.xlu0 %2615, %v2612
      %v2617 = vpop.permute.xlu0 %2616
      %2620 = vset.pattern.permute.xlu0 0
      %2621 = vperm.xlu0 %2620, %v2613
      %v2622 = vpop.permute.xlu0 %2621
      %v2625 = vsel %vm1645, %v2610, 0
      %v2628 = vsel %vm1645, %v2611, 0
      %2630 = vmatprep.subr.mxu0 0.0
      %2631 = vmatpush1.msra.mxu0 0.0
      %2632 = vmatprep.subr.mxu0 0.0
      %2633 = vmatpush1.msra.mxu0 0.0
      %2634 = vmatprep.subr.mxu0 0.0
      %2635 = vmatpush1.msra.mxu0 0.0
      %2636 = vmatprep.subr.mxu0 0.0
      %2637 = vmatpush1.msra.mxu0 0.0
      %2638 = vmatprep.subr.mxu0 0.0
      %2639 = vmatpush1.msra.mxu0 0.0
      %2640 = vmatprep.subr.mxu0 0.0
      %2641 = vmatpush1.msra.mxu0 0.0
      %2642 = vmatprep.subr.mxu0 0.0
      %2643 = vmatpush1.msra.mxu0 0.0
      %2644 = vmatprep.subr.mxu0 0.0
      %2645 = vmatpush1.msra.mxu0 0.0
      %2646 = vmatprep.subr.mxu0 0.0
      %2647 = vmatpush1.msra.mxu0 0.0
      %2648 = vmatprep.subr.mxu0 0.0
      %2649 = vmatpush1.msra.mxu0 0.0
      %2650 = vmatprep.subr.mxu0 0.0
      %2651 = vmatpush1.msra.mxu0 0.0
      %2652 = vmatprep.subr.mxu0 0.0
      %2653 = vmatpush1.msra.mxu0 0.0
      %2654 = vmatprep.subr.mxu0 0.0
      %2655 = vmatpush1.msra.mxu0 0.0
      %2656 = vmatprep.subr.mxu0 0.0
      %2657 = vmatpush1.msra.mxu0 0.0
      %2658 = vmatprep.subr.mxu0 %v2609
      %2659 = vmatpush1.msra.mxu0 %v2608
      %2660 = vmatprep.subr.mxu0 %v2605
      %2661 = vmatpush1.msra.mxu0 %v2604
      %2662 = vmatprep.subr.mxu0 0.0
      %2663 = vmatpush2.msra.mxu0 0.0
      %2664 = vmatprep.subr.mxu0 0.0
      %2665 = vmatpush2.msra.mxu0 0.0
      %2666 = vmatprep.subr.mxu0 0.0
      %2667 = vmatpush2.msra.mxu0 0.0
      %2668 = vmatprep.subr.mxu0 0.0
      %2669 = vmatpush2.msra.mxu0 0.0
      %2670 = vmatprep.subr.mxu0 0.0
      %2671 = vmatpush2.msra.mxu0 0.0
      %2672 = vmatprep.subr.mxu0 0.0
      %2673 = vmatpush2.msra.mxu0 0.0
      %2674 = vmatprep.subr.mxu0 0.0
      %2675 = vmatpush2.msra.mxu0 0.0
      %2676 = vmatprep.subr.mxu0 0.0
      %2677 = vmatpush2.msra.mxu0 0.0
      %2678 = vmatprep.subr.mxu0 0.0
      %2679 = vmatpush2.msra.mxu0 0.0
      %2680 = vmatprep.subr.mxu0 0.0
      %2681 = vmatpush2.msra.mxu0 0.0
      %2682 = vmatprep.subr.mxu0 0.0
      %2683 = vmatpush2.msra.mxu0 0.0
      %2684 = vmatprep.subr.mxu0 0.0
      %2685 = vmatpush2.msra.mxu0 0.0
      %2686 = vmatprep.subr.mxu0 0.0
      %2687 = vmatpush2.msra.mxu0 0.0
      %2688 = vmatprep.subr.mxu0 0.0
      %2689 = vmatpush2.msra.mxu0 0.0
      %2690 = vmatprep.subr.mxu0 0.0
      %2691 = vmatpush2.msra.mxu0 0.0
      %2692 = vmatprep.subr.mxu0 0.0
      %2693 = vmatpush2.msra.mxu0 0.0
      %2694 = vmatprep.mubr.f32.mxu0 0.0
      %2695 = vmatmul.mubr.f32.gmra.mxu0 %v2625
      %v2696 = vpop.f32.mrf.mxu0
      %v2697 = vadd.f32 %v2617, %v2696
      %v2698 = vpop.f32.mrf.mxu0
      %v2699 = vadd.f32 %v2617, %v2698
      %2700 = vmatprep.mubr.f32.mxu0 0.0
      %2701 = vmatmul.mubr.f32.gmra.mxu0 %v2628
      %v2702 = vpop.f32.mrf.mxu0
      %v2703 = vadd.f32 %v2622, %v2702
      %v2704 = vpop.f32.mrf.mxu0
      %v2705 = vadd.f32 %v2622, %v2704
      %2706 = vdwg.mxu0
      %s2707 = scalar_lea.vmem %s3, 4
      %v2708 = vld [vmem:[%s2707] sm:$0x3]
      %vm2709 = vcmp.gt.f32.partialorder %v2708, 0.0
      %v2710 = vsel %vm2709, 1, 0
      %v2711 = vlaneseq
      %v2712 = vshrl.u32 %v2711, 7
      %v2713 = vsub.s32 0, %v2712
      %v2714 = vrot.slane %v2710, %v2713
      %v2715 = vlaneseq
      %v2716 = vshrl.u32 %v2715, 7
      %v2717 = vsub.s32 1, %v2716
      %v2718 = vrot.slane %v2710, %v2717
      %vm2719 = vcmp.eq.s32.totalorder %v2714, 1
      %vm2720 = vcmp.eq.s32.totalorder %v2718, 1
      %v2721 = vsel %vm2719, %v2697, -inf
      %v2722 = vsel %vm2720, %v2699, -inf
      %v2723 = vsel %vm2719, %v2703, -inf
      %v2724 = vsel %vm2720, %v2705, -inf
      %v2725 = vmax.f32 %v2721, %v2722
      %2726 = vmax.xlane.f32.xlu0 %v2725
      %v2727 = vpop.xlane.xlu0 %2726
      %v2728 = vsel %vm781, %v2723, -inf
      %v2729 = vsel %vm781, %v2724, -inf
      %v2730 = vmax.f32 %v2728, %v2729
      %2731 = vmax.xlane.f32.xlu0 %v2730
      %v2732 = vpop.xlane.xlu0 %2731
      %v2733 = vsub.f32 %v2721, %v2727
      %v2734 = vsub.f32 %v2722, %v2727
      %v2735 = vsub.f32 %v2723, %v2732
      %v2736 = vsub.f32 %v2724, %v2732
      %v2737 = vmul.f32 %v2733, 1.442695
      %v2738 = vpow.pop %v2737
      %v2739 = vmul.f32 %v2734, 1.442695
      %v2740 = vpow.pop %v2739
      %v2741 = vmul.f32 %v2735, 1.442695
      %v2742 = vpow.pop %v2741
      %v2743 = vmul.f32 %v2736, 1.442695
      %v2744 = vpow.pop %v2743
      %v2745 = vadd.f32 %v2738, %v2740
      %2746 = vadd.xlane.f32.xlu0 %v2745
      %v2747 = vpop.xlane.xlu0 %2746
      %v2748 = vsel %vm781, %v2742, 0.0
      %v2749 = vsel %vm781, %v2744, 0.0
      %v2750 = vadd.f32 %v2748, %v2749
      %2751 = vadd.xlane.f32.xlu0 %v2750
      %v2752 = vpop.xlane.xlu0 %2751
      %v2753 = vlog2.pop %v2747
      %v2754 = vmul.f32 %v2753, 0.6931472
      %v2755 = vlog2.pop %v2752
      %v2756 = vmul.f32 %v2755, 0.6931472
      %v2757 = vadd.f32 %v2727, %v2754
      %v2758 = vadd.f32 %v2732, %v2756
      %v2759 = vmax.f32 %v1801, %v2757
      %v2760 = vmax.f32 %v1802, %v2758
      %v2761 = vsub.f32 %v1801, %v2759
      %v2762 = vsub.f32 %v1802, %v2760
      %v2763 = vmul.f32 %v2761, 1.442695
      %v2764 = vpow.pop %v2763
      %v2765 = vmul.f32 %v2762, 1.442695
      %v2766 = vpow.pop %v2765
      %v2767 = vsub.f32 %v2757, %v2759
      %v2768 = vsub.f32 %v2758, %v2760
      %v2769 = vmul.f32 %v2767, 1.442695
      %v2770 = vpow.pop %v2769
      %v2771 = vmul.f32 %v2768, 1.442695
      %v2772 = vpow.pop %v2771
      %v2773 = vadd.f32 %v2764, %v2770
      %v2774 = vadd.f32 %v2766, %v2772
      %v2775 = vlog2.pop %v2773
      %v2776 = vmul.f32 %v2775, 0.6931472
      %v2777 = vlog2.pop %v2774
      %v2778 = vmul.f32 %v2777, 0.6931472
      %v2779 = vadd.f32 %v2759, %v2776
      %v2780 = vadd.f32 %v2760, %v2778
      %v2781 = vld [vmem:[%s8] sm:$0xff]
      %2782 = vrot.lane.b32.xlu0 %v2604, 127
      %v2783 = vpop.permute.xlu0 %2782
      %2784 = vrot.lane.b32.xlu0 %v2608, 127
      %v2785 = vpop.permute.xlu0 %2784
      %2786 = vrot.lane.b32.xlu0 %v2605, 127
      %v2787 = vpop.permute.xlu0 %2786
      %2788 = vrot.lane.b32.xlu0 %v2609, 127
      %v2789 = vpop.permute.xlu0 %2788
      %v2790 = vsel %vm821, %v2783, %v2787
      %v2791 = vsel %vm821, %v2785, %v2789
      %v2792 = vsel %vm821, %v2787, %v2783
      %v2793 = vsel %vm821, %v2789, %v2785
      %s2794 = scalar_lea.vmem %s8, 8
      %v2795 = vld [vmem:[%s2794] sm:$0xff]
      %v2797 = vsel %vm1645, %v2795, 0
      %2799 = vmatprep.subr.mxu0 0.0
      %2800 = vmatpush1.msra.mxu0 0.0
      %2801 = vmatprep.subr.mxu0 0.0
      %2802 = vmatpush1.msra.mxu0 0.0
      %2803 = vmatprep.subr.mxu0 0.0
      %2804 = vmatpush1.msra.mxu0 0.0
      %2805 = vmatprep.subr.mxu0 0.0
      %2806 = vmatpush1.msra.mxu0 0.0
      %2807 = vmatprep.subr.mxu0 0.0
      %2808 = vmatpush1.msra.mxu0 0.0
      %2809 = vmatprep.subr.mxu0 0.0
      %2810 = vmatpush1.msra.mxu0 0.0
      %2811 = vmatprep.subr.mxu0 0.0
      %2812 = vmatpush1.msra.mxu0 0.0
      %2813 = vmatprep.subr.mxu0 0.0
      %2814 = vmatpush1.msra.mxu0 0.0
      %2815 = vmatprep.subr.mxu0 0.0
      %2816 = vmatpush1.msra.mxu0 0.0
      %2817 = vmatprep.subr.mxu0 0.0
      %2818 = vmatpush1.msra.mxu0 0.0
      %2819 = vmatprep.subr.mxu0 0.0
      %2820 = vmatpush1.msra.mxu0 0.0
      %2821 = vmatprep.subr.mxu0 0.0
      %2822 = vmatpush1.msra.mxu0 0.0
      %2823 = vmatprep.subr.mxu0 0.0
      %2824 = vmatpush1.msra.mxu0 0.0
      %2825 = vmatprep.subr.mxu0 0.0
      %2826 = vmatpush1.msra.mxu0 0.0
      %2827 = vmatprep.subr.mxu0 %v2793
      %2828 = vmatpush1.msra.mxu0 %v2791
      %2829 = vmatprep.subr.mxu0 %v2792
      %2830 = vmatpush1.msra.mxu0 %v2790
      %2831 = vmatprep.subr.mxu0 0.0
      %2832 = vmatpush2.msra.mxu0 0.0
      %2833 = vmatprep.subr.mxu0 0.0
      %2834 = vmatpush2.msra.mxu0 0.0
      %2835 = vmatprep.subr.mxu0 0.0
      %2836 = vmatpush2.msra.mxu0 0.0
      %2837 = vmatprep.subr.mxu0 0.0
      %2838 = vmatpush2.msra.mxu0 0.0
      %2839 = vmatprep.subr.mxu0 0.0
      %2840 = vmatpush2.msra.mxu0 0.0
      %2841 = vmatprep.subr.mxu0 0.0
      %2842 = vmatpush2.msra.mxu0 0.0
      %2843 = vmatprep.subr.mxu0 0.0
      %2844 = vmatpush2.msra.mxu0 0.0
      %2845 = vmatprep.subr.mxu0 0.0
      %2846 = vmatpush2.msra.mxu0 0.0
      %2847 = vmatprep.subr.mxu0 0.0
      %2848 = vmatpush2.msra.mxu0 0.0
      %2849 = vmatprep.subr.mxu0 0.0
      %2850 = vmatpush2.msra.mxu0 0.0
      %2851 = vmatprep.subr.mxu0 0.0
      %2852 = vmatpush2.msra.mxu0 0.0
      %2853 = vmatprep.subr.mxu0 0.0
      %2854 = vmatpush2.msra.mxu0 0.0
      %2855 = vmatprep.subr.mxu0 0.0
      %2856 = vmatpush2.msra.mxu0 0.0
      %2857 = vmatprep.subr.mxu0 0.0
      %2858 = vmatpush2.msra.mxu0 0.0
      %2859 = vmatprep.subr.mxu0 0.0
      %2860 = vmatpush2.msra.mxu0 0.0
      %2861 = vmatprep.subr.mxu0 0.0
      %2862 = vmatpush2.msra.mxu0 0.0
      %2863 = vmatprep.mubr.f32.mxu0 0.0
      %2864 = vmatmul.mubr.f32.gmra.mxu0 %v2797
      %v2865 = vpop.f32.mrf.mxu0
      %v2866 = vadd.f32 0.0, %v2865
      %v2867 = vpop.f32.mrf.mxu0
      %v2868 = vadd.f32 0.0, %v2867
      %2869 = vdwg.mxu0
      %v2871 = vsel %vm1645, %v2781, 0
      %2873 = vmatprep.subr.mxu0 0.0
      %2874 = vmatpush1.msra.mxu0 0.0
      %2875 = vmatprep.subr.mxu0 0.0
      %2876 = vmatpush1.msra.mxu0 0.0
      %2877 = vmatprep.subr.mxu0 0.0
      %2878 = vmatpush1.msra.mxu0 0.0
      %2879 = vmatprep.subr.mxu0 0.0
      %2880 = vmatpush1.msra.mxu0 0.0
      %2881 = vmatprep.subr.mxu0 0.0
      %2882 = vmatpush1.msra.mxu0 0.0
      %2883 = vmatprep.subr.mxu0 0.0
      %2884 = vmatpush1.msra.mxu0 0.0
      %2885 = vmatprep.subr.mxu0 0.0
      %2886 = vmatpush1.msra.mxu0 0.0
      %2887 = vmatprep.subr.mxu0 0.0
      %2888 = vmatpush1.msra.mxu0 0.0
      %2889 = vmatprep.subr.mxu0 0.0
      %2890 = vmatpush1.msra.mxu0 0.0
      %2891 = vmatprep.subr.mxu0 0.0
      %2892 = vmatpush1.msra.mxu0 0.0
      %2893 = vmatprep.subr.mxu0 0.0
      %2894 = vmatpush1.msra.mxu0 0.0
      %2895 = vmatprep.subr.mxu0 0.0
      %2896 = vmatpush1.msra.mxu0 0.0
      %2897 = vmatprep.subr.mxu0 0.0
      %2898 = vmatpush1.msra.mxu0 0.0
      %2899 = vmatprep.subr.mxu0 0.0
      %2900 = vmatpush1.msra.mxu0 0.0
      %2901 = vmatprep.subr.mxu0 %v2609
      %2902 = vmatpush1.msra.mxu0 %v2608
      %2903 = vmatprep.subr.mxu0 %v2605
      %2904 = vmatpush1.msra.mxu0 %v2604
      %2905 = vmatprep.subr.mxu0 0.0
      %2906 = vmatpush2.msra.mxu0 0.0
      %2907 = vmatprep.subr.mxu0 0.0
      %2908 = vmatpush2.msra.mxu0 0.0
      %2909 = vmatprep.subr.mxu0 0.0
      %2910 = vmatpush2.msra.mxu0 0.0
      %2911 = vmatprep.subr.mxu0 0.0
      %2912 = vmatpush2.msra.mxu0 0.0
      %2913 = vmatprep.subr.mxu0 0.0
      %2914 = vmatpush2.msra.mxu0 0.0
      %2915 = vmatprep.subr.mxu0 0.0
      %2916 = vmatpush2.msra.mxu0 0.0
      %2917 = vmatprep.subr.mxu0 0.0
      %2918 = vmatpush2.msra.mxu0 0.0
      %2919 = vmatprep.subr.mxu0 0.0
      %2920 = vmatpush2.msra.mxu0 0.0
      %2921 = vmatprep.subr.mxu0 0.0
      %2922 = vmatpush2.msra.mxu0 0.0
      %2923 = vmatprep.subr.mxu0 0.0
      %2924 = vmatpush2.msra.mxu0 0.0
      %2925 = vmatprep.subr.mxu0 0.0
      %2926 = vmatpush2.msra.mxu0 0.0
      %2927 = vmatprep.subr.mxu0 0.0
      %2928 = vmatpush2.msra.mxu0 0.0
      %2929 = vmatprep.subr.mxu0 0.0
      %2930 = vmatpush2.msra.mxu0 0.0
      %2931 = vmatprep.subr.mxu0 0.0
      %2932 = vmatpush2.msra.mxu0 0.0
      %2933 = vmatprep.subr.mxu0 0.0
      %2934 = vmatpush2.msra.mxu0 0.0
      %2935 = vmatprep.subr.mxu0 0.0
      %2936 = vmatpush2.msra.mxu0 0.0
      %2937 = vmatprep.mubr.f32.mxu0 0.0
      %2938 = vmatmul.mubr.f32.gmra.mxu0 %v2871
      %v2939 = vpop.f32.mrf.mxu0
      %v2940 = vadd.f32 %v2866, %v2939
      %v2941 = vpop.f32.mrf.mxu0
      %v2942 = vadd.f32 %v2868, %v2941
      %2943 = vdwg.mxu0
      %2944 = vrot.lane.b32.xlu0 %v2604, 126
      %v2945 = vpop.permute.xlu0 %2944
      %2946 = vrot.lane.b32.xlu0 %v2608, 126
      %v2947 = vpop.permute.xlu0 %2946
      %2948 = vrot.lane.b32.xlu0 %v2605, 126
      %v2949 = vpop.permute.xlu0 %2948
      %2950 = vrot.lane.b32.xlu0 %v2609, 126
      %v2951 = vpop.permute.xlu0 %2950
      %v2952 = vsel %vm984, %v2945, %v2949
      %v2953 = vsel %vm984, %v2947, %v2951
      %v2954 = vsel %vm984, %v2949, %v2945
      %v2955 = vsel %vm984, %v2951, %v2947
      %s2956 = scalar_lea.vmem %s8, 16
      %v2957 = vld [vmem:[%s2956] sm:$0xff]
      %v2959 = vsel %vm1645, %v2957, 0
      %2961 = vmatprep.subr.mxu0 0.0
      %2962 = vmatpush1.msra.mxu0 0.0
      %2963 = vmatprep.subr.mxu0 0.0
      %2964 = vmatpush1.msra.mxu0 0.0
      %2965 = vmatprep.subr.mxu0 0.0
      %2966 = vmatpush1.msra.mxu0 0.0
      %2967 = vmatprep.subr.mxu0 0.0
      %2968 = vmatpush1.msra.mxu0 0.0
      %2969 = vmatprep.subr.mxu0 0.0
      %2970 = vmatpush1.msra.mxu0 0.0
      %2971 = vmatprep.subr.mxu0 0.0
      %2972 = vmatpush1.msra.mxu0 0.0
      %2973 = vmatprep.subr.mxu0 0.0
      %2974 = vmatpush1.msra.mxu0 0.0
      %2975 = vmatprep.subr.mxu0 0.0
      %2976 = vmatpush1.msra.mxu0 0.0
      %2977 = vmatprep.subr.mxu0 0.0
      %2978 = vmatpush1.msra.mxu0 0.0
      %2979 = vmatprep.subr.mxu0 0.0
      %2980 = vmatpush1.msra.mxu0 0.0
      %2981 = vmatprep.subr.mxu0 0.0
      %2982 = vmatpush1.msra.mxu0 0.0
      %2983 = vmatprep.subr.mxu0 0.0
      %2984 = vmatpush1.msra.mxu0 0.0
      %2985 = vmatprep.subr.mxu0 0.0
      %2986 = vmatpush1.msra.mxu0 0.0
      %2987 = vmatprep.subr.mxu0 0.0
      %2988 = vmatpush1.msra.mxu0 0.0
      %2989 = vmatprep.subr.mxu0 %v2955
      %2990 = vmatpush1.msra.mxu0 %v2953
      %2991 = vmatprep.subr.mxu0 %v2954
      %2992 = vmatpush1.msra.mxu0 %v2952
      %2993 = vmatprep.subr.mxu0 0.0
      %2994 = vmatpush2.msra.mxu0 0.0
      %2995 = vmatprep.subr.mxu0 0.0
      %2996 = vmatpush2.msra.mxu0 0.0
      %2997 = vmatprep.subr.mxu0 0.0
      %2998 = vmatpush2.msra.mxu0 0.0
      %2999 = vmatprep.subr.mxu0 0.0
      %3000 = vmatpush2.msra.mxu0 0.0
      %3001 = vmatprep.subr.mxu0 0.0
      %3002 = vmatpush2.msra.mxu0 0.0
      %3003 = vmatprep.subr.mxu0 0.0
      %3004 = vmatpush2.msra.mxu0 0.0
      %3005 = vmatprep.subr.mxu0 0.0
      %3006 = vmatpush2.msra.mxu0 0.0
      %3007 = vmatprep.subr.mxu0 0.0
      %3008 = vmatpush2.msra.mxu0 0.0
      %3009 = vmatprep.subr.mxu0 0.0
      %3010 = vmatpush2.msra.mxu0 0.0
      %3011 = vmatprep.subr.mxu0 0.0
      %3012 = vmatpush2.msra.mxu0 0.0
      %3013 = vmatprep.subr.mxu0 0.0
      %3014 = vmatpush2.msra.mxu0 0.0
      %3015 = vmatprep.subr.mxu0 0.0
      %3016 = vmatpush2.msra.mxu0 0.0
      %3017 = vmatprep.subr.mxu0 0.0
      %3018 = vmatpush2.msra.mxu0 0.0
      %3019 = vmatprep.subr.mxu0 0.0
      %3020 = vmatpush2.msra.mxu0 0.0
      %3021 = vmatprep.subr.mxu0 0.0
      %3022 = vmatpush2.msra.mxu0 0.0
      %3023 = vmatprep.subr.mxu0 0.0
      %3024 = vmatpush2.msra.mxu0 0.0
      %3025 = vmatprep.mubr.f32.mxu0 0.0
      %3026 = vmatmul.mubr.f32.gmra.mxu0 %v2959
      %v3027 = vpop.f32.mrf.mxu0
      %v3028 = vadd.f32 0.0, %v3027
      %v3029 = vpop.f32.mrf.mxu0
      %v3030 = vadd.f32 0.0, %v3029
      %3031 = vdwg.mxu0
      %v3032 = vadd.f32 %v2940, %v3028
      %v3033 = vadd.f32 %v2942, %v3030
      %3034 = vrot.lane.b32.xlu0 %v2604, 112
      %v3035 = vpop.permute.xlu0 %3034
      %3036 = vrot.lane.b32.xlu0 %v2608, 112
      %v3037 = vpop.permute.xlu0 %3036
      %3038 = vrot.lane.b32.xlu0 %v2605, 112
      %v3039 = vpop.permute.xlu0 %3038
      %3040 = vrot.lane.b32.xlu0 %v2609, 112
      %v3041 = vpop.permute.xlu0 %3040
      %v3042 = vsel %vm1075, %v3035, %v3039
      %v3043 = vsel %vm1075, %v3037, %v3041
      %v3044 = vsel %vm1075, %v3039, %v3035
      %v3045 = vsel %vm1075, %v3041, %v3037
      %s3046 = scalar_lea.vmem %s8, 24
      %v3047 = vld [vmem:[%s3046] sm:$0xff]
      %v3049 = vsel %vm1645, %v3047, 0
      %3051 = vmatprep.subr.mxu0 0.0
      %3052 = vmatpush1.msra.mxu0 0.0
      %3053 = vmatprep.subr.mxu0 0.0
      %3054 = vmatpush1.msra.mxu0 0.0
      %3055 = vmatprep.subr.mxu0 0.0
      %3056 = vmatpush1.msra.mxu0 0.0
      %3057 = vmatprep.subr.mxu0 0.0
      %3058 = vmatpush1.msra.mxu0 0.0
      %3059 = vmatprep.subr.mxu0 0.0
      %3060 = vmatpush1.msra.mxu0 0.0
      %3061 = vmatprep.subr.mxu0 0.0
      %3062 = vmatpush1.msra.mxu0 0.0
      %3063 = vmatprep.subr.mxu0 0.0
      %3064 = vmatpush1.msra.mxu0 0.0
      %3065 = vmatprep.subr.mxu0 0.0
      %3066 = vmatpush1.msra.mxu0 0.0
      %3067 = vmatprep.subr.mxu0 0.0
      %3068 = vmatpush1.msra.mxu0 0.0
      %3069 = vmatprep.subr.mxu0 0.0
      %3070 = vmatpush1.msra.mxu0 0.0
      %3071 = vmatprep.subr.mxu0 0.0
      %3072 = vmatpush1.msra.mxu0 0.0
      %3073 = vmatprep.subr.mxu0 0.0
      %3074 = vmatpush1.msra.mxu0 0.0
      %3075 = vmatprep.subr.mxu0 0.0
      %3076 = vmatpush1.msra.mxu0 0.0
      %3077 = vmatprep.subr.mxu0 0.0
      %3078 = vmatpush1.msra.mxu0 0.0
      %3079 = vmatprep.subr.mxu0 %v3045
      %3080 = vmatpush1.msra.mxu0 %v3043
      %3081 = vmatprep.subr.mxu0 %v3044
      %3082 = vmatpush1.msra.mxu0 %v3042
      %3083 = vmatprep.subr.mxu0 0.0
      %3084 = vmatpush2.msra.mxu0 0.0
      %3085 = vmatprep.subr.mxu0 0.0
      %3086 = vmatpush2.msra.mxu0 0.0
      %3087 = vmatprep.subr.mxu0 0.0
      %3088 = vmatpush2.msra.mxu0 0.0
      %3089 = vmatprep.subr.mxu0 0.0
      %3090 = vmatpush2.msra.mxu0 0.0
      %3091 = vmatprep.subr.mxu0 0.0
      %3092 = vmatpush2.msra.mxu0 0.0
      %3093 = vmatprep.subr.mxu0 0.0
      %3094 = vmatpush2.msra.mxu0 0.0
      %3095 = vmatprep.subr.mxu0 0.0
      %3096 = vmatpush2.msra.mxu0 0.0
      %3097 = vmatprep.subr.mxu0 0.0
      %3098 = vmatpush2.msra.mxu0 0.0
      %3099 = vmatprep.subr.mxu0 0.0
      %3100 = vmatpush2.msra.mxu0 0.0
      %3101 = vmatprep.subr.mxu0 0.0
      %3102 = vmatpush2.msra.mxu0 0.0
      %3103 = vmatprep.subr.mxu0 0.0
      %3104 = vmatpush2.msra.mxu0 0.0
      %3105 = vmatprep.subr.mxu0 0.0
      %3106 = vmatpush2.msra.mxu0 0.0
      %3107 = vmatprep.subr.mxu0 0.0
      %3108 = vmatpush2.msra.mxu0 0.0
      %3109 = vmatprep.subr.mxu0 0.0
      %3110 = vmatpush2.msra.mxu0 0.0
      %3111 = vmatprep.subr.mxu0 0.0
      %3112 = vmatpush2.msra.mxu0 0.0
      %3113 = vmatprep.subr.mxu0 0.0
      %3114 = vmatpush2.msra.mxu0 0.0
      %3115 = vmatprep.mubr.f32.mxu0 0.0
      %3116 = vmatmul.mubr.f32.gmra.mxu0 %v3049
      %v3117 = vpop.f32.mrf.mxu0
      %v3118 = vadd.f32 0.0, %v3117
      %v3119 = vpop.f32.mrf.mxu0
      %v3120 = vadd.f32 0.0, %v3119
      %3121 = vdwg.mxu0
      %v3122 = vadd.f32 %v3032, %v3118
      %v3123 = vadd.f32 %v3033, %v3120
      %3124 = vrot.lane.b32.xlu0 %v2604, 111
      %v3125 = vpop.permute.xlu0 %3124
      %3126 = vrot.lane.b32.xlu0 %v2608, 111
      %v3127 = vpop.permute.xlu0 %3126
      %3128 = vrot.lane.b32.xlu0 %v2605, 111
      %v3129 = vpop.permute.xlu0 %3128
      %3130 = vrot.lane.b32.xlu0 %v2609, 111
      %v3131 = vpop.permute.xlu0 %3130
      %v3132 = vsel %vm1166, %v3125, %v3129
      %v3133 = vsel %vm1166, %v3127, %v3131
      %v3134 = vsel %vm1166, %v3129, %v3125
      %v3135 = vsel %vm1166, %v3131, %v3127
      %s3136 = scalar_lea.vmem %s8, 32
      %v3137 = vld [vmem:[%s3136] sm:$0xff]
      %v3139 = vsel %vm1645, %v3137, 0
      %3141 = vmatprep.subr.mxu0 0.0
      %3142 = vmatpush1.msra.mxu0 0.0
      %3143 = vmatprep.subr.mxu0 0.0
      %3144 = vmatpush1.msra.mxu0 0.0
      %3145 = vmatprep.subr.mxu0 0.0
      %3146 = vmatpush1.msra.mxu0 0.0
      %3147 = vmatprep.subr.mxu0 0.0
      %3148 = vmatpush1.msra.mxu0 0.0
      %3149 = vmatprep.subr.mxu0 0.0
      %3150 = vmatpush1.msra.mxu0 0.0
      %3151 = vmatprep.subr.mxu0 0.0
      %3152 = vmatpush1.msra.mxu0 0.0
      %3153 = vmatprep.subr.mxu0 0.0
      %3154 = vmatpush1.msra.mxu0 0.0
      %3155 = vmatprep.subr.mxu0 0.0
      %3156 = vmatpush1.msra.mxu0 0.0
      %3157 = vmatprep.subr.mxu0 0.0
      %3158 = vmatpush1.msra.mxu0 0.0
      %3159 = vmatprep.subr.mxu0 0.0
      %3160 = vmatpush1.msra.mxu0 0.0
      %3161 = vmatprep.subr.mxu0 0.0
      %3162 = vmatpush1.msra.mxu0 0.0
      %3163 = vmatprep.subr.mxu0 0.0
      %3164 = vmatpush1.msra.mxu0 0.0
      %3165 = vmatprep.subr.mxu0 0.0
      %3166 = vmatpush1.msra.mxu0 0.0
      %3167 = vmatprep.subr.mxu0 0.0
      %3168 = vmatpush1.msra.mxu0 0.0
      %3169 = vmatprep.subr.mxu0 %v3135
      %3170 = vmatpush1.msra.mxu0 %v3133
      %3171 = vmatprep.subr.mxu0 %v3134
      %3172 = vmatpush1.msra.mxu0 %v3132
      %3173 = vmatprep.subr.mxu0 0.0
      %3174 = vmatpush2.msra.mxu0 0.0
      %3175 = vmatprep.subr.mxu0 0.0
      %3176 = vmatpush2.msra.mxu0 0.0
      %3177 = vmatprep.subr.mxu0 0.0
      %3178 = vmatpush2.msra.mxu0 0.0
      %3179 = vmatprep.subr.mxu0 0.0
      %3180 = vmatpush2.msra.mxu0 0.0
      %3181 = vmatprep.subr.mxu0 0.0
      %3182 = vmatpush2.msra.mxu0 0.0
      %3183 = vmatprep.subr.mxu0 0.0
      %3184 = vmatpush2.msra.mxu0 0.0
      %3185 = vmatprep.subr.mxu0 0.0
      %3186 = vmatpush2.msra.mxu0 0.0
      %3187 = vmatprep.subr.mxu0 0.0
      %3188 = vmatpush2.msra.mxu0 0.0
      %3189 = vmatprep.subr.mxu0 0.0
      %3190 = vmatpush2.msra.mxu0 0.0
      %3191 = vmatprep.subr.mxu0 0.0
      %3192 = vmatpush2.msra.mxu0 0.0
      %3193 = vmatprep.subr.mxu0 0.0
      %3194 = vmatpush2.msra.mxu0 0.0
      %3195 = vmatprep.subr.mxu0 0.0
      %3196 = vmatpush2.msra.mxu0 0.0
      %3197 = vmatprep.subr.mxu0 0.0
      %3198 = vmatpush2.msra.mxu0 0.0
      %3199 = vmatprep.subr.mxu0 0.0
      %3200 = vmatpush2.msra.mxu0 0.0
      %3201 = vmatprep.subr.mxu0 0.0
      %3202 = vmatpush2.msra.mxu0 0.0
      %3203 = vmatprep.subr.mxu0 0.0
      %3204 = vmatpush2.msra.mxu0 0.0
      %3205 = vmatprep.mubr.f32.mxu0 0.0
      %3206 = vmatmul.mubr.f32.gmra.mxu0 %v3139
      %v3207 = vpop.f32.mrf.mxu0
      %v3208 = vadd.f32 0.0, %v3207
      %v3209 = vpop.f32.mrf.mxu0
      %v3210 = vadd.f32 0.0, %v3209
      %3211 = vdwg.mxu0
      %v3212 = vadd.f32 %v3122, %v3208
      %v3213 = vadd.f32 %v3123, %v3210
      %3214 = vrot.lane.b32.xlu0 %v2604, 110
      %v3215 = vpop.permute.xlu0 %3214
      %3216 = vrot.lane.b32.xlu0 %v2608, 110
      %v3217 = vpop.permute.xlu0 %3216
      %3218 = vrot.lane.b32.xlu0 %v2605, 110
      %v3219 = vpop.permute.xlu0 %3218
      %3220 = vrot.lane.b32.xlu0 %v2609, 110
      %v3221 = vpop.permute.xlu0 %3220
      %v3222 = vsel %vm1257, %v3215, %v3219
      %v3223 = vsel %vm1257, %v3217, %v3221
      %v3224 = vsel %vm1257, %v3219, %v3215
      %v3225 = vsel %vm1257, %v3221, %v3217
      %s3226 = scalar_lea.vmem %s8, 40
      %v3227 = vld [vmem:[%s3226] sm:$0xff]
      %v3229 = vsel %vm1645, %v3227, 0
      %3231 = vmatprep.subr.mxu0 0.0
      %3232 = vmatpush1.msra.mxu0 0.0
      %3233 = vmatprep.subr.mxu0 0.0
      %3234 = vmatpush1.msra.mxu0 0.0
      %3235 = vmatprep.subr.mxu0 0.0
      %3236 = vmatpush1.msra.mxu0 0.0
      %3237 = vmatprep.subr.mxu0 0.0
      %3238 = vmatpush1.msra.mxu0 0.0
      %3239 = vmatprep.subr.mxu0 0.0
      %3240 = vmatpush1.msra.mxu0 0.0
      %3241 = vmatprep.subr.mxu0 0.0
      %3242 = vmatpush1.msra.mxu0 0.0
      %3243 = vmatprep.subr.mxu0 0.0
      %3244 = vmatpush1.msra.mxu0 0.0
      %3245 = vmatprep.subr.mxu0 0.0
      %3246 = vmatpush1.msra.mxu0 0.0
      %3247 = vmatprep.subr.mxu0 0.0
      %3248 = vmatpush1.msra.mxu0 0.0
      %3249 = vmatprep.subr.mxu0 0.0
      %3250 = vmatpush1.msra.mxu0 0.0
      %3251 = vmatprep.subr.mxu0 0.0
      %3252 = vmatpush1.msra.mxu0 0.0
      %3253 = vmatprep.subr.mxu0 0.0
      %3254 = vmatpush1.msra.mxu0 0.0
      %3255 = vmatprep.subr.mxu0 0.0
      %3256 = vmatpush1.msra.mxu0 0.0
      %3257 = vmatprep.subr.mxu0 0.0
      %3258 = vmatpush1.msra.mxu0 0.0
      %3259 = vmatprep.subr.mxu0 %v3225
      %3260 = vmatpush1.msra.mxu0 %v3223
      %3261 = vmatprep.subr.mxu0 %v3224
      %3262 = vmatpush1.msra.mxu0 %v3222
      %3263 = vmatprep.subr.mxu0 0.0
      %3264 = vmatpush2.msra.mxu0 0.0
      %3265 = vmatprep.subr.mxu0 0.0
      %3266 = vmatpush2.msra.mxu0 0.0
      %3267 = vmatprep.subr.mxu0 0.0
      %3268 = vmatpush2.msra.mxu0 0.0
      %3269 = vmatprep.subr.mxu0 0.0
      %3270 = vmatpush2.msra.mxu0 0.0
      %3271 = vmatprep.subr.mxu0 0.0
      %3272 = vmatpush2.msra.mxu0 0.0
      %3273 = vmatprep.subr.mxu0 0.0
      %3274 = vmatpush2.msra.mxu0 0.0
      %3275 = vmatprep.subr.mxu0 0.0
      %3276 = vmatpush2.msra.mxu0 0.0
      %3277 = vmatprep.subr.mxu0 0.0
      %3278 = vmatpush2.msra.mxu0 0.0
      %3279 = vmatprep.subr.mxu0 0.0
      %3280 = vmatpush2.msra.mxu0 0.0
      %3281 = vmatprep.subr.mxu0 0.0
      %3282 = vmatpush2.msra.mxu0 0.0
      %3283 = vmatprep.subr.mxu0 0.0
      %3284 = vmatpush2.msra.mxu0 0.0
      %3285 = vmatprep.subr.mxu0 0.0
      %3286 = vmatpush2.msra.mxu0 0.0
      %3287 = vmatprep.subr.mxu0 0.0
      %3288 = vmatpush2.msra.mxu0 0.0
      %3289 = vmatprep.subr.mxu0 0.0
      %3290 = vmatpush2.msra.mxu0 0.0
      %3291 = vmatprep.subr.mxu0 0.0
      %3292 = vmatpush2.msra.mxu0 0.0
      %3293 = vmatprep.subr.mxu0 0.0
      %3294 = vmatpush2.msra.mxu0 0.0
      %3295 = vmatprep.mubr.f32.mxu0 0.0
      %3296 = vmatmul.mubr.f32.gmra.mxu0 %v3229
      %v3297 = vpop.f32.mrf.mxu0
      %v3298 = vadd.f32 0.0, %v3297
      %v3299 = vpop.f32.mrf.mxu0
      %v3300 = vadd.f32 0.0, %v3299
      %3301 = vdwg.mxu0
      %v3302 = vadd.f32 %v3212, %v3298
      %v3303 = vadd.f32 %v3213, %v3300
      %3304 = vrot.lane.b32.xlu0 %v2604, 96
      %v3305 = vpop.permute.xlu0 %3304
      %3306 = vrot.lane.b32.xlu0 %v2608, 96
      %v3307 = vpop.permute.xlu0 %3306
      %3308 = vrot.lane.b32.xlu0 %v2605, 96
      %v3309 = vpop.permute.xlu0 %3308
      %3310 = vrot.lane.b32.xlu0 %v2609, 96
      %v3311 = vpop.permute.xlu0 %3310
      %v3312 = vsel %vm1348, %v3305, %v3309
      %v3313 = vsel %vm1348, %v3307, %v3311
      %v3314 = vsel %vm1348, %v3309, %v3305
      %v3315 = vsel %vm1348, %v3311, %v3307
      %s3316 = scalar_lea.vmem %s8, 48
      %v3317 = vld [vmem:[%s3316] sm:$0xff]
      %v3319 = vsel %vm1645, %v3317, 0
      %3321 = vmatprep.subr.mxu0 0.0
      %3322 = vmatpush1.msra.mxu0 0.0
      %3323 = vmatprep.subr.mxu0 0.0
      %3324 = vmatpush1.msra.mxu0 0.0
      %3325 = vmatprep.subr.mxu0 0.0
      %3326 = vmatpush1.msra.mxu0 0.0
      %3327 = vmatprep.subr.mxu0 0.0
      %3328 = vmatpush1.msra.mxu0 0.0
      %3329 = vmatprep.subr.mxu0 0.0
      %3330 = vmatpush1.msra.mxu0 0.0
      %3331 = vmatprep.subr.mxu0 0.0
      %3332 = vmatpush1.msra.mxu0 0.0
      %3333 = vmatprep.subr.mxu0 0.0
      %3334 = vmatpush1.msra.mxu0 0.0
      %3335 = vmatprep.subr.mxu0 0.0
      %3336 = vmatpush1.msra.mxu0 0.0
      %3337 = vmatprep.subr.mxu0 0.0
      %3338 = vmatpush1.msra.mxu0 0.0
      %3339 = vmatprep.subr.mxu0 0.0
      %3340 = vmatpush1.msra.mxu0 0.0
      %3341 = vmatprep.subr.mxu0 0.0
      %3342 = vmatpush1.msra.mxu0 0.0
      %3343 = vmatprep.subr.mxu0 0.0
      %3344 = vmatpush1.msra.mxu0 0.0
      %3345 = vmatprep.subr.mxu0 0.0
      %3346 = vmatpush1.msra.mxu0 0.0
      %3347 = vmatprep.subr.mxu0 0.0
      %3348 = vmatpush1.msra.mxu0 0.0
      %3349 = vmatprep.subr.mxu0 %v3315
      %3350 = vmatpush1.msra.mxu0 %v3313
      %3351 = vmatprep.subr.mxu0 %v3314
      %3352 = vmatpush1.msra.mxu0 %v3312
      %3353 = vmatprep.subr.mxu0 0.0
      %3354 = vmatpush2.msra.mxu0 0.0
      %3355 = vmatprep.subr.mxu0 0.0
      %3356 = vmatpush2.msra.mxu0 0.0
      %3357 = vmatprep.subr.mxu0 0.0
      %3358 = vmatpush2.msra.mxu0 0.0
      %3359 = vmatprep.subr.mxu0 0.0
      %3360 = vmatpush2.msra.mxu0 0.0
      %3361 = vmatprep.subr.mxu0 0.0
      %3362 = vmatpush2.msra.mxu0 0.0
      %3363 = vmatprep.subr.mxu0 0.0
      %3364 = vmatpush2.msra.mxu0 0.0
      %3365 = vmatprep.subr.mxu0 0.0
      %3366 = vmatpush2.msra.mxu0 0.0
      %3367 = vmatprep.subr.mxu0 0.0
      %3368 = vmatpush2.msra.mxu0 0.0
      %3369 = vmatprep.subr.mxu0 0.0
      %3370 = vmatpush2.msra.mxu0 0.0
      %3371 = vmatprep.subr.mxu0 0.0
      %3372 = vmatpush2.msra.mxu0 0.0
      %3373 = vmatprep.subr.mxu0 0.0
      %3374 = vmatpush2.msra.mxu0 0.0
      %3375 = vmatprep.subr.mxu0 0.0
      %3376 = vmatpush2.msra.mxu0 0.0
      %3377 = vmatprep.subr.mxu0 0.0
      %3378 = vmatpush2.msra.mxu0 0.0
      %3379 = vmatprep.subr.mxu0 0.0
      %3380 = vmatpush2.msra.mxu0 0.0
      %3381 = vmatprep.subr.mxu0 0.0
      %3382 = vmatpush2.msra.mxu0 0.0
      %3383 = vmatprep.subr.mxu0 0.0
      %3384 = vmatpush2.msra.mxu0 0.0
      %3385 = vmatprep.mubr.f32.mxu0 0.0
      %3386 = vmatmul.mubr.f32.gmra.mxu0 %v3319
      %v3387 = vpop.f32.mrf.mxu0
      %v3388 = vadd.f32 0.0, %v3387
      %v3389 = vpop.f32.mrf.mxu0
      %v3390 = vadd.f32 0.0, %v3389
      %3391 = vdwg.mxu0
      %v3392 = vadd.f32 %v3302, %v3388
      %v3393 = vadd.f32 %v3303, %v3390
      %3394 = vrot.lane.b32.xlu0 %v2604, 95
      %v3395 = vpop.permute.xlu0 %3394
      %3396 = vrot.lane.b32.xlu0 %v2608, 95
      %v3397 = vpop.permute.xlu0 %3396
      %3398 = vrot.lane.b32.xlu0 %v2605, 95
      %v3399 = vpop.permute.xlu0 %3398
      %3400 = vrot.lane.b32.xlu0 %v2609, 95
      %v3401 = vpop.permute.xlu0 %3400
      %v3402 = vsel %vm1439, %v3395, %v3399
      %v3403 = vsel %vm1439, %v3397, %v3401
      %v3404 = vsel %vm1439, %v3399, %v3395
      %v3405 = vsel %vm1439, %v3401, %v3397
      %s3406 = scalar_lea.vmem %s8, 56
      %v3407 = vld [vmem:[%s3406] sm:$0xff]
      %v3409 = vsel %vm1645, %v3407, 0
      %3411 = vmatprep.subr.mxu0 0.0
      %3412 = vmatpush1.msra.mxu0 0.0
      %3413 = vmatprep.subr.mxu0 0.0
      %3414 = vmatpush1.msra.mxu0 0.0
      %3415 = vmatprep.subr.mxu0 0.0
      %3416 = vmatpush1.msra.mxu0 0.0
      %3417 = vmatprep.subr.mxu0 0.0
      %3418 = vmatpush1.msra.mxu0 0.0
      %3419 = vmatprep.subr.mxu0 0.0
      %3420 = vmatpush1.msra.mxu0 0.0
      %3421 = vmatprep.subr.mxu0 0.0
      %3422 = vmatpush1.msra.mxu0 0.0
      %3423 = vmatprep.subr.mxu0 0.0
      %3424 = vmatpush1.msra.mxu0 0.0
      %3425 = vmatprep.subr.mxu0 0.0
      %3426 = vmatpush1.msra.mxu0 0.0
      %3427 = vmatprep.subr.mxu0 0.0
      %3428 = vmatpush1.msra.mxu0 0.0
      %3429 = vmatprep.subr.mxu0 0.0
      %3430 = vmatpush1.msra.mxu0 0.0
      %3431 = vmatprep.subr.mxu0 0.0
      %3432 = vmatpush1.msra.mxu0 0.0
      %3433 = vmatprep.subr.mxu0 0.0
      %3434 = vmatpush1.msra.mxu0 0.0
      %3435 = vmatprep.subr.mxu0 0.0
      %3436 = vmatpush1.msra.mxu0 0.0
      %3437 = vmatprep.subr.mxu0 0.0
      %3438 = vmatpush1.msra.mxu0 0.0
      %3439 = vmatprep.subr.mxu0 %v3405
      %3440 = vmatpush1.msra.mxu0 %v3403
      %3441 = vmatprep.subr.mxu0 %v3404
      %3442 = vmatpush1.msra.mxu0 %v3402
      %3443 = vmatprep.subr.mxu0 0.0
      %3444 = vmatpush2.msra.mxu0 0.0
      %3445 = vmatprep.subr.mxu0 0.0
      %3446 = vmatpush2.msra.mxu0 0.0
      %3447 = vmatprep.subr.mxu0 0.0
      %3448 = vmatpush2.msra.mxu0 0.0
      %3449 = vmatprep.subr.mxu0 0.0
      %3450 = vmatpush2.msra.mxu0 0.0
      %3451 = vmatprep.subr.mxu0 0.0
      %3452 = vmatpush2.msra.mxu0 0.0
      %3453 = vmatprep.subr.mxu0 0.0
      %3454 = vmatpush2.msra.mxu0 0.0
      %3455 = vmatprep.subr.mxu0 0.0
      %3456 = vmatpush2.msra.mxu0 0.0
      %3457 = vmatprep.subr.mxu0 0.0
      %3458 = vmatpush2.msra.mxu0 0.0
      %3459 = vmatprep.subr.mxu0 0.0
      %3460 = vmatpush2.msra.mxu0 0.0
      %3461 = vmatprep.subr.mxu0 0.0
      %3462 = vmatpush2.msra.mxu0 0.0
      %3463 = vmatprep.subr.mxu0 0.0
      %3464 = vmatpush2.msra.mxu0 0.0
      %3465 = vmatprep.subr.mxu0 0.0
      %3466 = vmatpush2.msra.mxu0 0.0
      %3467 = vmatprep.subr.mxu0 0.0
      %3468 = vmatpush2.msra.mxu0 0.0
      %3469 = vmatprep.subr.mxu0 0.0
      %3470 = vmatpush2.msra.mxu0 0.0
      %3471 = vmatprep.subr.mxu0 0.0
      %3472 = vmatpush2.msra.mxu0 0.0
      %3473 = vmatprep.subr.mxu0 0.0
      %3474 = vmatpush2.msra.mxu0 0.0
      %3475 = vmatprep.mubr.f32.mxu0 0.0
      %3476 = vmatmul.mubr.f32.gmra.mxu0 %v3409
      %v3477 = vpop.f32.mrf.mxu0
      %v3478 = vadd.f32 0.0, %v3477
      %v3479 = vpop.f32.mrf.mxu0
      %v3480 = vadd.f32 0.0, %v3479
      %3481 = vdwg.mxu0
      %v3482 = vadd.f32 %v3392, %v3478
      %v3483 = vadd.f32 %v3393, %v3480
      %3484 = vrot.lane.b32.xlu0 %v2604, 94
      %v3485 = vpop.permute.xlu0 %3484
      %3486 = vrot.lane.b32.xlu0 %v2608, 94
      %v3487 = vpop.permute.xlu0 %3486
      %3488 = vrot.lane.b32.xlu0 %v2605, 94
      %v3489 = vpop.permute.xlu0 %3488
      %3490 = vrot.lane.b32.xlu0 %v2609, 94
      %v3491 = vpop.permute.xlu0 %3490
      %v3492 = vsel %vm1530, %v3485, %v3489
      %v3493 = vsel %vm1530, %v3487, %v3491
      %v3494 = vsel %vm1530, %v3489, %v3485
      %v3495 = vsel %vm1530, %v3491, %v3487
      %s3496 = scalar_lea.vmem %s8, 64
      %v3497 = vld [vmem:[%s3496] sm:$0xff]
      %v3499 = vsel %vm1645, %v3497, 0
      %3501 = vmatprep.subr.mxu0 0.0
      %3502 = vmatpush1.msra.mxu0 0.0
      %3503 = vmatprep.subr.mxu0 0.0
      %3504 = vmatpush1.msra.mxu0 0.0
      %3505 = vmatprep.subr.mxu0 0.0
      %3506 = vmatpush1.msra.mxu0 0.0
      %3507 = vmatprep.subr.mxu0 0.0
      %3508 = vmatpush1.msra.mxu0 0.0
      %3509 = vmatprep.subr.mxu0 0.0
      %3510 = vmatpush1.msra.mxu0 0.0
      %3511 = vmatprep.subr.mxu0 0.0
      %3512 = vmatpush1.msra.mxu0 0.0
      %3513 = vmatprep.subr.mxu0 0.0
      %3514 = vmatpush1.msra.mxu0 0.0
      %3515 = vmatprep.subr.mxu0 0.0
      %3516 = vmatpush1.msra.mxu0 0.0
      %3517 = vmatprep.subr.mxu0 0.0
      %3518 = vmatpush1.msra.mxu0 0.0
      %3519 = vmatprep.subr.mxu0 0.0
      %3520 = vmatpush1.msra.mxu0 0.0
      %3521 = vmatprep.subr.mxu0 0.0
      %3522 = vmatpush1.msra.mxu0 0.0
      %3523 = vmatprep.subr.mxu0 0.0
      %3524 = vmatpush1.msra.mxu0 0.0
      %3525 = vmatprep.subr.mxu0 0.0
      %3526 = vmatpush1.msra.mxu0 0.0
      %3527 = vmatprep.subr.mxu0 0.0
      %3528 = vmatpush1.msra.mxu0 0.0
      %3529 = vmatprep.subr.mxu0 %v3495
      %3530 = vmatpush1.msra.mxu0 %v3493
      %3531 = vmatprep.subr.mxu0 %v3494
      %3532 = vmatpush1.msra.mxu0 %v3492
      %3533 = vmatprep.subr.mxu0 0.0
      %3534 = vmatpush2.msra.mxu0 0.0
      %3535 = vmatprep.subr.mxu0 0.0
      %3536 = vmatpush2.msra.mxu0 0.0
      %3537 = vmatprep.subr.mxu0 0.0
      %3538 = vmatpush2.msra.mxu0 0.0
      %3539 = vmatprep.subr.mxu0 0.0
      %3540 = vmatpush2.msra.mxu0 0.0
      %3541 = vmatprep.subr.mxu0 0.0
      %3542 = vmatpush2.msra.mxu0 0.0
      %3543 = vmatprep.subr.mxu0 0.0
      %3544 = vmatpush2.msra.mxu0 0.0
      %3545 = vmatprep.subr.mxu0 0.0
      %3546 = vmatpush2.msra.mxu0 0.0
      %3547 = vmatprep.subr.mxu0 0.0
      %3548 = vmatpush2.msra.mxu0 0.0
      %3549 = vmatprep.subr.mxu0 0.0
      %3550 = vmatpush2.msra.mxu0 0.0
      %3551 = vmatprep.subr.mxu0 0.0
      %3552 = vmatpush2.msra.mxu0 0.0
      %3553 = vmatprep.subr.mxu0 0.0
      %3554 = vmatpush2.msra.mxu0 0.0
      %3555 = vmatprep.subr.mxu0 0.0
      %3556 = vmatpush2.msra.mxu0 0.0
      %3557 = vmatprep.subr.mxu0 0.0
      %3558 = vmatpush2.msra.mxu0 0.0
      %3559 = vmatprep.subr.mxu0 0.0
      %3560 = vmatpush2.msra.mxu0 0.0
      %3561 = vmatprep.subr.mxu0 0.0
      %3562 = vmatpush2.msra.mxu0 0.0
      %3563 = vmatprep.subr.mxu0 0.0
      %3564 = vmatpush2.msra.mxu0 0.0
      %3565 = vmatprep.mubr.f32.mxu0 0.0
      %3566 = vmatmul.mubr.f32.gmra.mxu0 %v3499
      %v3567 = vpop.f32.mrf.mxu0
      %v3568 = vadd.f32 0.0, %v3567
      %v3569 = vpop.f32.mrf.mxu0
      %v3570 = vadd.f32 0.0, %v3569
      %3571 = vdwg.mxu0
      %v3572 = vadd.f32 %v3482, %v3568
      %v3573 = vadd.f32 %v3483, %v3570
      %v3574 = vld [vmem:[%s9] sm:$0xff]
      %3576 = vset.pattern.permute.xlu0 0
      %3577 = vperm.xlu0 %3576, %v3574
      %v3578 = vpop.permute.xlu0 %3577
      %v3580 = vadd.f32 %v3572, %v3578
      %v3581 = vadd.f32 %v3573, %v3578
      %v3582 = vmax.f32 %v3580, 0.0
      %v3583 = vmax.f32 %v3581, 0.0
      %v3584 = vsub.f32 0.0, %v3580
      %v3585 = vsub.f32 0.0, %v3581
      %v3586 = vmax.f32 %v3584, 0.0
      %v3587 = vmax.f32 %v3585, 0.0
      %v3588 = vld [vmem:[%s16] sm:$0xff]
      %v3589 = vld [vmem:[%s16 + $0x8] sm:$0x3]
      %v3590 = vld [vmem:[%s17] sm:$0xff]
      %v3591 = vld [vmem:[%s17 + $0x8] sm:$0x3]
      %3593 = vset.pattern.permute.xlu0 0
      %3594 = vperm.xlu0 %3593, %v3590
      %v3595 = vpop.permute.xlu0 %3594
      %3598 = vset.pattern.permute.xlu0 0
      %3599 = vperm.xlu0 %3598, %v3591
      %v3600 = vpop.permute.xlu0 %3599
      %v3603 = vsel %vm1645, %v3588, 0
      %v3606 = vsel %vm1645, %v3589, 0
      %3608 = vmatprep.subr.mxu0 0.0
      %3609 = vmatpush1.msra.mxu0 0.0
      %3610 = vmatprep.subr.mxu0 0.0
      %3611 = vmatpush1.msra.mxu0 0.0
      %3612 = vmatprep.subr.mxu0 0.0
      %3613 = vmatpush1.msra.mxu0 0.0
      %3614 = vmatprep.subr.mxu0 0.0
      %3615 = vmatpush1.msra.mxu0 0.0
      %3616 = vmatprep.subr.mxu0 0.0
      %3617 = vmatpush1.msra.mxu0 0.0
      %3618 = vmatprep.subr.mxu0 0.0
      %3619 = vmatpush1.msra.mxu0 0.0
      %3620 = vmatprep.subr.mxu0 0.0
      %3621 = vmatpush1.msra.mxu0 0.0
      %3622 = vmatprep.subr.mxu0 0.0
      %3623 = vmatpush1.msra.mxu0 0.0
      %3624 = vmatprep.subr.mxu0 0.0
      %3625 = vmatpush1.msra.mxu0 0.0
      %3626 = vmatprep.subr.mxu0 0.0
      %3627 = vmatpush1.msra.mxu0 0.0
      %3628 = vmatprep.subr.mxu0 0.0
      %3629 = vmatpush1.msra.mxu0 0.0
      %3630 = vmatprep.subr.mxu0 0.0
      %3631 = vmatpush1.msra.mxu0 0.0
      %3632 = vmatprep.subr.mxu0 0.0
      %3633 = vmatpush1.msra.mxu0 0.0
      %3634 = vmatprep.subr.mxu0 0.0
      %3635 = vmatpush1.msra.mxu0 0.0
      %3636 = vmatprep.subr.mxu0 %v3587
      %3637 = vmatpush1.msra.mxu0 %v3586
      %3638 = vmatprep.subr.mxu0 %v3583
      %3639 = vmatpush1.msra.mxu0 %v3582
      %3640 = vmatprep.subr.mxu0 0.0
      %3641 = vmatpush2.msra.mxu0 0.0
      %3642 = vmatprep.subr.mxu0 0.0
      %3643 = vmatpush2.msra.mxu0 0.0
      %3644 = vmatprep.subr.mxu0 0.0
      %3645 = vmatpush2.msra.mxu0 0.0
      %3646 = vmatprep.subr.mxu0 0.0
      %3647 = vmatpush2.msra.mxu0 0.0
      %3648 = vmatprep.subr.mxu0 0.0
      %3649 = vmatpush2.msra.mxu0 0.0
      %3650 = vmatprep.subr.mxu0 0.0
      %3651 = vmatpush2.msra.mxu0 0.0
      %3652 = vmatprep.subr.mxu0 0.0
      %3653 = vmatpush2.msra.mxu0 0.0
      %3654 = vmatprep.subr.mxu0 0.0
      %3655 = vmatpush2.msra.mxu0 0.0
      %3656 = vmatprep.subr.mxu0 0.0
      %3657 = vmatpush2.msra.mxu0 0.0
      %3658 = vmatprep.subr.mxu0 0.0
      %3659 = vmatpush2.msra.mxu0 0.0
      %3660 = vmatprep.subr.mxu0 0.0
      %3661 = vmatpush2.msra.mxu0 0.0
      %3662 = vmatprep.subr.mxu0 0.0
      %3663 = vmatpush2.msra.mxu0 0.0
      %3664 = vmatprep.subr.mxu0 0.0
      %3665 = vmatpush2.msra.mxu0 0.0
      %3666 = vmatprep.subr.mxu0 0.0
      %3667 = vmatpush2.msra.mxu0 0.0
      %3668 = vmatprep.subr.mxu0 0.0
      %3669 = vmatpush2.msra.mxu0 0.0
      %3670 = vmatprep.subr.mxu0 0.0
      %3671 = vmatpush2.msra.mxu0 0.0
      %3672 = vmatprep.mubr.f32.mxu0 0.0
      %3673 = vmatmul.mubr.f32.gmra.mxu0 %v3603
      %v3674 = vpop.f32.mrf.mxu0
      %v3675 = vadd.f32 %v3595, %v3674
      %v3676 = vpop.f32.mrf.mxu0
      %v3677 = vadd.f32 %v3595, %v3676
      %3678 = vmatprep.mubr.f32.mxu0 0.0
      %3679 = vmatmul.mubr.f32.gmra.mxu0 %v3606
      %v3680 = vpop.f32.mrf.mxu0
      %v3681 = vadd.f32 %v3600, %v3680
      %v3682 = vpop.f32.mrf.mxu0
      %v3683 = vadd.f32 %v3600, %v3682
      %3684 = vdwg.mxu0
      %s3685 = scalar_lea.vmem %s3, 6
      %v3686 = vld [vmem:[%s3685] sm:$0x3]
      %vm3687 = vcmp.gt.f32.partialorder %v3686, 0.0
      %v3688 = vsel %vm3687, 1, 0
      %v3689 = vlaneseq
      %v3690 = vshrl.u32 %v3689, 7
      %v3691 = vsub.s32 0, %v3690
      %v3692 = vrot.slane %v3688, %v3691
      %v3693 = vlaneseq
      %v3694 = vshrl.u32 %v3693, 7
      %v3695 = vsub.s32 1, %v3694
      %v3696 = vrot.slane %v3688, %v3695
      %vm3697 = vcmp.eq.s32.totalorder %v3692, 1
      %vm3698 = vcmp.eq.s32.totalorder %v3696, 1
      %v3699 = vsel %vm3697, %v3675, -inf
      %v3700 = vsel %vm3698, %v3677, -inf
      %v3701 = vsel %vm3697, %v3681, -inf
      %v3702 = vsel %vm3698, %v3683, -inf
      %v3703 = vmax.f32 %v3699, %v3700
      %3704 = vmax.xlane.f32.xlu0 %v3703
      %v3705 = vpop.xlane.xlu0 %3704
      %v3706 = vsel %vm781, %v3701, -inf
      %v3707 = vsel %vm781, %v3702, -inf
      %v3708 = vmax.f32 %v3706, %v3707
      %3709 = vmax.xlane.f32.xlu0 %v3708
      %v3710 = vpop.xlane.xlu0 %3709
      %v3711 = vsub.f32 %v3699, %v3705
      %v3712 = vsub.f32 %v3700, %v3705
      %v3713 = vsub.f32 %v3701, %v3710
      %v3714 = vsub.f32 %v3702, %v3710
      %v3715 = vmul.f32 %v3711, 1.442695
      %v3716 = vpow.pop %v3715
      %v3717 = vmul.f32 %v3712, 1.442695
      %v3718 = vpow.pop %v3717
      %v3719 = vmul.f32 %v3713, 1.442695
      %v3720 = vpow.pop %v3719
      %v3721 = vmul.f32 %v3714, 1.442695
      %v3722 = vpow.pop %v3721
      %v3723 = vadd.f32 %v3716, %v3718
      %3724 = vadd.xlane.f32.xlu0 %v3723
      %v3725 = vpop.xlane.xlu0 %3724
      %v3726 = vsel %vm781, %v3720, 0.0
      %v3727 = vsel %vm781, %v3722, 0.0
      %v3728 = vadd.f32 %v3726, %v3727
      %3729 = vadd.xlane.f32.xlu0 %v3728
      %v3730 = vpop.xlane.xlu0 %3729
      %v3731 = vlog2.pop %v3725
      %v3732 = vmul.f32 %v3731, 0.6931472
      %v3733 = vlog2.pop %v3730
      %v3734 = vmul.f32 %v3733, 0.6931472
      %v3735 = vadd.f32 %v3705, %v3732
      %v3736 = vadd.f32 %v3710, %v3734
      %v3737 = vmax.f32 %v2779, %v3735
      %v3738 = vmax.f32 %v2780, %v3736
      %v3739 = vsub.f32 %v2779, %v3737
      %v3740 = vsub.f32 %v2780, %v3738
      %v3741 = vmul.f32 %v3739, 1.442695
      %v3742 = vpow.pop %v3741
      %v3743 = vmul.f32 %v3740, 1.442695
      %v3744 = vpow.pop %v3743
      %v3745 = vsub.f32 %v3735, %v3737
      %v3746 = vsub.f32 %v3736, %v3738
      %v3747 = vmul.f32 %v3745, 1.442695
      %v3748 = vpow.pop %v3747
      %v3749 = vmul.f32 %v3746, 1.442695
      %v3750 = vpow.pop %v3749
      %v3751 = vadd.f32 %v3742, %v3748
      %v3752 = vadd.f32 %v3744, %v3750
      %v3753 = vlog2.pop %v3751
      %v3754 = vmul.f32 %v3753, 0.6931472
      %v3755 = vlog2.pop %v3752
      %v3756 = vmul.f32 %v3755, 0.6931472
      %v3757 = vadd.f32 %v3737, %v3754
      %v3758 = vadd.f32 %v3738, %v3756
      %vm3759 = vcmask 7168
      %3760 = vst.msk [vmem:[%s643] sm:$0xff] %vm3759, %v3757
      %vm3761 = vcmask 1024
      %3762 = vst.msk [vmem:[%s643 + $0x8] sm:$0x3] %vm3761, %v3758
      %s3763 = scalar_lea.vmem %s636, 8
      %v3764 = vld [vmem:[%s3763] sm:$0x77]
      %s3765 = scalar_lea.vmem %s629, 8
      %v3766 = vld [vmem:[%s3765] sm:$0x77]
      %v3768 = vcombine.high %v3764, %v3764
      %v3770 = vmul.f32 %v658, %v3764
      %v3771 = vmul.f32 %v658, %v3768
      %v3774 = vcombine.low %v3770, %v3771
      %v3776 = vadd.f32 %v3766, %v3774
      %v3777 = vmul.f32 %v3764, -0.5
      %v3778 = vmul.f32 %v3777, %v3764
      %s3779 = scalar_lea.vmem %s650, 8
      %3780 = vst [vmem:[%s3779] sm:$0x77] %v3778
      %v3781 = vld [vmem:[%s10] sm:$0xff]
      %v3782 = vld [vmem:[%s10 + $0x8] sm:$0x3]
      %v3783 = vld [vmem:[%s11] sm:$0xff]
      %v3784 = vld [vmem:[%s11 + $0x8] sm:$0x3]
      %3786 = vset.pattern.permute.xlu0 0
      %3787 = vperm.xlu0 %3786, %v3783
      %v3788 = vpop.permute.xlu0 %3787
      %3791 = vset.pattern.permute.xlu0 0
      %3792 = vperm.xlu0 %3791, %v3784
      %v3793 = vpop.permute.xlu0 %3792
      %v3796 = vcombine.high %v3776, %v3776
      %v3798 = vsel %vm689, %v3781, 0
      %v3801 = vsel %vm689, %v3782, 0
      %v3803 = vsel %vm696, %v3776, 0
      %v3805 = vsel %vm696, %v3796, 0
      %3807 = vmatprep.subr.mxu0 0.0
      %3808 = vmatpush1.msra.mxu0 0.0
      %3809 = vmatprep.subr.mxu0 0.0
      %3810 = vmatpush1.msra.mxu0 0.0
      %3811 = vmatprep.subr.mxu0 0.0
      %3812 = vmatpush1.msra.mxu0 0.0
      %3813 = vmatprep.subr.mxu0 0.0
      %3814 = vmatpush1.msra.mxu0 0.0
      %3815 = vmatprep.subr.mxu0 0.0
      %3816 = vmatpush1.msra.mxu0 0.0
      %3817 = vmatprep.subr.mxu0 0.0
      %3818 = vmatpush1.msra.mxu0 0.0
      %3819 = vmatprep.subr.mxu0 0.0
      %3820 = vmatpush1.msra.mxu0 0.0
      %3821 = vmatprep.subr.mxu0 0.0
      %3822 = vmatpush1.msra.mxu0 0.0
      %3823 = vmatprep.subr.mxu0 0.0
      %3824 = vmatpush1.msra.mxu0 0.0
      %3825 = vmatprep.subr.mxu0 0.0
      %3826 = vmatpush1.msra.mxu0 0.0
      %3827 = vmatprep.subr.mxu0 0.0
      %3828 = vmatpush1.msra.mxu0 0.0
      %3829 = vmatprep.subr.mxu0 0.0
      %3830 = vmatpush1.msra.mxu0 0.0
      %3831 = vmatprep.subr.mxu0 0.0
      %3832 = vmatpush1.msra.mxu0 0.0
      %3833 = vmatprep.subr.mxu0 0.0
      %3834 = vmatpush1.msra.mxu0 0.0
      %3835 = vmatprep.subr.mxu0 0.0
      %3836 = vmatpush1.msra.mxu0 0.0
      %3837 = vmatprep.subr.mxu0 %v3805
      %3838 = vmatpush1.msra.mxu0 %v3803
      %3839 = vmatprep.subr.mxu0 0.0
      %3840 = vmatpush2.msra.mxu0 0.0
      %3841 = vmatprep.subr.mxu0 0.0
      %3842 = vmatpush2.msra.mxu0 0.0
      %3843 = vmatprep.subr.mxu0 0.0
      %3844 = vmatpush2.msra.mxu0 0.0
      %3845 = vmatprep.subr.mxu0 0.0
      %3846 = vmatpush2.msra.mxu0 0.0
      %3847 = vmatprep.subr.mxu0 0.0
      %3848 = vmatpush2.msra.mxu0 0.0
      %3849 = vmatprep.subr.mxu0 0.0
      %3850 = vmatpush2.msra.mxu0 0.0
      %3851 = vmatprep.subr.mxu0 0.0
      %3852 = vmatpush2.msra.mxu0 0.0
      %3853 = vmatprep.subr.mxu0 0.0
      %3854 = vmatpush2.msra.mxu0 0.0
      %3855 = vmatprep.subr.mxu0 0.0
      %3856 = vmatpush2.msra.mxu0 0.0
      %3857 = vmatprep.subr.mxu0 0.0
      %3858 = vmatpush2.msra.mxu0 0.0
      %3859 = vmatprep.subr.mxu0 0.0
      %3860 = vmatpush2.msra.mxu0 0.0
      %3861 = vmatprep.subr.mxu0 0.0
      %3862 = vmatpush2.msra.mxu0 0.0
      %3863 = vmatprep.subr.mxu0 0.0
      %3864 = vmatpush2.msra.mxu0 0.0
      %3865 = vmatprep.subr.mxu0 0.0
      %3866 = vmatpush2.msra.mxu0 0.0
      %3867 = vmatprep.subr.mxu0 0.0
      %3868 = vmatpush2.msra.mxu0 0.0
      %3869 = vmatprep.subr.mxu0 0.0
      %3870 = vmatpush2.msra.mxu0 0.0
      %3871 = vmatprep.mubr.f32.mxu0 0.0
      %3872 = vmatmul.mubr.f32.gmra.mxu0 %v3798
      %v3873 = vpop.f32.mrf.mxu0
      %v3874 = vadd.f32 %v3788, %v3873
      %v3875 = vpop.f32.mrf.mxu0
      %v3876 = vadd.f32 %v3788, %v3875
      %3877 = vmatprep.mubr.f32.mxu0 0.0
      %3878 = vmatmul.mubr.f32.gmra.mxu0 %v3801
      %v3879 = vpop.f32.mrf.mxu0
      %v3880 = vadd.f32 %v3793, %v3879
      %v3881 = vpop.f32.mrf.mxu0
      %v3882 = vadd.f32 %v3793, %v3881
      %3883 = vdwg.mxu0
      %v3884 = vmax.f32 %v3874, %v3876
      %3885 = vmax.xlane.f32.xlu0 %v3884
      %v3886 = vpop.xlane.xlu0 %3885
      %v3887 = vsel %vm781, %v3880, -inf
      %v3888 = vsel %vm781, %v3882, -inf
      %v3889 = vmax.f32 %v3887, %v3888
      %3890 = vmax.xlane.f32.xlu0 %v3889
      %v3891 = vpop.xlane.xlu0 %3890
      %v3892 = vsub.f32 %v3874, %v3886
      %v3893 = vsub.f32 %v3876, %v3886
      %v3894 = vsub.f32 %v3880, %v3891
      %v3895 = vsub.f32 %v3882, %v3891
      %v3896 = vmul.f32 %v3892, 1.442695
      %v3897 = vpow.pop %v3896
      %v3898 = vmul.f32 %v3893, 1.442695
      %v3899 = vpow.pop %v3898
      %v3900 = vmul.f32 %v3894, 1.442695
      %v3901 = vpow.pop %v3900
      %v3902 = vmul.f32 %v3895, 1.442695
      %v3903 = vpow.pop %v3902
      %v3904 = vadd.f32 %v3897, %v3899
      %3905 = vadd.xlane.f32.xlu0 %v3904
      %v3906 = vpop.xlane.xlu0 %3905
      %v3907 = vsel %vm781, %v3901, 0.0
      %v3908 = vsel %vm781, %v3903, 0.0
      %v3909 = vadd.f32 %v3907, %v3908
      %3910 = vadd.xlane.f32.xlu0 %v3909
      %v3911 = vpop.xlane.xlu0 %3910
      %v3912 = vlog2.pop %v3906
      %v3913 = vmul.f32 %v3912, 0.6931472
      %v3914 = vlog2.pop %v3911
      %v3915 = vmul.f32 %v3914, 0.6931472
      %v3916 = vadd.f32 %v3886, %v3913
      %v3917 = vadd.f32 %v3891, %v3915
      %v3918 = vld [vmem:[%s4] sm:$0xff]
      %3920 = vrot.lane.b32.xlu0 %v3776, 127
      %v3921 = vpop.permute.xlu0 %3920
      %3922 = vrot.lane.b32.xlu0 %v3796, 127
      %v3923 = vpop.permute.xlu0 %3922
      %v3924 = vsel %vm821, %v3921, %v3923
      %v3925 = vsel %vm821, %v3923, %v3921
      %v3926 = vld [vmem:[%s824] sm:$0xff]
      %v3928 = vsel %vm689, %v3926, 0
      %v3931 = vsel %vm696, %v3924, 0
      %v3934 = vsel %vm696, %v3925, 0
      %3936 = vmatprep.subr.mxu0 0.0
      %3937 = vmatpush1.msra.mxu0 0.0
      %3938 = vmatprep.subr.mxu0 0.0
      %3939 = vmatpush1.msra.mxu0 0.0
      %3940 = vmatprep.subr.mxu0 0.0
      %3941 = vmatpush1.msra.mxu0 0.0
      %3942 = vmatprep.subr.mxu0 0.0
      %3943 = vmatpush1.msra.mxu0 0.0
      %3944 = vmatprep.subr.mxu0 0.0
      %3945 = vmatpush1.msra.mxu0 0.0
      %3946 = vmatprep.subr.mxu0 0.0
      %3947 = vmatpush1.msra.mxu0 0.0
      %3948 = vmatprep.subr.mxu0 0.0
      %3949 = vmatpush1.msra.mxu0 0.0
      %3950 = vmatprep.subr.mxu0 0.0
      %3951 = vmatpush1.msra.mxu0 0.0
      %3952 = vmatprep.subr.mxu0 0.0
      %3953 = vmatpush1.msra.mxu0 0.0
      %3954 = vmatprep.subr.mxu0 0.0
      %3955 = vmatpush1.msra.mxu0 0.0
      %3956 = vmatprep.subr.mxu0 0.0
      %3957 = vmatpush1.msra.mxu0 0.0
      %3958 = vmatprep.subr.mxu0 0.0
      %3959 = vmatpush1.msra.mxu0 0.0
      %3960 = vmatprep.subr.mxu0 0.0
      %3961 = vmatpush1.msra.mxu0 0.0
      %3962 = vmatprep.subr.mxu0 0.0
      %3963 = vmatpush1.msra.mxu0 0.0
      %3964 = vmatprep.subr.mxu0 0.0
      %3965 = vmatpush1.msra.mxu0 0.0
      %3966 = vmatprep.subr.mxu0 %v3934
      %3967 = vmatpush1.msra.mxu0 %v3931
      %3968 = vmatprep.subr.mxu0 0.0
      %3969 = vmatpush2.msra.mxu0 0.0
      %3970 = vmatprep.subr.mxu0 0.0
      %3971 = vmatpush2.msra.mxu0 0.0
      %3972 = vmatprep.subr.mxu0 0.0
      %3973 = vmatpush2.msra.mxu0 0.0
      %3974 = vmatprep.subr.mxu0 0.0
      %3975 = vmatpush2.msra.mxu0 0.0
      %3976 = vmatprep.subr.mxu0 0.0
      %3977 = vmatpush2.msra.mxu0 0.0
      %3978 = vmatprep.subr.mxu0 0.0
      %3979 = vmatpush2.msra.mxu0 0.0
      %3980 = vmatprep.subr.mxu0 0.0
      %3981 = vmatpush2.msra.mxu0 0.0
      %3982 = vmatprep.subr.mxu0 0.0
      %3983 = vmatpush2.msra.mxu0 0.0
      %3984 = vmatprep.subr.mxu0 0.0
      %3985 = vmatpush2.msra.mxu0 0.0
      %3986 = vmatprep.subr.mxu0 0.0
      %3987 = vmatpush2.msra.mxu0 0.0
      %3988 = vmatprep.subr.mxu0 0.0
      %3989 = vmatpush2.msra.mxu0 0.0
      %3990 = vmatprep.subr.mxu0 0.0
      %3991 = vmatpush2.msra.mxu0 0.0
      %3992 = vmatprep.subr.mxu0 0.0
      %3993 = vmatpush2.msra.mxu0 0.0
      %3994 = vmatprep.subr.mxu0 0.0
      %3995 = vmatpush2.msra.mxu0 0.0
      %3996 = vmatprep.subr.mxu0 0.0
      %3997 = vmatpush2.msra.mxu0 0.0
      %3998 = vmatprep.subr.mxu0 0.0
      %3999 = vmatpush2.msra.mxu0 0.0
      %4000 = vmatprep.mubr.f32.mxu0 0.0
      %4001 = vmatmul.mubr.f32.gmra.mxu0 %v3928
      %v4002 = vpop.f32.mrf.mxu0
      %v4003 = vadd.f32 0.0, %v4002
      %v4004 = vpop.f32.mrf.mxu0
      %v4005 = vadd.f32 0.0, %v4004
      %4006 = vdwg.mxu0
      %v4008 = vsel %vm689, %v3918, 0
      %4010 = vmatprep.subr.mxu0 0.0
      %4011 = vmatpush1.msra.mxu0 0.0
      %4012 = vmatprep.subr.mxu0 0.0
      %4013 = vmatpush1.msra.mxu0 0.0
      %4014 = vmatprep.subr.mxu0 0.0
      %4015 = vmatpush1.msra.mxu0 0.0
      %4016 = vmatprep.subr.mxu0 0.0
      %4017 = vmatpush1.msra.mxu0 0.0
      %4018 = vmatprep.subr.mxu0 0.0
      %4019 = vmatpush1.msra.mxu0 0.0
      %4020 = vmatprep.subr.mxu0 0.0
      %4021 = vmatpush1.msra.mxu0 0.0
      %4022 = vmatprep.subr.mxu0 0.0
      %4023 = vmatpush1.msra.mxu0 0.0
      %4024 = vmatprep.subr.mxu0 0.0
      %4025 = vmatpush1.msra.mxu0 0.0
      %4026 = vmatprep.subr.mxu0 0.0
      %4027 = vmatpush1.msra.mxu0 0.0
      %4028 = vmatprep.subr.mxu0 0.0
      %4029 = vmatpush1.msra.mxu0 0.0
      %4030 = vmatprep.subr.mxu0 0.0
      %4031 = vmatpush1.msra.mxu0 0.0
      %4032 = vmatprep.subr.mxu0 0.0
      %4033 = vmatpush1.msra.mxu0 0.0
      %4034 = vmatprep.subr.mxu0 0.0
      %4035 = vmatpush1.msra.mxu0 0.0
      %4036 = vmatprep.subr.mxu0 0.0
      %4037 = vmatpush1.msra.mxu0 0.0
      %4038 = vmatprep.subr.mxu0 0.0
      %4039 = vmatpush1.msra.mxu0 0.0
      %4040 = vmatprep.subr.mxu0 %v3805
      %4041 = vmatpush1.msra.mxu0 %v3803
      %4042 = vmatprep.subr.mxu0 0.0
      %4043 = vmatpush2.msra.mxu0 0.0
      %4044 = vmatprep.subr.mxu0 0.0
      %4045 = vmatpush2.msra.mxu0 0.0
      %4046 = vmatprep.subr.mxu0 0.0
      %4047 = vmatpush2.msra.mxu0 0.0
      %4048 = vmatprep.subr.mxu0 0.0
      %4049 = vmatpush2.msra.mxu0 0.0
      %4050 = vmatprep.subr.mxu0 0.0
      %4051 = vmatpush2.msra.mxu0 0.0
      %4052 = vmatprep.subr.mxu0 0.0
      %4053 = vmatpush2.msra.mxu0 0.0
      %4054 = vmatprep.subr.mxu0 0.0
      %4055 = vmatpush2.msra.mxu0 0.0
      %4056 = vmatprep.subr.mxu0 0.0
      %4057 = vmatpush2.msra.mxu0 0.0
      %4058 = vmatprep.subr.mxu0 0.0
      %4059 = vmatpush2.msra.mxu0 0.0
      %4060 = vmatprep.subr.mxu0 0.0
      %4061 = vmatpush2.msra.mxu0 0.0
      %4062 = vmatprep.subr.mxu0 0.0
      %4063 = vmatpush2.msra.mxu0 0.0
      %4064 = vmatprep.subr.mxu0 0.0
      %4065 = vmatpush2.msra.mxu0 0.0
      %4066 = vmatprep.subr.mxu0 0.0
      %4067 = vmatpush2.msra.mxu0 0.0
      %4068 = vmatprep.subr.mxu0 0.0
      %4069 = vmatpush2.msra.mxu0 0.0
      %4070 = vmatprep.subr.mxu0 0.0
      %4071 = vmatpush2.msra.mxu0 0.0
      %4072 = vmatprep.subr.mxu0 0.0
      %4073 = vmatpush2.msra.mxu0 0.0
      %4074 = vmatprep.mubr.f32.mxu0 0.0
      %4075 = vmatmul.mubr.f32.gmra.mxu0 %v4008
      %v4076 = vpop.f32.mrf.mxu0
      %v4077 = vadd.f32 %v4003, %v4076
      %v4078 = vpop.f32.mrf.mxu0
      %v4079 = vadd.f32 %v4005, %v4078
      %4080 = vdwg.mxu0
      %4081 = vrot.lane.b32.xlu0 %v3776, 126
      %v4082 = vpop.permute.xlu0 %4081
      %4083 = vrot.lane.b32.xlu0 %v3796, 126
      %v4084 = vpop.permute.xlu0 %4083
      %v4085 = vsel %vm984, %v4082, %v4084
      %v4086 = vsel %vm984, %v4084, %v4082
      %v4087 = vld [vmem:[%s987] sm:$0xff]
      %v4089 = vsel %vm689, %v4087, 0
      %v4092 = vsel %vm696, %v4085, 0
      %v4095 = vsel %vm696, %v4086, 0
      %4097 = vmatprep.subr.mxu0 0.0
      %4098 = vmatpush1.msra.mxu0 0.0
      %4099 = vmatprep.subr.mxu0 0.0
      %4100 = vmatpush1.msra.mxu0 0.0
      %4101 = vmatprep.subr.mxu0 0.0
      %4102 = vmatpush1.msra.mxu0 0.0
      %4103 = vmatprep.subr.mxu0 0.0
      %4104 = vmatpush1.msra.mxu0 0.0
      %4105 = vmatprep.subr.mxu0 0.0
      %4106 = vmatpush1.msra.mxu0 0.0
      %4107 = vmatprep.subr.mxu0 0.0
      %4108 = vmatpush1.msra.mxu0 0.0
      %4109 = vmatprep.subr.mxu0 0.0
      %4110 = vmatpush1.msra.mxu0 0.0
      %4111 = vmatprep.subr.mxu0 0.0
      %4112 = vmatpush1.msra.mxu0 0.0
      %4113 = vmatprep.subr.mxu0 0.0
      %4114 = vmatpush1.msra.mxu0 0.0
      %4115 = vmatprep.subr.mxu0 0.0
      %4116 = vmatpush1.msra.mxu0 0.0
      %4117 = vmatprep.subr.mxu0 0.0
      %4118 = vmatpush1.msra.mxu0 0.0
      %4119 = vmatprep.subr.mxu0 0.0
      %4120 = vmatpush1.msra.mxu0 0.0
      %4121 = vmatprep.subr.mxu0 0.0
      %4122 = vmatpush1.msra.mxu0 0.0
      %4123 = vmatprep.subr.mxu0 0.0
      %4124 = vmatpush1.msra.mxu0 0.0
      %4125 = vmatprep.subr.mxu0 0.0
      %4126 = vmatpush1.msra.mxu0 0.0
      %4127 = vmatprep.subr.mxu0 %v4095
      %4128 = vmatpush1.msra.mxu0 %v4092
      %4129 = vmatprep.subr.mxu0 0.0
      %4130 = vmatpush2.msra.mxu0 0.0
      %4131 = vmatprep.subr.mxu0 0.0
      %4132 = vmatpush2.msra.mxu0 0.0
      %4133 = vmatprep.subr.mxu0 0.0
      %4134 = vmatpush2.msra.mxu0 0.0
      %4135 = vmatprep.subr.mxu0 0.0
      %4136 = vmatpush2.msra.mxu0 0.0
      %4137 = vmatprep.subr.mxu0 0.0
      %4138 = vmatpush2.msra.mxu0 0.0
      %4139 = vmatprep.subr.mxu0 0.0
      %4140 = vmatpush2.msra.mxu0 0.0
      %4141 = vmatprep.subr.mxu0 0.0
      %4142 = vmatpush2.msra.mxu0 0.0
      %4143 = vmatprep.subr.mxu0 0.0
      %4144 = vmatpush2.msra.mxu0 0.0
      %4145 = vmatprep.subr.mxu0 0.0
      %4146 = vmatpush2.msra.mxu0 0.0
      %4147 = vmatprep.subr.mxu0 0.0
      %4148 = vmatpush2.msra.mxu0 0.0
      %4149 = vmatprep.subr.mxu0 0.0
      %4150 = vmatpush2.msra.mxu0 0.0
      %4151 = vmatprep.subr.mxu0 0.0
      %4152 = vmatpush2.msra.mxu0 0.0
      %4153 = vmatprep.subr.mxu0 0.0
      %4154 = vmatpush2.msra.mxu0 0.0
      %4155 = vmatprep.subr.mxu0 0.0
      %4156 = vmatpush2.msra.mxu0 0.0
      %4157 = vmatprep.subr.mxu0 0.0
      %4158 = vmatpush2.msra.mxu0 0.0
      %4159 = vmatprep.subr.mxu0 0.0
      %4160 = vmatpush2.msra.mxu0 0.0
      %4161 = vmatprep.mubr.f32.mxu0 0.0
      %4162 = vmatmul.mubr.f32.gmra.mxu0 %v4089
      %v4163 = vpop.f32.mrf.mxu0
      %v4164 = vadd.f32 0.0, %v4163
      %v4165 = vpop.f32.mrf.mxu0
      %v4166 = vadd.f32 0.0, %v4165
      %4167 = vdwg.mxu0
      %v4168 = vadd.f32 %v4077, %v4164
      %v4169 = vadd.f32 %v4079, %v4166
      %4170 = vrot.lane.b32.xlu0 %v3776, 112
      %v4171 = vpop.permute.xlu0 %4170
      %4172 = vrot.lane.b32.xlu0 %v3796, 112
      %v4173 = vpop.permute.xlu0 %4172
      %v4174 = vsel %vm1075, %v4171, %v4173
      %v4175 = vsel %vm1075, %v4173, %v4171
      %v4176 = vld [vmem:[%s1078] sm:$0xff]
      %v4178 = vsel %vm689, %v4176, 0
      %v4181 = vsel %vm696, %v4174, 0
      %v4184 = vsel %vm696, %v4175, 0
      %4186 = vmatprep.subr.mxu0 0.0
      %4187 = vmatpush1.msra.mxu0 0.0
      %4188 = vmatprep.subr.mxu0 0.0
      %4189 = vmatpush1.msra.mxu0 0.0
      %4190 = vmatprep.subr.mxu0 0.0
      %4191 = vmatpush1.msra.mxu0 0.0
      %4192 = vmatprep.subr.mxu0 0.0
      %4193 = vmatpush1.msra.mxu0 0.0
      %4194 = vmatprep.subr.mxu0 0.0
      %4195 = vmatpush1.msra.mxu0 0.0
      %4196 = vmatprep.subr.mxu0 0.0
      %4197 = vmatpush1.msra.mxu0 0.0
      %4198 = vmatprep.subr.mxu0 0.0
      %4199 = vmatpush1.msra.mxu0 0.0
      %4200 = vmatprep.subr.mxu0 0.0
      %4201 = vmatpush1.msra.mxu0 0.0
      %4202 = vmatprep.subr.mxu0 0.0
      %4203 = vmatpush1.msra.mxu0 0.0
      %4204 = vmatprep.subr.mxu0 0.0
      %4205 = vmatpush1.msra.mxu0 0.0
      %4206 = vmatprep.subr.mxu0 0.0
      %4207 = vmatpush1.msra.mxu0 0.0
      %4208 = vmatprep.subr.mxu0 0.0
      %4209 = vmatpush1.msra.mxu0 0.0
      %4210 = vmatprep.subr.mxu0 0.0
      %4211 = vmatpush1.msra.mxu0 0.0
      %4212 = vmatprep.subr.mxu0 0.0
      %4213 = vmatpush1.msra.mxu0 0.0
      %4214 = vmatprep.subr.mxu0 0.0
      %4215 = vmatpush1.msra.mxu0 0.0
      %4216 = vmatprep.subr.mxu0 %v4184
      %4217 = vmatpush1.msra.mxu0 %v4181
      %4218 = vmatprep.subr.mxu0 0.0
      %4219 = vmatpush2.msra.mxu0 0.0
      %4220 = vmatprep.subr.mxu0 0.0
      %4221 = vmatpush2.msra.mxu0 0.0
      %4222 = vmatprep.subr.mxu0 0.0
      %4223 = vmatpush2.msra.mxu0 0.0
      %4224 = vmatprep.subr.mxu0 0.0
      %4225 = vmatpush2.msra.mxu0 0.0
      %4226 = vmatprep.subr.mxu0 0.0
      %4227 = vmatpush2.msra.mxu0 0.0
      %4228 = vmatprep.subr.mxu0 0.0
      %4229 = vmatpush2.msra.mxu0 0.0
      %4230 = vmatprep.subr.mxu0 0.0
      %4231 = vmatpush2.msra.mxu0 0.0
      %4232 = vmatprep.subr.mxu0 0.0
      %4233 = vmatpush2.msra.mxu0 0.0
      %4234 = vmatprep.subr.mxu0 0.0
      %4235 = vmatpush2.msra.mxu0 0.0
      %4236 = vmatprep.subr.mxu0 0.0
      %4237 = vmatpush2.msra.mxu0 0.0
      %4238 = vmatprep.subr.mxu0 0.0
      %4239 = vmatpush2.msra.mxu0 0.0
      %4240 = vmatprep.subr.mxu0 0.0
      %4241 = vmatpush2.msra.mxu0 0.0
      %4242 = vmatprep.subr.mxu0 0.0
      %4243 = vmatpush2.msra.mxu0 0.0
      %4244 = vmatprep.subr.mxu0 0.0
      %4245 = vmatpush2.msra.mxu0 0.0
      %4246 = vmatprep.subr.mxu0 0.0
      %4247 = vmatpush2.msra.mxu0 0.0
      %4248 = vmatprep.subr.mxu0 0.0
      %4249 = vmatpush2.msra.mxu0 0.0
      %4250 = vmatprep.mubr.f32.mxu0 0.0
      %4251 = vmatmul.mubr.f32.gmra.mxu0 %v4178
      %v4252 = vpop.f32.mrf.mxu0
      %v4253 = vadd.f32 0.0, %v4252
      %v4254 = vpop.f32.mrf.mxu0
      %v4255 = vadd.f32 0.0, %v4254
      %4256 = vdwg.mxu0
      %v4257 = vadd.f32 %v4168, %v4253
      %v4258 = vadd.f32 %v4169, %v4255
      %4259 = vrot.lane.b32.xlu0 %v3776, 111
      %v4260 = vpop.permute.xlu0 %4259
      %4261 = vrot.lane.b32.xlu0 %v3796, 111
      %v4262 = vpop.permute.xlu0 %4261
      %v4263 = vsel %vm1166, %v4260, %v4262
      %v4264 = vsel %vm1166, %v4262, %v4260
      %v4265 = vld [vmem:[%s1169] sm:$0xff]
      %v4267 = vsel %vm689, %v4265, 0
      %v4270 = vsel %vm696, %v4263, 0
      %v4273 = vsel %vm696, %v4264, 0
      %4275 = vmatprep.subr.mxu0 0.0
      %4276 = vmatpush1.msra.mxu0 0.0
      %4277 = vmatprep.subr.mxu0 0.0
      %4278 = vmatpush1.msra.mxu0 0.0
      %4279 = vmatprep.subr.mxu0 0.0
      %4280 = vmatpush1.msra.mxu0 0.0
      %4281 = vmatprep.subr.mxu0 0.0
      %4282 = vmatpush1.msra.mxu0 0.0
      %4283 = vmatprep.subr.mxu0 0.0
      %4284 = vmatpush1.msra.mxu0 0.0
      %4285 = vmatprep.subr.mxu0 0.0
      %4286 = vmatpush1.msra.mxu0 0.0
      %4287 = vmatprep.subr.mxu0 0.0
      %4288 = vmatpush1.msra.mxu0 0.0
      %4289 = vmatprep.subr.mxu0 0.0
      %4290 = vmatpush1.msra.mxu0 0.0
      %4291 = vmatprep.subr.mxu0 0.0
      %4292 = vmatpush1.msra.mxu0 0.0
      %4293 = vmatprep.subr.mxu0 0.0
      %4294 = vmatpush1.msra.mxu0 0.0
      %4295 = vmatprep.subr.mxu0 0.0
      %4296 = vmatpush1.msra.mxu0 0.0
      %4297 = vmatprep.subr.mxu0 0.0
      %4298 = vmatpush1.msra.mxu0 0.0
      %4299 = vmatprep.subr.mxu0 0.0
      %4300 = vmatpush1.msra.mxu0 0.0
      %4301 = vmatprep.subr.mxu0 0.0
      %4302 = vmatpush1.msra.mxu0 0.0
      %4303 = vmatprep.subr.mxu0 0.0
      %4304 = vmatpush1.msra.mxu0 0.0
      %4305 = vmatprep.subr.mxu0 %v4273
      %4306 = vmatpush1.msra.mxu0 %v4270
      %4307 = vmatprep.subr.mxu0 0.0
      %4308 = vmatpush2.msra.mxu0 0.0
      %4309 = vmatprep.subr.mxu0 0.0
      %4310 = vmatpush2.msra.mxu0 0.0
      %4311 = vmatprep.subr.mxu0 0.0
      %4312 = vmatpush2.msra.mxu0 0.0
      %4313 = vmatprep.subr.mxu0 0.0
      %4314 = vmatpush2.msra.mxu0 0.0
      %4315 = vmatprep.subr.mxu0 0.0
      %4316 = vmatpush2.msra.mxu0 0.0
      %4317 = vmatprep.subr.mxu0 0.0
      %4318 = vmatpush2.msra.mxu0 0.0
      %4319 = vmatprep.subr.mxu0 0.0
      %4320 = vmatpush2.msra.mxu0 0.0
      %4321 = vmatprep.subr.mxu0 0.0
      %4322 = vmatpush2.msra.mxu0 0.0
      %4323 = vmatprep.subr.mxu0 0.0
      %4324 = vmatpush2.msra.mxu0 0.0
      %4325 = vmatprep.subr.mxu0 0.0
      %4326 = vmatpush2.msra.mxu0 0.0
      %4327 = vmatprep.subr.mxu0 0.0
      %4328 = vmatpush2.msra.mxu0 0.0
      %4329 = vmatprep.subr.mxu0 0.0
      %4330 = vmatpush2.msra.mxu0 0.0
      %4331 = vmatprep.subr.mxu0 0.0
      %4332 = vmatpush2.msra.mxu0 0.0
      %4333 = vmatprep.subr.mxu0 0.0
      %4334 = vmatpush2.msra.mxu0 0.0
      %4335 = vmatprep.subr.mxu0 0.0
      %4336 = vmatpush2.msra.mxu0 0.0
      %4337 = vmatprep.subr.mxu0 0.0
      %4338 = vmatpush2.msra.mxu0 0.0
      %4339 = vmatprep.mubr.f32.mxu0 0.0
      %4340 = vmatmul.mubr.f32.gmra.mxu0 %v4267
      %v4341 = vpop.f32.mrf.mxu0
      %v4342 = vadd.f32 0.0, %v4341
      %v4343 = vpop.f32.mrf.mxu0
      %v4344 = vadd.f32 0.0, %v4343
      %4345 = vdwg.mxu0
      %v4346 = vadd.f32 %v4257, %v4342
      %v4347 = vadd.f32 %v4258, %v4344
      %4348 = vrot.lane.b32.xlu0 %v3776, 110
      %v4349 = vpop.permute.xlu0 %4348
      %4350 = vrot.lane.b32.xlu0 %v3796, 110
      %v4351 = vpop.permute.xlu0 %4350
      %v4352 = vsel %vm1257, %v4349, %v4351
      %v4353 = vsel %vm1257, %v4351, %v4349
      %v4354 = vld [vmem:[%s1260] sm:$0xff]
      %v4356 = vsel %vm689, %v4354, 0
      %v4359 = vsel %vm696, %v4352, 0
      %v4362 = vsel %vm696, %v4353, 0
      %4364 = vmatprep.subr.mxu0 0.0
      %4365 = vmatpush1.msra.mxu0 0.0
      %4366 = vmatprep.subr.mxu0 0.0
      %4367 = vmatpush1.msra.mxu0 0.0
      %4368 = vmatprep.subr.mxu0 0.0
      %4369 = vmatpush1.msra.mxu0 0.0
      %4370 = vmatprep.subr.mxu0 0.0
      %4371 = vmatpush1.msra.mxu0 0.0
      %4372 = vmatprep.subr.mxu0 0.0
      %4373 = vmatpush1.msra.mxu0 0.0
      %4374 = vmatprep.subr.mxu0 0.0
      %4375 = vmatpush1.msra.mxu0 0.0
      %4376 = vmatprep.subr.mxu0 0.0
      %4377 = vmatpush1.msra.mxu0 0.0
      %4378 = vmatprep.subr.mxu0 0.0
      %4379 = vmatpush1.msra.mxu0 0.0
      %4380 = vmatprep.subr.mxu0 0.0
      %4381 = vmatpush1.msra.mxu0 0.0
      %4382 = vmatprep.subr.mxu0 0.0
      %4383 = vmatpush1.msra.mxu0 0.0
      %4384 = vmatprep.subr.mxu0 0.0
      %4385 = vmatpush1.msra.mxu0 0.0
      %4386 = vmatprep.subr.mxu0 0.0
      %4387 = vmatpush1.msra.mxu0 0.0
      %4388 = vmatprep.subr.mxu0 0.0
      %4389 = vmatpush1.msra.mxu0 0.0
      %4390 = vmatprep.subr.mxu0 0.0
      %4391 = vmatpush1.msra.mxu0 0.0
      %4392 = vmatprep.subr.mxu0 0.0
      %4393 = vmatpush1.msra.mxu0 0.0
      %4394 = vmatprep.subr.mxu0 %v4362
      %4395 = vmatpush1.msra.mxu0 %v4359
      %4396 = vmatprep.subr.mxu0 0.0
      %4397 = vmatpush2.msra.mxu0 0.0
      %4398 = vmatprep.subr.mxu0 0.0
      %4399 = vmatpush2.msra.mxu0 0.0
      %4400 = vmatprep.subr.mxu0 0.0
      %4401 = vmatpush2.msra.mxu0 0.0
      %4402 = vmatprep.subr.mxu0 0.0
      %4403 = vmatpush2.msra.mxu0 0.0
      %4404 = vmatprep.subr.mxu0 0.0
      %4405 = vmatpush2.msra.mxu0 0.0
      %4406 = vmatprep.subr.mxu0 0.0
      %4407 = vmatpush2.msra.mxu0 0.0
      %4408 = vmatprep.subr.mxu0 0.0
      %4409 = vmatpush2.msra.mxu0 0.0
      %4410 = vmatprep.subr.mxu0 0.0
      %4411 = vmatpush2.msra.mxu0 0.0
      %4412 = vmatprep.subr.mxu0 0.0
      %4413 = vmatpush2.msra.mxu0 0.0
      %4414 = vmatprep.subr.mxu0 0.0
      %4415 = vmatpush2.msra.mxu0 0.0
      %4416 = vmatprep.subr.mxu0 0.0
      %4417 = vmatpush2.msra.mxu0 0.0
      %4418 = vmatprep.subr.mxu0 0.0
      %4419 = vmatpush2.msra.mxu0 0.0
      %4420 = vmatprep.subr.mxu0 0.0
      %4421 = vmatpush2.msra.mxu0 0.0
      %4422 = vmatprep.subr.mxu0 0.0
      %4423 = vmatpush2.msra.mxu0 0.0
      %4424 = vmatprep.subr.mxu0 0.0
      %4425 = vmatpush2.msra.mxu0 0.0
      %4426 = vmatprep.subr.mxu0 0.0
      %4427 = vmatpush2.msra.mxu0 0.0
      %4428 = vmatprep.mubr.f32.mxu0 0.0
      %4429 = vmatmul.mubr.f32.gmra.mxu0 %v4356
      %v4430 = vpop.f32.mrf.mxu0
      %v4431 = vadd.f32 0.0, %v4430
      %v4432 = vpop.f32.mrf.mxu0
      %v4433 = vadd.f32 0.0, %v4432
      %4434 = vdwg.mxu0
      %v4435 = vadd.f32 %v4346, %v4431
      %v4436 = vadd.f32 %v4347, %v4433
      %4437 = vrot.lane.b32.xlu0 %v3776, 96
      %v4438 = vpop.permute.xlu0 %4437
      %4439 = vrot.lane.b32.xlu0 %v3796, 96
      %v4440 = vpop.permute.xlu0 %4439
      %v4441 = vsel %vm1348, %v4438, %v4440
      %v4442 = vsel %vm1348, %v4440, %v4438
      %v4443 = vld [vmem:[%s1351] sm:$0xff]
      %v4445 = vsel %vm689, %v4443, 0
      %v4448 = vsel %vm696, %v4441, 0
      %v4451 = vsel %vm696, %v4442, 0
      %4453 = vmatprep.subr.mxu0 0.0
      %4454 = vmatpush1.msra.mxu0 0.0
      %4455 = vmatprep.subr.mxu0 0.0
      %4456 = vmatpush1.msra.mxu0 0.0
      %4457 = vmatprep.subr.mxu0 0.0
      %4458 = vmatpush1.msra.mxu0 0.0
      %4459 = vmatprep.subr.mxu0 0.0
      %4460 = vmatpush1.msra.mxu0 0.0
      %4461 = vmatprep.subr.mxu0 0.0
      %4462 = vmatpush1.msra.mxu0 0.0
      %4463 = vmatprep.subr.mxu0 0.0
      %4464 = vmatpush1.msra.mxu0 0.0
      %4465 = vmatprep.subr.mxu0 0.0
      %4466 = vmatpush1.msra.mxu0 0.0
      %4467 = vmatprep.subr.mxu0 0.0
      %4468 = vmatpush1.msra.mxu0 0.0
      %4469 = vmatprep.subr.mxu0 0.0
      %4470 = vmatpush1.msra.mxu0 0.0
      %4471 = vmatprep.subr.mxu0 0.0
      %4472 = vmatpush1.msra.mxu0 0.0
      %4473 = vmatprep.subr.mxu0 0.0
      %4474 = vmatpush1.msra.mxu0 0.0
      %4475 = vmatprep.subr.mxu0 0.0
      %4476 = vmatpush1.msra.mxu0 0.0
      %4477 = vmatprep.subr.mxu0 0.0
      %4478 = vmatpush1.msra.mxu0 0.0
      %4479 = vmatprep.subr.mxu0 0.0
      %4480 = vmatpush1.msra.mxu0 0.0
      %4481 = vmatprep.subr.mxu0 0.0
      %4482 = vmatpush1.msra.mxu0 0.0
      %4483 = vmatprep.subr.mxu0 %v4451
      %4484 = vmatpush1.msra.mxu0 %v4448
      %4485 = vmatprep.subr.mxu0 0.0
      %4486 = vmatpush2.msra.mxu0 0.0
      %4487 = vmatprep.subr.mxu0 0.0
      %4488 = vmatpush2.msra.mxu0 0.0
      %4489 = vmatprep.subr.mxu0 0.0
      %4490 = vmatpush2.msra.mxu0 0.0
      %4491 = vmatprep.subr.mxu0 0.0
      %4492 = vmatpush2.msra.mxu0 0.0
      %4493 = vmatprep.subr.mxu0 0.0
      %4494 = vmatpush2.msra.mxu0 0.0
      %4495 = vmatprep.subr.mxu0 0.0
      %4496 = vmatpush2.msra.mxu0 0.0
      %4497 = vmatprep.subr.mxu0 0.0
      %4498 = vmatpush2.msra.mxu0 0.0
      %4499 = vmatprep.subr.mxu0 0.0
      %4500 = vmatpush2.msra.mxu0 0.0
      %4501 = vmatprep.subr.mxu0 0.0
      %4502 = vmatpush2.msra.mxu0 0.0
      %4503 = vmatprep.subr.mxu0 0.0
      %4504 = vmatpush2.msra.mxu0 0.0
      %4505 = vmatprep.subr.mxu0 0.0
      %4506 = vmatpush2.msra.mxu0 0.0
      %4507 = vmatprep.subr.mxu0 0.0
      %4508 = vmatpush2.msra.mxu0 0.0
      %4509 = vmatprep.subr.mxu0 0.0
      %4510 = vmatpush2.msra.mxu0 0.0
      %4511 = vmatprep.subr.mxu0 0.0
      %4512 = vmatpush2.msra.mxu0 0.0
      %4513 = vmatprep.subr.mxu0 0.0
      %4514 = vmatpush2.msra.mxu0 0.0
      %4515 = vmatprep.subr.mxu0 0.0
      %4516 = vmatpush2.msra.mxu0 0.0
      %4517 = vmatprep.mubr.f32.mxu0 0.0
      %4518 = vmatmul.mubr.f32.gmra.mxu0 %v4445
      %v4519 = vpop.f32.mrf.mxu0
      %v4520 = vadd.f32 0.0, %v4519
      %v4521 = vpop.f32.mrf.mxu0
      %v4522 = vadd.f32 0.0, %v4521
      %4523 = vdwg.mxu0
      %v4524 = vadd.f32 %v4435, %v4520
      %v4525 = vadd.f32 %v4436, %v4522
      %4526 = vrot.lane.b32.xlu0 %v3776, 95
      %v4527 = vpop.permute.xlu0 %4526
      %4528 = vrot.lane.b32.xlu0 %v3796, 95
      %v4529 = vpop.permute.xlu0 %4528
      %v4530 = vsel %vm1439, %v4527, %v4529
      %v4531 = vsel %vm1439, %v4529, %v4527
      %v4532 = vld [vmem:[%s1442] sm:$0xff]
      %v4534 = vsel %vm689, %v4532, 0
      %v4537 = vsel %vm696, %v4530, 0
      %v4540 = vsel %vm696, %v4531, 0
      %4542 = vmatprep.subr.mxu0 0.0
      %4543 = vmatpush1.msra.mxu0 0.0
      %4544 = vmatprep.subr.mxu0 0.0
      %4545 = vmatpush1.msra.mxu0 0.0
      %4546 = vmatprep.subr.mxu0 0.0
      %4547 = vmatpush1.msra.mxu0 0.0
      %4548 = vmatprep.subr.mxu0 0.0
      %4549 = vmatpush1.msra.mxu0 0.0
      %4550 = vmatprep.subr.mxu0 0.0
      %4551 = vmatpush1.msra.mxu0 0.0
      %4552 = vmatprep.subr.mxu0 0.0
      %4553 = vmatpush1.msra.mxu0 0.0
      %4554 = vmatprep.subr.mxu0 0.0
      %4555 = vmatpush1.msra.mxu0 0.0
      %4556 = vmatprep.subr.mxu0 0.0
      %4557 = vmatpush1.msra.mxu0 0.0
      %4558 = vmatprep.subr.mxu0 0.0
      %4559 = vmatpush1.msra.mxu0 0.0
      %4560 = vmatprep.subr.mxu0 0.0
      %4561 = vmatpush1.msra.mxu0 0.0
      %4562 = vmatprep.subr.mxu0 0.0
      %4563 = vmatpush1.msra.mxu0 0.0
      %4564 = vmatprep.subr.mxu0 0.0
      %4565 = vmatpush1.msra.mxu0 0.0
      %4566 = vmatprep.subr.mxu0 0.0
      %4567 = vmatpush1.msra.mxu0 0.0
      %4568 = vmatprep.subr.mxu0 0.0
      %4569 = vmatpush1.msra.mxu0 0.0
      %4570 = vmatprep.subr.mxu0 0.0
      %4571 = vmatpush1.msra.mxu0 0.0
      %4572 = vmatprep.subr.mxu0 %v4540
      %4573 = vmatpush1.msra.mxu0 %v4537
      %4574 = vmatprep.subr.mxu0 0.0
      %4575 = vmatpush2.msra.mxu0 0.0
      %4576 = vmatprep.subr.mxu0 0.0
      %4577 = vmatpush2.msra.mxu0 0.0
      %4578 = vmatprep.subr.mxu0 0.0
      %4579 = vmatpush2.msra.mxu0 0.0
      %4580 = vmatprep.subr.mxu0 0.0
      %4581 = vmatpush2.msra.mxu0 0.0
      %4582 = vmatprep.subr.mxu0 0.0
      %4583 = vmatpush2.msra.mxu0 0.0
      %4584 = vmatprep.subr.mxu0 0.0
      %4585 = vmatpush2.msra.mxu0 0.0
      %4586 = vmatprep.subr.mxu0 0.0
      %4587 = vmatpush2.msra.mxu0 0.0
      %4588 = vmatprep.subr.mxu0 0.0
      %4589 = vmatpush2.msra.mxu0 0.0
      %4590 = vmatprep.subr.mxu0 0.0
      %4591 = vmatpush2.msra.mxu0 0.0
      %4592 = vmatprep.subr.mxu0 0.0
      %4593 = vmatpush2.msra.mxu0 0.0
      %4594 = vmatprep.subr.mxu0 0.0
      %4595 = vmatpush2.msra.mxu0 0.0
      %4596 = vmatprep.subr.mxu0 0.0
      %4597 = vmatpush2.msra.mxu0 0.0
      %4598 = vmatprep.subr.mxu0 0.0
      %4599 = vmatpush2.msra.mxu0 0.0
      %4600 = vmatprep.subr.mxu0 0.0
      %4601 = vmatpush2.msra.mxu0 0.0
      %4602 = vmatprep.subr.mxu0 0.0
      %4603 = vmatpush2.msra.mxu0 0.0
      %4604 = vmatprep.subr.mxu0 0.0
      %4605 = vmatpush2.msra.mxu0 0.0
      %4606 = vmatprep.mubr.f32.mxu0 0.0
      %4607 = vmatmul.mubr.f32.gmra.mxu0 %v4534
      %v4608 = vpop.f32.mrf.mxu0
      %v4609 = vadd.f32 0.0, %v4608
      %v4610 = vpop.f32.mrf.mxu0
      %v4611 = vadd.f32 0.0, %v4610
      %4612 = vdwg.mxu0
      %v4613 = vadd.f32 %v4524, %v4609
      %v4614 = vadd.f32 %v4525, %v4611
      %4615 = vrot.lane.b32.xlu0 %v3776, 94
      %v4616 = vpop.permute.xlu0 %4615
      %4617 = vrot.lane.b32.xlu0 %v3796, 94
      %v4618 = vpop.permute.xlu0 %4617
      %v4619 = vsel %vm1530, %v4616, %v4618
      %v4620 = vsel %vm1530, %v4618, %v4616
      %v4621 = vld [vmem:[%s1533] sm:$0xff]
      %v4623 = vsel %vm689, %v4621, 0
      %v4626 = vsel %vm696, %v4619, 0
      %v4629 = vsel %vm696, %v4620, 0
      %4631 = vmatprep.subr.mxu0 0.0
      %4632 = vmatpush1.msra.mxu0 0.0
      %4633 = vmatprep.subr.mxu0 0.0
      %4634 = vmatpush1.msra.mxu0 0.0
      %4635 = vmatprep.subr.mxu0 0.0
      %4636 = vmatpush1.msra.mxu0 0.0
      %4637 = vmatprep.subr.mxu0 0.0
      %4638 = vmatpush1.msra.mxu0 0.0
      %4639 = vmatprep.subr.mxu0 0.0
      %4640 = vmatpush1.msra.mxu0 0.0
      %4641 = vmatprep.subr.mxu0 0.0
      %4642 = vmatpush1.msra.mxu0 0.0
      %4643 = vmatprep.subr.mxu0 0.0
      %4644 = vmatpush1.msra.mxu0 0.0
      %4645 = vmatprep.subr.mxu0 0.0
      %4646 = vmatpush1.msra.mxu0 0.0
      %4647 = vmatprep.subr.mxu0 0.0
      %4648 = vmatpush1.msra.mxu0 0.0
      %4649 = vmatprep.subr.mxu0 0.0
      %4650 = vmatpush1.msra.mxu0 0.0
      %4651 = vmatprep.subr.mxu0 0.0
      %4652 = vmatpush1.msra.mxu0 0.0
      %4653 = vmatprep.subr.mxu0 0.0
      %4654 = vmatpush1.msra.mxu0 0.0
      %4655 = vmatprep.subr.mxu0 0.0
      %4656 = vmatpush1.msra.mxu0 0.0
      %4657 = vmatprep.subr.mxu0 0.0
      %4658 = vmatpush1.msra.mxu0 0.0
      %4659 = vmatprep.subr.mxu0 0.0
      %4660 = vmatpush1.msra.mxu0 0.0
      %4661 = vmatprep.subr.mxu0 %v4629
      %4662 = vmatpush1.msra.mxu0 %v4626
      %4663 = vmatprep.subr.mxu0 0.0
      %4664 = vmatpush2.msra.mxu0 0.0
      %4665 = vmatprep.subr.mxu0 0.0
      %4666 = vmatpush2.msra.mxu0 0.0
      %4667 = vmatprep.subr.mxu0 0.0
      %4668 = vmatpush2.msra.mxu0 0.0
      %4669 = vmatprep.subr.mxu0 0.0
      %4670 = vmatpush2.msra.mxu0 0.0
      %4671 = vmatprep.subr.mxu0 0.0
      %4672 = vmatpush2.msra.mxu0 0.0
      %4673 = vmatprep.subr.mxu0 0.0
      %4674 = vmatpush2.msra.mxu0 0.0
      %4675 = vmatprep.subr.mxu0 0.0
      %4676 = vmatpush2.msra.mxu0 0.0
      %4677 = vmatprep.subr.mxu0 0.0
      %4678 = vmatpush2.msra.mxu0 0.0
      %4679 = vmatprep.subr.mxu0 0.0
      %4680 = vmatpush2.msra.mxu0 0.0
      %4681 = vmatprep.subr.mxu0 0.0
      %4682 = vmatpush2.msra.mxu0 0.0
      %4683 = vmatprep.subr.mxu0 0.0
      %4684 = vmatpush2.msra.mxu0 0.0
      %4685 = vmatprep.subr.mxu0 0.0
      %4686 = vmatpush2.msra.mxu0 0.0
      %4687 = vmatprep.subr.mxu0 0.0
      %4688 = vmatpush2.msra.mxu0 0.0
      %4689 = vmatprep.subr.mxu0 0.0
      %4690 = vmatpush2.msra.mxu0 0.0
      %4691 = vmatprep.subr.mxu0 0.0
      %4692 = vmatpush2.msra.mxu0 0.0
      %4693 = vmatprep.subr.mxu0 0.0
      %4694 = vmatpush2.msra.mxu0 0.0
      %4695 = vmatprep.mubr.f32.mxu0 0.0
      %4696 = vmatmul.mubr.f32.gmra.mxu0 %v4623
      %v4697 = vpop.f32.mrf.mxu0
      %v4698 = vadd.f32 0.0, %v4697
      %v4699 = vpop.f32.mrf.mxu0
      %v4700 = vadd.f32 0.0, %v4699
      %4701 = vdwg.mxu0
      %v4702 = vadd.f32 %v4613, %v4698
      %v4703 = vadd.f32 %v4614, %v4700
      %v4704 = vld [vmem:[%s5] sm:$0xff]
      %4706 = vset.pattern.permute.xlu0 0
      %4707 = vperm.xlu0 %4706, %v4704
      %v4708 = vpop.permute.xlu0 %4707
      %v4710 = vadd.f32 %v4702, %v4708
      %v4711 = vadd.f32 %v4703, %v4708
      %v4712 = vmax.f32 %v4710, 0.0
      %v4713 = vmax.f32 %v4711, 0.0
      %v4714 = vsub.f32 0.0, %v4710
      %v4715 = vsub.f32 0.0, %v4711
      %v4716 = vmax.f32 %v4714, 0.0
      %v4717 = vmax.f32 %v4715, 0.0
      %v4718 = vld [vmem:[%s12] sm:$0xff]
      %v4719 = vld [vmem:[%s12 + $0x8] sm:$0x3]
      %v4720 = vld [vmem:[%s13] sm:$0xff]
      %v4721 = vld [vmem:[%s13 + $0x8] sm:$0x3]
      %4723 = vset.pattern.permute.xlu0 0
      %4724 = vperm.xlu0 %4723, %v4720
      %v4725 = vpop.permute.xlu0 %4724
      %4728 = vset.pattern.permute.xlu0 0
      %4729 = vperm.xlu0 %4728, %v4721
      %v4730 = vpop.permute.xlu0 %4729
      %v4733 = vsel %vm1645, %v4718, 0
      %v4736 = vsel %vm1645, %v4719, 0
      %4738 = vmatprep.subr.mxu0 0.0
      %4739 = vmatpush1.msra.mxu0 0.0
      %4740 = vmatprep.subr.mxu0 0.0
      %4741 = vmatpush1.msra.mxu0 0.0
      %4742 = vmatprep.subr.mxu0 0.0
      %4743 = vmatpush1.msra.mxu0 0.0
      %4744 = vmatprep.subr.mxu0 0.0
      %4745 = vmatpush1.msra.mxu0 0.0
      %4746 = vmatprep.subr.mxu0 0.0
      %4747 = vmatpush1.msra.mxu0 0.0
      %4748 = vmatprep.subr.mxu0 0.0
      %4749 = vmatpush1.msra.mxu0 0.0
      %4750 = vmatprep.subr.mxu0 0.0
      %4751 = vmatpush1.msra.mxu0 0.0
      %4752 = vmatprep.subr.mxu0 0.0
      %4753 = vmatpush1.msra.mxu0 0.0
      %4754 = vmatprep.subr.mxu0 0.0
      %4755 = vmatpush1.msra.mxu0 0.0
      %4756 = vmatprep.subr.mxu0 0.0
      %4757 = vmatpush1.msra.mxu0 0.0
      %4758 = vmatprep.subr.mxu0 0.0
      %4759 = vmatpush1.msra.mxu0 0.0
      %4760 = vmatprep.subr.mxu0 0.0
      %4761 = vmatpush1.msra.mxu0 0.0
      %4762 = vmatprep.subr.mxu0 0.0
      %4763 = vmatpush1.msra.mxu0 0.0
      %4764 = vmatprep.subr.mxu0 0.0
      %4765 = vmatpush1.msra.mxu0 0.0
      %4766 = vmatprep.subr.mxu0 %v4717
      %4767 = vmatpush1.msra.mxu0 %v4716
      %4768 = vmatprep.subr.mxu0 %v4713
      %4769 = vmatpush1.msra.mxu0 %v4712
      %4770 = vmatprep.subr.mxu0 0.0
      %4771 = vmatpush2.msra.mxu0 0.0
      %4772 = vmatprep.subr.mxu0 0.0
      %4773 = vmatpush2.msra.mxu0 0.0
      %4774 = vmatprep.subr.mxu0 0.0
      %4775 = vmatpush2.msra.mxu0 0.0
      %4776 = vmatprep.subr.mxu0 0.0
      %4777 = vmatpush2.msra.mxu0 0.0
      %4778 = vmatprep.subr.mxu0 0.0
      %4779 = vmatpush2.msra.mxu0 0.0
      %4780 = vmatprep.subr.mxu0 0.0
      %4781 = vmatpush2.msra.mxu0 0.0
      %4782 = vmatprep.subr.mxu0 0.0
      %4783 = vmatpush2.msra.mxu0 0.0
      %4784 = vmatprep.subr.mxu0 0.0
      %4785 = vmatpush2.msra.mxu0 0.0
      %4786 = vmatprep.subr.mxu0 0.0
      %4787 = vmatpush2.msra.mxu0 0.0
      %4788 = vmatprep.subr.mxu0 0.0
      %4789 = vmatpush2.msra.mxu0 0.0
      %4790 = vmatprep.subr.mxu0 0.0
      %4791 = vmatpush2.msra.mxu0 0.0
      %4792 = vmatprep.subr.mxu0 0.0
      %4793 = vmatpush2.msra.mxu0 0.0
      %4794 = vmatprep.subr.mxu0 0.0
      %4795 = vmatpush2.msra.mxu0 0.0
      %4796 = vmatprep.subr.mxu0 0.0
      %4797 = vmatpush2.msra.mxu0 0.0
      %4798 = vmatprep.subr.mxu0 0.0
      %4799 = vmatpush2.msra.mxu0 0.0
      %4800 = vmatprep.subr.mxu0 0.0
      %4801 = vmatpush2.msra.mxu0 0.0
      %4802 = vmatprep.mubr.f32.mxu0 0.0
      %4803 = vmatmul.mubr.f32.gmra.mxu0 %v4733
      %v4804 = vpop.f32.mrf.mxu0
      %v4805 = vadd.f32 %v4725, %v4804
      %v4806 = vpop.f32.mrf.mxu0
      %v4807 = vadd.f32 %v4725, %v4806
      %4808 = vmatprep.mubr.f32.mxu0 0.0
      %4809 = vmatmul.mubr.f32.gmra.mxu0 %v4736
      %v4810 = vpop.f32.mrf.mxu0
      %v4811 = vadd.f32 %v4730, %v4810
      %v4812 = vpop.f32.mrf.mxu0
      %v4813 = vadd.f32 %v4730, %v4812
      %4814 = vdwg.mxu0
      %v4815 = vld [vmem:[%s1729] sm:$0x3]
      %vm4816 = vcmp.gt.f32.partialorder %v4815, 0.0
      %v4817 = vsel %vm4816, 1, 0
      %v4818 = vlaneseq
      %v4819 = vshrl.u32 %v4818, 7
      %v4820 = vsub.s32 0, %v4819
      %v4821 = vrot.slane %v4817, %v4820
      %v4822 = vlaneseq
      %v4823 = vshrl.u32 %v4822, 7
      %v4824 = vsub.s32 1, %v4823
      %v4825 = vrot.slane %v4817, %v4824
      %vm4826 = vcmp.eq.s32.totalorder %v4821, 1
      %vm4827 = vcmp.eq.s32.totalorder %v4825, 1
      %v4828 = vsel %vm4826, %v4805, -inf
      %v4829 = vsel %vm4827, %v4807, -inf
      %v4830 = vsel %vm4826, %v4811, -inf
      %v4831 = vsel %vm4827, %v4813, -inf
      %v4832 = vmax.f32 %v4828, %v4829
      %4833 = vmax.xlane.f32.xlu0 %v4832
      %v4834 = vpop.xlane.xlu0 %4833
      %v4835 = vsel %vm781, %v4830, -inf
      %v4836 = vsel %vm781, %v4831, -inf
      %v4837 = vmax.f32 %v4835, %v4836
      %4838 = vmax.xlane.f32.xlu0 %v4837
      %v4839 = vpop.xlane.xlu0 %4838
      %v4840 = vsub.f32 %v4828, %v4834
      %v4841 = vsub.f32 %v4829, %v4834
      %v4842 = vsub.f32 %v4830, %v4839
      %v4843 = vsub.f32 %v4831, %v4839
      %v4844 = vmul.f32 %v4840, 1.442695
      %v4845 = vpow.pop %v4844
      %v4846 = vmul.f32 %v4841, 1.442695
      %v4847 = vpow.pop %v4846
      %v4848 = vmul.f32 %v4842, 1.442695
      %v4849 = vpow.pop %v4848
      %v4850 = vmul.f32 %v4843, 1.442695
      %v4851 = vpow.pop %v4850
      %v4852 = vadd.f32 %v4845, %v4847
      %4853 = vadd.xlane.f32.xlu0 %v4852
      %v4854 = vpop.xlane.xlu0 %4853
      %v4855 = vsel %vm781, %v4849, 0.0
      %v4856 = vsel %vm781, %v4851, 0.0
      %v4857 = vadd.f32 %v4855, %v4856
      %4858 = vadd.xlane.f32.xlu0 %v4857
      %v4859 = vpop.xlane.xlu0 %4858
      %v4860 = vlog2.pop %v4854
      %v4861 = vmul.f32 %v4860, 0.6931472
      %v4862 = vlog2.pop %v4859
      %v4863 = vmul.f32 %v4862, 0.6931472
      %v4864 = vadd.f32 %v4834, %v4861
      %v4865 = vadd.f32 %v4839, %v4863
      %v4866 = vmax.f32 %v3916, %v4864
      %v4867 = vmax.f32 %v3917, %v4865
      %v4868 = vsub.f32 %v3916, %v4866
      %v4869 = vsub.f32 %v3917, %v4867
      %v4870 = vmul.f32 %v4868, 1.442695
      %v4871 = vpow.pop %v4870
      %v4872 = vmul.f32 %v4869, 1.442695
      %v4873 = vpow.pop %v4872
      %v4874 = vsub.f32 %v4864, %v4866
      %v4875 = vsub.f32 %v4865, %v4867
      %v4876 = vmul.f32 %v4874, 1.442695
      %v4877 = vpow.pop %v4876
      %v4878 = vmul.f32 %v4875, 1.442695
      %v4879 = vpow.pop %v4878
      %v4880 = vadd.f32 %v4871, %v4877
      %v4881 = vadd.f32 %v4873, %v4879
      %v4882 = vlog2.pop %v4880
      %v4883 = vmul.f32 %v4882, 0.6931472
      %v4884 = vlog2.pop %v4881
      %v4885 = vmul.f32 %v4884, 0.6931472
      %v4886 = vadd.f32 %v4866, %v4883
      %v4887 = vadd.f32 %v4867, %v4885
      %v4888 = vld [vmem:[%s6] sm:$0xff]
      %4889 = vrot.lane.b32.xlu0 %v4712, 127
      %v4890 = vpop.permute.xlu0 %4889
      %4891 = vrot.lane.b32.xlu0 %v4716, 127
      %v4892 = vpop.permute.xlu0 %4891
      %4893 = vrot.lane.b32.xlu0 %v4713, 127
      %v4894 = vpop.permute.xlu0 %4893
      %4895 = vrot.lane.b32.xlu0 %v4717, 127
      %v4896 = vpop.permute.xlu0 %4895
      %v4897 = vsel %vm821, %v4890, %v4894
      %v4898 = vsel %vm821, %v4892, %v4896
      %v4899 = vsel %vm821, %v4894, %v4890
      %v4900 = vsel %vm821, %v4896, %v4892
      %v4901 = vld [vmem:[%s1816] sm:$0xff]
      %v4903 = vsel %vm1645, %v4901, 0
      %4905 = vmatprep.subr.mxu0 0.0
      %4906 = vmatpush1.msra.mxu0 0.0
      %4907 = vmatprep.subr.mxu0 0.0
      %4908 = vmatpush1.msra.mxu0 0.0
      %4909 = vmatprep.subr.mxu0 0.0
      %4910 = vmatpush1.msra.mxu0 0.0
      %4911 = vmatprep.subr.mxu0 0.0
      %4912 = vmatpush1.msra.mxu0 0.0
      %4913 = vmatprep.subr.mxu0 0.0
      %4914 = vmatpush1.msra.mxu0 0.0
      %4915 = vmatprep.subr.mxu0 0.0
      %4916 = vmatpush1.msra.mxu0 0.0
      %4917 = vmatprep.subr.mxu0 0.0
      %4918 = vmatpush1.msra.mxu0 0.0
      %4919 = vmatprep.subr.mxu0 0.0
      %4920 = vmatpush1.msra.mxu0 0.0
      %4921 = vmatprep.subr.mxu0 0.0
      %4922 = vmatpush1.msra.mxu0 0.0
      %4923 = vmatprep.subr.mxu0 0.0
      %4924 = vmatpush1.msra.mxu0 0.0
      %4925 = vmatprep.subr.mxu0 0.0
      %4926 = vmatpush1.msra.mxu0 0.0
      %4927 = vmatprep.subr.mxu0 0.0
      %4928 = vmatpush1.msra.mxu0 0.0
      %4929 = vmatprep.subr.mxu0 0.0
      %4930 = vmatpush1.msra.mxu0 0.0
      %4931 = vmatprep.subr.mxu0 0.0
      %4932 = vmatpush1.msra.mxu0 0.0
      %4933 = vmatprep.subr.mxu0 %v4900
      %4934 = vmatpush1.msra.mxu0 %v4898
      %4935 = vmatprep.subr.mxu0 %v4899
      %4936 = vmatpush1.msra.mxu0 %v4897
      %4937 = vmatprep.subr.mxu0 0.0
      %4938 = vmatpush2.msra.mxu0 0.0
      %4939 = vmatprep.subr.mxu0 0.0
      %4940 = vmatpush2.msra.mxu0 0.0
      %4941 = vmatprep.subr.mxu0 0.0
      %4942 = vmatpush2.msra.mxu0 0.0
      %4943 = vmatprep.subr.mxu0 0.0
      %4944 = vmatpush2.msra.mxu0 0.0
      %4945 = vmatprep.subr.mxu0 0.0
      %4946 = vmatpush2.msra.mxu0 0.0
      %4947 = vmatprep.subr.mxu0 0.0
      %4948 = vmatpush2.msra.mxu0 0.0
      %4949 = vmatprep.subr.mxu0 0.0
      %4950 = vmatpush2.msra.mxu0 0.0
      %4951 = vmatprep.subr.mxu0 0.0
      %4952 = vmatpush2.msra.mxu0 0.0
      %4953 = vmatprep.subr.mxu0 0.0
      %4954 = vmatpush2.msra.mxu0 0.0
      %4955 = vmatprep.subr.mxu0 0.0
      %4956 = vmatpush2.msra.mxu0 0.0
      %4957 = vmatprep.subr.mxu0 0.0
      %4958 = vmatpush2.msra.mxu0 0.0
      %4959 = vmatprep.subr.mxu0 0.0
      %4960 = vmatpush2.msra.mxu0 0.0
      %4961 = vmatprep.subr.mxu0 0.0
      %4962 = vmatpush2.msra.mxu0 0.0
      %4963 = vmatprep.subr.mxu0 0.0
      %4964 = vmatpush2.msra.mxu0 0.0
      %4965 = vmatprep.subr.mxu0 0.0
      %4966 = vmatpush2.msra.mxu0 0.0
      %4967 = vmatprep.subr.mxu0 0.0
      %4968 = vmatpush2.msra.mxu0 0.0
      %4969 = vmatprep.mubr.f32.mxu0 0.0
      %4970 = vmatmul.mubr.f32.gmra.mxu0 %v4903
      %v4971 = vpop.f32.mrf.mxu0
      %v4972 = vadd.f32 0.0, %v4971
      %v4973 = vpop.f32.mrf.mxu0
      %v4974 = vadd.f32 0.0, %v4973
      %4975 = vdwg.mxu0
      %v4977 = vsel %vm1645, %v4888, 0
      %4979 = vmatprep.subr.mxu0 0.0
      %4980 = vmatpush1.msra.mxu0 0.0
      %4981 = vmatprep.subr.mxu0 0.0
      %4982 = vmatpush1.msra.mxu0 0.0
      %4983 = vmatprep.subr.mxu0 0.0
      %4984 = vmatpush1.msra.mxu0 0.0
      %4985 = vmatprep.subr.mxu0 0.0
      %4986 = vmatpush1.msra.mxu0 0.0
      %4987 = vmatprep.subr.mxu0 0.0
      %4988 = vmatpush1.msra.mxu0 0.0
      %4989 = vmatprep.subr.mxu0 0.0
      %4990 = vmatpush1.msra.mxu0 0.0
      %4991 = vmatprep.subr.mxu0 0.0
      %4992 = vmatpush1.msra.mxu0 0.0
      %4993 = vmatprep.subr.mxu0 0.0
      %4994 = vmatpush1.msra.mxu0 0.0
      %4995 = vmatprep.subr.mxu0 0.0
      %4996 = vmatpush1.msra.mxu0 0.0
      %4997 = vmatprep.subr.mxu0 0.0
      %4998 = vmatpush1.msra.mxu0 0.0
      %4999 = vmatprep.subr.mxu0 0.0
      %5000 = vmatpush1.msra.mxu0 0.0
      %5001 = vmatprep.subr.mxu0 0.0
      %5002 = vmatpush1.msra.mxu0 0.0
      %5003 = vmatprep.subr.mxu0 0.0
      %5004 = vmatpush1.msra.mxu0 0.0
      %5005 = vmatprep.subr.mxu0 0.0
      %5006 = vmatpush1.msra.mxu0 0.0
      %5007 = vmatprep.subr.mxu0 %v4717
      %5008 = vmatpush1.msra.mxu0 %v4716
      %5009 = vmatprep.subr.mxu0 %v4713
      %5010 = vmatpush1.msra.mxu0 %v4712
      %5011 = vmatprep.subr.mxu0 0.0
      %5012 = vmatpush2.msra.mxu0 0.0
      %5013 = vmatprep.subr.mxu0 0.0
      %5014 = vmatpush2.msra.mxu0 0.0
      %5015 = vmatprep.subr.mxu0 0.0
      %5016 = vmatpush2.msra.mxu0 0.0
      %5017 = vmatprep.subr.mxu0 0.0
      %5018 = vmatpush2.msra.mxu0 0.0
      %5019 = vmatprep.subr.mxu0 0.0
      %5020 = vmatpush2.msra.mxu0 0.0
      %5021 = vmatprep.subr.mxu0 0.0
      %5022 = vmatpush2.msra.mxu0 0.0
      %5023 = vmatprep.subr.mxu0 0.0
      %5024 = vmatpush2.msra.mxu0 0.0
      %5025 = vmatprep.subr.mxu0 0.0
      %5026 = vmatpush2.msra.mxu0 0.0
      %5027 = vmatprep.subr.mxu0 0.0
      %5028 = vmatpush2.msra.mxu0 0.0
      %5029 = vmatprep.subr.mxu0 0.0
      %5030 = vmatpush2.msra.mxu0 0.0
      %5031 = vmatprep.subr.mxu0 0.0
      %5032 = vmatpush2.msra.mxu0 0.0
      %5033 = vmatprep.subr.mxu0 0.0
      %5034 = vmatpush2.msra.mxu0 0.0
      %5035 = vmatprep.subr.mxu0 0.0
      %5036 = vmatpush2.msra.mxu0 0.0
      %5037 = vmatprep.subr.mxu0 0.0
      %5038 = vmatpush2.msra.mxu0 0.0
      %5039 = vmatprep.subr.mxu0 0.0
      %5040 = vmatpush2.msra.mxu0 0.0
      %5041 = vmatprep.subr.mxu0 0.0
      %5042 = vmatpush2.msra.mxu0 0.0
      %5043 = vmatprep.mubr.f32.mxu0 0.0
      %5044 = vmatmul.mubr.f32.gmra.mxu0 %v4977
      %v5045 = vpop.f32.mrf.mxu0
      %v5046 = vadd.f32 %v4972, %v5045
      %v5047 = vpop.f32.mrf.mxu0
      %v5048 = vadd.f32 %v4974, %v5047
      %5049 = vdwg.mxu0
      %5050 = vrot.lane.b32.xlu0 %v4712, 126
      %v5051 = vpop.permute.xlu0 %5050
      %5052 = vrot.lane.b32.xlu0 %v4716, 126
      %v5053 = vpop.permute.xlu0 %5052
      %5054 = vrot.lane.b32.xlu0 %v4713, 126
      %v5055 = vpop.permute.xlu0 %5054
      %5056 = vrot.lane.b32.xlu0 %v4717, 126
      %v5057 = vpop.permute.xlu0 %5056
      %v5058 = vsel %vm984, %v5051, %v5055
      %v5059 = vsel %vm984, %v5053, %v5057
      %v5060 = vsel %vm984, %v5055, %v5051
      %v5061 = vsel %vm984, %v5057, %v5053
      %v5062 = vld [vmem:[%s1978] sm:$0xff]
      %v5064 = vsel %vm1645, %v5062, 0
      %5066 = vmatprep.subr.mxu0 0.0
      %5067 = vmatpush1.msra.mxu0 0.0
      %5068 = vmatprep.subr.mxu0 0.0
      %5069 = vmatpush1.msra.mxu0 0.0
      %5070 = vmatprep.subr.mxu0 0.0
      %5071 = vmatpush1.msra.mxu0 0.0
      %5072 = vmatprep.subr.mxu0 0.0
      %5073 = vmatpush1.msra.mxu0 0.0
      %5074 = vmatprep.subr.mxu0 0.0
      %5075 = vmatpush1.msra.mxu0 0.0
      %5076 = vmatprep.subr.mxu0 0.0
      %5077 = vmatpush1.msra.mxu0 0.0
      %5078 = vmatprep.subr.mxu0 0.0
      %5079 = vmatpush1.msra.mxu0 0.0
      %5080 = vmatprep.subr.mxu0 0.0
      %5081 = vmatpush1.msra.mxu0 0.0
      %5082 = vmatprep.subr.mxu0 0.0
      %5083 = vmatpush1.msra.mxu0 0.0
      %5084 = vmatprep.subr.mxu0 0.0
      %5085 = vmatpush1.msra.mxu0 0.0
      %5086 = vmatprep.subr.mxu0 0.0
      %5087 = vmatpush1.msra.mxu0 0.0
      %5088 = vmatprep.subr.mxu0 0.0
      %5089 = vmatpush1.msra.mxu0 0.0
      %5090 = vmatprep.subr.mxu0 0.0
      %5091 = vmatpush1.msra.mxu0 0.0
      %5092 = vmatprep.subr.mxu0 0.0
      %5093 = vmatpush1.msra.mxu0 0.0
      %5094 = vmatprep.subr.mxu0 %v5061
      %5095 = vmatpush1.msra.mxu0 %v5059
      %5096 = vmatprep.subr.mxu0 %v5060
      %5097 = vmatpush1.msra.mxu0 %v5058
      %5098 = vmatprep.subr.mxu0 0.0
      %5099 = vmatpush2.msra.mxu0 0.0
      %5100 = vmatprep.subr.mxu0 0.0
      %5101 = vmatpush2.msra.mxu0 0.0
      %5102 = vmatprep.subr.mxu0 0.0
      %5103 = vmatpush2.msra.mxu0 0.0
      %5104 = vmatprep.subr.mxu0 0.0
      %5105 = vmatpush2.msra.mxu0 0.0
      %5106 = vmatprep.subr.mxu0 0.0
      %5107 = vmatpush2.msra.mxu0 0.0
      %5108 = vmatprep.subr.mxu0 0.0
      %5109 = vmatpush2.msra.mxu0 0.0
      %5110 = vmatprep.subr.mxu0 0.0
      %5111 = vmatpush2.msra.mxu0 0.0
      %5112 = vmatprep.subr.mxu0 0.0
      %5113 = vmatpush2.msra.mxu0 0.0
      %5114 = vmatprep.subr.mxu0 0.0
      %5115 = vmatpush2.msra.mxu0 0.0
      %5116 = vmatprep.subr.mxu0 0.0
      %5117 = vmatpush2.msra.mxu0 0.0
      %5118 = vmatprep.subr.mxu0 0.0
      %5119 = vmatpush2.msra.mxu0 0.0
      %5120 = vmatprep.subr.mxu0 0.0
      %5121 = vmatpush2.msra.mxu0 0.0
      %5122 = vmatprep.subr.mxu0 0.0
      %5123 = vmatpush2.msra.mxu0 0.0
      %5124 = vmatprep.subr.mxu0 0.0
      %5125 = vmatpush2.msra.mxu0 0.0
      %5126 = vmatprep.subr.mxu0 0.0
      %5127 = vmatpush2.msra.mxu0 0.0
      %5128 = vmatprep.subr.mxu0 0.0
      %5129 = vmatpush2.msra.mxu0 0.0
      %5130 = vmatprep.mubr.f32.mxu0 0.0
      %5131 = vmatmul.mubr.f32.gmra.mxu0 %v5064
      %v5132 = vpop.f32.mrf.mxu0
      %v5133 = vadd.f32 0.0, %v5132
      %v5134 = vpop.f32.mrf.mxu0
      %v5135 = vadd.f32 0.0, %v5134
      %5136 = vdwg.mxu0
      %v5137 = vadd.f32 %v5046, %v5133
      %v5138 = vadd.f32 %v5048, %v5135
      %5139 = vrot.lane.b32.xlu0 %v4712, 112
      %v5140 = vpop.permute.xlu0 %5139
      %5141 = vrot.lane.b32.xlu0 %v4716, 112
      %v5142 = vpop.permute.xlu0 %5141
      %5143 = vrot.lane.b32.xlu0 %v4713, 112
      %v5144 = vpop.permute.xlu0 %5143
      %5145 = vrot.lane.b32.xlu0 %v4717, 112
      %v5146 = vpop.permute.xlu0 %5145
      %v5147 = vsel %vm1075, %v5140, %v5144
      %v5148 = vsel %vm1075, %v5142, %v5146
      %v5149 = vsel %vm1075, %v5144, %v5140
      %v5150 = vsel %vm1075, %v5146, %v5142
      %v5151 = vld [vmem:[%s2068] sm:$0xff]
      %v5153 = vsel %vm1645, %v5151, 0
      %5155 = vmatprep.subr.mxu0 0.0
      %5156 = vmatpush1.msra.mxu0 0.0
      %5157 = vmatprep.subr.mxu0 0.0
      %5158 = vmatpush1.msra.mxu0 0.0
      %5159 = vmatprep.subr.mxu0 0.0
      %5160 = vmatpush1.msra.mxu0 0.0
      %5161 = vmatprep.subr.mxu0 0.0
      %5162 = vmatpush1.msra.mxu0 0.0
      %5163 = vmatprep.subr.mxu0 0.0
      %5164 = vmatpush1.msra.mxu0 0.0
      %5165 = vmatprep.subr.mxu0 0.0
      %5166 = vmatpush1.msra.mxu0 0.0
      %5167 = vmatprep.subr.mxu0 0.0
      %5168 = vmatpush1.msra.mxu0 0.0
      %5169 = vmatprep.subr.mxu0 0.0
      %5170 = vmatpush1.msra.mxu0 0.0
      %5171 = vmatprep.subr.mxu0 0.0
      %5172 = vmatpush1.msra.mxu0 0.0
      %5173 = vmatprep.subr.mxu0 0.0
      %5174 = vmatpush1.msra.mxu0 0.0
      %5175 = vmatprep.subr.mxu0 0.0
      %5176 = vmatpush1.msra.mxu0 0.0
      %5177 = vmatprep.subr.mxu0 0.0
      %5178 = vmatpush1.msra.mxu0 0.0
      %5179 = vmatprep.subr.mxu0 0.0
      %5180 = vmatpush1.msra.mxu0 0.0
      %5181 = vmatprep.subr.mxu0 0.0
      %5182 = vmatpush1.msra.mxu0 0.0
      %5183 = vmatprep.subr.mxu0 %v5150
      %5184 = vmatpush1.msra.mxu0 %v5148
      %5185 = vmatprep.subr.mxu0 %v5149
      %5186 = vmatpush1.msra.mxu0 %v5147
      %5187 = vmatprep.subr.mxu0 0.0
      %5188 = vmatpush2.msra.mxu0 0.0
      %5189 = vmatprep.subr.mxu0 0.0
      %5190 = vmatpush2.msra.mxu0 0.0
      %5191 = vmatprep.subr.mxu0 0.0
      %5192 = vmatpush2.msra.mxu0 0.0
      %5193 = vmatprep.subr.mxu0 0.0
      %5194 = vmatpush2.msra.mxu0 0.0
      %5195 = vmatprep.subr.mxu0 0.0
      %5196 = vmatpush2.msra.mxu0 0.0
      %5197 = vmatprep.subr.mxu0 0.0
      %5198 = vmatpush2.msra.mxu0 0.0
      %5199 = vmatprep.subr.mxu0 0.0
      %5200 = vmatpush2.msra.mxu0 0.0
      %5201 = vmatprep.subr.mxu0 0.0
      %5202 = vmatpush2.msra.mxu0 0.0
      %5203 = vmatprep.subr.mxu0 0.0
      %5204 = vmatpush2.msra.mxu0 0.0
      %5205 = vmatprep.subr.mxu0 0.0
      %5206 = vmatpush2.msra.mxu0 0.0
      %5207 = vmatprep.subr.mxu0 0.0
      %5208 = vmatpush2.msra.mxu0 0.0
      %5209 = vmatprep.subr.mxu0 0.0
      %5210 = vmatpush2.msra.mxu0 0.0
      %5211 = vmatprep.subr.mxu0 0.0
      %5212 = vmatpush2.msra.mxu0 0.0
      %5213 = vmatprep.subr.mxu0 0.0
      %5214 = vmatpush2.msra.mxu0 0.0
      %5215 = vmatprep.subr.mxu0 0.0
      %5216 = vmatpush2.msra.mxu0 0.0
      %5217 = vmatprep.subr.mxu0 0.0
      %5218 = vmatpush2.msra.mxu0 0.0
      %5219 = vmatprep.mubr.f32.mxu0 0.0
      %5220 = vmatmul.mubr.f32.gmra.mxu0 %v5153
      %v5221 = vpop.f32.mrf.mxu0
      %v5222 = vadd.f32 0.0, %v5221
      %v5223 = vpop.f32.mrf.mxu0
      %v5224 = vadd.f32 0.0, %v5223
      %5225 = vdwg.mxu0
      %v5226 = vadd.f32 %v5137, %v5222
      %v5227 = vadd.f32 %v5138, %v5224
      %5228 = vrot.lane.b32.xlu0 %v4712, 111
      %v5229 = vpop.permute.xlu0 %5228
      %5230 = vrot.lane.b32.xlu0 %v4716, 111
      %v5231 = vpop.permute.xlu0 %5230
      %5232 = vrot.lane.b32.xlu0 %v4713, 111
      %v5233 = vpop.permute.xlu0 %5232
      %5234 = vrot.lane.b32.xlu0 %v4717, 111
      %v5235 = vpop.permute.xlu0 %5234
      %v5236 = vsel %vm1166, %v5229, %v5233
      %v5237 = vsel %vm1166, %v5231, %v5235
      %v5238 = vsel %vm1166, %v5233, %v5229
      %v5239 = vsel %vm1166, %v5235, %v5231
      %v5240 = vld [vmem:[%s2158] sm:$0xff]
      %v5242 = vsel %vm1645, %v5240, 0
      %5244 = vmatprep.subr.mxu0 0.0
      %5245 = vmatpush1.msra.mxu0 0.0
      %5246 = vmatprep.subr.mxu0 0.0
      %5247 = vmatpush1.msra.mxu0 0.0
      %5248 = vmatprep.subr.mxu0 0.0
      %5249 = vmatpush1.msra.mxu0 0.0
      %5250 = vmatprep.subr.mxu0 0.0
      %5251 = vmatpush1.msra.mxu0 0.0
      %5252 = vmatprep.subr.mxu0 0.0
      %5253 = vmatpush1.msra.mxu0 0.0
      %5254 = vmatprep.subr.mxu0 0.0
      %5255 = vmatpush1.msra.mxu0 0.0
      %5256 = vmatprep.subr.mxu0 0.0
      %5257 = vmatpush1.msra.mxu0 0.0
      %5258 = vmatprep.subr.mxu0 0.0
      %5259 = vmatpush1.msra.mxu0 0.0
      %5260 = vmatprep.subr.mxu0 0.0
      %5261 = vmatpush1.msra.mxu0 0.0
      %5262 = vmatprep.subr.mxu0 0.0
      %5263 = vmatpush1.msra.mxu0 0.0
      %5264 = vmatprep.subr.mxu0 0.0
      %5265 = vmatpush1.msra.mxu0 0.0
      %5266 = vmatprep.subr.mxu0 0.0
      %5267 = vmatpush1.msra.mxu0 0.0
      %5268 = vmatprep.subr.mxu0 0.0
      %5269 = vmatpush1.msra.mxu0 0.0
      %5270 = vmatprep.subr.mxu0 0.0
      %5271 = vmatpush1.msra.mxu0 0.0
      %5272 = vmatprep.subr.mxu0 %v5239
      %5273 = vmatpush1.msra.mxu0 %v5237
      %5274 = vmatprep.subr.mxu0 %v5238
      %5275 = vmatpush1.msra.mxu0 %v5236
      %5276 = vmatprep.subr.mxu0 0.0
      %5277 = vmatpush2.msra.mxu0 0.0
      %5278 = vmatprep.subr.mxu0 0.0
      %5279 = vmatpush2.msra.mxu0 0.0
      %5280 = vmatprep.subr.mxu0 0.0
      %5281 = vmatpush2.msra.mxu0 0.0
      %5282 = vmatprep.subr.mxu0 0.0
      %5283 = vmatpush2.msra.mxu0 0.0
      %5284 = vmatprep.subr.mxu0 0.0
      %5285 = vmatpush2.msra.mxu0 0.0
      %5286 = vmatprep.subr.mxu0 0.0
      %5287 = vmatpush2.msra.mxu0 0.0
      %5288 = vmatprep.subr.mxu0 0.0
      %5289 = vmatpush2.msra.mxu0 0.0
      %5290 = vmatprep.subr.mxu0 0.0
      %5291 = vmatpush2.msra.mxu0 0.0
      %5292 = vmatprep.subr.mxu0 0.0
      %5293 = vmatpush2.msra.mxu0 0.0
      %5294 = vmatprep.subr.mxu0 0.0
      %5295 = vmatpush2.msra.mxu0 0.0
      %5296 = vmatprep.subr.mxu0 0.0
      %5297 = vmatpush2.msra.mxu0 0.0
      %5298 = vmatprep.subr.mxu0 0.0
      %5299 = vmatpush2.msra.mxu0 0.0
      %5300 = vmatprep.subr.mxu0 0.0
      %5301 = vmatpush2.msra.mxu0 0.0
      %5302 = vmatprep.subr.mxu0 0.0
      %5303 = vmatpush2.msra.mxu0 0.0
      %5304 = vmatprep.subr.mxu0 0.0
      %5305 = vmatpush2.msra.mxu0 0.0
      %5306 = vmatprep.subr.mxu0 0.0
      %5307 = vmatpush2.msra.mxu0 0.0
      %5308 = vmatprep.mubr.f32.mxu0 0.0
      %5309 = vmatmul.mubr.f32.gmra.mxu0 %v5242
      %v5310 = vpop.f32.mrf.mxu0
      %v5311 = vadd.f32 0.0, %v5310
      %v5312 = vpop.f32.mrf.mxu0
      %v5313 = vadd.f32 0.0, %v5312
      %5314 = vdwg.mxu0
      %v5315 = vadd.f32 %v5226, %v5311
      %v5316 = vadd.f32 %v5227, %v5313
      %5317 = vrot.lane.b32.xlu0 %v4712, 110
      %v5318 = vpop.permute.xlu0 %5317
      %5319 = vrot.lane.b32.xlu0 %v4716, 110
      %v5320 = vpop.permute.xlu0 %5319
      %5321 = vrot.lane.b32.xlu0 %v4713, 110
      %v5322 = vpop.permute.xlu0 %5321
      %5323 = vrot.lane.b32.xlu0 %v4717, 110
      %v5324 = vpop.permute.xlu0 %5323
      %v5325 = vsel %vm1257, %v5318, %v5322
      %v5326 = vsel %vm1257, %v5320, %v5324
      %v5327 = vsel %vm1257, %v5322, %v5318
      %v5328 = vsel %vm1257, %v5324, %v5320
      %v5329 = vld [vmem:[%s2248] sm:$0xff]
      %v5331 = vsel %vm1645, %v5329, 0
      %5333 = vmatprep.subr.mxu0 0.0
      %5334 = vmatpush1.msra.mxu0 0.0
      %5335 = vmatprep.subr.mxu0 0.0
      %5336 = vmatpush1.msra.mxu0 0.0
      %5337 = vmatprep.subr.mxu0 0.0
      %5338 = vmatpush1.msra.mxu0 0.0
      %5339 = vmatprep.subr.mxu0 0.0
      %5340 = vmatpush1.msra.mxu0 0.0
      %5341 = vmatprep.subr.mxu0 0.0
      %5342 = vmatpush1.msra.mxu0 0.0
      %5343 = vmatprep.subr.mxu0 0.0
      %5344 = vmatpush1.msra.mxu0 0.0
      %5345 = vmatprep.subr.mxu0 0.0
      %5346 = vmatpush1.msra.mxu0 0.0
      %5347 = vmatprep.subr.mxu0 0.0
      %5348 = vmatpush1.msra.mxu0 0.0
      %5349 = vmatprep.subr.mxu0 0.0
      %5350 = vmatpush1.msra.mxu0 0.0
      %5351 = vmatprep.subr.mxu0 0.0
      %5352 = vmatpush1.msra.mxu0 0.0
      %5353 = vmatprep.subr.mxu0 0.0
      %5354 = vmatpush1.msra.mxu0 0.0
      %5355 = vmatprep.subr.mxu0 0.0
      %5356 = vmatpush1.msra.mxu0 0.0
      %5357 = vmatprep.subr.mxu0 0.0
      %5358 = vmatpush1.msra.mxu0 0.0
      %5359 = vmatprep.subr.mxu0 0.0
      %5360 = vmatpush1.msra.mxu0 0.0
      %5361 = vmatprep.subr.mxu0 %v5328
      %5362 = vmatpush1.msra.mxu0 %v5326
      %5363 = vmatprep.subr.mxu0 %v5327
      %5364 = vmatpush1.msra.mxu0 %v5325
      %5365 = vmatprep.subr.mxu0 0.0
      %5366 = vmatpush2.msra.mxu0 0.0
      %5367 = vmatprep.subr.mxu0 0.0
      %5368 = vmatpush2.msra.mxu0 0.0
      %5369 = vmatprep.subr.mxu0 0.0
      %5370 = vmatpush2.msra.mxu0 0.0
      %5371 = vmatprep.subr.mxu0 0.0
      %5372 = vmatpush2.msra.mxu0 0.0
      %5373 = vmatprep.subr.mxu0 0.0
      %5374 = vmatpush2.msra.mxu0 0.0
      %5375 = vmatprep.subr.mxu0 0.0
      %5376 = vmatpush2.msra.mxu0 0.0
      %5377 = vmatprep.subr.mxu0 0.0
      %5378 = vmatpush2.msra.mxu0 0.0
      %5379 = vmatprep.subr.mxu0 0.0
      %5380 = vmatpush2.msra.mxu0 0.0
      %5381 = vmatprep.subr.mxu0 0.0
      %5382 = vmatpush2.msra.mxu0 0.0
      %5383 = vmatprep.subr.mxu0 0.0
      %5384 = vmatpush2.msra.mxu0 0.0
      %5385 = vmatprep.subr.mxu0 0.0
      %5386 = vmatpush2.msra.mxu0 0.0
      %5387 = vmatprep.subr.mxu0 0.0
      %5388 = vmatpush2.msra.mxu0 0.0
      %5389 = vmatprep.subr.mxu0 0.0
      %5390 = vmatpush2.msra.mxu0 0.0
      %5391 = vmatprep.subr.mxu0 0.0
      %5392 = vmatpush2.msra.mxu0 0.0
      %5393 = vmatprep.subr.mxu0 0.0
      %5394 = vmatpush2.msra.mxu0 0.0
      %5395 = vmatprep.subr.mxu0 0.0
      %5396 = vmatpush2.msra.mxu0 0.0
      %5397 = vmatprep.mubr.f32.mxu0 0.0
      %5398 = vmatmul.mubr.f32.gmra.mxu0 %v5331
      %v5399 = vpop.f32.mrf.mxu0
      %v5400 = vadd.f32 0.0, %v5399
      %v5401 = vpop.f32.mrf.mxu0
      %v5402 = vadd.f32 0.0, %v5401
      %5403 = vdwg.mxu0
      %v5404 = vadd.f32 %v5315, %v5400
      %v5405 = vadd.f32 %v5316, %v5402
      %5406 = vrot.lane.b32.xlu0 %v4712, 96
      %v5407 = vpop.permute.xlu0 %5406
      %5408 = vrot.lane.b32.xlu0 %v4716, 96
      %v5409 = vpop.permute.xlu0 %5408
      %5410 = vrot.lane.b32.xlu0 %v4713, 96
      %v5411 = vpop.permute.xlu0 %5410
      %5412 = vrot.lane.b32.xlu0 %v4717, 96
      %v5413 = vpop.permute.xlu0 %5412
      %v5414 = vsel %vm1348, %v5407, %v5411
      %v5415 = vsel %vm1348, %v5409, %v5413
      %v5416 = vsel %vm1348, %v5411, %v5407
      %v5417 = vsel %vm1348, %v5413, %v5409
      %v5418 = vld [vmem:[%s2338] sm:$0xff]
      %v5420 = vsel %vm1645, %v5418, 0
      %5422 = vmatprep.subr.mxu0 0.0
      %5423 = vmatpush1.msra.mxu0 0.0
      %5424 = vmatprep.subr.mxu0 0.0
      %5425 = vmatpush1.msra.mxu0 0.0
      %5426 = vmatprep.subr.mxu0 0.0
      %5427 = vmatpush1.msra.mxu0 0.0
      %5428 = vmatprep.subr.mxu0 0.0
      %5429 = vmatpush1.msra.mxu0 0.0
      %5430 = vmatprep.subr.mxu0 0.0
      %5431 = vmatpush1.msra.mxu0 0.0
      %5432 = vmatprep.subr.mxu0 0.0
      %5433 = vmatpush1.msra.mxu0 0.0
      %5434 = vmatprep.subr.mxu0 0.0
      %5435 = vmatpush1.msra.mxu0 0.0
      %5436 = vmatprep.subr.mxu0 0.0
      %5437 = vmatpush1.msra.mxu0 0.0
      %5438 = vmatprep.subr.mxu0 0.0
      %5439 = vmatpush1.msra.mxu0 0.0
      %5440 = vmatprep.subr.mxu0 0.0
      %5441 = vmatpush1.msra.mxu0 0.0
      %5442 = vmatprep.subr.mxu0 0.0
      %5443 = vmatpush1.msra.mxu0 0.0
      %5444 = vmatprep.subr.mxu0 0.0
      %5445 = vmatpush1.msra.mxu0 0.0
      %5446 = vmatprep.subr.mxu0 0.0
      %5447 = vmatpush1.msra.mxu0 0.0
      %5448 = vmatprep.subr.mxu0 0.0
      %5449 = vmatpush1.msra.mxu0 0.0
      %5450 = vmatprep.subr.mxu0 %v5417
      %5451 = vmatpush1.msra.mxu0 %v5415
      %5452 = vmatprep.subr.mxu0 %v5416
      %5453 = vmatpush1.msra.mxu0 %v5414
      %5454 = vmatprep.subr.mxu0 0.0
      %5455 = vmatpush2.msra.mxu0 0.0
      %5456 = vmatprep.subr.mxu0 0.0
      %5457 = vmatpush2.msra.mxu0 0.0
      %5458 = vmatprep.subr.mxu0 0.0
      %5459 = vmatpush2.msra.mxu0 0.0
      %5460 = vmatprep.subr.mxu0 0.0
      %5461 = vmatpush2.msra.mxu0 0.0
      %5462 = vmatprep.subr.mxu0 0.0
      %5463 = vmatpush2.msra.mxu0 0.0
      %5464 = vmatprep.subr.mxu0 0.0
      %5465 = vmatpush2.msra.mxu0 0.0
      %5466 = vmatprep.subr.mxu0 0.0
      %5467 = vmatpush2.msra.mxu0 0.0
      %5468 = vmatprep.subr.mxu0 0.0
      %5469 = vmatpush2.msra.mxu0 0.0
      %5470 = vmatprep.subr.mxu0 0.0
      %5471 = vmatpush2.msra.mxu0 0.0
      %5472 = vmatprep.subr.mxu0 0.0
      %5473 = vmatpush2.msra.mxu0 0.0
      %5474 = vmatprep.subr.mxu0 0.0
      %5475 = vmatpush2.msra.mxu0 0.0
      %5476 = vmatprep.subr.mxu0 0.0
      %5477 = vmatpush2.msra.mxu0 0.0
      %5478 = vmatprep.subr.mxu0 0.0
      %5479 = vmatpush2.msra.mxu0 0.0
      %5480 = vmatprep.subr.mxu0 0.0
      %5481 = vmatpush2.msra.mxu0 0.0
      %5482 = vmatprep.subr.mxu0 0.0
      %5483 = vmatpush2.msra.mxu0 0.0
      %5484 = vmatprep.subr.mxu0 0.0
      %5485 = vmatpush2.msra.mxu0 0.0
      %5486 = vmatprep.mubr.f32.mxu0 0.0
      %5487 = vmatmul.mubr.f32.gmra.mxu0 %v5420
      %v5488 = vpop.f32.mrf.mxu0
      %v5489 = vadd.f32 0.0, %v5488
      %v5490 = vpop.f32.mrf.mxu0
      %v5491 = vadd.f32 0.0, %v5490
      %5492 = vdwg.mxu0
      %v5493 = vadd.f32 %v5404, %v5489
      %v5494 = vadd.f32 %v5405, %v5491
      %5495 = vrot.lane.b32.xlu0 %v4712, 95
      %v5496 = vpop.permute.xlu0 %5495
      %5497 = vrot.lane.b32.xlu0 %v4716, 95
      %v5498 = vpop.permute.xlu0 %5497
      %5499 = vrot.lane.b32.xlu0 %v4713, 95
      %v5500 = vpop.permute.xlu0 %5499
      %5501 = vrot.lane.b32.xlu0 %v4717, 95
      %v5502 = vpop.permute.xlu0 %5501
      %v5503 = vsel %vm1439, %v5496, %v5500
      %v5504 = vsel %vm1439, %v5498, %v5502
      %v5505 = vsel %vm1439, %v5500, %v5496
      %v5506 = vsel %vm1439, %v5502, %v5498
      %v5507 = vld [vmem:[%s2428] sm:$0xff]
      %v5509 = vsel %vm1645, %v5507, 0
      %5511 = vmatprep.subr.mxu0 0.0
      %5512 = vmatpush1.msra.mxu0 0.0
      %5513 = vmatprep.subr.mxu0 0.0
      %5514 = vmatpush1.msra.mxu0 0.0
      %5515 = vmatprep.subr.mxu0 0.0
      %5516 = vmatpush1.msra.mxu0 0.0
      %5517 = vmatprep.subr.mxu0 0.0
      %5518 = vmatpush1.msra.mxu0 0.0
      %5519 = vmatprep.subr.mxu0 0.0
      %5520 = vmatpush1.msra.mxu0 0.0
      %5521 = vmatprep.subr.mxu0 0.0
      %5522 = vmatpush1.msra.mxu0 0.0
      %5523 = vmatprep.subr.mxu0 0.0
      %5524 = vmatpush1.msra.mxu0 0.0
      %5525 = vmatprep.subr.mxu0 0.0
      %5526 = vmatpush1.msra.mxu0 0.0
      %5527 = vmatprep.subr.mxu0 0.0
      %5528 = vmatpush1.msra.mxu0 0.0
      %5529 = vmatprep.subr.mxu0 0.0
      %5530 = vmatpush1.msra.mxu0 0.0
      %5531 = vmatprep.subr.mxu0 0.0
      %5532 = vmatpush1.msra.mxu0 0.0
      %5533 = vmatprep.subr.mxu0 0.0
      %5534 = vmatpush1.msra.mxu0 0.0
      %5535 = vmatprep.subr.mxu0 0.0
      %5536 = vmatpush1.msra.mxu0 0.0
      %5537 = vmatprep.subr.mxu0 0.0
      %5538 = vmatpush1.msra.mxu0 0.0
      %5539 = vmatprep.subr.mxu0 %v5506
      %5540 = vmatpush1.msra.mxu0 %v5504
      %5541 = vmatprep.subr.mxu0 %v5505
      %5542 = vmatpush1.msra.mxu0 %v5503
      %5543 = vmatprep.subr.mxu0 0.0
      %5544 = vmatpush2.msra.mxu0 0.0
      %5545 = vmatprep.subr.mxu0 0.0
      %5546 = vmatpush2.msra.mxu0 0.0
      %5547 = vmatprep.subr.mxu0 0.0
      %5548 = vmatpush2.msra.mxu0 0.0
      %5549 = vmatprep.subr.mxu0 0.0
      %5550 = vmatpush2.msra.mxu0 0.0
      %5551 = vmatprep.subr.mxu0 0.0
      %5552 = vmatpush2.msra.mxu0 0.0
      %5553 = vmatprep.subr.mxu0 0.0
      %5554 = vmatpush2.msra.mxu0 0.0
      %5555 = vmatprep.subr.mxu0 0.0
      %5556 = vmatpush2.msra.mxu0 0.0
      %5557 = vmatprep.subr.mxu0 0.0
      %5558 = vmatpush2.msra.mxu0 0.0
      %5559 = vmatprep.subr.mxu0 0.0
      %5560 = vmatpush2.msra.mxu0 0.0
      %5561 = vmatprep.subr.mxu0 0.0
      %5562 = vmatpush2.msra.mxu0 0.0
      %5563 = vmatprep.subr.mxu0 0.0
      %5564 = vmatpush2.msra.mxu0 0.0
      %5565 = vmatprep.subr.mxu0 0.0
      %5566 = vmatpush2.msra.mxu0 0.0
      %5567 = vmatprep.subr.mxu0 0.0
      %5568 = vmatpush2.msra.mxu0 0.0
      %5569 = vmatprep.subr.mxu0 0.0
      %5570 = vmatpush2.msra.mxu0 0.0
      %5571 = vmatprep.subr.mxu0 0.0
      %5572 = vmatpush2.msra.mxu0 0.0
      %5573 = vmatprep.subr.mxu0 0.0
      %5574 = vmatpush2.msra.mxu0 0.0
      %5575 = vmatprep.mubr.f32.mxu0 0.0
      %5576 = vmatmul.mubr.f32.gmra.mxu0 %v5509
      %v5577 = vpop.f32.mrf.mxu0
      %v5578 = vadd.f32 0.0, %v5577
      %v5579 = vpop.f32.mrf.mxu0
      %v5580 = vadd.f32 0.0, %v5579
      %5581 = vdwg.mxu0
      %v5582 = vadd.f32 %v5493, %v5578
      %v5583 = vadd.f32 %v5494, %v5580
      %5584 = vrot.lane.b32.xlu0 %v4712, 94
      %v5585 = vpop.permute.xlu0 %5584
      %5586 = vrot.lane.b32.xlu0 %v4716, 94
      %v5587 = vpop.permute.xlu0 %5586
      %5588 = vrot.lane.b32.xlu0 %v4713, 94
      %v5589 = vpop.permute.xlu0 %5588
      %5590 = vrot.lane.b32.xlu0 %v4717, 94
      %v5591 = vpop.permute.xlu0 %5590
      %v5592 = vsel %vm1530, %v5585, %v5589
      %v5593 = vsel %vm1530, %v5587, %v5591
      %v5594 = vsel %vm1530, %v5589, %v5585
      %v5595 = vsel %vm1530, %v5591, %v5587
      %v5596 = vld [vmem:[%s2518] sm:$0xff]
      %v5598 = vsel %vm1645, %v5596, 0
      %5600 = vmatprep.subr.mxu0 0.0
      %5601 = vmatpush1.msra.mxu0 0.0
      %5602 = vmatprep.subr.mxu0 0.0
      %5603 = vmatpush1.msra.mxu0 0.0
      %5604 = vmatprep.subr.mxu0 0.0
      %5605 = vmatpush1.msra.mxu0 0.0
      %5606 = vmatprep.subr.mxu0 0.0
      %5607 = vmatpush1.msra.mxu0 0.0
      %5608 = vmatprep.subr.mxu0 0.0
      %5609 = vmatpush1.msra.mxu0 0.0
      %5610 = vmatprep.subr.mxu0 0.0
      %5611 = vmatpush1.msra.mxu0 0.0
      %5612 = vmatprep.subr.mxu0 0.0
      %5613 = vmatpush1.msra.mxu0 0.0
      %5614 = vmatprep.subr.mxu0 0.0
      %5615 = vmatpush1.msra.mxu0 0.0
      %5616 = vmatprep.subr.mxu0 0.0
      %5617 = vmatpush1.msra.mxu0 0.0
      %5618 = vmatprep.subr.mxu0 0.0
      %5619 = vmatpush1.msra.mxu0 0.0
      %5620 = vmatprep.subr.mxu0 0.0
      %5621 = vmatpush1.msra.mxu0 0.0
      %5622 = vmatprep.subr.mxu0 0.0
      %5623 = vmatpush1.msra.mxu0 0.0
      %5624 = vmatprep.subr.mxu0 0.0
      %5625 = vmatpush1.msra.mxu0 0.0
      %5626 = vmatprep.subr.mxu0 0.0
      %5627 = vmatpush1.msra.mxu0 0.0
      %5628 = vmatprep.subr.mxu0 %v5595
      %5629 = vmatpush1.msra.mxu0 %v5593
      %5630 = vmatprep.subr.mxu0 %v5594
      %5631 = vmatpush1.msra.mxu0 %v5592
      %5632 = vmatprep.subr.mxu0 0.0
      %5633 = vmatpush2.msra.mxu0 0.0
      %5634 = vmatprep.subr.mxu0 0.0
      %5635 = vmatpush2.msra.mxu0 0.0
      %5636 = vmatprep.subr.mxu0 0.0
      %5637 = vmatpush2.msra.mxu0 0.0
      %5638 = vmatprep.subr.mxu0 0.0
      %5639 = vmatpush2.msra.mxu0 0.0
      %5640 = vmatprep.subr.mxu0 0.0
      %5641 = vmatpush2.msra.mxu0 0.0
      %5642 = vmatprep.subr.mxu0 0.0
      %5643 = vmatpush2.msra.mxu0 0.0
      %5644 = vmatprep.subr.mxu0 0.0
      %5645 = vmatpush2.msra.mxu0 0.0
      %5646 = vmatprep.subr.mxu0 0.0
      %5647 = vmatpush2.msra.mxu0 0.0
      %5648 = vmatprep.subr.mxu0 0.0
      %5649 = vmatpush2.msra.mxu0 0.0
      %5650 = vmatprep.subr.mxu0 0.0
      %5651 = vmatpush2.msra.mxu0 0.0
      %5652 = vmatprep.subr.mxu0 0.0
      %5653 = vmatpush2.msra.mxu0 0.0
      %5654 = vmatprep.subr.mxu0 0.0
      %5655 = vmatpush2.msra.mxu0 0.0
      %5656 = vmatprep.subr.mxu0 0.0
      %5657 = vmatpush2.msra.mxu0 0.0
      %5658 = vmatprep.subr.mxu0 0.0
      %5659 = vmatpush2.msra.mxu0 0.0
      %5660 = vmatprep.subr.mxu0 0.0
      %5661 = vmatpush2.msra.mxu0 0.0
      %5662 = vmatprep.subr.mxu0 0.0
      %5663 = vmatpush2.msra.mxu0 0.0
      %5664 = vmatprep.mubr.f32.mxu0 0.0
      %5665 = vmatmul.mubr.f32.gmra.mxu0 %v5598
      %v5666 = vpop.f32.mrf.mxu0
      %v5667 = vadd.f32 0.0, %v5666
      %v5668 = vpop.f32.mrf.mxu0
      %v5669 = vadd.f32 0.0, %v5668
      %5670 = vdwg.mxu0
      %v5671 = vadd.f32 %v5582, %v5667
      %v5672 = vadd.f32 %v5583, %v5669
      %v5673 = vld [vmem:[%s7] sm:$0xff]
      %5675 = vset.pattern.permute.xlu0 0
      %5676 = vperm.xlu0 %5675, %v5673
      %v5677 = vpop.permute.xlu0 %5676
      %v5679 = vadd.f32 %v5671, %v5677
      %v5680 = vadd.f32 %v5672, %v5677
      %v5681 = vmax.f32 %v5679, 0.0
      %v5682 = vmax.f32 %v5680, 0.0
      %v5683 = vsub.f32 0.0, %v5679
      %v5684 = vsub.f32 0.0, %v5680
      %v5685 = vmax.f32 %v5683, 0.0
      %v5686 = vmax.f32 %v5684, 0.0
      %v5687 = vld [vmem:[%s14] sm:$0xff]
      %v5688 = vld [vmem:[%s14 + $0x8] sm:$0x3]
      %v5689 = vld [vmem:[%s15] sm:$0xff]
      %v5690 = vld [vmem:[%s15 + $0x8] sm:$0x3]
      %5692 = vset.pattern.permute.xlu0 0
      %5693 = vperm.xlu0 %5692, %v5689
      %v5694 = vpop.permute.xlu0 %5693
      %5697 = vset.pattern.permute.xlu0 0
      %5698 = vperm.xlu0 %5697, %v5690
      %v5699 = vpop.permute.xlu0 %5698
      %v5702 = vsel %vm1645, %v5687, 0
      %v5705 = vsel %vm1645, %v5688, 0
      %5707 = vmatprep.subr.mxu0 0.0
      %5708 = vmatpush1.msra.mxu0 0.0
      %5709 = vmatprep.subr.mxu0 0.0
      %5710 = vmatpush1.msra.mxu0 0.0
      %5711 = vmatprep.subr.mxu0 0.0
      %5712 = vmatpush1.msra.mxu0 0.0
      %5713 = vmatprep.subr.mxu0 0.0
      %5714 = vmatpush1.msra.mxu0 0.0
      %5715 = vmatprep.subr.mxu0 0.0
      %5716 = vmatpush1.msra.mxu0 0.0
      %5717 = vmatprep.subr.mxu0 0.0
      %5718 = vmatpush1.msra.mxu0 0.0
      %5719 = vmatprep.subr.mxu0 0.0
      %5720 = vmatpush1.msra.mxu0 0.0
      %5721 = vmatprep.subr.mxu0 0.0
      %5722 = vmatpush1.msra.mxu0 0.0
      %5723 = vmatprep.subr.mxu0 0.0
      %5724 = vmatpush1.msra.mxu0 0.0
      %5725 = vmatprep.subr.mxu0 0.0
      %5726 = vmatpush1.msra.mxu0 0.0
      %5727 = vmatprep.subr.mxu0 0.0
      %5728 = vmatpush1.msra.mxu0 0.0
      %5729 = vmatprep.subr.mxu0 0.0
      %5730 = vmatpush1.msra.mxu0 0.0
      %5731 = vmatprep.subr.mxu0 0.0
      %5732 = vmatpush1.msra.mxu0 0.0
      %5733 = vmatprep.subr.mxu0 0.0
      %5734 = vmatpush1.msra.mxu0 0.0
      %5735 = vmatprep.subr.mxu0 %v5686
      %5736 = vmatpush1.msra.mxu0 %v5685
      %5737 = vmatprep.subr.mxu0 %v5682
      %5738 = vmatpush1.msra.mxu0 %v5681
      %5739 = vmatprep.subr.mxu0 0.0
      %5740 = vmatpush2.msra.mxu0 0.0
      %5741 = vmatprep.subr.mxu0 0.0
      %5742 = vmatpush2.msra.mxu0 0.0
      %5743 = vmatprep.subr.mxu0 0.0
      %5744 = vmatpush2.msra.mxu0 0.0
      %5745 = vmatprep.subr.mxu0 0.0
      %5746 = vmatpush2.msra.mxu0 0.0
      %5747 = vmatprep.subr.mxu0 0.0
      %5748 = vmatpush2.msra.mxu0 0.0
      %5749 = vmatprep.subr.mxu0 0.0
      %5750 = vmatpush2.msra.mxu0 0.0
      %5751 = vmatprep.subr.mxu0 0.0
      %5752 = vmatpush2.msra.mxu0 0.0
      %5753 = vmatprep.subr.mxu0 0.0
      %5754 = vmatpush2.msra.mxu0 0.0
      %5755 = vmatprep.subr.mxu0 0.0
      %5756 = vmatpush2.msra.mxu0 0.0
      %5757 = vmatprep.subr.mxu0 0.0
      %5758 = vmatpush2.msra.mxu0 0.0
      %5759 = vmatprep.subr.mxu0 0.0
      %5760 = vmatpush2.msra.mxu0 0.0
      %5761 = vmatprep.subr.mxu0 0.0
      %5762 = vmatpush2.msra.mxu0 0.0
      %5763 = vmatprep.subr.mxu0 0.0
      %5764 = vmatpush2.msra.mxu0 0.0
      %5765 = vmatprep.subr.mxu0 0.0
      %5766 = vmatpush2.msra.mxu0 0.0
      %5767 = vmatprep.subr.mxu0 0.0
      %5768 = vmatpush2.msra.mxu0 0.0
      %5769 = vmatprep.subr.mxu0 0.0
      %5770 = vmatpush2.msra.mxu0 0.0
      %5771 = vmatprep.mubr.f32.mxu0 0.0
      %5772 = vmatmul.mubr.f32.gmra.mxu0 %v5702
      %v5773 = vpop.f32.mrf.mxu0
      %v5774 = vadd.f32 %v5694, %v5773
      %v5775 = vpop.f32.mrf.mxu0
      %v5776 = vadd.f32 %v5694, %v5775
      %5777 = vmatprep.mubr.f32.mxu0 0.0
      %5778 = vmatmul.mubr.f32.gmra.mxu0 %v5705
      %v5779 = vpop.f32.mrf.mxu0
      %v5780 = vadd.f32 %v5699, %v5779
      %v5781 = vpop.f32.mrf.mxu0
      %v5782 = vadd.f32 %v5699, %v5781
      %5783 = vdwg.mxu0
      %v5784 = vld [vmem:[%s2707] sm:$0x3]
      %vm5785 = vcmp.gt.f32.partialorder %v5784, 0.0
      %v5786 = vsel %vm5785, 1, 0
      %v5787 = vlaneseq
      %v5788 = vshrl.u32 %v5787, 7
      %v5789 = vsub.s32 0, %v5788
      %v5790 = vrot.slane %v5786, %v5789
      %v5791 = vlaneseq
      %v5792 = vshrl.u32 %v5791, 7
      %v5793 = vsub.s32 1, %v5792
      %v5794 = vrot.slane %v5786, %v5793
      %vm5795 = vcmp.eq.s32.totalorder %v5790, 1
      %vm5796 = vcmp.eq.s32.totalorder %v5794, 1
      %v5797 = vsel %vm5795, %v5774, -inf
      %v5798 = vsel %vm5796, %v5776, -inf
      %v5799 = vsel %vm5795, %v5780, -inf
      %v5800 = vsel %vm5796, %v5782, -inf
      %v5801 = vmax.f32 %v5797, %v5798
      %5802 = vmax.xlane.f32.xlu0 %v5801
      %v5803 = vpop.xlane.xlu0 %5802
      %v5804 = vsel %vm781, %v5799, -inf
      %v5805 = vsel %vm781, %v5800, -inf
      %v5806 = vmax.f32 %v5804, %v5805
      %5807 = vmax.xlane.f32.xlu0 %v5806
      %v5808 = vpop.xlane.xlu0 %5807
      %v5809 = vsub.f32 %v5797, %v5803
      %v5810 = vsub.f32 %v5798, %v5803
      %v5811 = vsub.f32 %v5799, %v5808
      %v5812 = vsub.f32 %v5800, %v5808
      %v5813 = vmul.f32 %v5809, 1.442695
      %v5814 = vpow.pop %v5813
      %v5815 = vmul.f32 %v5810, 1.442695
      %v5816 = vpow.pop %v5815
      %v5817 = vmul.f32 %v5811, 1.442695
      %v5818 = vpow.pop %v5817
      %v5819 = vmul.f32 %v5812, 1.442695
      %v5820 = vpow.pop %v5819
      %v5821 = vadd.f32 %v5814, %v5816
      %5822 = vadd.xlane.f32.xlu0 %v5821
      %v5823 = vpop.xlane.xlu0 %5822
      %v5824 = vsel %vm781, %v5818, 0.0
      %v5825 = vsel %vm781, %v5820, 0.0
      %v5826 = vadd.f32 %v5824, %v5825
      %5827 = vadd.xlane.f32.xlu0 %v5826
      %v5828 = vpop.xlane.xlu0 %5827
      %v5829 = vlog2.pop %v5823
      %v5830 = vmul.f32 %v5829, 0.6931472
      %v5831 = vlog2.pop %v5828
      %v5832 = vmul.f32 %v5831, 0.6931472
      %v5833 = vadd.f32 %v5803, %v5830
      %v5834 = vadd.f32 %v5808, %v5832
      %v5835 = vmax.f32 %v4886, %v5833
      %v5836 = vmax.f32 %v4887, %v5834
      %v5837 = vsub.f32 %v4886, %v5835
      %v5838 = vsub.f32 %v4887, %v5836
      %v5839 = vmul.f32 %v5837, 1.442695
      %v5840 = vpow.pop %v5839
      %v5841 = vmul.f32 %v5838, 1.442695
      %v5842 = vpow.pop %v5841
      %v5843 = vsub.f32 %v5833, %v5835
      %v5844 = vsub.f32 %v5834, %v5836
      %v5845 = vmul.f32 %v5843, 1.442695
      %v5846 = vpow.pop %v5845
      %v5847 = vmul.f32 %v5844, 1.442695
      %v5848 = vpow.pop %v5847
      %v5849 = vadd.f32 %v5840, %v5846
      %v5850 = vadd.f32 %v5842, %v5848
      %v5851 = vlog2.pop %v5849
      %v5852 = vmul.f32 %v5851, 0.6931472
      %v5853 = vlog2.pop %v5850
      %v5854 = vmul.f32 %v5853, 0.6931472
      %v5855 = vadd.f32 %v5835, %v5852
      %v5856 = vadd.f32 %v5836, %v5854
      %v5857 = vld [vmem:[%s8] sm:$0xff]
      %5858 = vrot.lane.b32.xlu0 %v5681, 127
      %v5859 = vpop.permute.xlu0 %5858
      %5860 = vrot.lane.b32.xlu0 %v5685, 127
      %v5861 = vpop.permute.xlu0 %5860
      %5862 = vrot.lane.b32.xlu0 %v5682, 127
      %v5863 = vpop.permute.xlu0 %5862
      %5864 = vrot.lane.b32.xlu0 %v5686, 127
      %v5865 = vpop.permute.xlu0 %5864
      %v5866 = vsel %vm821, %v5859, %v5863
      %v5867 = vsel %vm821, %v5861, %v5865
      %v5868 = vsel %vm821, %v5863, %v5859
      %v5869 = vsel %vm821, %v5865, %v5861
      %v5870 = vld [vmem:[%s2794] sm:$0xff]
      %v5872 = vsel %vm1645, %v5870, 0
      %5874 = vmatprep.subr.mxu0 0.0
      %5875 = vmatpush1.msra.mxu0 0.0
      %5876 = vmatprep.subr.mxu0 0.0
      %5877 = vmatpush1.msra.mxu0 0.0
      %5878 = vmatprep.subr.mxu0 0.0
      %5879 = vmatpush1.msra.mxu0 0.0
      %5880 = vmatprep.subr.mxu0 0.0
      %5881 = vmatpush1.msra.mxu0 0.0
      %5882 = vmatprep.subr.mxu0 0.0
      %5883 = vmatpush1.msra.mxu0 0.0
      %5884 = vmatprep.subr.mxu0 0.0
      %5885 = vmatpush1.msra.mxu0 0.0
      %5886 = vmatprep.subr.mxu0 0.0
      %5887 = vmatpush1.msra.mxu0 0.0
      %5888 = vmatprep.subr.mxu0 0.0
      %5889 = vmatpush1.msra.mxu0 0.0
      %5890 = vmatprep.subr.mxu0 0.0
      %5891 = vmatpush1.msra.mxu0 0.0
      %5892 = vmatprep.subr.mxu0 0.0
      %5893 = vmatpush1.msra.mxu0 0.0
      %5894 = vmatprep.subr.mxu0 0.0
      %5895 = vmatpush1.msra.mxu0 0.0
      %5896 = vmatprep.subr.mxu0 0.0
      %5897 = vmatpush1.msra.mxu0 0.0
      %5898 = vmatprep.subr.mxu0 0.0
      %5899 = vmatpush1.msra.mxu0 0.0
      %5900 = vmatprep.subr.mxu0 0.0
      %5901 = vmatpush1.msra.mxu0 0.0
      %5902 = vmatprep.subr.mxu0 %v5869
      %5903 = vmatpush1.msra.mxu0 %v5867
      %5904 = vmatprep.subr.mxu0 %v5868
      %5905 = vmatpush1.msra.mxu0 %v5866
      %5906 = vmatprep.subr.mxu0 0.0
      %5907 = vmatpush2.msra.mxu0 0.0
      %5908 = vmatprep.subr.mxu0 0.0
      %5909 = vmatpush2.msra.mxu0 0.0
      %5910 = vmatprep.subr.mxu0 0.0
      %5911 = vmatpush2.msra.mxu0 0.0
      %5912 = vmatprep.subr.mxu0 0.0
      %5913 = vmatpush2.msra.mxu0 0.0
      %5914 = vmatprep.subr.mxu0 0.0
      %5915 = vmatpush2.msra.mxu0 0.0
      %5916 = vmatprep.subr.mxu0 0.0
      %5917 = vmatpush2.msra.mxu0 0.0
      %5918 = vmatprep.subr.mxu0 0.0
      %5919 = vmatpush2.msra.mxu0 0.0
      %5920 = vmatprep.subr.mxu0 0.0
      %5921 = vmatpush2.msra.mxu0 0.0
      %5922 = vmatprep.subr.mxu0 0.0
      %5923 = vmatpush2.msra.mxu0 0.0
      %5924 = vmatprep.subr.mxu0 0.0
      %5925 = vmatpush2.msra.mxu0 0.0
      %5926 = vmatprep.subr.mxu0 0.0
      %5927 = vmatpush2.msra.mxu0 0.0
      %5928 = vmatprep.subr.mxu0 0.0
      %5929 = vmatpush2.msra.mxu0 0.0
      %5930 = vmatprep.subr.mxu0 0.0
      %5931 = vmatpush2.msra.mxu0 0.0
      %5932 = vmatprep.subr.mxu0 0.0
      %5933 = vmatpush2.msra.mxu0 0.0
      %5934 = vmatprep.subr.mxu0 0.0
      %5935 = vmatpush2.msra.mxu0 0.0
      %5936 = vmatprep.subr.mxu0 0.0
      %5937 = vmatpush2.msra.mxu0 0.0
      %5938 = vmatprep.mubr.f32.mxu0 0.0
      %5939 = vmatmul.mubr.f32.gmra.mxu0 %v5872
      %v5940 = vpop.f32.mrf.mxu0
      %v5941 = vadd.f32 0.0, %v5940
      %v5942 = vpop.f32.mrf.mxu0
      %v5943 = vadd.f32 0.0, %v5942
      %5944 = vdwg.mxu0
      %v5946 = vsel %vm1645, %v5857, 0
      %5948 = vmatprep.subr.mxu0 0.0
      %5949 = vmatpush1.msra.mxu0 0.0
      %5950 = vmatprep.subr.mxu0 0.0
      %5951 = vmatpush1.msra.mxu0 0.0
      %5952 = vmatprep.subr.mxu0 0.0
      %5953 = vmatpush1.msra.mxu0 0.0
      %5954 = vmatprep.subr.mxu0 0.0
      %5955 = vmatpush1.msra.mxu0 0.0
      %5956 = vmatprep.subr.mxu0 0.0
      %5957 = vmatpush1.msra.mxu0 0.0
      %5958 = vmatprep.subr.mxu0 0.0
      %5959 = vmatpush1.msra.mxu0 0.0
      %5960 = vmatprep.subr.mxu0 0.0
      %5961 = vmatpush1.msra.mxu0 0.0
      %5962 = vmatprep.subr.mxu0 0.0
      %5963 = vmatpush1.msra.mxu0 0.0
      %5964 = vmatprep.subr.mxu0 0.0
      %5965 = vmatpush1.msra.mxu0 0.0
      %5966 = vmatprep.subr.mxu0 0.0
      %5967 = vmatpush1.msra.mxu0 0.0
      %5968 = vmatprep.subr.mxu0 0.0
      %5969 = vmatpush1.msra.mxu0 0.0
      %5970 = vmatprep.subr.mxu0 0.0
      %5971 = vmatpush1.msra.mxu0 0.0
      %5972 = vmatprep.subr.mxu0 0.0
      %5973 = vmatpush1.msra.mxu0 0.0
      %5974 = vmatprep.subr.mxu0 0.0
      %5975 = vmatpush1.msra.mxu0 0.0
      %5976 = vmatprep.subr.mxu0 %v5686
      %5977 = vmatpush1.msra.mxu0 %v5685
      %5978 = vmatprep.subr.mxu0 %v5682
      %5979 = vmatpush1.msra.mxu0 %v5681
      %5980 = vmatprep.subr.mxu0 0.0
      %5981 = vmatpush2.msra.mxu0 0.0
      %5982 = vmatprep.subr.mxu0 0.0
      %5983 = vmatpush2.msra.mxu0 0.0
      %5984 = vmatprep.subr.mxu0 0.0
      %5985 = vmatpush2.msra.mxu0 0.0
      %5986 = vmatprep.subr.mxu0 0.0
      %5987 = vmatpush2.msra.mxu0 0.0
      %5988 = vmatprep.subr.mxu0 0.0
      %5989 = vmatpush2.msra.mxu0 0.0
      %5990 = vmatprep.subr.mxu0 0.0
      %5991 = vmatpush2.msra.mxu0 0.0
      %5992 = vmatprep.subr.mxu0 0.0
      %5993 = vmatpush2.msra.mxu0 0.0
      %5994 = vmatprep.subr.mxu0 0.0
      %5995 = vmatpush2.msra.mxu0 0.0
      %5996 = vmatprep.subr.mxu0 0.0
      %5997 = vmatpush2.msra.mxu0 0.0
      %5998 = vmatprep.subr.mxu0 0.0
      %5999 = vmatpush2.msra.mxu0 0.0
      %6000 = vmatprep.subr.mxu0 0.0
      %6001 = vmatpush2.msra.mxu0 0.0
      %6002 = vmatprep.subr.mxu0 0.0
      %6003 = vmatpush2.msra.mxu0 0.0
      %6004 = vmatprep.subr.mxu0 0.0
      %6005 = vmatpush2.msra.mxu0 0.0
      %6006 = vmatprep.subr.mxu0 0.0
      %6007 = vmatpush2.msra.mxu0 0.0
      %6008 = vmatprep.subr.mxu0 0.0
      %6009 = vmatpush2.msra.mxu0 0.0
      %6010 = vmatprep.subr.mxu0 0.0
      %6011 = vmatpush2.msra.mxu0 0.0
      %6012 = vmatprep.mubr.f32.mxu0 0.0
      %6013 = vmatmul.mubr.f32.gmra.mxu0 %v5946
      %v6014 = vpop.f32.mrf.mxu0
      %v6015 = vadd.f32 %v5941, %v6014
      %v6016 = vpop.f32.mrf.mxu0
      %v6017 = vadd.f32 %v5943, %v6016
      %6018 = vdwg.mxu0
      %6019 = vrot.lane.b32.xlu0 %v5681, 126
      %v6020 = vpop.permute.xlu0 %6019
      %6021 = vrot.lane.b32.xlu0 %v5685, 126
      %v6022 = vpop.permute.xlu0 %6021
      %6023 = vrot.lane.b32.xlu0 %v5682, 126
      %v6024 = vpop.permute.xlu0 %6023
      %6025 = vrot.lane.b32.xlu0 %v5686, 126
      %v6026 = vpop.permute.xlu0 %6025
      %v6027 = vsel %vm984, %v6020, %v6024
      %v6028 = vsel %vm984, %v6022, %v6026
      %v6029 = vsel %vm984, %v6024, %v6020
      %v6030 = vsel %vm984, %v6026, %v6022
      %v6031 = vld [vmem:[%s2956] sm:$0xff]
      %v6033 = vsel %vm1645, %v6031, 0
      %6035 = vmatprep.subr.mxu0 0.0
      %6036 = vmatpush1.msra.mxu0 0.0
      %6037 = vmatprep.subr.mxu0 0.0
      %6038 = vmatpush1.msra.mxu0 0.0
      %6039 = vmatprep.subr.mxu0 0.0
      %6040 = vmatpush1.msra.mxu0 0.0
      %6041 = vmatprep.subr.mxu0 0.0
      %6042 = vmatpush1.msra.mxu0 0.0
      %6043 = vmatprep.subr.mxu0 0.0
      %6044 = vmatpush1.msra.mxu0 0.0
      %6045 = vmatprep.subr.mxu0 0.0
      %6046 = vmatpush1.msra.mxu0 0.0
      %6047 = vmatprep.subr.mxu0 0.0
      %6048 = vmatpush1.msra.mxu0 0.0
      %6049 = vmatprep.subr.mxu0 0.0
      %6050 = vmatpush1.msra.mxu0 0.0
      %6051 = vmatprep.subr.mxu0 0.0
      %6052 = vmatpush1.msra.mxu0 0.0
      %6053 = vmatprep.subr.mxu0 0.0
      %6054 = vmatpush1.msra.mxu0 0.0
      %6055 = vmatprep.subr.mxu0 0.0
      %6056 = vmatpush1.msra.mxu0 0.0
      %6057 = vmatprep.subr.mxu0 0.0
      %6058 = vmatpush1.msra.mxu0 0.0
      %6059 = vmatprep.subr.mxu0 0.0
      %6060 = vmatpush1.msra.mxu0 0.0
      %6061 = vmatprep.subr.mxu0 0.0
      %6062 = vmatpush1.msra.mxu0 0.0
      %6063 = vmatprep.subr.mxu0 %v6030
      %6064 = vmatpush1.msra.mxu0 %v6028
      %6065 = vmatprep.subr.mxu0 %v6029
      %6066 = vmatpush1.msra.mxu0 %v6027
      %6067 = vmatprep.subr.mxu0 0.0
      %6068 = vmatpush2.msra.mxu0 0.0
      %6069 = vmatprep.subr.mxu0 0.0
      %6070 = vmatpush2.msra.mxu0 0.0
      %6071 = vmatprep.subr.mxu0 0.0
      %6072 = vmatpush2.msra.mxu0 0.0
      %6073 = vmatprep.subr.mxu0 0.0
      %6074 = vmatpush2.msra.mxu0 0.0
      %6075 = vmatprep.subr.mxu0 0.0
      %6076 = vmatpush2.msra.mxu0 0.0
      %6077 = vmatprep.subr.mxu0 0.0
      %6078 = vmatpush2.msra.mxu0 0.0
      %6079 = vmatprep.subr.mxu0 0.0
      %6080 = vmatpush2.msra.mxu0 0.0
      %6081 = vmatprep.subr.mxu0 0.0
      %6082 = vmatpush2.msra.mxu0 0.0
      %6083 = vmatprep.subr.mxu0 0.0
      %6084 = vmatpush2.msra.mxu0 0.0
      %6085 = vmatprep.subr.mxu0 0.0
      %6086 = vmatpush2.msra.mxu0 0.0
      %6087 = vmatprep.subr.mxu0 0.0
      %6088 = vmatpush2.msra.mxu0 0.0
      %6089 = vmatprep.subr.mxu0 0.0
      %6090 = vmatpush2.msra.mxu0 0.0
      %6091 = vmatprep.subr.mxu0 0.0
      %6092 = vmatpush2.msra.mxu0 0.0
      %6093 = vmatprep.subr.mxu0 0.0
      %6094 = vmatpush2.msra.mxu0 0.0
      %6095 = vmatprep.subr.mxu0 0.0
      %6096 = vmatpush2.msra.mxu0 0.0
      %6097 = vmatprep.subr.mxu0 0.0
      %6098 = vmatpush2.msra.mxu0 0.0
      %6099 = vmatprep.mubr.f32.mxu0 0.0
      %6100 = vmatmul.mubr.f32.gmra.mxu0 %v6033
      %v6101 = vpop.f32.mrf.mxu0
      %v6102 = vadd.f32 0.0, %v6101
      %v6103 = vpop.f32.mrf.mxu0
      %v6104 = vadd.f32 0.0, %v6103
      %6105 = vdwg.mxu0
      %v6106 = vadd.f32 %v6015, %v6102
      %v6107 = vadd.f32 %v6017, %v6104
      %6108 = vrot.lane.b32.xlu0 %v5681, 112
      %v6109 = vpop.permute.xlu0 %6108
      %6110 = vrot.lane.b32.xlu0 %v5685, 112
      %v6111 = vpop.permute.xlu0 %6110
      %6112 = vrot.lane.b32.xlu0 %v5682, 112
      %v6113 = vpop.permute.xlu0 %6112
      %6114 = vrot.lane.b32.xlu0 %v5686, 112
      %v6115 = vpop.permute.xlu0 %6114
      %v6116 = vsel %vm1075, %v6109, %v6113
      %v6117 = vsel %vm1075, %v6111, %v6115
      %v6118 = vsel %vm1075, %v6113, %v6109
      %v6119 = vsel %vm1075, %v6115, %v6111
      %v6120 = vld [vmem:[%s3046] sm:$0xff]
      %v6122 = vsel %vm1645, %v6120, 0
      %6124 = vmatprep.subr.mxu0 0.0
      %6125 = vmatpush1.msra.mxu0 0.0
      %6126 = vmatprep.subr.mxu0 0.0
      %6127 = vmatpush1.msra.mxu0 0.0
      %6128 = vmatprep.subr.mxu0 0.0
      %6129 = vmatpush1.msra.mxu0 0.0
      %6130 = vmatprep.subr.mxu0 0.0
      %6131 = vmatpush1.msra.mxu0 0.0
      %6132 = vmatprep.subr.mxu0 0.0
      %6133 = vmatpush1.msra.mxu0 0.0
      %6134 = vmatprep.subr.mxu0 0.0
      %6135 = vmatpush1.msra.mxu0 0.0
      %6136 = vmatprep.subr.mxu0 0.0
      %6137 = vmatpush1.msra.mxu0 0.0
      %6138 = vmatprep.subr.mxu0 0.0
      %6139 = vmatpush1.msra.mxu0 0.0
      %6140 = vmatprep.subr.mxu0 0.0
      %6141 = vmatpush1.msra.mxu0 0.0
      %6142 = vmatprep.subr.mxu0 0.0
      %6143 = vmatpush1.msra.mxu0 0.0
      %6144 = vmatprep.subr.mxu0 0.0
      %6145 = vmatpush1.msra.mxu0 0.0
      %6146 = vmatprep.subr.mxu0 0.0
      %6147 = vmatpush1.msra.mxu0 0.0
      %6148 = vmatprep.subr.mxu0 0.0
      %6149 = vmatpush1.msra.mxu0 0.0
      %6150 = vmatprep.subr.mxu0 0.0
      %6151 = vmatpush1.msra.mxu0 0.0
      %6152 = vmatprep.subr.mxu0 %v6119
      %6153 = vmatpush1.msra.mxu0 %v6117
      %6154 = vmatprep.subr.mxu0 %v6118
      %6155 = vmatpush1.msra.mxu0 %v6116
      %6156 = vmatprep.subr.mxu0 0.0
      %6157 = vmatpush2.msra.mxu0 0.0
      %6158 = vmatprep.subr.mxu0 0.0
      %6159 = vmatpush2.msra.mxu0 0.0
      %6160 = vmatprep.subr.mxu0 0.0
      %6161 = vmatpush2.msra.mxu0 0.0
      %6162 = vmatprep.subr.mxu0 0.0
      %6163 = vmatpush2.msra.mxu0 0.0
      %6164 = vmatprep.subr.mxu0 0.0
      %6165 = vmatpush2.msra.mxu0 0.0
      %6166 = vmatprep.subr.mxu0 0.0
      %6167 = vmatpush2.msra.mxu0 0.0
      %6168 = vmatprep.subr.mxu0 0.0
      %6169 = vmatpush2.msra.mxu0 0.0
      %6170 = vmatprep.subr.mxu0 0.0
      %6171 = vmatpush2.msra.mxu0 0.0
      %6172 = vmatprep.subr.mxu0 0.0
      %6173 = vmatpush2.msra.mxu0 0.0
      %6174 = vmatprep.subr.mxu0 0.0
      %6175 = vmatpush2.msra.mxu0 0.0
      %6176 = vmatprep.subr.mxu0 0.0
      %6177 = vmatpush2.msra.mxu0 0.0
      %6178 = vmatprep.subr.mxu0 0.0
      %6179 = vmatpush2.msra.mxu0 0.0
      %6180 = vmatprep.subr.mxu0 0.0
      %6181 = vmatpush2.msra.mxu0 0.0
      %6182 = vmatprep.subr.mxu0 0.0
      %6183 = vmatpush2.msra.mxu0 0.0
      %6184 = vmatprep.subr.mxu0 0.0
      %6185 = vmatpush2.msra.mxu0 0.0
      %6186 = vmatprep.subr.mxu0 0.0
      %6187 = vmatpush2.msra.mxu0 0.0
      %6188 = vmatprep.mubr.f32.mxu0 0.0
      %6189 = vmatmul.mubr.f32.gmra.mxu0 %v6122
      %v6190 = vpop.f32.mrf.mxu0
      %v6191 = vadd.f32 0.0, %v6190
      %v6192 = vpop.f32.mrf.mxu0
      %v6193 = vadd.f32 0.0, %v6192
      %6194 = vdwg.mxu0
      %v6195 = vadd.f32 %v6106, %v6191
      %v6196 = vadd.f32 %v6107, %v6193
      %6197 = vrot.lane.b32.xlu0 %v5681, 111
      %v6198 = vpop.permute.xlu0 %6197
      %6199 = vrot.lane.b32.xlu0 %v5685, 111
      %v6200 = vpop.permute.xlu0 %6199
      %6201 = vrot.lane.b32.xlu0 %v5682, 111
      %v6202 = vpop.permute.xlu0 %6201
      %6203 = vrot.lane.b32.xlu0 %v5686, 111
      %v6204 = vpop.permute.xlu0 %6203
      %v6205 = vsel %vm1166, %v6198, %v6202
      %v6206 = vsel %vm1166, %v6200, %v6204
      %v6207 = vsel %vm1166, %v6202, %v6198
      %v6208 = vsel %vm1166, %v6204, %v6200
      %v6209 = vld [vmem:[%s3136] sm:$0xff]
      %v6211 = vsel %vm1645, %v6209, 0
      %6213 = vmatprep.subr.mxu0 0.0
      %6214 = vmatpush1.msra.mxu0 0.0
      %6215 = vmatprep.subr.mxu0 0.0
      %6216 = vmatpush1.msra.mxu0 0.0
      %6217 = vmatprep.subr.mxu0 0.0
      %6218 = vmatpush1.msra.mxu0 0.0
      %6219 = vmatprep.subr.mxu0 0.0
      %6220 = vmatpush1.msra.mxu0 0.0
      %6221 = vmatprep.subr.mxu0 0.0
      %6222 = vmatpush1.msra.mxu0 0.0
      %6223 = vmatprep.subr.mxu0 0.0
      %6224 = vmatpush1.msra.mxu0 0.0
      %6225 = vmatprep.subr.mxu0 0.0
      %6226 = vmatpush1.msra.mxu0 0.0
      %6227 = vmatprep.subr.mxu0 0.0
      %6228 = vmatpush1.msra.mxu0 0.0
      %6229 = vmatprep.subr.mxu0 0.0
      %6230 = vmatpush1.msra.mxu0 0.0
      %6231 = vmatprep.subr.mxu0 0.0
      %6232 = vmatpush1.msra.mxu0 0.0
      %6233 = vmatprep.subr.mxu0 0.0
      %6234 = vmatpush1.msra.mxu0 0.0
      %6235 = vmatprep.subr.mxu0 0.0
      %6236 = vmatpush1.msra.mxu0 0.0
      %6237 = vmatprep.subr.mxu0 0.0
      %6238 = vmatpush1.msra.mxu0 0.0
      %6239 = vmatprep.subr.mxu0 0.0
      %6240 = vmatpush1.msra.mxu0 0.0
      %6241 = vmatprep.subr.mxu0 %v6208
      %6242 = vmatpush1.msra.mxu0 %v6206
      %6243 = vmatprep.subr.mxu0 %v6207
      %6244 = vmatpush1.msra.mxu0 %v6205
      %6245 = vmatprep.subr.mxu0 0.0
      %6246 = vmatpush2.msra.mxu0 0.0
      %6247 = vmatprep.subr.mxu0 0.0
      %6248 = vmatpush2.msra.mxu0 0.0
      %6249 = vmatprep.subr.mxu0 0.0
      %6250 = vmatpush2.msra.mxu0 0.0
      %6251 = vmatprep.subr.mxu0 0.0
      %6252 = vmatpush2.msra.mxu0 0.0
      %6253 = vmatprep.subr.mxu0 0.0
      %6254 = vmatpush2.msra.mxu0 0.0
      %6255 = vmatprep.subr.mxu0 0.0
      %6256 = vmatpush2.msra.mxu0 0.0
      %6257 = vmatprep.subr.mxu0 0.0
      %6258 = vmatpush2.msra.mxu0 0.0
      %6259 = vmatprep.subr.mxu0 0.0
      %6260 = vmatpush2.msra.mxu0 0.0
      %6261 = vmatprep.subr.mxu0 0.0
      %6262 = vmatpush2.msra.mxu0 0.0
      %6263 = vmatprep.subr.mxu0 0.0
      %6264 = vmatpush2.msra.mxu0 0.0
      %6265 = vmatprep.subr.mxu0 0.0
      %6266 = vmatpush2.msra.mxu0 0.0
      %6267 = vmatprep.subr.mxu0 0.0
      %6268 = vmatpush2.msra.mxu0 0.0
      %6269 = vmatprep.subr.mxu0 0.0
      %6270 = vmatpush2.msra.mxu0 0.0
      %6271 = vmatprep.subr.mxu0 0.0
      %6272 = vmatpush2.msra.mxu0 0.0
      %6273 = vmatprep.subr.mxu0 0.0
      %6274 = vmatpush2.msra.mxu0 0.0
      %6275 = vmatprep.subr.mxu0 0.0
      %6276 = vmatpush2.msra.mxu0 0.0
      %6277 = vmatprep.mubr.f32.mxu0 0.0
      %6278 = vmatmul.mubr.f32.gmra.mxu0 %v6211
      %v6279 = vpop.f32.mrf.mxu0
      %v6280 = vadd.f32 0.0, %v6279
      %v6281 = vpop.f32.mrf.mxu0
      %v6282 = vadd.f32 0.0, %v6281
      %6283 = vdwg.mxu0
      %v6284 = vadd.f32 %v6195, %v6280
      %v6285 = vadd.f32 %v6196, %v6282
      %6286 = vrot.lane.b32.xlu0 %v5681, 110
      %v6287 = vpop.permute.xlu0 %6286
      %6288 = vrot.lane.b32.xlu0 %v5685, 110
      %v6289 = vpop.permute.xlu0 %6288
      %6290 = vrot.lane.b32.xlu0 %v5682, 110
      %v6291 = vpop.permute.xlu0 %6290
      %6292 = vrot.lane.b32.xlu0 %v5686, 110
      %v6293 = vpop.permute.xlu0 %6292
      %v6294 = vsel %vm1257, %v6287, %v6291
      %v6295 = vsel %vm1257, %v6289, %v6293
      %v6296 = vsel %vm1257, %v6291, %v6287
      %v6297 = vsel %vm1257, %v6293, %v6289
      %v6298 = vld [vmem:[%s3226] sm:$0xff]
      %v6300 = vsel %vm1645, %v6298, 0
      %6302 = vmatprep.subr.mxu0 0.0
      %6303 = vmatpush1.msra.mxu0 0.0
      %6304 = vmatprep.subr.mxu0 0.0
      %6305 = vmatpush1.msra.mxu0 0.0
      %6306 = vmatprep.subr.mxu0 0.0
      %6307 = vmatpush1.msra.mxu0 0.0
      %6308 = vmatprep.subr.mxu0 0.0
      %6309 = vmatpush1.msra.mxu0 0.0
      %6310 = vmatprep.subr.mxu0 0.0
      %6311 = vmatpush1.msra.mxu0 0.0
      %6312 = vmatprep.subr.mxu0 0.0
      %6313 = vmatpush1.msra.mxu0 0.0
      %6314 = vmatprep.subr.mxu0 0.0
      %6315 = vmatpush1.msra.mxu0 0.0
      %6316 = vmatprep.subr.mxu0 0.0
      %6317 = vmatpush1.msra.mxu0 0.0
      %6318 = vmatprep.subr.mxu0 0.0
      %6319 = vmatpush1.msra.mxu0 0.0
      %6320 = vmatprep.subr.mxu0 0.0
      %6321 = vmatpush1.msra.mxu0 0.0
      %6322 = vmatprep.subr.mxu0 0.0
      %6323 = vmatpush1.msra.mxu0 0.0
      %6324 = vmatprep.subr.mxu0 0.0
      %6325 = vmatpush1.msra.mxu0 0.0
      %6326 = vmatprep.subr.mxu0 0.0
      %6327 = vmatpush1.msra.mxu0 0.0
      %6328 = vmatprep.subr.mxu0 0.0
      %6329 = vmatpush1.msra.mxu0 0.0
      %6330 = vmatprep.subr.mxu0 %v6297
      %6331 = vmatpush1.msra.mxu0 %v6295
      %6332 = vmatprep.subr.mxu0 %v6296
      %6333 = vmatpush1.msra.mxu0 %v6294
      %6334 = vmatprep.subr.mxu0 0.0
      %6335 = vmatpush2.msra.mxu0 0.0
      %6336 = vmatprep.subr.mxu0 0.0
      %6337 = vmatpush2.msra.mxu0 0.0
      %6338 = vmatprep.subr.mxu0 0.0
      %6339 = vmatpush2.msra.mxu0 0.0
      %6340 = vmatprep.subr.mxu0 0.0
      %6341 = vmatpush2.msra.mxu0 0.0
      %6342 = vmatprep.subr.mxu0 0.0
      %6343 = vmatpush2.msra.mxu0 0.0
      %6344 = vmatprep.subr.mxu0 0.0
      %6345 = vmatpush2.msra.mxu0 0.0
      %6346 = vmatprep.subr.mxu0 0.0
      %6347 = vmatpush2.msra.mxu0 0.0
      %6348 = vmatprep.subr.mxu0 0.0
      %6349 = vmatpush2.msra.mxu0 0.0
      %6350 = vmatprep.subr.mxu0 0.0
      %6351 = vmatpush2.msra.mxu0 0.0
      %6352 = vmatprep.subr.mxu0 0.0
      %6353 = vmatpush2.msra.mxu0 0.0
      %6354 = vmatprep.subr.mxu0 0.0
      %6355 = vmatpush2.msra.mxu0 0.0
      %6356 = vmatprep.subr.mxu0 0.0
      %6357 = vmatpush2.msra.mxu0 0.0
      %6358 = vmatprep.subr.mxu0 0.0
      %6359 = vmatpush2.msra.mxu0 0.0
      %6360 = vmatprep.subr.mxu0 0.0
      %6361 = vmatpush2.msra.mxu0 0.0
      %6362 = vmatprep.subr.mxu0 0.0
      %6363 = vmatpush2.msra.mxu0 0.0
      %6364 = vmatprep.subr.mxu0 0.0
      %6365 = vmatpush2.msra.mxu0 0.0
      %6366 = vmatprep.mubr.f32.mxu0 0.0
      %6367 = vmatmul.mubr.f32.gmra.mxu0 %v6300
      %v6368 = vpop.f32.mrf.mxu0
      %v6369 = vadd.f32 0.0, %v6368
      %v6370 = vpop.f32.mrf.mxu0
      %v6371 = vadd.f32 0.0, %v6370
      %6372 = vdwg.mxu0
      %v6373 = vadd.f32 %v6284, %v6369
      %v6374 = vadd.f32 %v6285, %v6371
      %6375 = vrot.lane.b32.xlu0 %v5681, 96
      %v6376 = vpop.permute.xlu0 %6375
      %6377 = vrot.lane.b32.xlu0 %v5685, 96
      %v6378 = vpop.permute.xlu0 %6377
      %6379 = vrot.lane.b32.xlu0 %v5682, 96
      %v6380 = vpop.permute.xlu0 %6379
      %6381 = vrot.lane.b32.xlu0 %v5686, 96
      %v6382 = vpop.permute.xlu0 %6381
      %v6383 = vsel %vm1348, %v6376, %v6380
      %v6384 = vsel %vm1348, %v6378, %v6382
      %v6385 = vsel %vm1348, %v6380, %v6376
      %v6386 = vsel %vm1348, %v6382, %v6378
      %v6387 = vld [vmem:[%s3316] sm:$0xff]
      %v6389 = vsel %vm1645, %v6387, 0
      %6391 = vmatprep.subr.mxu0 0.0
      %6392 = vmatpush1.msra.mxu0 0.0
      %6393 = vmatprep.subr.mxu0 0.0
      %6394 = vmatpush1.msra.mxu0 0.0
      %6395 = vmatprep.subr.mxu0 0.0
      %6396 = vmatpush1.msra.mxu0 0.0
      %6397 = vmatprep.subr.mxu0 0.0
      %6398 = vmatpush1.msra.mxu0 0.0
      %6399 = vmatprep.subr.mxu0 0.0
      %6400 = vmatpush1.msra.mxu0 0.0
      %6401 = vmatprep.subr.mxu0 0.0
      %6402 = vmatpush1.msra.mxu0 0.0
      %6403 = vmatprep.subr.mxu0 0.0
      %6404 = vmatpush1.msra.mxu0 0.0
      %6405 = vmatprep.subr.mxu0 0.0
      %6406 = vmatpush1.msra.mxu0 0.0
      %6407 = vmatprep.subr.mxu0 0.0
      %6408 = vmatpush1.msra.mxu0 0.0
      %6409 = vmatprep.subr.mxu0 0.0
      %6410 = vmatpush1.msra.mxu0 0.0
      %6411 = vmatprep.subr.mxu0 0.0
      %6412 = vmatpush1.msra.mxu0 0.0
      %6413 = vmatprep.subr.mxu0 0.0
      %6414 = vmatpush1.msra.mxu0 0.0
      %6415 = vmatprep.subr.mxu0 0.0
      %6416 = vmatpush1.msra.mxu0 0.0
      %6417 = vmatprep.subr.mxu0 0.0
      %6418 = vmatpush1.msra.mxu0 0.0
      %6419 = vmatprep.subr.mxu0 %v6386
      %6420 = vmatpush1.msra.mxu0 %v6384
      %6421 = vmatprep.subr.mxu0 %v6385
      %6422 = vmatpush1.msra.mxu0 %v6383
      %6423 = vmatprep.subr.mxu0 0.0
      %6424 = vmatpush2.msra.mxu0 0.0
      %6425 = vmatprep.subr.mxu0 0.0
      %6426 = vmatpush2.msra.mxu0 0.0
      %6427 = vmatprep.subr.mxu0 0.0
      %6428 = vmatpush2.msra.mxu0 0.0
      %6429 = vmatprep.subr.mxu0 0.0
      %6430 = vmatpush2.msra.mxu0 0.0
      %6431 = vmatprep.subr.mxu0 0.0
      %6432 = vmatpush2.msra.mxu0 0.0
      %6433 = vmatprep.subr.mxu0 0.0
      %6434 = vmatpush2.msra.mxu0 0.0
      %6435 = vmatprep.subr.mxu0 0.0
      %6436 = vmatpush2.msra.mxu0 0.0
      %6437 = vmatprep.subr.mxu0 0.0
      %6438 = vmatpush2.msra.mxu0 0.0
      %6439 = vmatprep.subr.mxu0 0.0
      %6440 = vmatpush2.msra.mxu0 0.0
      %6441 = vmatprep.subr.mxu0 0.0
      %6442 = vmatpush2.msra.mxu0 0.0
      %6443 = vmatprep.subr.mxu0 0.0
      %6444 = vmatpush2.msra.mxu0 0.0
      %6445 = vmatprep.subr.mxu0 0.0
      %6446 = vmatpush2.msra.mxu0 0.0
      %6447 = vmatprep.subr.mxu0 0.0
      %6448 = vmatpush2.msra.mxu0 0.0
      %6449 = vmatprep.subr.mxu0 0.0
      %6450 = vmatpush2.msra.mxu0 0.0
      %6451 = vmatprep.subr.mxu0 0.0
      %6452 = vmatpush2.msra.mxu0 0.0
      %6453 = vmatprep.subr.mxu0 0.0
      %6454 = vmatpush2.msra.mxu0 0.0
      %6455 = vmatprep.mubr.f32.mxu0 0.0
      %6456 = vmatmul.mubr.f32.gmra.mxu0 %v6389
      %v6457 = vpop.f32.mrf.mxu0
      %v6458 = vadd.f32 0.0, %v6457
      %v6459 = vpop.f32.mrf.mxu0
      %v6460 = vadd.f32 0.0, %v6459
      %6461 = vdwg.mxu0
      %v6462 = vadd.f32 %v6373, %v6458
      %v6463 = vadd.f32 %v6374, %v6460
      %6464 = vrot.lane.b32.xlu0 %v5681, 95
      %v6465 = vpop.permute.xlu0 %6464
      %6466 = vrot.lane.b32.xlu0 %v5685, 95
      %v6467 = vpop.permute.xlu0 %6466
      %6468 = vrot.lane.b32.xlu0 %v5682, 95
      %v6469 = vpop.permute.xlu0 %6468
      %6470 = vrot.lane.b32.xlu0 %v5686, 95
      %v6471 = vpop.permute.xlu0 %6470
      %v6472 = vsel %vm1439, %v6465, %v6469
      %v6473 = vsel %vm1439, %v6467, %v6471
      %v6474 = vsel %vm1439, %v6469, %v6465
      %v6475 = vsel %vm1439, %v6471, %v6467
      %v6476 = vld [vmem:[%s3406] sm:$0xff]
      %v6478 = vsel %vm1645, %v6476, 0
      %6480 = vmatprep.subr.mxu0 0.0
      %6481 = vmatpush1.msra.mxu0 0.0
      %6482 = vmatprep.subr.mxu0 0.0
      %6483 = vmatpush1.msra.mxu0 0.0
      %6484 = vmatprep.subr.mxu0 0.0
      %6485 = vmatpush1.msra.mxu0 0.0
      %6486 = vmatprep.subr.mxu0 0.0
      %6487 = vmatpush1.msra.mxu0 0.0
      %6488 = vmatprep.subr.mxu0 0.0
      %6489 = vmatpush1.msra.mxu0 0.0
      %6490 = vmatprep.subr.mxu0 0.0
      %6491 = vmatpush1.msra.mxu0 0.0
      %6492 = vmatprep.subr.mxu0 0.0
      %6493 = vmatpush1.msra.mxu0 0.0
      %6494 = vmatprep.subr.mxu0 0.0
      %6495 = vmatpush1.msra.mxu0 0.0
      %6496 = vmatprep.subr.mxu0 0.0
      %6497 = vmatpush1.msra.mxu0 0.0
      %6498 = vmatprep.subr.mxu0 0.0
      %6499 = vmatpush1.msra.mxu0 0.0
      %6500 = vmatprep.subr.mxu0 0.0
      %6501 = vmatpush1.msra.mxu0 0.0
      %6502 = vmatprep.subr.mxu0 0.0
      %6503 = vmatpush1.msra.mxu0 0.0
      %6504 = vmatprep.subr.mxu0 0.0
      %6505 = vmatpush1.msra.mxu0 0.0
      %6506 = vmatprep.subr.mxu0 0.0
      %6507 = vmatpush1.msra.mxu0 0.0
      %6508 = vmatprep.subr.mxu0 %v6475
      %6509 = vmatpush1.msra.mxu0 %v6473
      %6510 = vmatprep.subr.mxu0 %v6474
      %6511 = vmatpush1.msra.mxu0 %v6472
      %6512 = vmatprep.subr.mxu0 0.0
      %6513 = vmatpush2.msra.mxu0 0.0
      %6514 = vmatprep.subr.mxu0 0.0
      %6515 = vmatpush2.msra.mxu0 0.0
      %6516 = vmatprep.subr.mxu0 0.0
      %6517 = vmatpush2.msra.mxu0 0.0
      %6518 = vmatprep.subr.mxu0 0.0
      %6519 = vmatpush2.msra.mxu0 0.0
      %6520 = vmatprep.subr.mxu0 0.0
      %6521 = vmatpush2.msra.mxu0 0.0
      %6522 = vmatprep.subr.mxu0 0.0
      %6523 = vmatpush2.msra.mxu0 0.0
      %6524 = vmatprep.subr.mxu0 0.0
      %6525 = vmatpush2.msra.mxu0 0.0
      %6526 = vmatprep.subr.mxu0 0.0
      %6527 = vmatpush2.msra.mxu0 0.0
      %6528 = vmatprep.subr.mxu0 0.0
      %6529 = vmatpush2.msra.mxu0 0.0
      %6530 = vmatprep.subr.mxu0 0.0
      %6531 = vmatpush2.msra.mxu0 0.0
      %6532 = vmatprep.subr.mxu0 0.0
      %6533 = vmatpush2.msra.mxu0 0.0
      %6534 = vmatprep.subr.mxu0 0.0
      %6535 = vmatpush2.msra.mxu0 0.0
      %6536 = vmatprep.subr.mxu0 0.0
      %6537 = vmatpush2.msra.mxu0 0.0
      %6538 = vmatprep.subr.mxu0 0.0
      %6539 = vmatpush2.msra.mxu0 0.0
      %6540 = vmatprep.subr.mxu0 0.0
      %6541 = vmatpush2.msra.mxu0 0.0
      %6542 = vmatprep.subr.mxu0 0.0
      %6543 = vmatpush2.msra.mxu0 0.0
      %6544 = vmatprep.mubr.f32.mxu0 0.0
      %6545 = vmatmul.mubr.f32.gmra.mxu0 %v6478
      %v6546 = vpop.f32.mrf.mxu0
      %v6547 = vadd.f32 0.0, %v6546
      %v6548 = vpop.f32.mrf.mxu0
      %v6549 = vadd.f32 0.0, %v6548
      %6550 = vdwg.mxu0
      %v6551 = vadd.f32 %v6462, %v6547
      %v6552 = vadd.f32 %v6463, %v6549
      %6553 = vrot.lane.b32.xlu0 %v5681, 94
      %v6554 = vpop.permute.xlu0 %6553
      %6555 = vrot.lane.b32.xlu0 %v5685, 94
      %v6556 = vpop.permute.xlu0 %6555
      %6557 = vrot.lane.b32.xlu0 %v5682, 94
      %v6558 = vpop.permute.xlu0 %6557
      %6559 = vrot.lane.b32.xlu0 %v5686, 94
      %v6560 = vpop.permute.xlu0 %6559
      %v6561 = vsel %vm1530, %v6554, %v6558
      %v6562 = vsel %vm1530, %v6556, %v6560
      %v6563 = vsel %vm1530, %v6558, %v6554
      %v6564 = vsel %vm1530, %v6560, %v6556
      %v6565 = vld [vmem:[%s3496] sm:$0xff]
      %v6567 = vsel %vm1645, %v6565, 0
      %6569 = vmatprep.subr.mxu0 0.0
      %6570 = vmatpush1.msra.mxu0 0.0
      %6571 = vmatprep.subr.mxu0 0.0
      %6572 = vmatpush1.msra.mxu0 0.0
      %6573 = vmatprep.subr.mxu0 0.0
      %6574 = vmatpush1.msra.mxu0 0.0
      %6575 = vmatprep.subr.mxu0 0.0
      %6576 = vmatpush1.msra.mxu0 0.0
      %6577 = vmatprep.subr.mxu0 0.0
      %6578 = vmatpush1.msra.mxu0 0.0
      %6579 = vmatprep.subr.mxu0 0.0
      %6580 = vmatpush1.msra.mxu0 0.0
      %6581 = vmatprep.subr.mxu0 0.0
      %6582 = vmatpush1.msra.mxu0 0.0
      %6583 = vmatprep.subr.mxu0 0.0
      %6584 = vmatpush1.msra.mxu0 0.0
      %6585 = vmatprep.subr.mxu0 0.0
      %6586 = vmatpush1.msra.mxu0 0.0
      %6587 = vmatprep.subr.mxu0 0.0
      %6588 = vmatpush1.msra.mxu0 0.0
      %6589 = vmatprep.subr.mxu0 0.0
      %6590 = vmatpush1.msra.mxu0 0.0
      %6591 = vmatprep.subr.mxu0 0.0
      %6592 = vmatpush1.msra.mxu0 0.0
      %6593 = vmatprep.subr.mxu0 0.0
      %6594 = vmatpush1.msra.mxu0 0.0
      %6595 = vmatprep.subr.mxu0 0.0
      %6596 = vmatpush1.msra.mxu0 0.0
      %6597 = vmatprep.subr.mxu0 %v6564
      %6598 = vmatpush1.msra.mxu0 %v6562
      %6599 = vmatprep.subr.mxu0 %v6563
      %6600 = vmatpush1.msra.mxu0 %v6561
      %6601 = vmatprep.subr.mxu0 0.0
      %6602 = vmatpush2.msra.mxu0 0.0
      %6603 = vmatprep.subr.mxu0 0.0
      %6604 = vmatpush2.msra.mxu0 0.0
      %6605 = vmatprep.subr.mxu0 0.0
      %6606 = vmatpush2.msra.mxu0 0.0
      %6607 = vmatprep.subr.mxu0 0.0
      %6608 = vmatpush2.msra.mxu0 0.0
      %6609 = vmatprep.subr.mxu0 0.0
      %6610 = vmatpush2.msra.mxu0 0.0
      %6611 = vmatprep.subr.mxu0 0.0
      %6612 = vmatpush2.msra.mxu0 0.0
      %6613 = vmatprep.subr.mxu0 0.0
      %6614 = vmatpush2.msra.mxu0 0.0
      %6615 = vmatprep.subr.mxu0 0.0
      %6616 = vmatpush2.msra.mxu0 0.0
      %6617 = vmatprep.subr.mxu0 0.0
      %6618 = vmatpush2.msra.mxu0 0.0
      %6619 = vmatprep.subr.mxu0 0.0
      %6620 = vmatpush2.msra.mxu0 0.0
      %6621 = vmatprep.subr.mxu0 0.0
      %6622 = vmatpush2.msra.mxu0 0.0
      %6623 = vmatprep.subr.mxu0 0.0
      %6624 = vmatpush2.msra.mxu0 0.0
      %6625 = vmatprep.subr.mxu0 0.0
      %6626 = vmatpush2.msra.mxu0 0.0
      %6627 = vmatprep.subr.mxu0 0.0
      %6628 = vmatpush2.msra.mxu0 0.0
      %6629 = vmatprep.subr.mxu0 0.0
      %6630 = vmatpush2.msra.mxu0 0.0
      %6631 = vmatprep.subr.mxu0 0.0
      %6632 = vmatpush2.msra.mxu0 0.0
      %6633 = vmatprep.mubr.f32.mxu0 0.0
      %6634 = vmatmul.mubr.f32.gmra.mxu0 %v6567
      %v6635 = vpop.f32.mrf.mxu0
      %v6636 = vadd.f32 0.0, %v6635
      %v6637 = vpop.f32.mrf.mxu0
      %v6638 = vadd.f32 0.0, %v6637
      %6639 = vdwg.mxu0
      %v6640 = vadd.f32 %v6551, %v6636
      %v6641 = vadd.f32 %v6552, %v6638
      %v6642 = vld [vmem:[%s9] sm:$0xff]
      %6644 = vset.pattern.permute.xlu0 0
      %6645 = vperm.xlu0 %6644, %v6642
      %v6646 = vpop.permute.xlu0 %6645
      %v6648 = vadd.f32 %v6640, %v6646
      %v6649 = vadd.f32 %v6641, %v6646
      %v6650 = vmax.f32 %v6648, 0.0
      %v6651 = vmax.f32 %v6649, 0.0
      %v6652 = vsub.f32 0.0, %v6648
      %v6653 = vsub.f32 0.0, %v6649
      %v6654 = vmax.f32 %v6652, 0.0
      %v6655 = vmax.f32 %v6653, 0.0
      %v6656 = vld [vmem:[%s16] sm:$0xff]
      %v6657 = vld [vmem:[%s16 + $0x8] sm:$0x3]
      %v6658 = vld [vmem:[%s17] sm:$0xff]
      %v6659 = vld [vmem:[%s17 + $0x8] sm:$0x3]
      %6661 = vset.pattern.permute.xlu0 0
      %6662 = vperm.xlu0 %6661, %v6658
      %v6663 = vpop.permute.xlu0 %6662
      %6666 = vset.pattern.permute.xlu0 0
      %6667 = vperm.xlu0 %6666, %v6659
      %v6668 = vpop.permute.xlu0 %6667
      %v6671 = vsel %vm1645, %v6656, 0
      %v6674 = vsel %vm1645, %v6657, 0
      %6676 = vmatprep.subr.mxu0 0.0
      %6677 = vmatpush1.msra.mxu0 0.0
      %6678 = vmatprep.subr.mxu0 0.0
      %6679 = vmatpush1.msra.mxu0 0.0
      %6680 = vmatprep.subr.mxu0 0.0
      %6681 = vmatpush1.msra.mxu0 0.0
      %6682 = vmatprep.subr.mxu0 0.0
      %6683 = vmatpush1.msra.mxu0 0.0
      %6684 = vmatprep.subr.mxu0 0.0
      %6685 = vmatpush1.msra.mxu0 0.0
      %6686 = vmatprep.subr.mxu0 0.0
      %6687 = vmatpush1.msra.mxu0 0.0
      %6688 = vmatprep.subr.mxu0 0.0
      %6689 = vmatpush1.msra.mxu0 0.0
      %6690 = vmatprep.subr.mxu0 0.0
      %6691 = vmatpush1.msra.mxu0 0.0
      %6692 = vmatprep.subr.mxu0 0.0
      %6693 = vmatpush1.msra.mxu0 0.0
      %6694 = vmatprep.subr.mxu0 0.0
      %6695 = vmatpush1.msra.mxu0 0.0
      %6696 = vmatprep.subr.mxu0 0.0
      %6697 = vmatpush1.msra.mxu0 0.0
      %6698 = vmatprep.subr.mxu0 0.0
      %6699 = vmatpush1.msra.mxu0 0.0
      %6700 = vmatprep.subr.mxu0 0.0
      %6701 = vmatpush1.msra.mxu0 0.0
      %6702 = vmatprep.subr.mxu0 0.0
      %6703 = vmatpush1.msra.mxu0 0.0
      %6704 = vmatprep.subr.mxu0 %v6655
      %6705 = vmatpush1.msra.mxu0 %v6654
      %6706 = vmatprep.subr.mxu0 %v6651
      %6707 = vmatpush1.msra.mxu0 %v6650
      %6708 = vmatprep.subr.mxu0 0.0
      %6709 = vmatpush2.msra.mxu0 0.0
      %6710 = vmatprep.subr.mxu0 0.0
      %6711 = vmatpush2.msra.mxu0 0.0
      %6712 = vmatprep.subr.mxu0 0.0
      %6713 = vmatpush2.msra.mxu0 0.0
      %6714 = vmatprep.subr.mxu0 0.0
      %6715 = vmatpush2.msra.mxu0 0.0
      %6716 = vmatprep.subr.mxu0 0.0
      %6717 = vmatpush2.msra.mxu0 0.0
      %6718 = vmatprep.subr.mxu0 0.0
      %6719 = vmatpush2.msra.mxu0 0.0
      %6720 = vmatprep.subr.mxu0 0.0
      %6721 = vmatpush2.msra.mxu0 0.0
      %6722 = vmatprep.subr.mxu0 0.0
      %6723 = vmatpush2.msra.mxu0 0.0
      %6724 = vmatprep.subr.mxu0 0.0
      %6725 = vmatpush2.msra.mxu0 0.0
      %6726 = vmatprep.subr.mxu0 0.0
      %6727 = vmatpush2.msra.mxu0 0.0
      %6728 = vmatprep.subr.mxu0 0.0
      %6729 = vmatpush2.msra.mxu0 0.0
      %6730 = vmatprep.subr.mxu0 0.0
      %6731 = vmatpush2.msra.mxu0 0.0
      %6732 = vmatprep.subr.mxu0 0.0
      %6733 = vmatpush2.msra.mxu0 0.0
      %6734 = vmatprep.subr.mxu0 0.0
      %6735 = vmatpush2.msra.mxu0 0.0
      %6736 = vmatprep.subr.mxu0 0.0
      %6737 = vmatpush2.msra.mxu0 0.0
      %6738 = vmatprep.subr.mxu0 0.0
      %6739 = vmatpush2.msra.mxu0 0.0
      %6740 = vmatprep.mubr.f32.mxu0 0.0
      %6741 = vmatmul.mubr.f32.gmra.mxu0 %v6671
      %v6742 = vpop.f32.mrf.mxu0
      %v6743 = vadd.f32 %v6663, %v6742
      %v6744 = vpop.f32.mrf.mxu0
      %v6745 = vadd.f32 %v6663, %v6744
      %6746 = vmatprep.mubr.f32.mxu0 0.0
      %6747 = vmatmul.mubr.f32.gmra.mxu0 %v6674
      %v6748 = vpop.f32.mrf.mxu0
      %v6749 = vadd.f32 %v6668, %v6748
      %v6750 = vpop.f32.mrf.mxu0
      %v6751 = vadd.f32 %v6668, %v6750
      %6752 = vdwg.mxu0
      %v6753 = vld [vmem:[%s3685] sm:$0x3]
      %vm6754 = vcmp.gt.f32.partialorder %v6753, 0.0
      %v6755 = vsel %vm6754, 1, 0
      %v6756 = vlaneseq
      %v6757 = vshrl.u32 %v6756, 7
      %v6758 = vsub.s32 0, %v6757
      %v6759 = vrot.slane %v6755, %v6758
      %v6760 = vlaneseq
      %v6761 = vshrl.u32 %v6760, 7
      %v6762 = vsub.s32 1, %v6761
      %v6763 = vrot.slane %v6755, %v6762
      %vm6764 = vcmp.eq.s32.totalorder %v6759, 1
      %vm6765 = vcmp.eq.s32.totalorder %v6763, 1
      %v6766 = vsel %vm6764, %v6743, -inf
      %v6767 = vsel %vm6765, %v6745, -inf
      %v6768 = vsel %vm6764, %v6749, -inf
      %v6769 = vsel %vm6765, %v6751, -inf
      %v6770 = vmax.f32 %v6766, %v6767
      %6771 = vmax.xlane.f32.xlu0 %v6770
      %v6772 = vpop.xlane.xlu0 %6771
      %v6773 = vsel %vm781, %v6768, -inf
      %v6774 = vsel %vm781, %v6769, -inf
      %v6775 = vmax.f32 %v6773, %v6774
      %6776 = vmax.xlane.f32.xlu0 %v6775
      %v6777 = vpop.xlane.xlu0 %6776
      %v6778 = vsub.f32 %v6766, %v6772
      %v6779 = vsub.f32 %v6767, %v6772
      %v6780 = vsub.f32 %v6768, %v6777
      %v6781 = vsub.f32 %v6769, %v6777
      %v6782 = vmul.f32 %v6778, 1.442695
      %v6783 = vpow.pop %v6782
      %v6784 = vmul.f32 %v6779, 1.442695
      %v6785 = vpow.pop %v6784
      %v6786 = vmul.f32 %v6780, 1.442695
      %v6787 = vpow.pop %v6786
      %v6788 = vmul.f32 %v6781, 1.442695
      %v6789 = vpow.pop %v6788
      %v6790 = vadd.f32 %v6783, %v6785
      %6791 = vadd.xlane.f32.xlu0 %v6790
      %v6792 = vpop.xlane.xlu0 %6791
      %v6793 = vsel %vm781, %v6787, 0.0
      %v6794 = vsel %vm781, %v6789, 0.0
      %v6795 = vadd.f32 %v6793, %v6794
      %6796 = vadd.xlane.f32.xlu0 %v6795
      %v6797 = vpop.xlane.xlu0 %6796
      %v6798 = vlog2.pop %v6792
      %v6799 = vmul.f32 %v6798, 0.6931472
      %v6800 = vlog2.pop %v6797
      %v6801 = vmul.f32 %v6800, 0.6931472
      %v6802 = vadd.f32 %v6772, %v6799
      %v6803 = vadd.f32 %v6777, %v6801
      %v6804 = vmax.f32 %v5855, %v6802
      %v6805 = vmax.f32 %v5856, %v6803
      %v6806 = vsub.f32 %v5855, %v6804
      %v6807 = vsub.f32 %v5856, %v6805
      %v6808 = vmul.f32 %v6806, 1.442695
      %v6809 = vpow.pop %v6808
      %v6810 = vmul.f32 %v6807, 1.442695
      %v6811 = vpow.pop %v6810
      %v6812 = vsub.f32 %v6802, %v6804
      %v6813 = vsub.f32 %v6803, %v6805
      %v6814 = vmul.f32 %v6812, 1.442695
      %v6815 = vpow.pop %v6814
      %v6816 = vmul.f32 %v6813, 1.442695
      %v6817 = vpow.pop %v6816
      %v6818 = vadd.f32 %v6809, %v6815
      %v6819 = vadd.f32 %v6811, %v6817
      %v6820 = vlog2.pop %v6818
      %v6821 = vmul.f32 %v6820, 0.6931472
      %v6822 = vlog2.pop %v6819
      %v6823 = vmul.f32 %v6822, 0.6931472
      %v6824 = vadd.f32 %v6804, %v6821
      %v6825 = vadd.f32 %v6805, %v6823
      %s6826 = scalar_lea.vmem %s643, 16
      %6827 = vst.msk [vmem:[%s6826] sm:$0xff] %vm3759, %v6824
      %6828 = vst.msk [vmem:[%s6826 + $0x8] sm:$0x3] %vm3761, %v6825
      %s6829 = smul.u32 2, %s31
      %p6830 = scmp.lt.s32.totalorder %s6829, 3
      %s6831 = scalar_select %p6830, %s6829, 3
      %s6832 = smul.addr %s6831, 2
      %s6833 = smul.addr %s6832, 8
      %s6834 = scalar_lea.vmem %s18, %s6833
      %s6835 = smul.u32 2, %s31
      %p6836 = scmp.lt.s32.totalorder %s6835, 3
      %s6837 = scalar_select %p6836, %s6835, 3
      %s6838 = smul.addr %s6837, 2
      %s6839 = smul.addr %s6838, 4
      %s6840 = scalar_lea.vmem %s19, %s6839
      // Predicated region
      $region93: #{bottlenet_forward.1} parent=91 // pred_check
        %p6841 = pneg %p437
      $region94: #{bottlenet_forward.1} parent=91 // pred_check_branch
        %6843 = sbr.rel (%p6841) target = $region96
      $region95: #{bottlenet_forward.1} parent=91 // pred_region
        %s6844 = smul.u32 2, %s31
      $region96: #{bottlenet_forward.1} parent=91 // pred_fallthru
        _
      // Predicated region
      $region97: #{bottlenet_forward.1} parent=91 // pred_check
        %p6845 = pneg %p463
      $region98: #{bottlenet_forward.1} parent=91 // pred_check_branch
        %6847 = sbr.rel (%p6845) target = $region100
      $region99: #{bottlenet_forward.1} parent=91 // pred_region
        %s6848 = smul.u32 2, %s31
      $region100: #{bottlenet_forward.1} parent=91 // pred_fallthru
        _
    $region92: #{bottlenet_forward.1} parent=5 // pred_fallthru
      _
    %p6849 = scmp.le.s32.totalorder 2, %s26
    // Predicated region
    $region101: #{bottlenet_forward.1} parent=5 // pred_check
      %p6850 = pneg %p6849
    $region102: #{bottlenet_forward.1} parent=5 // pred_check_branch
      %6852 = sbr.rel (%p6850) target = $region104
    $region103: #{bottlenet_forward.1} parent=5 // pred_region
      %s6853 = ssub.s32 %s26, 2
      // Predicated region
      $region105: #{bottlenet_forward.1} parent=103 // pred_check
        %p6854 = pneg %p443
      $region106: #{bottlenet_forward.1} parent=103 // pred_check_branch
        %6856 = sbr.rel (%p6854) target = $region108
      $region107: #{bottlenet_forward.1} parent=103 // pred_region
        %s6857 = smul.u32 2, %s32
        %p6858 = scmp.lt.s32.totalorder %s6857, 3
        %s6859 = scalar_select %p6858, %s6857, 3
        %s6860 = smul.addr %s6859, 2
        %s6861 = smul.addr %s6860, 8
        %s6862 = scalar_lea.vmem %s18, %s6861
      $region108: #{bottlenet_forward.1} parent=103 // pred_fallthru
        _
      // Predicated region
      $region109: #{bottlenet_forward.1} parent=103 // pred_check
        %p6863 = pneg %p469
      $region110: #{bottlenet_forward.1} parent=103 // pred_check_branch
        %6865 = sbr.rel (%p6863) target = $region112
      $region111: #{bottlenet_forward.1} parent=103 // pred_region
        %s6866 = smul.u32 2, %s32
        %p6867 = scmp.lt.s32.totalorder %s6866, 3
        %s6868 = scalar_select %p6867, %s6866, 3
        %s6869 = smul.addr %s6868, 2
        %s6870 = smul.addr %s6869, 4
        %s6871 = scalar_lea.vmem %s19, %s6870
      $region112: #{bottlenet_forward.1} parent=103 // pred_fallthru
        _
    $region104: #{bottlenet_forward.1} parent=5 // pred_fallthru
      _
  $region6: #{bottlenet_forward.1} parent=0 // loop_footer
    %s30 = sadd.s32 1, %s26
  $region7: #{bottlenet_forward.1} parent=0 // loop_footer_branch
    %25 = sbr.rel target = $region3
  $region8: #{bottlenet_forward.1} parent=0 // loop_exit
    _

</llo_original>
